<compile_context>
chip_gen: v6e
topology: v6e:2x2x1
jax: 0.10.0
libtpu: 0.0.40
codegen_flags: <defaults>
</compile_context>

<pallas_src>
import functools

import jax
import jax.numpy as jnp
from jax import lax
from jax.experimental import pallas as pl
from jax.experimental.pallas import tpu as pltpu


def _round_up(x, m):
    return (x + m - 1) // m * m


# ---------------------------------------------------------------------------
# Fused Pallas kernel: conv1+ReLU -> conv2+ReLU -> global-avg-pool -> fc
# One grid step = one image.  All intermediates stay in VMEM.
# ---------------------------------------------------------------------------
def _encoder_kernel(x_ref, mask_ref, pool_ref, w1_ref, b1_ref, w2_ref, b2_ref,
                    fcw_ref, fcb_ref, out_ref, z1_ref, *, dims):
    M, WP, PAD_TOP, Q2_START, C1P, C2P = dims  # static Python ints

    # ---- conv1 + bias + ReLU: 9 shifted matmuls over the padded input frame.
    acc1 = jnp.zeros((M, C1P), jnp.float32)
    for s in range(9):
        dh, dw = divmod(s, 3)
        off = dh * WP + dw                                   # static offset
        lhs = x_ref[off:off + M, :].astype(jnp.bfloat16)     # (M, Cin)
        acc1 = acc1 + jnp.dot(lhs, w1_ref[s],
                              preferred_element_type=jnp.float32)
    # mask zeroes the wrap-around columns so they act as zero padding for conv2
    y1 = jnp.maximum(acc1 + b1_ref[...], 0.0) * mask_ref[...]

    # ---- stage the intermediate activation in VMEM only (never hits HBM)
    z1_ref[...] = jnp.zeros_like(z1_ref)
    z1_ref[PAD_TOP:PAD_TOP + M, :] = y1                      # aligned store

    # ---- conv2 + bias + ReLU: same shifted-matmul scheme on the VMEM frame.
    acc2 = jnp.zeros((M, C2P), jnp.float32)
    for s in range(9):
        dh, dw = divmod(s, 3)
        off = Q2_START + dh * WP + dw
        lhs = z1_ref[off:off + M, :].astype(jnp.bfloat16)    # (M, C1P)
        acc2 = acc2 + jnp.dot(lhs, w2_ref[s],
                              preferred_element_type=jnp.float32)
    y2 = jnp.maximum(acc2 + b2_ref[...], 0.0)

    # ---- global average pool as an MXU matmul (pool_ref holds mask/(H*W)),
    #      then the fc head; output stays lane-dense (padded to 128 classes).
    pooled = jnp.dot(pool_ref[...], y2,
                     preferred_element_type=jnp.float32)     # (1, C2P)
    out_ref[...] = (jnp.dot(pooled, fcw_ref[...],
                            preferred_element_type=jnp.float32)
                    + fcb_ref[...])


# ---------------------------------------------------------------------------
# Wrapper: layout glue (NCHW -> padded flattened NHWC rows), weight padding,
# pallas_call plumbing.
# ---------------------------------------------------------------------------
@jax.jit
def image_encoder_forward(params, x_nchw):
    N, CIN, H, W = x_nchw.shape
    C1 = params["conv1_w"].shape[-1]
    C2 = params["conv2_w"].shape[-1]
    K = params["fc_w"].shape[-1]

    HP, WP = H + 2, W + 2
    M = H * WP                             # anchors per image (incl. 2 wrap cols/row)
    XROWS = _round_up(HP * WP + 2, 8)      # flattened padded frame + guard rows
    PAD_TOP = _round_up(WP + 1, 8)         # aligned placement of y1 inside z1
    Q2_START = PAD_TOP - WP - 1
    Z1_ROWS = _round_up(Q2_START + 2 * WP + 2 + M, 8)
    C1P = _round_up(C1, 128)
    C2P = _round_up(C2, 128)
    KP = _round_up(K, 128)

    f32, bf16 = jnp.float32, jnp.bfloat16

    # NCHW -> NHWC, zero-pad spatially (conv pad=1), flatten rows. No im2col.
    x = jnp.transpose(x_nchw, (0, 2, 3, 1)).astype(f32)
    xf = jnp.pad(x, ((0, 0), (1, 1), (1, 1), (0, 0))).reshape(N, HP * WP, CIN)
    xf = jnp.pad(xf, ((0, 0), (0, XROWS - HP * WP), (0, 0)))

    # valid-column mask over the M anchors, and pooling weights (1/HW at valid)
    col = jnp.arange(M, dtype=jnp.int32) % WP
    mask = (col < W).astype(f32).reshape(M, 1)
    pool_row = (mask / float(H * W)).reshape(1, M)

    # weights: pad output channels to 128-multiples (lane-dense), bf16 for MXU
    w1 = jnp.pad(params["conv1_w"],
                 ((0, 0), (0, 0), (0, 0), (0, C1P - C1))
                 ).reshape(9, CIN, C1P).astype(bf16)
    b1 = jnp.pad(params["conv1_b"], (0, C1P - C1)).reshape(1, C1P).astype(f32)
    w2 = jnp.pad(params["conv2_w"],
                 ((0, 0), (0, 0), (0, C1P - C1), (0, C2P - C2))
                 ).reshape(9, C1P, C2P).astype(bf16)
    b2 = jnp.pad(params["conv2_b"], (0, C2P - C2)).reshape(1, C2P).astype(f32)
    fcw = jnp.pad(params["fc_w"], ((0, C2P - C2), (0, KP - K))).astype(f32)
    fcb = jnp.pad(params["fc_b"], (0, KP - K)).reshape(1, KP).astype(f32)

    kernel = functools.partial(
        _encoder_kernel, dims=(M, WP, PAD_TOP, Q2_START, C1P, C2P))

    const2 = lambda n: (0, 0)
    const3 = lambda n: (0, 0, 0)

    out = pl.pallas_call(
        kernel,
        out_shape=jax.ShapeDtypeStruct((N, 1, KP), f32),
        grid=(N,),
        in_specs=[
            pl.BlockSpec((None, XROWS, CIN), lambda n: (n, 0, 0)),  # per-image frame
            pl.BlockSpec((M, 1), const2),                           # valid-col mask
            pl.BlockSpec((1, M), const2),                           # pooling weights
            pl.BlockSpec((9, CIN, C1P), const3),                    # conv1 w (bf16)
            pl.BlockSpec((1, C1P), const2),                         # conv1 b
            pl.BlockSpec((9, C1P, C2P), const3),                    # conv2 w (bf16)
            pl.BlockSpec((1, C2P), const2),                         # conv2 b
            pl.BlockSpec((C2P, KP), const2),                        # fc w
            pl.BlockSpec((1, KP), const2),                          # fc b
        ],
        out_specs=pl.BlockSpec((None, 1, KP), lambda n: (n, 0, 0)),
        scratch_shapes=[pltpu.VMEM((Z1_ROWS, C1P), f32)],           # VMEM-only h
        compiler_params=pltpu.CompilerParams(
            dimension_semantics=("parallel",),
            vmem_limit_bytes=32 * 1024 * 1024,
        ),
    )(xf, mask, pool_row, w1, b1, w2, b2, fcw, fcb)

    return out.reshape(N, KP)[:, :K]


# ---------------------------------------------------------------------------
# Parameters + plain-JAX reference (mirrors the kernel's bf16 cast points)
# ---------------------------------------------------------------------------
def init_image_encoder_params(key, in_ch=3, c1=16, c2=32, num_classes=8):
    k1, k2, k3, k4, k5, k6 = jax.random.split(key, 6)
    s1 = 1.0 / (9 * in_ch) ** 0.5
    s2 = 1.0 / (9 * c1) ** 0.5
    s3 = 1.0 / c2 ** 0.5
    return {
        "conv1_w": jax.random.normal(k1, (3, 3, in_ch, c1), jnp.float32) * s1,
        "conv1_b": jax.random.normal(k2, (c1,), jnp.float32) * s1,
        "conv2_w": jax.random.normal(k3, (3, 3, c1, c2), jnp.float32) * s2,
        "conv2_b": jax.random.normal(k4, (c2,), jnp.float32) * s2,
        "fc_w": jax.random.normal(k5, (c2, num_classes), jnp.float32) * s3,
        "fc_b": jax.random.normal(k6, (num_classes,), jnp.float32) * s3,
    }


def _reference_forward(params, x_nchw):
    f32 = jnp.float32
    q = lambda a: a.astype(jnp.bfloat16).astype(f32)     # match kernel casts
    dn = ("NHWC", "HWIO", "NHWC")
    x = jnp.transpose(x_nchw, (0, 2, 3, 1)).astype(f32)
    h = lax.conv_general_dilated(q(x), q(params["conv1_w"]), (1, 1),
                                 ((1, 1), (1, 1)), dimension_numbers=dn,
                                 precision=lax.Precision.HIGHEST)
    h = jnp.maximum(h + params["conv1_b"], 0.0)
    h = lax.conv_general_dilated(q(h), q(params["conv2_w"]), (1, 1),
                                 ((1, 1), (1, 1)), dimension_numbers=dn,
                                 precision=lax.Precision.HIGHEST)
    h = jnp.maximum(h + params["conv2_b"], 0.0)
    pooled = jnp.mean(h, axis=(1, 2))
    return pooled @ params["fc_w"] + params["fc_b"]


if __name__ == "__main__":
    key = jax.random.PRNGKey(0)
    pkey, xkey = jax.random.split(key)

    num_classes = 8
    params = init_image_encoder_params(pkey, in_ch=3, c1=16, c2=32,
                                       num_classes=num_classes)

    # PyTorch-style NCHW input: batch=2, channels=3, spatial=16x16
    x = jax.random.normal(xkey, (2, 3, 16, 16), jnp.float32)

    out = jax.block_until_ready(image_encoder_forward(params, x))
    assert out.shape == (2, num_classes), out.shape

    ref = jax.block_until_ready(_reference_forward(params, x))
    err = float(jnp.max(jnp.abs(out - ref)))
    assert err < 2e-2, f"kernel/reference mismatch: max abs err = {err}"

    print("KERNEL_OK")
</pallas_src>

<mosaic_0001>
module attributes {stable_mosaic.version = 11 : i64} {
  func.func @_encoder_kernel(%arg0: i32, %arg1: memref<1x328x3xf32, #tpu.memory_space<vmem>>, %arg2: memref<288x1xf32, #tpu.memory_space<vmem>>, %arg3: memref<1x288xf32, #tpu.memory_space<vmem>>, %arg4: memref<9x3x128xbf16, #tpu.memory_space<vmem>>, %arg5: memref<1x128xf32, #tpu.memory_space<vmem>>, %arg6: memref<9x128x128xbf16, #tpu.memory_space<vmem>>, %arg7: memref<1x128xf32, #tpu.memory_space<vmem>>, %arg8: memref<128x128xf32, #tpu.memory_space<vmem>>, %arg9: memref<1x128xf32, #tpu.memory_space<vmem>>, %arg10: memref<1x1x128xf32, #tpu.memory_space<vmem>>, %arg11: memref<336x128xf32, #tpu.memory_space<vmem>>) attributes {dimension_semantics = [#tpu.dimension_semantics<parallel>], iteration_bounds = array<i64: 2>, scalar_prefetch = 0 : i64, scratch_operands = 1 : i64, tpu.core_type = #tpu.core_type<tc>, window_params = [{transform_indices = @transform_0, window_bounds = array<i64: 1, 328, 3>}, {pipeline_mode = #tpu.pipeline_mode<synchronous>, transform_indices = @transform_1, window_bounds = array<i64: 288, 1>}, {pipeline_mode = #tpu.pipeline_mode<synchronous>, transform_indices = @transform_2, window_bounds = array<i64: 1, 288>}, {pipeline_mode = #tpu.pipeline_mode<synchronous>, transform_indices = @transform_3, window_bounds = array<i64: 9, 3, 128>}, {pipeline_mode = #tpu.pipeline_mode<synchronous>, transform_indices = @transform_4, window_bounds = array<i64: 1, 128>}, {pipeline_mode = #tpu.pipeline_mode<synchronous>, transform_indices = @transform_5, window_bounds = array<i64: 9, 128, 128>}, {pipeline_mode = #tpu.pipeline_mode<synchronous>, transform_indices = @transform_6, window_bounds = array<i64: 1, 128>}, {pipeline_mode = #tpu.pipeline_mode<synchronous>, transform_indices = @transform_7, window_bounds = array<i64: 128, 128>}, {pipeline_mode = #tpu.pipeline_mode<synchronous>, transform_indices = @transform_8, window_bounds = array<i64: 1, 128>}, {transform_indices = @transform_9, window_bounds = array<i64: 1, 1, 128>}]} {
    %cst = arith.constant 0.000000e+00 : f32
    %0 = vector.broadcast %cst : f32 to vector<288x128xf32>
    %c0 = arith.constant 0 : index
    %c0_0 = arith.constant 0 : index
    %c0_1 = arith.constant 0 : index
    %1 = vector.load %arg1[%c0, %c0_0, %c0_1] : memref<1x328x3xf32, #tpu.memory_space<vmem>>, vector<1x288x3xf32>
    %2 = vector.shape_cast %1 : vector<1x288x3xf32> to vector<288x3xf32>
    %3 = arith.truncf %2 : vector<288x3xf32> to vector<288x3xbf16>
    %c0_2 = arith.constant 0 : index
    %c0_3 = arith.constant 0 : index
    %c0_4 = arith.constant 0 : index
    %4 = vector.load %arg4[%c0_2, %c0_3, %c0_4] : memref<9x3x128xbf16, #tpu.memory_space<vmem>>, vector<1x3x128xbf16>
    %5 = vector.shape_cast %4 : vector<1x3x128xbf16> to vector<3x128xbf16>
    %cst_5 = arith.constant dense<0.000000e+00> : vector<288x128xf32>
    %6 = tpu.matmul %3, %5, %cst_5 {dimension_numbers = #tpu.dot_dimension_numbers<[1], [0], [0], [1], [0, 0, 1, 1], [], []>} : vector<288x3xbf16>, vector<3x128xbf16>, vector<288x128xf32> -> vector<288x128xf32>
    %7 = arith.addf %0, %6 : vector<288x128xf32>
    %c0_6 = arith.constant 0 : index
    %c1 = arith.constant 1 : index
    %c0_7 = arith.constant 0 : index
    %8 = vector.load %arg1[%c0_6, %c1, %c0_7] : memref<1x328x3xf32, #tpu.memory_space<vmem>>, vector<1x288x3xf32>
    %9 = vector.shape_cast %8 : vector<1x288x3xf32> to vector<288x3xf32>
    %10 = arith.truncf %9 : vector<288x3xf32> to vector<288x3xbf16>
    %c1_8 = arith.constant 1 : index
    %c0_9 = arith.constant 0 : index
    %c0_10 = arith.constant 0 : index
    %11 = vector.load %arg4[%c1_8, %c0_9, %c0_10] : memref<9x3x128xbf16, #tpu.memory_space<vmem>>, vector<1x3x128xbf16>
    %12 = vector.shape_cast %11 : vector<1x3x128xbf16> to vector<3x128xbf16>
    %cst_11 = arith.constant dense<0.000000e+00> : vector<288x128xf32>
    %13 = tpu.matmul %10, %12, %cst_11 {dimension_numbers = #tpu.dot_dimension_numbers<[1], [0], [0], [1], [0, 0, 1, 1], [], []>} : vector<288x3xbf16>, vector<3x128xbf16>, vector<288x128xf32> -> vector<288x128xf32>
    %14 = arith.addf %7, %13 : vector<288x128xf32>
    %c0_12 = arith.constant 0 : index
    %c2 = arith.constant 2 : index
    %c0_13 = arith.constant 0 : index
    %15 = vector.load %arg1[%c0_12, %c2, %c0_13] : memref<1x328x3xf32, #tpu.memory_space<vmem>>, vector<1x288x3xf32>
    %16 = vector.shape_cast %15 : vector<1x288x3xf32> to vector<288x3xf32>
    %17 = arith.truncf %16 : vector<288x3xf32> to vector<288x3xbf16>
    %c2_14 = arith.constant 2 : index
    %c0_15 = arith.constant 0 : index
    %c0_16 = arith.constant 0 : index
    %18 = vector.load %arg4[%c2_14, %c0_15, %c0_16] : memref<9x3x128xbf16, #tpu.memory_space<vmem>>, vector<1x3x128xbf16>
    %19 = vector.shape_cast %18 : vector<1x3x128xbf16> to vector<3x128xbf16>
    %cst_17 = arith.constant dense<0.000000e+00> : vector<288x128xf32>
    %20 = tpu.matmul %17, %19, %cst_17 {dimension_numbers = #tpu.dot_dimension_numbers<[1], [0], [0], [1], [0, 0, 1, 1], [], []>} : vector<288x3xbf16>, vector<3x128xbf16>, vector<288x128xf32> -> vector<288x128xf32>
    %21 = arith.addf %14, %20 : vector<288x128xf32>
    %c0_18 = arith.constant 0 : index
    %c18 = arith.constant 18 : index
    %c0_19 = arith.constant 0 : index
    %22 = vector.load %arg1[%c0_18, %c18, %c0_19] : memref<1x328x3xf32, #tpu.memory_space<vmem>>, vector<1x288x3xf32>
    %23 = vector.shape_cast %22 : vector<1x288x3xf32> to vector<288x3xf32>
    %24 = arith.truncf %23 : vector<288x3xf32> to vector<288x3xbf16>
    %c3 = arith.constant 3 : index
    %c0_20 = arith.constant 0 : index
    %c0_21 = arith.constant 0 : index
    %25 = vector.load %arg4[%c3, %c0_20, %c0_21] : memref<9x3x128xbf16, #tpu.memory_space<vmem>>, vector<1x3x128xbf16>
    %26 = vector.shape_cast %25 : vector<1x3x128xbf16> to vector<3x128xbf16>
    %cst_22 = arith.constant dense<0.000000e+00> : vector<288x128xf32>
    %27 = tpu.matmul %24, %26, %cst_22 {dimension_numbers = #tpu.dot_dimension_numbers<[1], [0], [0], [1], [0, 0, 1, 1], [], []>} : vector<288x3xbf16>, vector<3x128xbf16>, vector<288x128xf32> -> vector<288x128xf32>
    %28 = arith.addf %21, %27 : vector<288x128xf32>
    %c0_23 = arith.constant 0 : index
    %c19 = arith.constant 19 : index
    %c0_24 = arith.constant 0 : index
    %29 = vector.load %arg1[%c0_23, %c19, %c0_24] : memref<1x328x3xf32, #tpu.memory_space<vmem>>, vector<1x288x3xf32>
    %30 = vector.shape_cast %29 : vector<1x288x3xf32> to vector<288x3xf32>
    %31 = arith.truncf %30 : vector<288x3xf32> to vector<288x3xbf16>
    %c4 = arith.constant 4 : index
    %c0_25 = arith.constant 0 : index
    %c0_26 = arith.constant 0 : index
    %32 = vector.load %arg4[%c4, %c0_25, %c0_26] : memref<9x3x128xbf16, #tpu.memory_space<vmem>>, vector<1x3x128xbf16>
    %33 = vector.shape_cast %32 : vector<1x3x128xbf16> to vector<3x128xbf16>
    %cst_27 = arith.constant dense<0.000000e+00> : vector<288x128xf32>
    %34 = tpu.matmul %31, %33, %cst_27 {dimension_numbers = #tpu.dot_dimension_numbers<[1], [0], [0], [1], [0, 0, 1, 1], [], []>} : vector<288x3xbf16>, vector<3x128xbf16>, vector<288x128xf32> -> vector<288x128xf32>
    %35 = arith.addf %28, %34 : vector<288x128xf32>
    %c0_28 = arith.constant 0 : index
    %c20 = arith.constant 20 : index
    %c0_29 = arith.constant 0 : index
    %36 = vector.load %arg1[%c0_28, %c20, %c0_29] : memref<1x328x3xf32, #tpu.memory_space<vmem>>, vector<1x288x3xf32>
    %37 = vector.shape_cast %36 : vector<1x288x3xf32> to vector<288x3xf32>
    %38 = arith.truncf %37 : vector<288x3xf32> to vector<288x3xbf16>
    %c5 = arith.constant 5 : index
    %c0_30 = arith.constant 0 : index
    %c0_31 = arith.constant 0 : index
    %39 = vector.load %arg4[%c5, %c0_30, %c0_31] : memref<9x3x128xbf16, #tpu.memory_space<vmem>>, vector<1x3x128xbf16>
    %40 = vector.shape_cast %39 : vector<1x3x128xbf16> to vector<3x128xbf16>
    %cst_32 = arith.constant dense<0.000000e+00> : vector<288x128xf32>
    %41 = tpu.matmul %38, %40, %cst_32 {dimension_numbers = #tpu.dot_dimension_numbers<[1], [0], [0], [1], [0, 0, 1, 1], [], []>} : vector<288x3xbf16>, vector<3x128xbf16>, vector<288x128xf32> -> vector<288x128xf32>
    %42 = arith.addf %35, %41 : vector<288x128xf32>
    %c0_33 = arith.constant 0 : index
    %c36 = arith.constant 36 : index
    %c0_34 = arith.constant 0 : index
    %43 = vector.load %arg1[%c0_33, %c36, %c0_34] : memref<1x328x3xf32, #tpu.memory_space<vmem>>, vector<1x288x3xf32>
    %44 = vector.shape_cast %43 : vector<1x288x3xf32> to vector<288x3xf32>
    %45 = arith.truncf %44 : vector<288x3xf32> to vector<288x3xbf16>
    %c6 = arith.constant 6 : index
    %c0_35 = arith.constant 0 : index
    %c0_36 = arith.constant 0 : index
    %46 = vector.load %arg4[%c6, %c0_35, %c0_36] : memref<9x3x128xbf16, #tpu.memory_space<vmem>>, vector<1x3x128xbf16>
    %47 = vector.shape_cast %46 : vector<1x3x128xbf16> to vector<3x128xbf16>
    %cst_37 = arith.constant dense<0.000000e+00> : vector<288x128xf32>
    %48 = tpu.matmul %45, %47, %cst_37 {dimension_numbers = #tpu.dot_dimension_numbers<[1], [0], [0], [1], [0, 0, 1, 1], [], []>} : vector<288x3xbf16>, vector<3x128xbf16>, vector<288x128xf32> -> vector<288x128xf32>
    %49 = arith.addf %42, %48 : vector<288x128xf32>
    %c0_38 = arith.constant 0 : index
    %c37 = arith.constant 37 : index
    %c0_39 = arith.constant 0 : index
    %50 = vector.load %arg1[%c0_38, %c37, %c0_39] : memref<1x328x3xf32, #tpu.memory_space<vmem>>, vector<1x288x3xf32>
    %51 = vector.shape_cast %50 : vector<1x288x3xf32> to vector<288x3xf32>
    %52 = arith.truncf %51 : vector<288x3xf32> to vector<288x3xbf16>
    %c7 = arith.constant 7 : index
    %c0_40 = arith.constant 0 : index
    %c0_41 = arith.constant 0 : index
    %53 = vector.load %arg4[%c7, %c0_40, %c0_41] : memref<9x3x128xbf16, #tpu.memory_space<vmem>>, vector<1x3x128xbf16>
    %54 = vector.shape_cast %53 : vector<1x3x128xbf16> to vector<3x128xbf16>
    %cst_42 = arith.constant dense<0.000000e+00> : vector<288x128xf32>
    %55 = tpu.matmul %52, %54, %cst_42 {dimension_numbers = #tpu.dot_dimension_numbers<[1], [0], [0], [1], [0, 0, 1, 1], [], []>} : vector<288x3xbf16>, vector<3x128xbf16>, vector<288x128xf32> -> vector<288x128xf32>
    %56 = arith.addf %49, %55 : vector<288x128xf32>
    %c0_43 = arith.constant 0 : index
    %c38 = arith.constant 38 : index
    %c0_44 = arith.constant 0 : index
    %57 = vector.load %arg1[%c0_43, %c38, %c0_44] : memref<1x328x3xf32, #tpu.memory_space<vmem>>, vector<1x288x3xf32>
    %58 = vector.shape_cast %57 : vector<1x288x3xf32> to vector<288x3xf32>
    %59 = arith.truncf %58 : vector<288x3xf32> to vector<288x3xbf16>
    %c8 = arith.constant 8 : index
    %c0_45 = arith.constant 0 : index
    %c0_46 = arith.constant 0 : index
    %60 = vector.load %arg4[%c8, %c0_45, %c0_46] : memref<9x3x128xbf16, #tpu.memory_space<vmem>>, vector<1x3x128xbf16>
    %61 = vector.shape_cast %60 : vector<1x3x128xbf16> to vector<3x128xbf16>
    %cst_47 = arith.constant dense<0.000000e+00> : vector<288x128xf32>
    %62 = tpu.matmul %59, %61, %cst_47 {dimension_numbers = #tpu.dot_dimension_numbers<[1], [0], [0], [1], [0, 0, 1, 1], [], []>} : vector<288x3xbf16>, vector<3x128xbf16>, vector<288x128xf32> -> vector<288x128xf32>
    %63 = arith.addf %56, %62 : vector<288x128xf32>
    %c0_48 = arith.constant 0 : index
    %c0_49 = arith.constant 0 : index
    %64 = vector.load %arg5[%c0_48, %c0_49] : memref<1x128xf32, #tpu.memory_space<vmem>>, vector<1x128xf32>
    %65 = vector.broadcast %64 : vector<1x128xf32> to vector<288x128xf32>
    %66 = arith.addf %63, %65 : vector<288x128xf32>
    %cst_50 = arith.constant 0.000000e+00 : f32
    %67 = vector.broadcast %cst_50 : f32 to vector<288x128xf32>
    %68 = arith.maximumf %66, %67 : vector<288x128xf32>
    %c0_51 = arith.constant 0 : index
    %c0_52 = arith.constant 0 : index
    %69 = vector.load %arg2[%c0_51, %c0_52] : memref<288x1xf32, #tpu.memory_space<vmem>>, vector<288x1xf32>
    %70 = vector.broadcast %69 : vector<288x1xf32> to vector<288x128xf32>
    %71 = arith.mulf %68, %70 : vector<288x128xf32>
    %cst_53 = arith.constant 0.000000e+00 : f32
    %72 = vector.broadcast %cst_53 : f32 to vector<336x128xf32>
    %c0_54 = arith.constant 0 : index
    %c0_55 = arith.constant 0 : index
    %73 = vector.load %arg11[%c0_54, %c0_55] : memref<336x128xf32, #tpu.memory_space<vmem>>, vector<336x128xf32>
    tpu.vector_store %arg11[%c0_54, %c0_55], %72 {strides = array<i32>} : memref<336x128xf32, #tpu.memory_space<vmem>>, vector<336x128xf32>,
    %c24 = arith.constant 24 : index
    %c0_56 = arith.constant 0 : index
    %74 = vector.load %arg11[%c24, %c0_56] : memref<336x128xf32, #tpu.memory_space<vmem>>, vector<288x128xf32>
    tpu.vector_store %arg11[%c24, %c0_56], %71 {strides = array<i32>} : memref<336x128xf32, #tpu.memory_space<vmem>>, vector<288x128xf32>,
    %cst_57 = arith.constant 0.000000e+00 : f32
    %75 = vector.broadcast %cst_57 : f32 to vector<288x128xf32>
    %c5_58 = arith.constant 5 : index
    %c0_59 = arith.constant 0 : index
    %76 = vector.load %arg11[%c5_58, %c0_59] : memref<336x128xf32, #tpu.memory_space<vmem>>, vector<288x128xf32>
    %77 = arith.truncf %76 : vector<288x128xf32> to vector<288x128xbf16>
    %c0_60 = arith.constant 0 : index
    %c0_61 = arith.constant 0 : index
    %c0_62 = arith.constant 0 : index
    %78 = vector.load %arg6[%c0_60, %c0_61, %c0_62] : memref<9x128x128xbf16, #tpu.memory_space<vmem>>, vector<1x128x128xbf16>
    %79 = vector.shape_cast %78 : vector<1x128x128xbf16> to vector<128x128xbf16>
    %cst_63 = arith.constant dense<0.000000e+00> : vector<288x128xf32>
    %80 = tpu.matmul %77, %79, %cst_63 {dimension_numbers = #tpu.dot_dimension_numbers<[1], [0], [0], [1], [0, 0, 1, 1], [], []>} : vector<288x128xbf16>, vector<128x128xbf16>, vector<288x128xf32> -> vector<288x128xf32>
    %81 = arith.addf %75, %80 : vector<288x128xf32>
    %c6_64 = arith.constant 6 : index
    %c0_65 = arith.constant 0 : index
    %82 = vector.load %arg11[%c6_64, %c0_65] : memref<336x128xf32, #tpu.memory_space<vmem>>, vector<288x128xf32>
    %83 = arith.truncf %82 : vector<288x128xf32> to vector<288x128xbf16>
    %c1_66 = arith.constant 1 : index
    %c0_67 = arith.constant 0 : index
    %c0_68 = arith.constant 0 : index
    %84 = vector.load %arg6[%c1_66, %c0_67, %c0_68] : memref<9x128x128xbf16, #tpu.memory_space<vmem>>, vector<1x128x128xbf16>
    %85 = vector.shape_cast %84 : vector<1x128x128xbf16> to vector<128x128xbf16>
    %cst_69 = arith.constant dense<0.000000e+00> : vector<288x128xf32>
    %86 = tpu.matmul %83, %85, %cst_69 {dimension_numbers = #tpu.dot_dimension_numbers<[1], [0], [0], [1], [0, 0, 1, 1], [], []>} : vector<288x128xbf16>, vector<128x128xbf16>, vector<288x128xf32> -> vector<288x128xf32>
    %87 = arith.addf %81, %86 : vector<288x128xf32>
    %c7_70 = arith.constant 7 : index
    %c0_71 = arith.constant 0 : index
    %88 = vector.load %arg11[%c7_70, %c0_71] : memref<336x128xf32, #tpu.memory_space<vmem>>, vector<288x128xf32>
    %89 = arith.truncf %88 : vector<288x128xf32> to vector<288x128xbf16>
    %c2_72 = arith.constant 2 : index
    %c0_73 = arith.constant 0 : index
    %c0_74 = arith.constant 0 : index
    %90 = vector.load %arg6[%c2_72, %c0_73, %c0_74] : memref<9x128x128xbf16, #tpu.memory_space<vmem>>, vector<1x128x128xbf16>
    %91 = vector.shape_cast %90 : vector<1x128x128xbf16> to vector<128x128xbf16>
    %cst_75 = arith.constant dense<0.000000e+00> : vector<288x128xf32>
    %92 = tpu.matmul %89, %91, %cst_75 {dimension_numbers = #tpu.dot_dimension_numbers<[1], [0], [0], [1], [0, 0, 1, 1], [], []>} : vector<288x128xbf16>, vector<128x128xbf16>, vector<288x128xf32> -> vector<288x128xf32>
    %93 = arith.addf %87, %92 : vector<288x128xf32>
    %c23 = arith.constant 23 : index
    %c0_76 = arith.constant 0 : index
    %94 = vector.load %arg11[%c23, %c0_76] : memref<336x128xf32, #tpu.memory_space<vmem>>, vector<288x128xf32>
    %95 = arith.truncf %94 : vector<288x128xf32> to vector<288x128xbf16>
    %c3_77 = arith.constant 3 : index
    %c0_78 = arith.constant 0 : index
    %c0_79 = arith.constant 0 : index
    %96 = vector.load %arg6[%c3_77, %c0_78, %c0_79] : memref<9x128x128xbf16, #tpu.memory_space<vmem>>, vector<1x128x128xbf16>
    %97 = vector.shape_cast %96 : vector<1x128x128xbf16> to vector<128x128xbf16>
    %cst_80 = arith.constant dense<0.000000e+00> : vector<288x128xf32>
    %98 = tpu.matmul %95, %97, %cst_80 {dimension_numbers = #tpu.dot_dimension_numbers<[1], [0], [0], [1], [0, 0, 1, 1], [], []>} : vector<288x128xbf16>, vector<128x128xbf16>, vector<288x128xf32> -> vector<288x128xf32>
    %99 = arith.addf %93, %98 : vector<288x128xf32>
    %c24_81 = arith.constant 24 : index
    %c0_82 = arith.constant 0 : index
    %100 = vector.load %arg11[%c24_81, %c0_82] : memref<336x128xf32, #tpu.memory_space<vmem>>, vector<288x128xf32>
    %101 = arith.truncf %100 : vector<288x128xf32> to vector<288x128xbf16>
    %c4_83 = arith.constant 4 : index
    %c0_84 = arith.constant 0 : index
    %c0_85 = arith.constant 0 : index
    %102 = vector.load %arg6[%c4_83, %c0_84, %c0_85] : memref<9x128x128xbf16, #tpu.memory_space<vmem>>, vector<1x128x128xbf16>
    %103 = vector.shape_cast %102 : vector<1x128x128xbf16> to vector<128x128xbf16>
    %cst_86 = arith.constant dense<0.000000e+00> : vector<288x128xf32>
    %104 = tpu.matmul %101, %103, %cst_86 {dimension_numbers = #tpu.dot_dimension_numbers<[1], [0], [0], [1], [0, 0, 1, 1], [], []>} : vector<288x128xbf16>, vector<128x128xbf16>, vector<288x128xf32> -> vector<288x128xf32>
    %105 = arith.addf %99, %104 : vector<288x128xf32>
    %c25 = arith.constant 25 : index
    %c0_87 = arith.constant 0 : index
    %106 = vector.load %arg11[%c25, %c0_87] : memref<336x128xf32, #tpu.memory_space<vmem>>, vector<288x128xf32>
    %107 = arith.truncf %106 : vector<288x128xf32> to vector<288x128xbf16>
    %c5_88 = arith.constant 5 : index
    %c0_89 = arith.constant 0 : index
    %c0_90 = arith.constant 0 : index
    %108 = vector.load %arg6[%c5_88, %c0_89, %c0_90] : memref<9x128x128xbf16, #tpu.memory_space<vmem>>, vector<1x128x128xbf16>
    %109 = vector.shape_cast %108 : vector<1x128x128xbf16> to vector<128x128xbf16>
    %cst_91 = arith.constant dense<0.000000e+00> : vector<288x128xf32>
    %110 = tpu.matmul %107, %109, %cst_91 {dimension_numbers = #tpu.dot_dimension_numbers<[1], [0], [0], [1], [0, 0, 1, 1], [], []>} : vector<288x128xbf16>, vector<128x128xbf16>, vector<288x128xf32> -> vector<288x128xf32>
    %111 = arith.addf %105, %110 : vector<288x128xf32>
    %c41 = arith.constant 41 : index
    %c0_92 = arith.constant 0 : index
    %112 = vector.load %arg11[%c41, %c0_92] : memref<336x128xf32, #tpu.memory_space<vmem>>, vector<288x128xf32>
    %113 = arith.truncf %112 : vector<288x128xf32> to vector<288x128xbf16>
    %c6_93 = arith.constant 6 : index
    %c0_94 = arith.constant 0 : index
    %c0_95 = arith.constant 0 : index
    %114 = vector.load %arg6[%c6_93, %c0_94, %c0_95] : memref<9x128x128xbf16, #tpu.memory_space<vmem>>, vector<1x128x128xbf16>
    %115 = vector.shape_cast %114 : vector<1x128x128xbf16> to vector<128x128xbf16>
    %cst_96 = arith.constant dense<0.000000e+00> : vector<288x128xf32>
    %116 = tpu.matmul %113, %115, %cst_96 {dimension_numbers = #tpu.dot_dimension_numbers<[1], [0], [0], [1], [0, 0, 1, 1], [], []>} : vector<288x128xbf16>, vector<128x128xbf16>, vector<288x128xf32> -> vector<288x128xf32>
    %117 = arith.addf %111, %116 : vector<288x128xf32>
    %c42 = arith.constant 42 : index
    %c0_97 = arith.constant 0 : index
    %118 = vector.load %arg11[%c42, %c0_97] : memref<336x128xf32, #tpu.memory_space<vmem>>, vector<288x128xf32>
    %119 = arith.truncf %118 : vector<288x128xf32> to vector<288x128xbf16>
    %c7_98 = arith.constant 7 : index
    %c0_99 = arith.constant 0 : index
    %c0_100 = arith.constant 0 : index
    %120 = vector.load %arg6[%c7_98, %c0_99, %c0_100] : memref<9x128x128xbf16, #tpu.memory_space<vmem>>, vector<1x128x128xbf16>
    %121 = vector.shape_cast %120 : vector<1x128x128xbf16> to vector<128x128xbf16>
    %cst_101 = arith.constant dense<0.000000e+00> : vector<288x128xf32>
    %122 = tpu.matmul %119, %121, %cst_101 {dimension_numbers = #tpu.dot_dimension_numbers<[1], [0], [0], [1], [0, 0, 1, 1], [], []>} : vector<288x128xbf16>, vector<128x128xbf16>, vector<288x128xf32> -> vector<288x128xf32>
    %123 = arith.addf %117, %122 : vector<288x128xf32>
    %c43 = arith.constant 43 : index
    %c0_102 = arith.constant 0 : index
    %124 = vector.load %arg11[%c43, %c0_102] : memref<336x128xf32, #tpu.memory_space<vmem>>, vector<288x128xf32>
    %125 = arith.truncf %124 : vector<288x128xf32> to vector<288x128xbf16>
    %c8_103 = arith.constant 8 : index
    %c0_104 = arith.constant 0 : index
    %c0_105 = arith.constant 0 : index
    %126 = vector.load %arg6[%c8_103, %c0_104, %c0_105] : memref<9x128x128xbf16, #tpu.memory_space<vmem>>, vector<1x128x128xbf16>
    %127 = vector.shape_cast %126 : vector<1x128x128xbf16> to vector<128x128xbf16>
    %cst_106 = arith.constant dense<0.000000e+00> : vector<288x128xf32>
    %128 = tpu.matmul %125, %127, %cst_106 {dimension_numbers = #tpu.dot_dimension_numbers<[1], [0], [0], [1], [0, 0, 1, 1], [], []>} : vector<288x128xbf16>, vector<128x128xbf16>, vector<288x128xf32> -> vector<288x128xf32>
    %129 = arith.addf %123, %128 : vector<288x128xf32>
    %c0_107 = arith.constant 0 : index
    %c0_108 = arith.constant 0 : index
    %130 = vector.load %arg7[%c0_107, %c0_108] : memref<1x128xf32, #tpu.memory_space<vmem>>, vector<1x128xf32>
    %131 = vector.broadcast %130 : vector<1x128xf32> to vector<288x128xf32>
    %132 = arith.addf %129, %131 : vector<288x128xf32>
    %cst_109 = arith.constant 0.000000e+00 : f32
    %133 = vector.broadcast %cst_109 : f32 to vector<288x128xf32>
    %134 = arith.maximumf %132, %133 : vector<288x128xf32>
    %c0_110 = arith.constant 0 : index
    %c0_111 = arith.constant 0 : index
    %135 = vector.load %arg3[%c0_110, %c0_111] : memref<1x288xf32, #tpu.memory_space<vmem>>, vector<1x288xf32>
    %cst_112 = arith.constant dense<0.000000e+00> : vector<1x128xf32>
    %136 = tpu.matmul %135, %134, %cst_112 {dimension_numbers = #tpu.dot_dimension_numbers<[1], [0], [0], [1], [0, 0, 1, 1], [], []>} : vector<1x288xf32>, vector<288x128xf32>, vector<1x128xf32> -> vector<1x128xf32>
    %c0_113 = arith.constant 0 : index
    %c0_114 = arith.constant 0 : index
    %137 = vector.load %arg8[%c0_113, %c0_114] : memref<128x128xf32, #tpu.memory_space<vmem>>, vector<128x128xf32>
    %cst_115 = arith.constant dense<0.000000e+00> : vector<1x128xf32>
    %138 = tpu.matmul %136, %137, %cst_115 {dimension_numbers = #tpu.dot_dimension_numbers<[1], [0], [0], [1], [0, 0, 1, 1], [], []>} : vector<1x128xf32>, vector<128x128xf32>, vector<1x128xf32> -> vector<1x128xf32>
    %c0_116 = arith.constant 0 : index
    %c0_117 = arith.constant 0 : index
    %139 = vector.load %arg9[%c0_116, %c0_117] : memref<1x128xf32, #tpu.memory_space<vmem>>, vector<1x128xf32>
    %140 = arith.addf %138, %139 : vector<1x128xf32>
    %c0_118 = arith.constant 0 : index
    %c0_119 = arith.constant 0 : index
    %c0_120 = arith.constant 0 : index
    %141 = vector.load %arg10[%c0_118, %c0_119, %c0_120] : memref<1x1x128xf32, #tpu.memory_space<vmem>>, vector<1x1x128xf32>
    %142 = vector.shape_cast %141 : vector<1x1x128xf32> to vector<1x128xf32>
    %143 = vector.shape_cast %140 : vector<1x128xf32> to vector<1x1x128xf32>
    tpu.vector_store %arg10[%c0_118, %c0_119, %c0_120], %143 {strides = array<i32>} : memref<1x1x128xf32, #tpu.memory_space<vmem>>, vector<1x1x128xf32>,
    return
  }
  func.func @transform_0(%arg0: i32) -> (i32, i32, i32) {
    %c0_i32 = arith.constant 0 : i32
    %c0_i32_0 = arith.constant 0 : i32
    %c0_i32_1 = arith.constant 0 : i32
    return %arg0, %c0_i32, %c0_i32_0 : i32, i32, i32
  }
  func.func @transform_1(%arg0: i32) -> (i32, i32) {
    %c0_i32 = arith.constant 0 : i32
    %c0_i32_0 = arith.constant 0 : i32
    %c0_i32_1 = arith.constant 0 : i32
    return %c0_i32, %c0_i32_0 : i32, i32
  }
  func.func @transform_2(%arg0: i32) -> (i32, i32) {
    %c0_i32 = arith.constant 0 : i32
    %c0_i32_0 = arith.constant 0 : i32
    %c0_i32_1 = arith.constant 0 : i32
    return %c0_i32, %c0_i32_0 : i32, i32
  }
  func.func @transform_3(%arg0: i32) -> (i32, i32, i32) {
    %c0_i32 = arith.constant 0 : i32
    %c0_i32_0 = arith.constant 0 : i32
    %c0_i32_1 = arith.constant 0 : i32
    %c0_i32_2 = arith.constant 0 : i32
    return %c0_i32, %c0_i32_0, %c0_i32_1 : i32, i32, i32
  }
  func.func @transform_4(%arg0: i32) -> (i32, i32) {
    %c0_i32 = arith.constant 0 : i32
    %c0_i32_0 = arith.constant 0 : i32
    %c0_i32_1 = arith.constant 0 : i32
    return %c0_i32, %c0_i32_0 : i32, i32
  }
  func.func @transform_5(%arg0: i32) -> (i32, i32, i32) {
    %c0_i32 = arith.constant 0 : i32
    %c0_i32_0 = arith.constant 0 : i32
    %c0_i32_1 = arith.constant 0 : i32
    %c0_i32_2 = arith.constant 0 : i32
    return %c0_i32, %c0_i32_0, %c0_i32_1 : i32, i32, i32
  }
  func.func @transform_6(%arg0: i32) -> (i32, i32) {
    %c0_i32 = arith.constant 0 : i32
    %c0_i32_0 = arith.constant 0 : i32
    %c0_i32_1 = arith.constant 0 : i32
    return %c0_i32, %c0_i32_0 : i32, i32
  }
  func.func @transform_7(%arg0: i32) -> (i32, i32) {
    %c0_i32 = arith.constant 0 : i32
    %c0_i32_0 = arith.constant 0 : i32
    %c0_i32_1 = arith.constant 0 : i32
    return %c0_i32, %c0_i32_0 : i32, i32
  }
  func.func @transform_8(%arg0: i32) -> (i32, i32) {
    %c0_i32 = arith.constant 0 : i32
    %c0_i32_0 = arith.constant 0 : i32
    %c0_i32_1 = arith.constant 0 : i32
    return %c0_i32, %c0_i32_0 : i32, i32
  }
  func.func @transform_9(%arg0: i32) -> (i32, i32, i32) {
    %c0_i32 = arith.constant 0 : i32
    %c0_i32_0 = arith.constant 0 : i32
    %c0_i32_1 = arith.constant 0 : i32
    return %arg0, %c0_i32, %c0_i32_0 : i32, i32, i32
  }
}

</mosaic_0001>

<llo_original>
// kernel: image_encoder_forward.1
$region0: #{image_encoder_forward.1}
  #allocation0 [shape = 'u32[]', space=smem, size = 0x4, offset = 0x4, fixed_abs, tag = 'smem constant byte address 0x4 - core index']
  #allocation1 [shape = 'u32[144,128]{1,0:T(1,128)}', space=vmem, size = 0x12000, scoped, tag = 'internal scratch']
  #allocation2 [shape = 'f32[336,128]{1,0:T(8,128)}', space=vmem, size = 0x2a000, scoped, tag = 'scratch operand']
  %s0 = inlined_call_operand.vmem [shape: f32[2,328,3], index: 0, kind: input, shape index: {}]
  %s1 = inlined_call_operand.vmem [shape: f32[288,1], index: 1, kind: input, shape index: {}]
  %s2 = inlined_call_operand.vmem [shape: f32[1,288], index: 2, kind: input, shape index: {}]
  %s3 = inlined_call_operand.vmem [shape: bf16[9,3,128], index: 3, kind: input, shape index: {}]
  %s4 = inlined_call_operand.vmem [shape: f32[1,128], index: 4, kind: input, shape index: {}]
  %s5 = inlined_call_operand.vmem [shape: bf16[9,128,128], index: 5, kind: input, shape index: {}]
  %s6 = inlined_call_operand.vmem [shape: f32[1,128], index: 6, kind: input, shape index: {}]
  %s7 = inlined_call_operand.vmem [shape: f32[128,128], index: 7, kind: input, shape index: {}]
  %s8 = inlined_call_operand.vmem [shape: f32[1,128], index: 8, kind: input, shape index: {}]
  %s9 = inlined_call_operand.hbm [shape: f32[2,1,128], index: 9, kind: output, shape index: {}]
  %s10 = sld [smem:[#allocation0]]
  $region69: #{image_encoder_forward.1} parent=0
    _
  %s12 = ssub.s32 1, %s10
  %s13 = scalar_select 0, %s12, %s10
  $region1: #{image_encoder_forward.1} parent=0
    #allocation3 [shape = 'u8[1024]{0}', space=vmem, size = 0x400, scoped, tag = 'output window, operand 0']
    #allocation4 [shape = 's32[2]{0}', space=sflag, size = 0x8, scoped, tag = 'scoped memory for image_encoder_forward.1']
    %14 = vsyncpa [#allocation4], 0
    %s15 = scalar_lea.sflag [#allocation4], 1
    %16 = vsyncpa %s15, 0
    loop: start=0, step=1, limit=4
    $region2: #{image_encoder_forward.1} parent=1 // loop_pre_header
      _
    $region3: #{image_encoder_forward.1} parent=1 // loop_header
      %s18 = sphi 0, %s22
      %p19 = scmp.ge.s32.totalorder %s18, 4
      %s28 = sphi 0, %s30
      %s31 = sphi 0, %s28
      %s32 = sphi 0, %s31
      %s48 = sphi 0, %s32
      %s52 = sphi 0, %s52
      %s54 = sphi 0, %s52
      %s55 = sphi 0, %s54
      %s69 = sphi 0, %s55
      %s73 = sphi 0, %s73
      %s75 = sphi 0, %s73
      %s76 = sphi 0, %s75
      %s90 = sphi 0, %s76
      %s94 = sphi 0, %s94
      %s96 = sphi 0, %s94
      %s97 = sphi 0, %s96
      %s111 = sphi 0, %s97
      %s115 = sphi 0, %s115
      %s117 = sphi 0, %s115
      %s118 = sphi 0, %s117
      %s132 = sphi 0, %s118
      %s136 = sphi 0, %s136
      %s138 = sphi 0, %s136
      %s139 = sphi 0, %s138
      %s153 = sphi 0, %s139
      %s157 = sphi 0, %s157
      %s159 = sphi 0, %s157
      %s160 = sphi 0, %s159
      %s174 = sphi 0, %s160
      %s178 = sphi 0, %s178
      %s180 = sphi 0, %s178
      %s181 = sphi 0, %s180
      %s195 = sphi 0, %s181
      %s199 = sphi 0, %s199
      %s201 = sphi 0, %s199
      %s202 = sphi 0, %s201
      %s216 = sphi 0, %s202
      %s222 = sphi 0, %s224
      %s225 = sphi 0, %s222
      %s226 = sphi 0, %s225
      %s242 = sphi 0, %s226
    $region4: #{image_encoder_forward.1} parent=1 // loop_header_branch
      %21 = sbr.rel (%p19) target = $region8
    $region5: #{image_encoder_forward.1} parent=1 // loop_body
      %s23 = ssub.s32 %s18, 1
      %s24 = ssub.s32 %s18, 2
      %s25 = sadd.s32 %s18, 1
      %s26 = ssub.s32 %s18, %s25
      %p27 = scmp.eq.s32.totalorder %s26, 0
      %s29 = sadd.s32 %s28, 1
      %s30 = scalar_select %p27, %s28, %s29
      %p33 = pneg %p27
      %p34 = scmp.eq.s32.totalorder %s18, 1
      %p35 = por %p33, %p34
      %p36 = scmp.ne.s32.totalorder %s28, %s31
      %p37 = scmp.eq.s32.totalorder %s18, 0
      %p38 = por %p36, %p37
      %p39 = scmp.ne.s32.totalorder %s28, %s31
      %p40 = scmp.eq.s32.totalorder %s23, 1
      %p41 = por %p39, %p40
      %p42 = scmp.ne.s32.totalorder %s31, %s32
      %p43 = scmp.eq.s32.totalorder %s23, 0
      %p44 = por %p42, %p43
      %p45 = scmp.ne.s32.totalorder %s31, %s32
      %p46 = scmp.eq.s32.totalorder %s24, 1
      %p47 = por %p45, %p46
      %p49 = scmp.ne.s32.totalorder %s32, %s48
      %p50 = scmp.eq.s32.totalorder %s24, 0
      %p51 = por %p49, %p50
      %s53 = sadd.s32 %s52, 1
      %p56 = scmp.eq.s32.totalorder %s18, 1
      %p57 = scmp.ne.s32.totalorder %s52, %s54
      %p58 = scmp.eq.s32.totalorder %s18, 0
      %p59 = por %p57, %p58
      %p60 = scmp.ne.s32.totalorder %s52, %s54
      %p61 = scmp.eq.s32.totalorder %s23, 1
      %p62 = por %p60, %p61
      %p63 = scmp.ne.s32.totalorder %s54, %s55
      %p64 = scmp.eq.s32.totalorder %s23, 0
      %p65 = por %p63, %p64
      %p66 = scmp.ne.s32.totalorder %s54, %s55
      %p67 = scmp.eq.s32.totalorder %s24, 1
      %p68 = por %p66, %p67
      %p70 = scmp.ne.s32.totalorder %s55, %s69
      %p71 = scmp.eq.s32.totalorder %s24, 0
      %p72 = por %p70, %p71
      %s74 = sadd.s32 %s73, 1
      %p77 = scmp.eq.s32.totalorder %s18, 1
      %p78 = scmp.ne.s32.totalorder %s73, %s75
      %p79 = scmp.eq.s32.totalorder %s18, 0
      %p80 = por %p78, %p79
      %p81 = scmp.ne.s32.totalorder %s73, %s75
      %p82 = scmp.eq.s32.totalorder %s23, 1
      %p83 = por %p81, %p82
      %p84 = scmp.ne.s32.totalorder %s75, %s76
      %p85 = scmp.eq.s32.totalorder %s23, 0
      %p86 = por %p84, %p85
      %p87 = scmp.ne.s32.totalorder %s75, %s76
      %p88 = scmp.eq.s32.totalorder %s24, 1
      %p89 = por %p87, %p88
      %p91 = scmp.ne.s32.totalorder %s76, %s90
      %p92 = scmp.eq.s32.totalorder %s24, 0
      %p93 = por %p91, %p92
      %s95 = sadd.s32 %s94, 1
      %p98 = scmp.eq.s32.totalorder %s18, 1
      %p99 = scmp.ne.s32.totalorder %s94, %s96
      %p100 = scmp.eq.s32.totalorder %s18, 0
      %p101 = por %p99, %p100
      %p102 = scmp.ne.s32.totalorder %s94, %s96
      %p103 = scmp.eq.s32.totalorder %s23, 1
      %p104 = por %p102, %p103
      %p105 = scmp.ne.s32.totalorder %s96, %s97
      %p106 = scmp.eq.s32.totalorder %s23, 0
      %p107 = por %p105, %p106
      %p108 = scmp.ne.s32.totalorder %s96, %s97
      %p109 = scmp.eq.s32.totalorder %s24, 1
      %p110 = por %p108, %p109
      %p112 = scmp.ne.s32.totalorder %s97, %s111
      %p113 = scmp.eq.s32.totalorder %s24, 0
      %p114 = por %p112, %p113
      %s116 = sadd.s32 %s115, 1
      %p119 = scmp.eq.s32.totalorder %s18, 1
      %p120 = scmp.ne.s32.totalorder %s115, %s117
      %p121 = scmp.eq.s32.totalorder %s18, 0
      %p122 = por %p120, %p121
      %p123 = scmp.ne.s32.totalorder %s115, %s117
      %p124 = scmp.eq.s32.totalorder %s23, 1
      %p125 = por %p123, %p124
      %p126 = scmp.ne.s32.totalorder %s117, %s118
      %p127 = scmp.eq.s32.totalorder %s23, 0
      %p128 = por %p126, %p127
      %p129 = scmp.ne.s32.totalorder %s117, %s118
      %p130 = scmp.eq.s32.totalorder %s24, 1
      %p131 = por %p129, %p130
      %p133 = scmp.ne.s32.totalorder %s118, %s132
      %p134 = scmp.eq.s32.totalorder %s24, 0
      %p135 = por %p133, %p134
      %s137 = sadd.s32 %s136, 1
      %p140 = scmp.eq.s32.totalorder %s18, 1
      %p141 = scmp.ne.s32.totalorder %s136, %s138
      %p142 = scmp.eq.s32.totalorder %s18, 0
      %p143 = por %p141, %p142
      %p144 = scmp.ne.s32.totalorder %s136, %s138
      %p145 = scmp.eq.s32.totalorder %s23, 1
      %p146 = por %p144, %p145
      %p147 = scmp.ne.s32.totalorder %s138, %s139
      %p148 = scmp.eq.s32.totalorder %s23, 0
      %p149 = por %p147, %p148
      %p150 = scmp.ne.s32.totalorder %s138, %s139
      %p151 = scmp.eq.s32.totalorder %s24, 1
      %p152 = por %p150, %p151
      %p154 = scmp.ne.s32.totalorder %s139, %s153
      %p155 = scmp.eq.s32.totalorder %s24, 0
      %p156 = por %p154, %p155
      %s158 = sadd.s32 %s157, 1
      %p161 = scmp.eq.s32.totalorder %s18, 1
      %p162 = scmp.ne.s32.totalorder %s157, %s159
      %p163 = scmp.eq.s32.totalorder %s18, 0
      %p164 = por %p162, %p163
      %p165 = scmp.ne.s32.totalorder %s157, %s159
      %p166 = scmp.eq.s32.totalorder %s23, 1
      %p167 = por %p165, %p166
      %p168 = scmp.ne.s32.totalorder %s159, %s160
      %p169 = scmp.eq.s32.totalorder %s23, 0
      %p170 = por %p168, %p169
      %p171 = scmp.ne.s32.totalorder %s159, %s160
      %p172 = scmp.eq.s32.totalorder %s24, 1
      %p173 = por %p171, %p172
      %p175 = scmp.ne.s32.totalorder %s160, %s174
      %p176 = scmp.eq.s32.totalorder %s24, 0
      %p177 = por %p175, %p176
      %s179 = sadd.s32 %s178, 1
      %p182 = scmp.eq.s32.totalorder %s18, 1
      %p183 = scmp.ne.s32.totalorder %s178, %s180
      %p184 = scmp.eq.s32.totalorder %s18, 0
      %p185 = por %p183, %p184
      %p186 = scmp.ne.s32.totalorder %s178, %s180
      %p187 = scmp.eq.s32.totalorder %s23, 1
      %p188 = por %p186, %p187
      %p189 = scmp.ne.s32.totalorder %s180, %s181
      %p190 = scmp.eq.s32.totalorder %s23, 0
      %p191 = por %p189, %p190
      %p192 = scmp.ne.s32.totalorder %s180, %s181
      %p193 = scmp.eq.s32.totalorder %s24, 1
      %p194 = por %p192, %p193
      %p196 = scmp.ne.s32.totalorder %s181, %s195
      %p197 = scmp.eq.s32.totalorder %s24, 0
      %p198 = por %p196, %p197
      %s200 = sadd.s32 %s199, 1
      %p203 = scmp.eq.s32.totalorder %s18, 1
      %p204 = scmp.ne.s32.totalorder %s199, %s201
      %p205 = scmp.eq.s32.totalorder %s18, 0
      %p206 = por %p204, %p205
      %p207 = scmp.ne.s32.totalorder %s199, %s201
      %p208 = scmp.eq.s32.totalorder %s23, 1
      %p209 = por %p207, %p208
      %p210 = scmp.ne.s32.totalorder %s201, %s202
      %p211 = scmp.eq.s32.totalorder %s23, 0
      %p212 = por %p210, %p211
      %p213 = scmp.ne.s32.totalorder %s201, %s202
      %p214 = scmp.eq.s32.totalorder %s24, 1
      %p215 = por %p213, %p214
      %p217 = scmp.ne.s32.totalorder %s202, %s216
      %p218 = scmp.eq.s32.totalorder %s24, 0
      %p219 = por %p217, %p218
      %s220 = ssub.s32 %s18, %s25
      %p221 = scmp.eq.s32.totalorder %s220, 0
      %s223 = sadd.s32 %s222, 1
      %s224 = scalar_select %p221, %s222, %s223
      %p227 = pneg %p221
      %p228 = scmp.eq.s32.totalorder %s18, 1
      %p229 = por %p227, %p228
      %p230 = scmp.ne.s32.totalorder %s222, %s225
      %p231 = scmp.eq.s32.totalorder %s18, 0
      %p232 = por %p230, %p231
      %p233 = scmp.ne.s32.totalorder %s222, %s225
      %p234 = scmp.eq.s32.totalorder %s23, 1
      %p235 = por %p233, %p234
      %p236 = scmp.ne.s32.totalorder %s225, %s226
      %p237 = scmp.eq.s32.totalorder %s23, 0
      %p238 = por %p236, %p237
      %p239 = scmp.ne.s32.totalorder %s225, %s226
      %p240 = scmp.eq.s32.totalorder %s24, 1
      %p241 = por %p239, %p240
      %p243 = scmp.ne.s32.totalorder %s226, %s242
      %p244 = scmp.eq.s32.totalorder %s24, 0
      %p245 = por %p243, %p244
      %p246 = scmp.le.s32.totalorder 1, %s18
      %p247 = scmp.lt.s32.totalorder %s18, 3
      %p248 = pnand %p246, %p247
      %p249 = pneg %p248
      // Predicated region
      $region9: #{image_encoder_forward.1} parent=5 // pred_check
        _
      $region10: #{image_encoder_forward.1} parent=5 // pred_check_branch
        %251 = sbr.rel (%p248) target = $region12
      $region11: #{image_encoder_forward.1} parent=5 // pred_region
        %s252 = ssub.s32 %s18, 1
        // Predicated region
        $region13: #{image_encoder_forward.1} parent=11 // pred_check
          %p253 = pneg %p65
        $region14: #{image_encoder_forward.1} parent=11 // pred_check_branch
          %255 = sbr.rel (%p253) target = $region16
        $region15: #{image_encoder_forward.1} parent=11 // pred_region
          _
        $region16: #{image_encoder_forward.1} parent=11 // pred_fallthru
          _
        // Predicated region
        $region17: #{image_encoder_forward.1} parent=11 // pred_check
          %p256 = pneg %p86
        $region18: #{image_encoder_forward.1} parent=11 // pred_check_branch
          %258 = sbr.rel (%p256) target = $region20
        $region19: #{image_encoder_forward.1} parent=11 // pred_region
          _
        $region20: #{image_encoder_forward.1} parent=11 // pred_fallthru
          _
        // Predicated region
        $region21: #{image_encoder_forward.1} parent=11 // pred_check
          %p259 = pneg %p107
        $region22: #{image_encoder_forward.1} parent=11 // pred_check_branch
          %261 = sbr.rel (%p259) target = $region24
        $region23: #{image_encoder_forward.1} parent=11 // pred_region
          _
        $region24: #{image_encoder_forward.1} parent=11 // pred_fallthru
          _
        // Predicated region
        $region25: #{image_encoder_forward.1} parent=11 // pred_check
          %p262 = pneg %p128
        $region26: #{image_encoder_forward.1} parent=11 // pred_check_branch
          %264 = sbr.rel (%p262) target = $region28
        $region27: #{image_encoder_forward.1} parent=11 // pred_region
          _
        $region28: #{image_encoder_forward.1} parent=11 // pred_fallthru
          _
        // Predicated region
        $region29: #{image_encoder_forward.1} parent=11 // pred_check
          %p265 = pneg %p149
        $region30: #{image_encoder_forward.1} parent=11 // pred_check_branch
          %267 = sbr.rel (%p265) target = $region32
        $region31: #{image_encoder_forward.1} parent=11 // pred_region
          _
        $region32: #{image_encoder_forward.1} parent=11 // pred_fallthru
          _
        // Predicated region
        $region33: #{image_encoder_forward.1} parent=11 // pred_check
          %p268 = pneg %p170
        $region34: #{image_encoder_forward.1} parent=11 // pred_check_branch
          %270 = sbr.rel (%p268) target = $region36
        $region35: #{image_encoder_forward.1} parent=11 // pred_region
          _
        $region36: #{image_encoder_forward.1} parent=11 // pred_fallthru
          _
        // Predicated region
        $region37: #{image_encoder_forward.1} parent=11 // pred_check
          %p271 = pneg %p191
        $region38: #{image_encoder_forward.1} parent=11 // pred_check_branch
          %273 = sbr.rel (%p271) target = $region40
        $region39: #{image_encoder_forward.1} parent=11 // pred_region
          _
        $region40: #{image_encoder_forward.1} parent=11 // pred_fallthru
          _
        // Predicated region
        $region41: #{image_encoder_forward.1} parent=11 // pred_check
          %p274 = pneg %p212
        $region42: #{image_encoder_forward.1} parent=11 // pred_check_branch
          %276 = sbr.rel (%p274) target = $region44
        $region43: #{image_encoder_forward.1} parent=11 // pred_region
          _
        $region44: #{image_encoder_forward.1} parent=11 // pred_fallthru
          _
      $region12: #{image_encoder_forward.1} parent=5 // pred_fallthru
        _
      %p277 = scmp.lt.s32.totalorder %s18, 2
      // Predicated region
      $region45: #{image_encoder_forward.1} parent=5 // pred_check
        %p278 = pneg %p277
      $region46: #{image_encoder_forward.1} parent=5 // pred_check_branch
        %280 = sbr.rel (%p278) target = $region48
      $region47: #{image_encoder_forward.1} parent=5 // pred_region
        // Predicated region
        $region49: #{image_encoder_forward.1} parent=47 // pred_check
          %p281 = pneg %p38
        $region50: #{image_encoder_forward.1} parent=47 // pred_check_branch
          %283 = sbr.rel (%p281) target = $region52
        $region51: #{image_encoder_forward.1} parent=47 // pred_region
          %p284 = scmp.lt.s32.totalorder %s18, 1
          %s285 = scalar_select %p284, %s18, 1
          %s286 = smul.addr %s285, 41
          %s287 = smul.addr %s286, 8
          %s288 = scalar_lea.vmem %s0, %s287
        $region52: #{image_encoder_forward.1} parent=47 // pred_fallthru
          _
      $region48: #{image_encoder_forward.1} parent=5 // pred_fallthru
        _
      %p289 = scmp.le.s32.totalorder 1, %s18
      %p290 = scmp.lt.s32.totalorder %s18, 3
      %p291 = pnand %p289, %p290
      %p292 = pneg %p291
      // Predicated region
      $region53: #{image_encoder_forward.1} parent=5 // pred_check
        _
      $region54: #{image_encoder_forward.1} parent=5 // pred_check_branch
        %294 = sbr.rel (%p291) target = $region56
      $region55: #{image_encoder_forward.1} parent=5 // pred_region
        %s295 = ssub.s32 %s18, 1
        %p296 = scmp.lt.s32.totalorder %s23, 1
        %s297 = scalar_select %p296, %s23, 1
        %s298 = smul.addr %s297, 41
        %s299 = smul.addr %s298, 8
        %s300 = scalar_lea.vmem %s0, %s299
        %p301 = pneg %p44
        %p302 = pneg %p41
        %p303 = pneg %p65
        %p304 = pneg %p62
        %p305 = pneg %p86
        %p306 = pneg %p83
        %p307 = pneg %p107
        %p308 = pneg %p104
        %p309 = pneg %p128
        %p310 = pneg %p125
        %p311 = pneg %p149
        %p312 = pneg %p146
        %p313 = pneg %p170
        %p314 = pneg %p167
        %p315 = pneg %p191
        %p316 = pneg %p188
        %p317 = pneg %p212
        %p318 = pneg %p209
        %p319 = pneg %p238
        %p320 = pneg %p235
        %s321 = sand.u32 %s225, 1
        %s322 = scalar_lea.sflag [#allocation4], %s321
        %s323 = sand.u32 %s225, 1
        %s324 = scalar_lea.vmem [#allocation3], %s323
        %p325 = scmp.lt.s32.totalorder %s23, 1
        %s326 = scalar_select %p325, %s23, 1
        %s327 = smul.addr %s326, 41
        %s328 = smul.addr %s327, 8
        %s329 = scalar_lea.vmem %s0, %s328
        %v331 = vld [vmem:[%s329] sm:$0xff]
        %v332 = vld [vmem:[%s329 + $0x8] sm:$0xff]
        %v333 = vld [vmem:[%s329 + $0x10] sm:$0xff]
        %v334 = vld [vmem:[%s329 + $0x18] sm:$0xff]
        %v335 = vld [vmem:[%s329 + $0x20] sm:$0xff]
        %v336 = vld [vmem:[%s329 + $0x28] sm:$0xff]
        %v337 = vld [vmem:[%s329 + $0x30] sm:$0xff]
        %v338 = vld [vmem:[%s329 + $0x38] sm:$0xff]
        %v339 = vld [vmem:[%s329 + $0x40] sm:$0xff]
        %v340 = vld [vmem:[%s329 + $0x48] sm:$0xff]
        %v341 = vld [vmem:[%s329 + $0x50] sm:$0xff]
        %v342 = vld [vmem:[%s329 + $0x58] sm:$0xff]
        %v343 = vld [vmem:[%s329 + $0x60] sm:$0xff]
        %v344 = vld [vmem:[%s329 + $0x68] sm:$0xff]
        %v345 = vld [vmem:[%s329 + $0x70] sm:$0xff]
        %v346 = vld [vmem:[%s329 + $0x78] sm:$0xff]
        %v347 = vld [vmem:[%s329 + $0x80] sm:$0xff]
        %v348 = vld [vmem:[%s329 + $0x88] sm:$0xff]
        %v349 = vld [vmem:[%s329 + $0x90] sm:$0xff]
        %v350 = vld [vmem:[%s329 + $0x98] sm:$0xff]
        %v351 = vld [vmem:[%s329 + $0xa0] sm:$0xff]
        %v352 = vld [vmem:[%s329 + $0xa8] sm:$0xff]
        %v353 = vld [vmem:[%s329 + $0xb0] sm:$0xff]
        %v354 = vld [vmem:[%s329 + $0xb8] sm:$0xff]
        %v355 = vld [vmem:[%s329 + $0xc0] sm:$0xff]
        %v356 = vld [vmem:[%s329 + $0xc8] sm:$0xff]
        %v357 = vld [vmem:[%s329 + $0xd0] sm:$0xff]
        %v358 = vld [vmem:[%s329 + $0xd8] sm:$0xff]
        %v359 = vld [vmem:[%s329 + $0xe0] sm:$0xff]
        %v360 = vld [vmem:[%s329 + $0xe8] sm:$0xff]
        %v361 = vld [vmem:[%s329 + $0xf0] sm:$0xff]
        %v362 = vld [vmem:[%s329 + $0xf8] sm:$0xff]
        %v363 = vld [vmem:[%s329 + $0x100] sm:$0xff]
        %v364 = vld [vmem:[%s329 + $0x108] sm:$0xff]
        %v365 = vld [vmem:[%s329 + $0x110] sm:$0xff]
        %v366 = vld [vmem:[%s329 + $0x118] sm:$0xff]
        %v367 = vpack.c.bf16 %v332, %v331
        %v368 = vpack.c.bf16 %v334, %v333
        %v369 = vpack.c.bf16 %v336, %v335
        %v370 = vpack.c.bf16 %v338, %v337
        %v371 = vpack.c.bf16 %v340, %v339
        %v372 = vpack.c.bf16 %v342, %v341
        %v373 = vpack.c.bf16 %v344, %v343
        %v374 = vpack.c.bf16 %v346, %v345
        %v375 = vpack.c.bf16 %v348, %v347
        %v376 = vpack.c.bf16 %v350, %v349
        %v377 = vpack.c.bf16 %v352, %v351
        %v378 = vpack.c.bf16 %v354, %v353
        %v379 = vpack.c.bf16 %v356, %v355
        %v380 = vpack.c.bf16 %v358, %v357
        %v381 = vpack.c.bf16 %v360, %v359
        %v382 = vpack.c.bf16 %v362, %v361
        %v383 = vpack.c.bf16 %v364, %v363
        %v384 = vpack.c.bf16 %v366, %v365
        %v385 = vld [vmem:[%s3] sm:$0x3]
        %v386 = vld [vmem:[%s329 + $0x1] sm:$0xff]
        %v387 = vld [vmem:[%s329 + $0x9] sm:$0xff]
        %v388 = vld [vmem:[%s329 + $0x11] sm:$0xff]
        %v389 = vld [vmem:[%s329 + $0x19] sm:$0xff]
        %v390 = vld [vmem:[%s329 + $0x21] sm:$0xff]
        %v391 = vld [vmem:[%s329 + $0x29] sm:$0xff]
        %v392 = vld [vmem:[%s329 + $0x31] sm:$0xff]
        %v393 = vld [vmem:[%s329 + $0x39] sm:$0xff]
        %v394 = vld [vmem:[%s329 + $0x41] sm:$0xff]
        %v395 = vld [vmem:[%s329 + $0x49] sm:$0xff]
        %v396 = vld [vmem:[%s329 + $0x51] sm:$0xff]
        %v397 = vld [vmem:[%s329 + $0x59] sm:$0xff]
        %v398 = vld [vmem:[%s329 + $0x61] sm:$0xff]
        %v399 = vld [vmem:[%s329 + $0x69] sm:$0xff]
        %v400 = vld [vmem:[%s329 + $0x71] sm:$0xff]
        %v401 = vld [vmem:[%s329 + $0x79] sm:$0xff]
        %v402 = vld [vmem:[%s329 + $0x81] sm:$0xff]
        %v403 = vld [vmem:[%s329 + $0x89] sm:$0xff]
        %v404 = vld [vmem:[%s329 + $0x91] sm:$0xff]
        %v405 = vld [vmem:[%s329 + $0x99] sm:$0xff]
        %v406 = vld [vmem:[%s329 + $0xa1] sm:$0xff]
        %v407 = vld [vmem:[%s329 + $0xa9] sm:$0xff]
        %v408 = vld [vmem:[%s329 + $0xb1] sm:$0xff]
        %v409 = vld [vmem:[%s329 + $0xb9] sm:$0xff]
        %v410 = vld [vmem:[%s329 + $0xc1] sm:$0xff]
        %v411 = vld [vmem:[%s329 + $0xc9] sm:$0xff]
        %v412 = vld [vmem:[%s329 + $0xd1] sm:$0xff]
        %v413 = vld [vmem:[%s329 + $0xd9] sm:$0xff]
        %v414 = vld [vmem:[%s329 + $0xe1] sm:$0xff]
        %v415 = vld [vmem:[%s329 + $0xe9] sm:$0xff]
        %v416 = vld [vmem:[%s329 + $0xf1] sm:$0xff]
        %v417 = vld [vmem:[%s329 + $0xf9] sm:$0xff]
        %v418 = vld [vmem:[%s329 + $0x101] sm:$0xff]
        %v419 = vld [vmem:[%s329 + $0x109] sm:$0xff]
        %v420 = vld [vmem:[%s329 + $0x111] sm:$0xff]
        %v421 = vld [vmem:[%s329 + $0x119] sm:$0xff]
        %v422 = vpack.c.bf16 %v387, %v386
        %v423 = vpack.c.bf16 %v389, %v388
        %v424 = vpack.c.bf16 %v391, %v390
        %v425 = vpack.c.bf16 %v393, %v392
        %v426 = vpack.c.bf16 %v395, %v394
        %v427 = vpack.c.bf16 %v397, %v396
        %v428 = vpack.c.bf16 %v399, %v398
        %v429 = vpack.c.bf16 %v401, %v400
        %v430 = vpack.c.bf16 %v403, %v402
        %v431 = vpack.c.bf16 %v405, %v404
        %v432 = vpack.c.bf16 %v407, %v406
        %v433 = vpack.c.bf16 %v409, %v408
        %v434 = vpack.c.bf16 %v411, %v410
        %v435 = vpack.c.bf16 %v413, %v412
        %v436 = vpack.c.bf16 %v415, %v414
        %v437 = vpack.c.bf16 %v417, %v416
        %v438 = vpack.c.bf16 %v419, %v418
        %v439 = vpack.c.bf16 %v421, %v420
        %s440 = scalar_lea.vmem %s3, 2
        %v441 = vld [vmem:[%s440] sm:$0x3]
        %vm442 = vcmask 23552
        %v444 = vsel %vm442, %v422, 0
        %v447 = vsel %vm442, %v423, 0
        %v450 = vsel %vm442, %v424, 0
        %v453 = vsel %vm442, %v425, 0
        %v456 = vsel %vm442, %v426, 0
        %v459 = vsel %vm442, %v427, 0
        %v462 = vsel %vm442, %v428, 0
        %v465 = vsel %vm442, %v429, 0
        %v468 = vsel %vm442, %v430, 0
        %v471 = vsel %vm442, %v431, 0
        %v474 = vsel %vm442, %v432, 0
        %v477 = vsel %vm442, %v433, 0
        %v480 = vsel %vm442, %v434, 0
        %v483 = vsel %vm442, %v435, 0
        %v486 = vsel %vm442, %v436, 0
        %v489 = vsel %vm442, %v437, 0
        %v492 = vsel %vm442, %v438, 0
        %v495 = vsel %vm442, %v439, 0
        %vm497 = vcmask 1040384
        %vm498 = vcmask 1041408
        %v499 = vsel %vm497, 4294967295, 65535
        %v500 = vsel %vm498, %v499, 0
        %v502 = vand.u32 %v441, %v500
        %504 = vmatprep.subr.bf16.mxu0 0
        %505 = vmatpush1.bf16.msra.mxu0 0
        %506 = vmatprep.subr.bf16.mxu0 0
        %507 = vmatpush1.bf16.msra.mxu0 0
        %508 = vmatprep.subr.bf16.mxu0 0
        %509 = vmatpush1.bf16.msra.mxu0 0
        %510 = vmatprep.subr.bf16.mxu0 0
        %511 = vmatpush1.bf16.msra.mxu0 0
        %512 = vmatprep.subr.bf16.mxu0 0
        %513 = vmatpush1.bf16.msra.mxu0 0
        %514 = vmatprep.subr.bf16.mxu0 0
        %515 = vmatpush1.bf16.msra.mxu0 0
        %516 = vmatprep.subr.bf16.mxu0 0
        %517 = vmatpush1.bf16.msra.mxu0 0
        %518 = vmatprep.subr.bf16.mxu0 0
        %519 = vmatpush1.bf16.msra.mxu0 %v502
        %520 = vmatprep.subr.bf16.mxu0 0
        %521 = vmatpush2.bf16.msra.mxu0 0
        %522 = vmatprep.subr.bf16.mxu0 0
        %523 = vmatpush2.bf16.msra.mxu0 0
        %524 = vmatprep.subr.bf16.mxu0 0
        %525 = vmatpush2.bf16.msra.mxu0 0
        %526 = vmatprep.subr.bf16.mxu0 0
        %527 = vmatpush2.bf16.msra.mxu0 0
        %528 = vmatprep.subr.bf16.mxu0 0
        %529 = vmatpush2.bf16.msra.mxu0 0
        %530 = vmatprep.subr.bf16.mxu0 0
        %531 = vmatpush2.bf16.msra.mxu0 0
        %532 = vmatprep.subr.bf16.mxu0 0
        %533 = vmatpush2.bf16.msra.mxu0 0
        %534 = vmatprep.subr.bf16.mxu0 0
        %535 = vmatpush2.bf16.msra.mxu0 0
        %536 = vmatprep.mubr.bf16.mxu0 0
        %537 = vmatmul.mubr.bf16.gmra.mxu0 %v444
        %v538 = vpop.f32.mrf.mxu0
        %v539 = vadd.f32 0.0, %v538
        %v540 = vpop.f32.mrf.mxu0
        %v541 = vpop.f32.mrf.mxu0
        %v542 = vadd.f32 0.0, %v541
        %v543 = vpop.f32.mrf.mxu0
        %544 = vmatprep.mubr.bf16.mxu0 0
        %545 = vmatmul.mubr.bf16.gmra.mxu0 %v447
        %v546 = vpop.f32.mrf.mxu0
        %v547 = vadd.f32 0.0, %v546
        %v548 = vpop.f32.mrf.mxu0
        %v549 = vpop.f32.mrf.mxu0
        %v550 = vadd.f32 0.0, %v549
        %v551 = vpop.f32.mrf.mxu0
        %552 = vmatprep.mubr.bf16.mxu0 0
        %553 = vmatmul.mubr.bf16.gmra.mxu0 %v450
        %v554 = vpop.f32.mrf.mxu0
        %v555 = vadd.f32 0.0, %v554
        %v556 = vpop.f32.mrf.mxu0
        %v557 = vpop.f32.mrf.mxu0
        %v558 = vadd.f32 0.0, %v557
        %v559 = vpop.f32.mrf.mxu0
        %560 = vmatprep.mubr.bf16.mxu0 0
        %561 = vmatmul.mubr.bf16.gmra.mxu0 %v453
        %v562 = vpop.f32.mrf.mxu0
        %v563 = vadd.f32 0.0, %v562
        %v564 = vpop.f32.mrf.mxu0
        %v565 = vpop.f32.mrf.mxu0
        %v566 = vadd.f32 0.0, %v565
        %v567 = vpop.f32.mrf.mxu0
        %568 = vmatprep.mubr.bf16.mxu0 0
        %569 = vmatmul.mubr.bf16.gmra.mxu0 %v456
        %v570 = vpop.f32.mrf.mxu0
        %v571 = vadd.f32 0.0, %v570
        %v572 = vpop.f32.mrf.mxu0
        %v573 = vpop.f32.mrf.mxu0
        %v574 = vadd.f32 0.0, %v573
        %v575 = vpop.f32.mrf.mxu0
        %576 = vmatprep.mubr.bf16.mxu0 0
        %577 = vmatmul.mubr.bf16.gmra.mxu0 %v459
        %v578 = vpop.f32.mrf.mxu0
        %v579 = vadd.f32 0.0, %v578
        %v580 = vpop.f32.mrf.mxu0
        %v581 = vpop.f32.mrf.mxu0
        %v582 = vadd.f32 0.0, %v581
        %v583 = vpop.f32.mrf.mxu0
        %584 = vmatprep.mubr.bf16.mxu0 0
        %585 = vmatmul.mubr.bf16.gmra.mxu0 %v462
        %v586 = vpop.f32.mrf.mxu0
        %v587 = vadd.f32 0.0, %v586
        %v588 = vpop.f32.mrf.mxu0
        %v589 = vpop.f32.mrf.mxu0
        %v590 = vadd.f32 0.0, %v589
        %v591 = vpop.f32.mrf.mxu0
        %592 = vmatprep.mubr.bf16.mxu0 0
        %593 = vmatmul.mubr.bf16.gmra.mxu0 %v465
        %v594 = vpop.f32.mrf.mxu0
        %v595 = vadd.f32 0.0, %v594
        %v596 = vpop.f32.mrf.mxu0
        %v597 = vpop.f32.mrf.mxu0
        %v598 = vadd.f32 0.0, %v597
        %v599 = vpop.f32.mrf.mxu0
        %600 = vmatprep.mubr.bf16.mxu0 0
        %601 = vmatmul.mubr.bf16.gmra.mxu0 %v468
        %v602 = vpop.f32.mrf.mxu0
        %v603 = vadd.f32 0.0, %v602
        %v604 = vpop.f32.mrf.mxu0
        %v605 = vpop.f32.mrf.mxu0
        %v606 = vadd.f32 0.0, %v605
        %v607 = vpop.f32.mrf.mxu0
        %608 = vmatprep.mubr.bf16.mxu0 0
        %609 = vmatmul.mubr.bf16.gmra.mxu0 %v471
        %v610 = vpop.f32.mrf.mxu0
        %v611 = vadd.f32 0.0, %v610
        %v612 = vpop.f32.mrf.mxu0
        %v613 = vpop.f32.mrf.mxu0
        %v614 = vadd.f32 0.0, %v613
        %v615 = vpop.f32.mrf.mxu0
        %616 = vmatprep.mubr.bf16.mxu0 0
        %617 = vmatmul.mubr.bf16.gmra.mxu0 %v474
        %v618 = vpop.f32.mrf.mxu0
        %v619 = vadd.f32 0.0, %v618
        %v620 = vpop.f32.mrf.mxu0
        %v621 = vpop.f32.mrf.mxu0
        %v622 = vadd.f32 0.0, %v621
        %v623 = vpop.f32.mrf.mxu0
        %624 = vmatprep.mubr.bf16.mxu0 0
        %625 = vmatmul.mubr.bf16.gmra.mxu0 %v477
        %v626 = vpop.f32.mrf.mxu0
        %v627 = vadd.f32 0.0, %v626
        %v628 = vpop.f32.mrf.mxu0
        %v629 = vpop.f32.mrf.mxu0
        %v630 = vadd.f32 0.0, %v629
        %v631 = vpop.f32.mrf.mxu0
        %632 = vmatprep.mubr.bf16.mxu0 0
        %633 = vmatmul.mubr.bf16.gmra.mxu0 %v480
        %v634 = vpop.f32.mrf.mxu0
        %v635 = vadd.f32 0.0, %v634
        %v636 = vpop.f32.mrf.mxu0
        %v637 = vpop.f32.mrf.mxu0
        %v638 = vadd.f32 0.0, %v637
        %v639 = vpop.f32.mrf.mxu0
        %640 = vmatprep.mubr.bf16.mxu0 0
        %641 = vmatmul.mubr.bf16.gmra.mxu0 %v483
        %v642 = vpop.f32.mrf.mxu0
        %v643 = vadd.f32 0.0, %v642
        %v644 = vpop.f32.mrf.mxu0
        %v645 = vpop.f32.mrf.mxu0
        %v646 = vadd.f32 0.0, %v645
        %v647 = vpop.f32.mrf.mxu0
        %648 = vmatprep.mubr.bf16.mxu0 0
        %649 = vmatmul.mubr.bf16.gmra.mxu0 %v486
        %v650 = vpop.f32.mrf.mxu0
        %v651 = vadd.f32 0.0, %v650
        %v652 = vpop.f32.mrf.mxu0
        %v653 = vpop.f32.mrf.mxu0
        %v654 = vadd.f32 0.0, %v653
        %v655 = vpop.f32.mrf.mxu0
        %656 = vmatprep.mubr.bf16.mxu0 0
        %657 = vmatmul.mubr.bf16.gmra.mxu0 %v489
        %v658 = vpop.f32.mrf.mxu0
        %v659 = vadd.f32 0.0, %v658
        %v660 = vpop.f32.mrf.mxu0
        %v661 = vpop.f32.mrf.mxu0
        %v662 = vadd.f32 0.0, %v661
        %v663 = vpop.f32.mrf.mxu0
        %664 = vmatprep.mubr.bf16.mxu0 0
        %665 = vmatmul.mubr.bf16.gmra.mxu0 %v492
        %v666 = vpop.f32.mrf.mxu0
        %v667 = vadd.f32 0.0, %v666
        %v668 = vpop.f32.mrf.mxu0
        %v669 = vpop.f32.mrf.mxu0
        %v670 = vadd.f32 0.0, %v669
        %v671 = vpop.f32.mrf.mxu0
        %672 = vmatprep.mubr.bf16.mxu0 0
        %673 = vmatmul.mubr.bf16.gmra.mxu0 %v495
        %v674 = vpop.f32.mrf.mxu0
        %v675 = vadd.f32 0.0, %v674
        %v676 = vpop.f32.mrf.mxu0
        %v677 = vpop.f32.mrf.mxu0
        %v678 = vadd.f32 0.0, %v677
        %v679 = vpop.f32.mrf.mxu0
        %680 = vdwg.mxu0
        %v682 = vsel %vm442, %v367, 0
        %v685 = vsel %vm442, %v368, 0
        %v688 = vsel %vm442, %v369, 0
        %v691 = vsel %vm442, %v370, 0
        %v694 = vsel %vm442, %v371, 0
        %v697 = vsel %vm442, %v372, 0
        %v700 = vsel %vm442, %v373, 0
        %v703 = vsel %vm442, %v374, 0
        %v706 = vsel %vm442, %v375, 0
        %v709 = vsel %vm442, %v376, 0
        %v712 = vsel %vm442, %v377, 0
        %v715 = vsel %vm442, %v378, 0
        %v718 = vsel %vm442, %v379, 0
        %v721 = vsel %vm442, %v380, 0
        %v724 = vsel %vm442, %v381, 0
        %v727 = vsel %vm442, %v382, 0
        %v730 = vsel %vm442, %v383, 0
        %v733 = vsel %vm442, %v384, 0
        %v736 = vand.u32 %v385, %v500
        %738 = vmatprep.subr.bf16.mxu0 0
        %739 = vmatpush1.bf16.msra.mxu0 0
        %740 = vmatprep.subr.bf16.mxu0 0
        %741 = vmatpush1.bf16.msra.mxu0 0
        %742 = vmatprep.subr.bf16.mxu0 0
        %743 = vmatpush1.bf16.msra.mxu0 0
        %744 = vmatprep.subr.bf16.mxu0 0
        %745 = vmatpush1.bf16.msra.mxu0 0
        %746 = vmatprep.subr.bf16.mxu0 0
        %747 = vmatpush1.bf16.msra.mxu0 0
        %748 = vmatprep.subr.bf16.mxu0 0
        %749 = vmatpush1.bf16.msra.mxu0 0
        %750 = vmatprep.subr.bf16.mxu0 0
        %751 = vmatpush1.bf16.msra.mxu0 0
        %752 = vmatprep.subr.bf16.mxu0 0
        %753 = vmatpush1.bf16.msra.mxu0 %v736
        %754 = vmatprep.subr.bf16.mxu0 0
        %755 = vmatpush2.bf16.msra.mxu0 0
        %756 = vmatprep.subr.bf16.mxu0 0
        %757 = vmatpush2.bf16.msra.mxu0 0
        %758 = vmatprep.subr.bf16.mxu0 0
        %759 = vmatpush2.bf16.msra.mxu0 0
        %760 = vmatprep.subr.bf16.mxu0 0
        %761 = vmatpush2.bf16.msra.mxu0 0
        %762 = vmatprep.subr.bf16.mxu0 0
        %763 = vmatpush2.bf16.msra.mxu0 0
        %764 = vmatprep.subr.bf16.mxu0 0
        %765 = vmatpush2.bf16.msra.mxu0 0
        %766 = vmatprep.subr.bf16.mxu0 0
        %767 = vmatpush2.bf16.msra.mxu0 0
        %768 = vmatprep.subr.bf16.mxu0 0
        %769 = vmatpush2.bf16.msra.mxu0 0
        %770 = vmatprep.mubr.bf16.mxu0 0
        %771 = vmatmul.mubr.bf16.gmra.mxu0 %v682
        %v772 = vpop.f32.mrf.mxu0
        %v773 = vadd.f32 %v539, %v772
        %v774 = vpop.f32.mrf.mxu0
        %v775 = vpop.f32.mrf.mxu0
        %v776 = vadd.f32 %v542, %v775
        %v777 = vpop.f32.mrf.mxu0
        %778 = vmatprep.mubr.bf16.mxu0 0
        %779 = vmatmul.mubr.bf16.gmra.mxu0 %v685
        %v780 = vpop.f32.mrf.mxu0
        %v781 = vadd.f32 %v547, %v780
        %v782 = vpop.f32.mrf.mxu0
        %v783 = vpop.f32.mrf.mxu0
        %v784 = vadd.f32 %v550, %v783
        %v785 = vpop.f32.mrf.mxu0
        %786 = vmatprep.mubr.bf16.mxu0 0
        %787 = vmatmul.mubr.bf16.gmra.mxu0 %v688
        %v788 = vpop.f32.mrf.mxu0
        %v789 = vadd.f32 %v555, %v788
        %v790 = vpop.f32.mrf.mxu0
        %v791 = vpop.f32.mrf.mxu0
        %v792 = vadd.f32 %v558, %v791
        %v793 = vpop.f32.mrf.mxu0
        %794 = vmatprep.mubr.bf16.mxu0 0
        %795 = vmatmul.mubr.bf16.gmra.mxu0 %v691
        %v796 = vpop.f32.mrf.mxu0
        %v797 = vadd.f32 %v563, %v796
        %v798 = vpop.f32.mrf.mxu0
        %v799 = vpop.f32.mrf.mxu0
        %v800 = vadd.f32 %v566, %v799
        %v801 = vpop.f32.mrf.mxu0
        %802 = vmatprep.mubr.bf16.mxu0 0
        %803 = vmatmul.mubr.bf16.gmra.mxu0 %v694
        %v804 = vpop.f32.mrf.mxu0
        %v805 = vadd.f32 %v571, %v804
        %v806 = vpop.f32.mrf.mxu0
        %v807 = vpop.f32.mrf.mxu0
        %v808 = vadd.f32 %v574, %v807
        %v809 = vpop.f32.mrf.mxu0
        %810 = vmatprep.mubr.bf16.mxu0 0
        %811 = vmatmul.mubr.bf16.gmra.mxu0 %v697
        %v812 = vpop.f32.mrf.mxu0
        %v813 = vadd.f32 %v579, %v812
        %v814 = vpop.f32.mrf.mxu0
        %v815 = vpop.f32.mrf.mxu0
        %v816 = vadd.f32 %v582, %v815
        %v817 = vpop.f32.mrf.mxu0
        %818 = vmatprep.mubr.bf16.mxu0 0
        %819 = vmatmul.mubr.bf16.gmra.mxu0 %v700
        %v820 = vpop.f32.mrf.mxu0
        %v821 = vadd.f32 %v587, %v820
        %v822 = vpop.f32.mrf.mxu0
        %v823 = vpop.f32.mrf.mxu0
        %v824 = vadd.f32 %v590, %v823
        %v825 = vpop.f32.mrf.mxu0
        %826 = vmatprep.mubr.bf16.mxu0 0
        %827 = vmatmul.mubr.bf16.gmra.mxu0 %v703
        %v828 = vpop.f32.mrf.mxu0
        %v829 = vadd.f32 %v595, %v828
        %v830 = vpop.f32.mrf.mxu0
        %v831 = vpop.f32.mrf.mxu0
        %v832 = vadd.f32 %v598, %v831
        %v833 = vpop.f32.mrf.mxu0
        %834 = vmatprep.mubr.bf16.mxu0 0
        %835 = vmatmul.mubr.bf16.gmra.mxu0 %v706
        %v836 = vpop.f32.mrf.mxu0
        %v837 = vadd.f32 %v603, %v836
        %v838 = vpop.f32.mrf.mxu0
        %v839 = vpop.f32.mrf.mxu0
        %v840 = vadd.f32 %v606, %v839
        %v841 = vpop.f32.mrf.mxu0
        %842 = vmatprep.mubr.bf16.mxu0 0
        %843 = vmatmul.mubr.bf16.gmra.mxu0 %v709
        %v844 = vpop.f32.mrf.mxu0
        %v845 = vadd.f32 %v611, %v844
        %v846 = vpop.f32.mrf.mxu0
        %v847 = vpop.f32.mrf.mxu0
        %v848 = vadd.f32 %v614, %v847
        %v849 = vpop.f32.mrf.mxu0
        %850 = vmatprep.mubr.bf16.mxu0 0
        %851 = vmatmul.mubr.bf16.gmra.mxu0 %v712
        %v852 = vpop.f32.mrf.mxu0
        %v853 = vadd.f32 %v619, %v852
        %v854 = vpop.f32.mrf.mxu0
        %v855 = vpop.f32.mrf.mxu0
        %v856 = vadd.f32 %v622, %v855
        %v857 = vpop.f32.mrf.mxu0
        %858 = vmatprep.mubr.bf16.mxu0 0
        %859 = vmatmul.mubr.bf16.gmra.mxu0 %v715
        %v860 = vpop.f32.mrf.mxu0
        %v861 = vadd.f32 %v627, %v860
        %v862 = vpop.f32.mrf.mxu0
        %v863 = vpop.f32.mrf.mxu0
        %v864 = vadd.f32 %v630, %v863
        %v865 = vpop.f32.mrf.mxu0
        %866 = vmatprep.mubr.bf16.mxu0 0
        %867 = vmatmul.mubr.bf16.gmra.mxu0 %v718
        %v868 = vpop.f32.mrf.mxu0
        %v869 = vadd.f32 %v635, %v868
        %v870 = vpop.f32.mrf.mxu0
        %v871 = vpop.f32.mrf.mxu0
        %v872 = vadd.f32 %v638, %v871
        %v873 = vpop.f32.mrf.mxu0
        %874 = vmatprep.mubr.bf16.mxu0 0
        %875 = vmatmul.mubr.bf16.gmra.mxu0 %v721
        %v876 = vpop.f32.mrf.mxu0
        %v877 = vadd.f32 %v643, %v876
        %v878 = vpop.f32.mrf.mxu0
        %v879 = vpop.f32.mrf.mxu0
        %v880 = vadd.f32 %v646, %v879
        %v881 = vpop.f32.mrf.mxu0
        %882 = vmatprep.mubr.bf16.mxu0 0
        %883 = vmatmul.mubr.bf16.gmra.mxu0 %v724
        %v884 = vpop.f32.mrf.mxu0
        %v885 = vadd.f32 %v651, %v884
        %v886 = vpop.f32.mrf.mxu0
        %v887 = vpop.f32.mrf.mxu0
        %v888 = vadd.f32 %v654, %v887
        %v889 = vpop.f32.mrf.mxu0
        %890 = vmatprep.mubr.bf16.mxu0 0
        %891 = vmatmul.mubr.bf16.gmra.mxu0 %v727
        %v892 = vpop.f32.mrf.mxu0
        %v893 = vadd.f32 %v659, %v892
        %v894 = vpop.f32.mrf.mxu0
        %v895 = vpop.f32.mrf.mxu0
        %v896 = vadd.f32 %v662, %v895
        %v897 = vpop.f32.mrf.mxu0
        %898 = vmatprep.mubr.bf16.mxu0 0
        %899 = vmatmul.mubr.bf16.gmra.mxu0 %v730
        %v900 = vpop.f32.mrf.mxu0
        %v901 = vadd.f32 %v667, %v900
        %v902 = vpop.f32.mrf.mxu0
        %v903 = vpop.f32.mrf.mxu0
        %v904 = vadd.f32 %v670, %v903
        %v905 = vpop.f32.mrf.mxu0
        %906 = vmatprep.mubr.bf16.mxu0 0
        %907 = vmatmul.mubr.bf16.gmra.mxu0 %v733
        %v908 = vpop.f32.mrf.mxu0
        %v909 = vadd.f32 %v675, %v908
        %v910 = vpop.f32.mrf.mxu0
        %v911 = vpop.f32.mrf.mxu0
        %v912 = vadd.f32 %v678, %v911
        %v913 = vpop.f32.mrf.mxu0
        %914 = vdwg.mxu0
        %v915 = vld [vmem:[%s329 + $0x2] sm:$0xff]
        %v916 = vld [vmem:[%s329 + $0xa] sm:$0xff]
        %v917 = vld [vmem:[%s329 + $0x12] sm:$0xff]
        %v918 = vld [vmem:[%s329 + $0x1a] sm:$0xff]
        %v919 = vld [vmem:[%s329 + $0x22] sm:$0xff]
        %v920 = vld [vmem:[%s329 + $0x2a] sm:$0xff]
        %v921 = vld [vmem:[%s329 + $0x32] sm:$0xff]
        %v922 = vld [vmem:[%s329 + $0x3a] sm:$0xff]
        %v923 = vld [vmem:[%s329 + $0x42] sm:$0xff]
        %v924 = vld [vmem:[%s329 + $0x4a] sm:$0xff]
        %v925 = vld [vmem:[%s329 + $0x52] sm:$0xff]
        %v926 = vld [vmem:[%s329 + $0x5a] sm:$0xff]
        %v927 = vld [vmem:[%s329 + $0x62] sm:$0xff]
        %v928 = vld [vmem:[%s329 + $0x6a] sm:$0xff]
        %v929 = vld [vmem:[%s329 + $0x72] sm:$0xff]
        %v930 = vld [vmem:[%s329 + $0x7a] sm:$0xff]
        %v931 = vld [vmem:[%s329 + $0x82] sm:$0xff]
        %v932 = vld [vmem:[%s329 + $0x8a] sm:$0xff]
        %v933 = vld [vmem:[%s329 + $0x92] sm:$0xff]
        %v934 = vld [vmem:[%s329 + $0x9a] sm:$0xff]
        %v935 = vld [vmem:[%s329 + $0xa2] sm:$0xff]
        %v936 = vld [vmem:[%s329 + $0xaa] sm:$0xff]
        %v937 = vld [vmem:[%s329 + $0xb2] sm:$0xff]
        %v938 = vld [vmem:[%s329 + $0xba] sm:$0xff]
        %v939 = vld [vmem:[%s329 + $0xc2] sm:$0xff]
        %v940 = vld [vmem:[%s329 + $0xca] sm:$0xff]
        %v941 = vld [vmem:[%s329 + $0xd2] sm:$0xff]
        %v942 = vld [vmem:[%s329 + $0xda] sm:$0xff]
        %v943 = vld [vmem:[%s329 + $0xe2] sm:$0xff]
        %v944 = vld [vmem:[%s329 + $0xea] sm:$0xff]
        %v945 = vld [vmem:[%s329 + $0xf2] sm:$0xff]
        %v946 = vld [vmem:[%s329 + $0xfa] sm:$0xff]
        %v947 = vld [vmem:[%s329 + $0x102] sm:$0xff]
        %v948 = vld [vmem:[%s329 + $0x10a] sm:$0xff]
        %v949 = vld [vmem:[%s329 + $0x112] sm:$0xff]
        %v950 = vld [vmem:[%s329 + $0x11a] sm:$0xff]
        %v951 = vpack.c.bf16 %v916, %v915
        %v952 = vpack.c.bf16 %v918, %v917
        %v953 = vpack.c.bf16 %v920, %v919
        %v954 = vpack.c.bf16 %v922, %v921
        %v955 = vpack.c.bf16 %v924, %v923
        %v956 = vpack.c.bf16 %v926, %v925
        %v957 = vpack.c.bf16 %v928, %v927
        %v958 = vpack.c.bf16 %v930, %v929
        %v959 = vpack.c.bf16 %v932, %v931
        %v960 = vpack.c.bf16 %v934, %v933
        %v961 = vpack.c.bf16 %v936, %v935
        %v962 = vpack.c.bf16 %v938, %v937
        %v963 = vpack.c.bf16 %v940, %v939
        %v964 = vpack.c.bf16 %v942, %v941
        %v965 = vpack.c.bf16 %v944, %v943
        %v966 = vpack.c.bf16 %v946, %v945
        %v967 = vpack.c.bf16 %v948, %v947
        %v968 = vpack.c.bf16 %v950, %v949
        %s969 = scalar_lea.vmem %s3, 4
        %v970 = vld [vmem:[%s969] sm:$0x3]
        %v972 = vsel %vm442, %v951, 0
        %v975 = vsel %vm442, %v952, 0
        %v978 = vsel %vm442, %v953, 0
        %v981 = vsel %vm442, %v954, 0
        %v984 = vsel %vm442, %v955, 0
        %v987 = vsel %vm442, %v956, 0
        %v990 = vsel %vm442, %v957, 0
        %v993 = vsel %vm442, %v958, 0
        %v996 = vsel %vm442, %v959, 0
        %v999 = vsel %vm442, %v960, 0
        %v1002 = vsel %vm442, %v961, 0
        %v1005 = vsel %vm442, %v962, 0
        %v1008 = vsel %vm442, %v963, 0
        %v1011 = vsel %vm442, %v964, 0
        %v1014 = vsel %vm442, %v965, 0
        %v1017 = vsel %vm442, %v966, 0
        %v1020 = vsel %vm442, %v967, 0
        %v1023 = vsel %vm442, %v968, 0
        %v1026 = vand.u32 %v970, %v500
        %1028 = vmatprep.subr.bf16.mxu0 0
        %1029 = vmatpush1.bf16.msra.mxu0 0
        %1030 = vmatprep.subr.bf16.mxu0 0
        %1031 = vmatpush1.bf16.msra.mxu0 0
        %1032 = vmatprep.subr.bf16.mxu0 0
        %1033 = vmatpush1.bf16.msra.mxu0 0
        %1034 = vmatprep.subr.bf16.mxu0 0
        %1035 = vmatpush1.bf16.msra.mxu0 0
        %1036 = vmatprep.subr.bf16.mxu0 0
        %1037 = vmatpush1.bf16.msra.mxu0 0
        %1038 = vmatprep.subr.bf16.mxu0 0
        %1039 = vmatpush1.bf16.msra.mxu0 0
        %1040 = vmatprep.subr.bf16.mxu0 0
        %1041 = vmatpush1.bf16.msra.mxu0 0
        %1042 = vmatprep.subr.bf16.mxu0 0
        %1043 = vmatpush1.bf16.msra.mxu0 %v1026
        %1044 = vmatprep.subr.bf16.mxu0 0
        %1045 = vmatpush2.bf16.msra.mxu0 0
        %1046 = vmatprep.subr.bf16.mxu0 0
        %1047 = vmatpush2.bf16.msra.mxu0 0
        %1048 = vmatprep.subr.bf16.mxu0 0
        %1049 = vmatpush2.bf16.msra.mxu0 0
        %1050 = vmatprep.subr.bf16.mxu0 0
        %1051 = vmatpush2.bf16.msra.mxu0 0
        %1052 = vmatprep.subr.bf16.mxu0 0
        %1053 = vmatpush2.bf16.msra.mxu0 0
        %1054 = vmatprep.subr.bf16.mxu0 0
        %1055 = vmatpush2.bf16.msra.mxu0 0
        %1056 = vmatprep.subr.bf16.mxu0 0
        %1057 = vmatpush2.bf16.msra.mxu0 0
        %1058 = vmatprep.subr.bf16.mxu0 0
        %1059 = vmatpush2.bf16.msra.mxu0 0
        %1060 = vmatprep.mubr.bf16.mxu0 0
        %1061 = vmatmul.mubr.bf16.gmra.mxu0 %v972
        %v1062 = vpop.f32.mrf.mxu0
        %v1063 = vadd.f32 0.0, %v1062
        %v1064 = vpop.f32.mrf.mxu0
        %v1065 = vpop.f32.mrf.mxu0
        %v1066 = vadd.f32 0.0, %v1065
        %v1067 = vpop.f32.mrf.mxu0
        %1068 = vmatprep.mubr.bf16.mxu0 0
        %1069 = vmatmul.mubr.bf16.gmra.mxu0 %v975
        %v1070 = vpop.f32.mrf.mxu0
        %v1071 = vadd.f32 0.0, %v1070
        %v1072 = vpop.f32.mrf.mxu0
        %v1073 = vpop.f32.mrf.mxu0
        %v1074 = vadd.f32 0.0, %v1073
        %v1075 = vpop.f32.mrf.mxu0
        %1076 = vmatprep.mubr.bf16.mxu0 0
        %1077 = vmatmul.mubr.bf16.gmra.mxu0 %v978
        %v1078 = vpop.f32.mrf.mxu0
        %v1079 = vadd.f32 0.0, %v1078
        %v1080 = vpop.f32.mrf.mxu0
        %v1081 = vpop.f32.mrf.mxu0
        %v1082 = vadd.f32 0.0, %v1081
        %v1083 = vpop.f32.mrf.mxu0
        %1084 = vmatprep.mubr.bf16.mxu0 0
        %1085 = vmatmul.mubr.bf16.gmra.mxu0 %v981
        %v1086 = vpop.f32.mrf.mxu0
        %v1087 = vadd.f32 0.0, %v1086
        %v1088 = vpop.f32.mrf.mxu0
        %v1089 = vpop.f32.mrf.mxu0
        %v1090 = vadd.f32 0.0, %v1089
        %v1091 = vpop.f32.mrf.mxu0
        %1092 = vmatprep.mubr.bf16.mxu0 0
        %1093 = vmatmul.mubr.bf16.gmra.mxu0 %v984
        %v1094 = vpop.f32.mrf.mxu0
        %v1095 = vadd.f32 0.0, %v1094
        %v1096 = vpop.f32.mrf.mxu0
        %v1097 = vpop.f32.mrf.mxu0
        %v1098 = vadd.f32 0.0, %v1097
        %v1099 = vpop.f32.mrf.mxu0
        %1100 = vmatprep.mubr.bf16.mxu0 0
        %1101 = vmatmul.mubr.bf16.gmra.mxu0 %v987
        %v1102 = vpop.f32.mrf.mxu0
        %v1103 = vadd.f32 0.0, %v1102
        %v1104 = vpop.f32.mrf.mxu0
        %v1105 = vpop.f32.mrf.mxu0
        %v1106 = vadd.f32 0.0, %v1105
        %v1107 = vpop.f32.mrf.mxu0
        %1108 = vmatprep.mubr.bf16.mxu0 0
        %1109 = vmatmul.mubr.bf16.gmra.mxu0 %v990
        %v1110 = vpop.f32.mrf.mxu0
        %v1111 = vadd.f32 0.0, %v1110
        %v1112 = vpop.f32.mrf.mxu0
        %v1113 = vpop.f32.mrf.mxu0
        %v1114 = vadd.f32 0.0, %v1113
        %v1115 = vpop.f32.mrf.mxu0
        %1116 = vmatprep.mubr.bf16.mxu0 0
        %1117 = vmatmul.mubr.bf16.gmra.mxu0 %v993
        %v1118 = vpop.f32.mrf.mxu0
        %v1119 = vadd.f32 0.0, %v1118
        %v1120 = vpop.f32.mrf.mxu0
        %v1121 = vpop.f32.mrf.mxu0
        %v1122 = vadd.f32 0.0, %v1121
        %v1123 = vpop.f32.mrf.mxu0
        %1124 = vmatprep.mubr.bf16.mxu0 0
        %1125 = vmatmul.mubr.bf16.gmra.mxu0 %v996
        %v1126 = vpop.f32.mrf.mxu0
        %v1127 = vadd.f32 0.0, %v1126
        %v1128 = vpop.f32.mrf.mxu0
        %v1129 = vpop.f32.mrf.mxu0
        %v1130 = vadd.f32 0.0, %v1129
        %v1131 = vpop.f32.mrf.mxu0
        %1132 = vmatprep.mubr.bf16.mxu0 0
        %1133 = vmatmul.mubr.bf16.gmra.mxu0 %v999
        %v1134 = vpop.f32.mrf.mxu0
        %v1135 = vadd.f32 0.0, %v1134
        %v1136 = vpop.f32.mrf.mxu0
        %v1137 = vpop.f32.mrf.mxu0
        %v1138 = vadd.f32 0.0, %v1137
        %v1139 = vpop.f32.mrf.mxu0
        %1140 = vmatprep.mubr.bf16.mxu0 0
        %1141 = vmatmul.mubr.bf16.gmra.mxu0 %v1002
        %v1142 = vpop.f32.mrf.mxu0
        %v1143 = vadd.f32 0.0, %v1142
        %v1144 = vpop.f32.mrf.mxu0
        %v1145 = vpop.f32.mrf.mxu0
        %v1146 = vadd.f32 0.0, %v1145
        %v1147 = vpop.f32.mrf.mxu0
        %1148 = vmatprep.mubr.bf16.mxu0 0
        %1149 = vmatmul.mubr.bf16.gmra.mxu0 %v1005
        %v1150 = vpop.f32.mrf.mxu0
        %v1151 = vadd.f32 0.0, %v1150
        %v1152 = vpop.f32.mrf.mxu0
        %v1153 = vpop.f32.mrf.mxu0
        %v1154 = vadd.f32 0.0, %v1153
        %v1155 = vpop.f32.mrf.mxu0
        %1156 = vmatprep.mubr.bf16.mxu0 0
        %1157 = vmatmul.mubr.bf16.gmra.mxu0 %v1008
        %v1158 = vpop.f32.mrf.mxu0
        %v1159 = vadd.f32 0.0, %v1158
        %v1160 = vpop.f32.mrf.mxu0
        %v1161 = vpop.f32.mrf.mxu0
        %v1162 = vadd.f32 0.0, %v1161
        %v1163 = vpop.f32.mrf.mxu0
        %1164 = vmatprep.mubr.bf16.mxu0 0
        %1165 = vmatmul.mubr.bf16.gmra.mxu0 %v1011
        %v1166 = vpop.f32.mrf.mxu0
        %v1167 = vadd.f32 0.0, %v1166
        %v1168 = vpop.f32.mrf.mxu0
        %v1169 = vpop.f32.mrf.mxu0
        %v1170 = vadd.f32 0.0, %v1169
        %v1171 = vpop.f32.mrf.mxu0
        %1172 = vmatprep.mubr.bf16.mxu0 0
        %1173 = vmatmul.mubr.bf16.gmra.mxu0 %v1014
        %v1174 = vpop.f32.mrf.mxu0
        %v1175 = vadd.f32 0.0, %v1174
        %v1176 = vpop.f32.mrf.mxu0
        %v1177 = vpop.f32.mrf.mxu0
        %v1178 = vadd.f32 0.0, %v1177
        %v1179 = vpop.f32.mrf.mxu0
        %1180 = vmatprep.mubr.bf16.mxu0 0
        %1181 = vmatmul.mubr.bf16.gmra.mxu0 %v1017
        %v1182 = vpop.f32.mrf.mxu0
        %v1183 = vadd.f32 0.0, %v1182
        %v1184 = vpop.f32.mrf.mxu0
        %v1185 = vpop.f32.mrf.mxu0
        %v1186 = vadd.f32 0.0, %v1185
        %v1187 = vpop.f32.mrf.mxu0
        %1188 = vmatprep.mubr.bf16.mxu0 0
        %1189 = vmatmul.mubr.bf16.gmra.mxu0 %v1020
        %v1190 = vpop.f32.mrf.mxu0
        %v1191 = vadd.f32 0.0, %v1190
        %v1192 = vpop.f32.mrf.mxu0
        %v1193 = vpop.f32.mrf.mxu0
        %v1194 = vadd.f32 0.0, %v1193
        %v1195 = vpop.f32.mrf.mxu0
        %1196 = vmatprep.mubr.bf16.mxu0 0
        %1197 = vmatmul.mubr.bf16.gmra.mxu0 %v1023
        %v1198 = vpop.f32.mrf.mxu0
        %v1199 = vadd.f32 0.0, %v1198
        %v1200 = vpop.f32.mrf.mxu0
        %v1201 = vpop.f32.mrf.mxu0
        %v1202 = vadd.f32 0.0, %v1201
        %v1203 = vpop.f32.mrf.mxu0
        %1204 = vdwg.mxu0
        %v1205 = vadd.f32 %v773, %v1063
        %v1206 = vadd.f32 %v776, %v1066
        %v1207 = vadd.f32 %v781, %v1071
        %v1208 = vadd.f32 %v784, %v1074
        %v1209 = vadd.f32 %v789, %v1079
        %v1210 = vadd.f32 %v792, %v1082
        %v1211 = vadd.f32 %v797, %v1087
        %v1212 = vadd.f32 %v800, %v1090
        %v1213 = vadd.f32 %v805, %v1095
        %v1214 = vadd.f32 %v808, %v1098
        %v1215 = vadd.f32 %v813, %v1103
        %v1216 = vadd.f32 %v816, %v1106
        %v1217 = vadd.f32 %v821, %v1111
        %v1218 = vadd.f32 %v824, %v1114
        %v1219 = vadd.f32 %v829, %v1119
        %v1220 = vadd.f32 %v832, %v1122
        %v1221 = vadd.f32 %v837, %v1127
        %v1222 = vadd.f32 %v840, %v1130
        %v1223 = vadd.f32 %v845, %v1135
        %v1224 = vadd.f32 %v848, %v1138
        %v1225 = vadd.f32 %v853, %v1143
        %v1226 = vadd.f32 %v856, %v1146
        %v1227 = vadd.f32 %v861, %v1151
        %v1228 = vadd.f32 %v864, %v1154
        %v1229 = vadd.f32 %v869, %v1159
        %v1230 = vadd.f32 %v872, %v1162
        %v1231 = vadd.f32 %v877, %v1167
        %v1232 = vadd.f32 %v880, %v1170
        %v1233 = vadd.f32 %v885, %v1175
        %v1234 = vadd.f32 %v888, %v1178
        %v1235 = vadd.f32 %v893, %v1183
        %v1236 = vadd.f32 %v896, %v1186
        %v1237 = vadd.f32 %v901, %v1191
        %v1238 = vadd.f32 %v904, %v1194
        %v1239 = vadd.f32 %v909, %v1199
        %v1240 = vadd.f32 %v912, %v1202
        %v1241 = vld [vmem:[%s329 + $0x12] sm:$0xff]
        %v1242 = vld [vmem:[%s329 + $0x1a] sm:$0xff]
        %v1243 = vld [vmem:[%s329 + $0x22] sm:$0xff]
        %v1244 = vld [vmem:[%s329 + $0x2a] sm:$0xff]
        %v1245 = vld [vmem:[%s329 + $0x32] sm:$0xff]
        %v1246 = vld [vmem:[%s329 + $0x3a] sm:$0xff]
        %v1247 = vld [vmem:[%s329 + $0x42] sm:$0xff]
        %v1248 = vld [vmem:[%s329 + $0x4a] sm:$0xff]
        %v1249 = vld [vmem:[%s329 + $0x52] sm:$0xff]
        %v1250 = vld [vmem:[%s329 + $0x5a] sm:$0xff]
        %v1251 = vld [vmem:[%s329 + $0x62] sm:$0xff]
        %v1252 = vld [vmem:[%s329 + $0x6a] sm:$0xff]
        %v1253 = vld [vmem:[%s329 + $0x72] sm:$0xff]
        %v1254 = vld [vmem:[%s329 + $0x7a] sm:$0xff]
        %v1255 = vld [vmem:[%s329 + $0x82] sm:$0xff]
        %v1256 = vld [vmem:[%s329 + $0x8a] sm:$0xff]
        %v1257 = vld [vmem:[%s329 + $0x92] sm:$0xff]
        %v1258 = vld [vmem:[%s329 + $0x9a] sm:$0xff]
        %v1259 = vld [vmem:[%s329 + $0xa2] sm:$0xff]
        %v1260 = vld [vmem:[%s329 + $0xaa] sm:$0xff]
        %v1261 = vld [vmem:[%s329 + $0xb2] sm:$0xff]
        %v1262 = vld [vmem:[%s329 + $0xba] sm:$0xff]
        %v1263 = vld [vmem:[%s329 + $0xc2] sm:$0xff]
        %v1264 = vld [vmem:[%s329 + $0xca] sm:$0xff]
        %v1265 = vld [vmem:[%s329 + $0xd2] sm:$0xff]
        %v1266 = vld [vmem:[%s329 + $0xda] sm:$0xff]
        %v1267 = vld [vmem:[%s329 + $0xe2] sm:$0xff]
        %v1268 = vld [vmem:[%s329 + $0xea] sm:$0xff]
        %v1269 = vld [vmem:[%s329 + $0xf2] sm:$0xff]
        %v1270 = vld [vmem:[%s329 + $0xfa] sm:$0xff]
        %v1271 = vld [vmem:[%s329 + $0x102] sm:$0xff]
        %v1272 = vld [vmem:[%s329 + $0x10a] sm:$0xff]
        %v1273 = vld [vmem:[%s329 + $0x112] sm:$0xff]
        %v1274 = vld [vmem:[%s329 + $0x11a] sm:$0xff]
        %v1275 = vld [vmem:[%s329 + $0x122] sm:$0xff]
        %v1276 = vld [vmem:[%s329 + $0x12a] sm:$0xff]
        %v1277 = vpack.c.bf16 %v1242, %v1241
        %v1278 = vpack.c.bf16 %v1244, %v1243
        %v1279 = vpack.c.bf16 %v1246, %v1245
        %v1280 = vpack.c.bf16 %v1248, %v1247
        %v1281 = vpack.c.bf16 %v1250, %v1249
        %v1282 = vpack.c.bf16 %v1252, %v1251
        %v1283 = vpack.c.bf16 %v1254, %v1253
        %v1284 = vpack.c.bf16 %v1256, %v1255
        %v1285 = vpack.c.bf16 %v1258, %v1257
        %v1286 = vpack.c.bf16 %v1260, %v1259
        %v1287 = vpack.c.bf16 %v1262, %v1261
        %v1288 = vpack.c.bf16 %v1264, %v1263
        %v1289 = vpack.c.bf16 %v1266, %v1265
        %v1290 = vpack.c.bf16 %v1268, %v1267
        %v1291 = vpack.c.bf16 %v1270, %v1269
        %v1292 = vpack.c.bf16 %v1272, %v1271
        %v1293 = vpack.c.bf16 %v1274, %v1273
        %v1294 = vpack.c.bf16 %v1276, %v1275
        %s1295 = scalar_lea.vmem %s3, 6
        %v1296 = vld [vmem:[%s1295] sm:$0x3]
        %v1298 = vsel %vm442, %v1277, 0
        %v1301 = vsel %vm442, %v1278, 0
        %v1304 = vsel %vm442, %v1279, 0
        %v1307 = vsel %vm442, %v1280, 0
        %v1310 = vsel %vm442, %v1281, 0
        %v1313 = vsel %vm442, %v1282, 0
        %v1316 = vsel %vm442, %v1283, 0
        %v1319 = vsel %vm442, %v1284, 0
        %v1322 = vsel %vm442, %v1285, 0
        %v1325 = vsel %vm442, %v1286, 0
        %v1328 = vsel %vm442, %v1287, 0
        %v1331 = vsel %vm442, %v1288, 0
        %v1334 = vsel %vm442, %v1289, 0
        %v1337 = vsel %vm442, %v1290, 0
        %v1340 = vsel %vm442, %v1291, 0
        %v1343 = vsel %vm442, %v1292, 0
        %v1346 = vsel %vm442, %v1293, 0
        %v1349 = vsel %vm442, %v1294, 0
        %v1352 = vand.u32 %v1296, %v500
        %1354 = vmatprep.subr.bf16.mxu0 0
        %1355 = vmatpush1.bf16.msra.mxu0 0
        %1356 = vmatprep.subr.bf16.mxu0 0
        %1357 = vmatpush1.bf16.msra.mxu0 0
        %1358 = vmatprep.subr.bf16.mxu0 0
        %1359 = vmatpush1.bf16.msra.mxu0 0
        %1360 = vmatprep.subr.bf16.mxu0 0
        %1361 = vmatpush1.bf16.msra.mxu0 0
        %1362 = vmatprep.subr.bf16.mxu0 0
        %1363 = vmatpush1.bf16.msra.mxu0 0
        %1364 = vmatprep.subr.bf16.mxu0 0
        %1365 = vmatpush1.bf16.msra.mxu0 0
        %1366 = vmatprep.subr.bf16.mxu0 0
        %1367 = vmatpush1.bf16.msra.mxu0 0
        %1368 = vmatprep.subr.bf16.mxu0 0
        %1369 = vmatpush1.bf16.msra.mxu0 %v1352
        %1370 = vmatprep.subr.bf16.mxu0 0
        %1371 = vmatpush2.bf16.msra.mxu0 0
        %1372 = vmatprep.subr.bf16.mxu0 0
        %1373 = vmatpush2.bf16.msra.mxu0 0
        %1374 = vmatprep.subr.bf16.mxu0 0
        %1375 = vmatpush2.bf16.msra.mxu0 0
        %1376 = vmatprep.subr.bf16.mxu0 0
        %1377 = vmatpush2.bf16.msra.mxu0 0
        %1378 = vmatprep.subr.bf16.mxu0 0
        %1379 = vmatpush2.bf16.msra.mxu0 0
        %1380 = vmatprep.subr.bf16.mxu0 0
        %1381 = vmatpush2.bf16.msra.mxu0 0
        %1382 = vmatprep.subr.bf16.mxu0 0
        %1383 = vmatpush2.bf16.msra.mxu0 0
        %1384 = vmatprep.subr.bf16.mxu0 0
        %1385 = vmatpush2.bf16.msra.mxu0 0
        %1386 = vmatprep.mubr.bf16.mxu0 0
        %1387 = vmatmul.mubr.bf16.gmra.mxu0 %v1298
        %v1388 = vpop.f32.mrf.mxu0
        %v1389 = vadd.f32 0.0, %v1388
        %v1390 = vpop.f32.mrf.mxu0
        %v1391 = vpop.f32.mrf.mxu0
        %v1392 = vadd.f32 0.0, %v1391
        %v1393 = vpop.f32.mrf.mxu0
        %1394 = vmatprep.mubr.bf16.mxu0 0
        %1395 = vmatmul.mubr.bf16.gmra.mxu0 %v1301
        %v1396 = vpop.f32.mrf.mxu0
        %v1397 = vadd.f32 0.0, %v1396
        %v1398 = vpop.f32.mrf.mxu0
        %v1399 = vpop.f32.mrf.mxu0
        %v1400 = vadd.f32 0.0, %v1399
        %v1401 = vpop.f32.mrf.mxu0
        %1402 = vmatprep.mubr.bf16.mxu0 0
        %1403 = vmatmul.mubr.bf16.gmra.mxu0 %v1304
        %v1404 = vpop.f32.mrf.mxu0
        %v1405 = vadd.f32 0.0, %v1404
        %v1406 = vpop.f32.mrf.mxu0
        %v1407 = vpop.f32.mrf.mxu0
        %v1408 = vadd.f32 0.0, %v1407
        %v1409 = vpop.f32.mrf.mxu0
        %1410 = vmatprep.mubr.bf16.mxu0 0
        %1411 = vmatmul.mubr.bf16.gmra.mxu0 %v1307
        %v1412 = vpop.f32.mrf.mxu0
        %v1413 = vadd.f32 0.0, %v1412
        %v1414 = vpop.f32.mrf.mxu0
        %v1415 = vpop.f32.mrf.mxu0
        %v1416 = vadd.f32 0.0, %v1415
        %v1417 = vpop.f32.mrf.mxu0
        %1418 = vmatprep.mubr.bf16.mxu0 0
        %1419 = vmatmul.mubr.bf16.gmra.mxu0 %v1310
        %v1420 = vpop.f32.mrf.mxu0
        %v1421 = vadd.f32 0.0, %v1420
        %v1422 = vpop.f32.mrf.mxu0
        %v1423 = vpop.f32.mrf.mxu0
        %v1424 = vadd.f32 0.0, %v1423
        %v1425 = vpop.f32.mrf.mxu0
        %1426 = vmatprep.mubr.bf16.mxu0 0
        %1427 = vmatmul.mubr.bf16.gmra.mxu0 %v1313
        %v1428 = vpop.f32.mrf.mxu0
        %v1429 = vadd.f32 0.0, %v1428
        %v1430 = vpop.f32.mrf.mxu0
        %v1431 = vpop.f32.mrf.mxu0
        %v1432 = vadd.f32 0.0, %v1431
        %v1433 = vpop.f32.mrf.mxu0
        %1434 = vmatprep.mubr.bf16.mxu0 0
        %1435 = vmatmul.mubr.bf16.gmra.mxu0 %v1316
        %v1436 = vpop.f32.mrf.mxu0
        %v1437 = vadd.f32 0.0, %v1436
        %v1438 = vpop.f32.mrf.mxu0
        %v1439 = vpop.f32.mrf.mxu0
        %v1440 = vadd.f32 0.0, %v1439
        %v1441 = vpop.f32.mrf.mxu0
        %1442 = vmatprep.mubr.bf16.mxu0 0
        %1443 = vmatmul.mubr.bf16.gmra.mxu0 %v1319
        %v1444 = vpop.f32.mrf.mxu0
        %v1445 = vadd.f32 0.0, %v1444
        %v1446 = vpop.f32.mrf.mxu0
        %v1447 = vpop.f32.mrf.mxu0
        %v1448 = vadd.f32 0.0, %v1447
        %v1449 = vpop.f32.mrf.mxu0
        %1450 = vmatprep.mubr.bf16.mxu0 0
        %1451 = vmatmul.mubr.bf16.gmra.mxu0 %v1322
        %v1452 = vpop.f32.mrf.mxu0
        %v1453 = vadd.f32 0.0, %v1452
        %v1454 = vpop.f32.mrf.mxu0
        %v1455 = vpop.f32.mrf.mxu0
        %v1456 = vadd.f32 0.0, %v1455
        %v1457 = vpop.f32.mrf.mxu0
        %1458 = vmatprep.mubr.bf16.mxu0 0
        %1459 = vmatmul.mubr.bf16.gmra.mxu0 %v1325
        %v1460 = vpop.f32.mrf.mxu0
        %v1461 = vadd.f32 0.0, %v1460
        %v1462 = vpop.f32.mrf.mxu0
        %v1463 = vpop.f32.mrf.mxu0
        %v1464 = vadd.f32 0.0, %v1463
        %v1465 = vpop.f32.mrf.mxu0
        %1466 = vmatprep.mubr.bf16.mxu0 0
        %1467 = vmatmul.mubr.bf16.gmra.mxu0 %v1328
        %v1468 = vpop.f32.mrf.mxu0
        %v1469 = vadd.f32 0.0, %v1468
        %v1470 = vpop.f32.mrf.mxu0
        %v1471 = vpop.f32.mrf.mxu0
        %v1472 = vadd.f32 0.0, %v1471
        %v1473 = vpop.f32.mrf.mxu0
        %1474 = vmatprep.mubr.bf16.mxu0 0
        %1475 = vmatmul.mubr.bf16.gmra.mxu0 %v1331
        %v1476 = vpop.f32.mrf.mxu0
        %v1477 = vadd.f32 0.0, %v1476
        %v1478 = vpop.f32.mrf.mxu0
        %v1479 = vpop.f32.mrf.mxu0
        %v1480 = vadd.f32 0.0, %v1479
        %v1481 = vpop.f32.mrf.mxu0
        %1482 = vmatprep.mubr.bf16.mxu0 0
        %1483 = vmatmul.mubr.bf16.gmra.mxu0 %v1334
        %v1484 = vpop.f32.mrf.mxu0
        %v1485 = vadd.f32 0.0, %v1484
        %v1486 = vpop.f32.mrf.mxu0
        %v1487 = vpop.f32.mrf.mxu0
        %v1488 = vadd.f32 0.0, %v1487
        %v1489 = vpop.f32.mrf.mxu0
        %1490 = vmatprep.mubr.bf16.mxu0 0
        %1491 = vmatmul.mubr.bf16.gmra.mxu0 %v1337
        %v1492 = vpop.f32.mrf.mxu0
        %v1493 = vadd.f32 0.0, %v1492
        %v1494 = vpop.f32.mrf.mxu0
        %v1495 = vpop.f32.mrf.mxu0
        %v1496 = vadd.f32 0.0, %v1495
        %v1497 = vpop.f32.mrf.mxu0
        %1498 = vmatprep.mubr.bf16.mxu0 0
        %1499 = vmatmul.mubr.bf16.gmra.mxu0 %v1340
        %v1500 = vpop.f32.mrf.mxu0
        %v1501 = vadd.f32 0.0, %v1500
        %v1502 = vpop.f32.mrf.mxu0
        %v1503 = vpop.f32.mrf.mxu0
        %v1504 = vadd.f32 0.0, %v1503
        %v1505 = vpop.f32.mrf.mxu0
        %1506 = vmatprep.mubr.bf16.mxu0 0
        %1507 = vmatmul.mubr.bf16.gmra.mxu0 %v1343
        %v1508 = vpop.f32.mrf.mxu0
        %v1509 = vadd.f32 0.0, %v1508
        %v1510 = vpop.f32.mrf.mxu0
        %v1511 = vpop.f32.mrf.mxu0
        %v1512 = vadd.f32 0.0, %v1511
        %v1513 = vpop.f32.mrf.mxu0
        %1514 = vmatprep.mubr.bf16.mxu0 0
        %1515 = vmatmul.mubr.bf16.gmra.mxu0 %v1346
        %v1516 = vpop.f32.mrf.mxu0
        %v1517 = vadd.f32 0.0, %v1516
        %v1518 = vpop.f32.mrf.mxu0
        %v1519 = vpop.f32.mrf.mxu0
        %v1520 = vadd.f32 0.0, %v1519
        %v1521 = vpop.f32.mrf.mxu0
        %1522 = vmatprep.mubr.bf16.mxu0 0
        %1523 = vmatmul.mubr.bf16.gmra.mxu0 %v1349
        %v1524 = vpop.f32.mrf.mxu0
        %v1525 = vadd.f32 0.0, %v1524
        %v1526 = vpop.f32.mrf.mxu0
        %v1527 = vpop.f32.mrf.mxu0
        %v1528 = vadd.f32 0.0, %v1527
        %v1529 = vpop.f32.mrf.mxu0
        %1530 = vdwg.mxu0
        %v1531 = vadd.f32 %v1205, %v1389
        %v1532 = vadd.f32 %v1206, %v1392
        %v1533 = vadd.f32 %v1207, %v1397
        %v1534 = vadd.f32 %v1208, %v1400
        %v1535 = vadd.f32 %v1209, %v1405
        %v1536 = vadd.f32 %v1210, %v1408
        %v1537 = vadd.f32 %v1211, %v1413
        %v1538 = vadd.f32 %v1212, %v1416
        %v1539 = vadd.f32 %v1213, %v1421
        %v1540 = vadd.f32 %v1214, %v1424
        %v1541 = vadd.f32 %v1215, %v1429
        %v1542 = vadd.f32 %v1216, %v1432
        %v1543 = vadd.f32 %v1217, %v1437
        %v1544 = vadd.f32 %v1218, %v1440
        %v1545 = vadd.f32 %v1219, %v1445
        %v1546 = vadd.f32 %v1220, %v1448
        %v1547 = vadd.f32 %v1221, %v1453
        %v1548 = vadd.f32 %v1222, %v1456
        %v1549 = vadd.f32 %v1223, %v1461
        %v1550 = vadd.f32 %v1224, %v1464
        %v1551 = vadd.f32 %v1225, %v1469
        %v1552 = vadd.f32 %v1226, %v1472
        %v1553 = vadd.f32 %v1227, %v1477
        %v1554 = vadd.f32 %v1228, %v1480
        %v1555 = vadd.f32 %v1229, %v1485
        %v1556 = vadd.f32 %v1230, %v1488
        %v1557 = vadd.f32 %v1231, %v1493
        %v1558 = vadd.f32 %v1232, %v1496
        %v1559 = vadd.f32 %v1233, %v1501
        %v1560 = vadd.f32 %v1234, %v1504
        %v1561 = vadd.f32 %v1235, %v1509
        %v1562 = vadd.f32 %v1236, %v1512
        %v1563 = vadd.f32 %v1237, %v1517
        %v1564 = vadd.f32 %v1238, %v1520
        %v1565 = vadd.f32 %v1239, %v1525
        %v1566 = vadd.f32 %v1240, %v1528
        %v1567 = vld [vmem:[%s329 + $0x13] sm:$0xff]
        %v1568 = vld [vmem:[%s329 + $0x1b] sm:$0xff]
        %v1569 = vld [vmem:[%s329 + $0x23] sm:$0xff]
        %v1570 = vld [vmem:[%s329 + $0x2b] sm:$0xff]
        %v1571 = vld [vmem:[%s329 + $0x33] sm:$0xff]
        %v1572 = vld [vmem:[%s329 + $0x3b] sm:$0xff]
        %v1573 = vld [vmem:[%s329 + $0x43] sm:$0xff]
        %v1574 = vld [vmem:[%s329 + $0x4b] sm:$0xff]
        %v1575 = vld [vmem:[%s329 + $0x53] sm:$0xff]
        %v1576 = vld [vmem:[%s329 + $0x5b] sm:$0xff]
        %v1577 = vld [vmem:[%s329 + $0x63] sm:$0xff]
        %v1578 = vld [vmem:[%s329 + $0x6b] sm:$0xff]
        %v1579 = vld [vmem:[%s329 + $0x73] sm:$0xff]
        %v1580 = vld [vmem:[%s329 + $0x7b] sm:$0xff]
        %v1581 = vld [vmem:[%s329 + $0x83] sm:$0xff]
        %v1582 = vld [vmem:[%s329 + $0x8b] sm:$0xff]
        %v1583 = vld [vmem:[%s329 + $0x93] sm:$0xff]
        %v1584 = vld [vmem:[%s329 + $0x9b] sm:$0xff]
        %v1585 = vld [vmem:[%s329 + $0xa3] sm:$0xff]
        %v1586 = vld [vmem:[%s329 + $0xab] sm:$0xff]
        %v1587 = vld [vmem:[%s329 + $0xb3] sm:$0xff]
        %v1588 = vld [vmem:[%s329 + $0xbb] sm:$0xff]
        %v1589 = vld [vmem:[%s329 + $0xc3] sm:$0xff]
        %v1590 = vld [vmem:[%s329 + $0xcb] sm:$0xff]
        %v1591 = vld [vmem:[%s329 + $0xd3] sm:$0xff]
        %v1592 = vld [vmem:[%s329 + $0xdb] sm:$0xff]
        %v1593 = vld [vmem:[%s329 + $0xe3] sm:$0xff]
        %v1594 = vld [vmem:[%s329 + $0xeb] sm:$0xff]
        %v1595 = vld [vmem:[%s329 + $0xf3] sm:$0xff]
        %v1596 = vld [vmem:[%s329 + $0xfb] sm:$0xff]
        %v1597 = vld [vmem:[%s329 + $0x103] sm:$0xff]
        %v1598 = vld [vmem:[%s329 + $0x10b] sm:$0xff]
        %v1599 = vld [vmem:[%s329 + $0x113] sm:$0xff]
        %v1600 = vld [vmem:[%s329 + $0x11b] sm:$0xff]
        %v1601 = vld [vmem:[%s329 + $0x123] sm:$0xff]
        %v1602 = vld [vmem:[%s329 + $0x12b] sm:$0xff]
        %v1603 = vpack.c.bf16 %v1568, %v1567
        %v1604 = vpack.c.bf16 %v1570, %v1569
        %v1605 = vpack.c.bf16 %v1572, %v1571
        %v1606 = vpack.c.bf16 %v1574, %v1573
        %v1607 = vpack.c.bf16 %v1576, %v1575
        %v1608 = vpack.c.bf16 %v1578, %v1577
        %v1609 = vpack.c.bf16 %v1580, %v1579
        %v1610 = vpack.c.bf16 %v1582, %v1581
        %v1611 = vpack.c.bf16 %v1584, %v1583
        %v1612 = vpack.c.bf16 %v1586, %v1585
        %v1613 = vpack.c.bf16 %v1588, %v1587
        %v1614 = vpack.c.bf16 %v1590, %v1589
        %v1615 = vpack.c.bf16 %v1592, %v1591
        %v1616 = vpack.c.bf16 %v1594, %v1593
        %v1617 = vpack.c.bf16 %v1596, %v1595
        %v1618 = vpack.c.bf16 %v1598, %v1597
        %v1619 = vpack.c.bf16 %v1600, %v1599
        %v1620 = vpack.c.bf16 %v1602, %v1601
        %s1621 = scalar_lea.vmem %s3, 8
        %v1622 = vld [vmem:[%s1621] sm:$0x3]
        %v1624 = vsel %vm442, %v1603, 0
        %v1627 = vsel %vm442, %v1604, 0
        %v1630 = vsel %vm442, %v1605, 0
        %v1633 = vsel %vm442, %v1606, 0
        %v1636 = vsel %vm442, %v1607, 0
        %v1639 = vsel %vm442, %v1608, 0
        %v1642 = vsel %vm442, %v1609, 0
        %v1645 = vsel %vm442, %v1610, 0
        %v1648 = vsel %vm442, %v1611, 0
        %v1651 = vsel %vm442, %v1612, 0
        %v1654 = vsel %vm442, %v1613, 0
        %v1657 = vsel %vm442, %v1614, 0
        %v1660 = vsel %vm442, %v1615, 0
        %v1663 = vsel %vm442, %v1616, 0
        %v1666 = vsel %vm442, %v1617, 0
        %v1669 = vsel %vm442, %v1618, 0
        %v1672 = vsel %vm442, %v1619, 0
        %v1675 = vsel %vm442, %v1620, 0
        %v1678 = vand.u32 %v1622, %v500
        %1680 = vmatprep.subr.bf16.mxu0 0
        %1681 = vmatpush1.bf16.msra.mxu0 0
        %1682 = vmatprep.subr.bf16.mxu0 0
        %1683 = vmatpush1.bf16.msra.mxu0 0
        %1684 = vmatprep.subr.bf16.mxu0 0
        %1685 = vmatpush1.bf16.msra.mxu0 0
        %1686 = vmatprep.subr.bf16.mxu0 0
        %1687 = vmatpush1.bf16.msra.mxu0 0
        %1688 = vmatprep.subr.bf16.mxu0 0
        %1689 = vmatpush1.bf16.msra.mxu0 0
        %1690 = vmatprep.subr.bf16.mxu0 0
        %1691 = vmatpush1.bf16.msra.mxu0 0
        %1692 = vmatprep.subr.bf16.mxu0 0
        %1693 = vmatpush1.bf16.msra.mxu0 0
        %1694 = vmatprep.subr.bf16.mxu0 0
        %1695 = vmatpush1.bf16.msra.mxu0 %v1678
        %1696 = vmatprep.subr.bf16.mxu0 0
        %1697 = vmatpush2.bf16.msra.mxu0 0
        %1698 = vmatprep.subr.bf16.mxu0 0
        %1699 = vmatpush2.bf16.msra.mxu0 0
        %1700 = vmatprep.subr.bf16.mxu0 0
        %1701 = vmatpush2.bf16.msra.mxu0 0
        %1702 = vmatprep.subr.bf16.mxu0 0
        %1703 = vmatpush2.bf16.msra.mxu0 0
        %1704 = vmatprep.subr.bf16.mxu0 0
        %1705 = vmatpush2.bf16.msra.mxu0 0
        %1706 = vmatprep.subr.bf16.mxu0 0
        %1707 = vmatpush2.bf16.msra.mxu0 0
        %1708 = vmatprep.subr.bf16.mxu0 0
        %1709 = vmatpush2.bf16.msra.mxu0 0
        %1710 = vmatprep.subr.bf16.mxu0 0
        %1711 = vmatpush2.bf16.msra.mxu0 0
        %1712 = vmatprep.mubr.bf16.mxu0 0
        %1713 = vmatmul.mubr.bf16.gmra.mxu0 %v1624
        %v1714 = vpop.f32.mrf.mxu0
        %v1715 = vadd.f32 0.0, %v1714
        %v1716 = vpop.f32.mrf.mxu0
        %v1717 = vpop.f32.mrf.mxu0
        %v1718 = vadd.f32 0.0, %v1717
        %v1719 = vpop.f32.mrf.mxu0
        %1720 = vmatprep.mubr.bf16.mxu0 0
        %1721 = vmatmul.mubr.bf16.gmra.mxu0 %v1627
        %v1722 = vpop.f32.mrf.mxu0
        %v1723 = vadd.f32 0.0, %v1722
        %v1724 = vpop.f32.mrf.mxu0
        %v1725 = vpop.f32.mrf.mxu0
        %v1726 = vadd.f32 0.0, %v1725
        %v1727 = vpop.f32.mrf.mxu0
        %1728 = vmatprep.mubr.bf16.mxu0 0
        %1729 = vmatmul.mubr.bf16.gmra.mxu0 %v1630
        %v1730 = vpop.f32.mrf.mxu0
        %v1731 = vadd.f32 0.0, %v1730
        %v1732 = vpop.f32.mrf.mxu0
        %v1733 = vpop.f32.mrf.mxu0
        %v1734 = vadd.f32 0.0, %v1733
        %v1735 = vpop.f32.mrf.mxu0
        %1736 = vmatprep.mubr.bf16.mxu0 0
        %1737 = vmatmul.mubr.bf16.gmra.mxu0 %v1633
        %v1738 = vpop.f32.mrf.mxu0
        %v1739 = vadd.f32 0.0, %v1738
        %v1740 = vpop.f32.mrf.mxu0
        %v1741 = vpop.f32.mrf.mxu0
        %v1742 = vadd.f32 0.0, %v1741
        %v1743 = vpop.f32.mrf.mxu0
        %1744 = vmatprep.mubr.bf16.mxu0 0
        %1745 = vmatmul.mubr.bf16.gmra.mxu0 %v1636
        %v1746 = vpop.f32.mrf.mxu0
        %v1747 = vadd.f32 0.0, %v1746
        %v1748 = vpop.f32.mrf.mxu0
        %v1749 = vpop.f32.mrf.mxu0
        %v1750 = vadd.f32 0.0, %v1749
        %v1751 = vpop.f32.mrf.mxu0
        %1752 = vmatprep.mubr.bf16.mxu0 0
        %1753 = vmatmul.mubr.bf16.gmra.mxu0 %v1639
        %v1754 = vpop.f32.mrf.mxu0
        %v1755 = vadd.f32 0.0, %v1754
        %v1756 = vpop.f32.mrf.mxu0
        %v1757 = vpop.f32.mrf.mxu0
        %v1758 = vadd.f32 0.0, %v1757
        %v1759 = vpop.f32.mrf.mxu0
        %1760 = vmatprep.mubr.bf16.mxu0 0
        %1761 = vmatmul.mubr.bf16.gmra.mxu0 %v1642
        %v1762 = vpop.f32.mrf.mxu0
        %v1763 = vadd.f32 0.0, %v1762
        %v1764 = vpop.f32.mrf.mxu0
        %v1765 = vpop.f32.mrf.mxu0
        %v1766 = vadd.f32 0.0, %v1765
        %v1767 = vpop.f32.mrf.mxu0
        %1768 = vmatprep.mubr.bf16.mxu0 0
        %1769 = vmatmul.mubr.bf16.gmra.mxu0 %v1645
        %v1770 = vpop.f32.mrf.mxu0
        %v1771 = vadd.f32 0.0, %v1770
        %v1772 = vpop.f32.mrf.mxu0
        %v1773 = vpop.f32.mrf.mxu0
        %v1774 = vadd.f32 0.0, %v1773
        %v1775 = vpop.f32.mrf.mxu0
        %1776 = vmatprep.mubr.bf16.mxu0 0
        %1777 = vmatmul.mubr.bf16.gmra.mxu0 %v1648
        %v1778 = vpop.f32.mrf.mxu0
        %v1779 = vadd.f32 0.0, %v1778
        %v1780 = vpop.f32.mrf.mxu0
        %v1781 = vpop.f32.mrf.mxu0
        %v1782 = vadd.f32 0.0, %v1781
        %v1783 = vpop.f32.mrf.mxu0
        %1784 = vmatprep.mubr.bf16.mxu0 0
        %1785 = vmatmul.mubr.bf16.gmra.mxu0 %v1651
        %v1786 = vpop.f32.mrf.mxu0
        %v1787 = vadd.f32 0.0, %v1786
        %v1788 = vpop.f32.mrf.mxu0
        %v1789 = vpop.f32.mrf.mxu0
        %v1790 = vadd.f32 0.0, %v1789
        %v1791 = vpop.f32.mrf.mxu0
        %1792 = vmatprep.mubr.bf16.mxu0 0
        %1793 = vmatmul.mubr.bf16.gmra.mxu0 %v1654
        %v1794 = vpop.f32.mrf.mxu0
        %v1795 = vadd.f32 0.0, %v1794
        %v1796 = vpop.f32.mrf.mxu0
        %v1797 = vpop.f32.mrf.mxu0
        %v1798 = vadd.f32 0.0, %v1797
        %v1799 = vpop.f32.mrf.mxu0
        %1800 = vmatprep.mubr.bf16.mxu0 0
        %1801 = vmatmul.mubr.bf16.gmra.mxu0 %v1657
        %v1802 = vpop.f32.mrf.mxu0
        %v1803 = vadd.f32 0.0, %v1802
        %v1804 = vpop.f32.mrf.mxu0
        %v1805 = vpop.f32.mrf.mxu0
        %v1806 = vadd.f32 0.0, %v1805
        %v1807 = vpop.f32.mrf.mxu0
        %1808 = vmatprep.mubr.bf16.mxu0 0
        %1809 = vmatmul.mubr.bf16.gmra.mxu0 %v1660
        %v1810 = vpop.f32.mrf.mxu0
        %v1811 = vadd.f32 0.0, %v1810
        %v1812 = vpop.f32.mrf.mxu0
        %v1813 = vpop.f32.mrf.mxu0
        %v1814 = vadd.f32 0.0, %v1813
        %v1815 = vpop.f32.mrf.mxu0
        %1816 = vmatprep.mubr.bf16.mxu0 0
        %1817 = vmatmul.mubr.bf16.gmra.mxu0 %v1663
        %v1818 = vpop.f32.mrf.mxu0
        %v1819 = vadd.f32 0.0, %v1818
        %v1820 = vpop.f32.mrf.mxu0
        %v1821 = vpop.f32.mrf.mxu0
        %v1822 = vadd.f32 0.0, %v1821
        %v1823 = vpop.f32.mrf.mxu0
        %1824 = vmatprep.mubr.bf16.mxu0 0
        %1825 = vmatmul.mubr.bf16.gmra.mxu0 %v1666
        %v1826 = vpop.f32.mrf.mxu0
        %v1827 = vadd.f32 0.0, %v1826
        %v1828 = vpop.f32.mrf.mxu0
        %v1829 = vpop.f32.mrf.mxu0
        %v1830 = vadd.f32 0.0, %v1829
        %v1831 = vpop.f32.mrf.mxu0
        %1832 = vmatprep.mubr.bf16.mxu0 0
        %1833 = vmatmul.mubr.bf16.gmra.mxu0 %v1669
        %v1834 = vpop.f32.mrf.mxu0
        %v1835 = vadd.f32 0.0, %v1834
        %v1836 = vpop.f32.mrf.mxu0
        %v1837 = vpop.f32.mrf.mxu0
        %v1838 = vadd.f32 0.0, %v1837
        %v1839 = vpop.f32.mrf.mxu0
        %1840 = vmatprep.mubr.bf16.mxu0 0
        %1841 = vmatmul.mubr.bf16.gmra.mxu0 %v1672
        %v1842 = vpop.f32.mrf.mxu0
        %v1843 = vadd.f32 0.0, %v1842
        %v1844 = vpop.f32.mrf.mxu0
        %v1845 = vpop.f32.mrf.mxu0
        %v1846 = vadd.f32 0.0, %v1845
        %v1847 = vpop.f32.mrf.mxu0
        %1848 = vmatprep.mubr.bf16.mxu0 0
        %1849 = vmatmul.mubr.bf16.gmra.mxu0 %v1675
        %v1850 = vpop.f32.mrf.mxu0
        %v1851 = vadd.f32 0.0, %v1850
        %v1852 = vpop.f32.mrf.mxu0
        %v1853 = vpop.f32.mrf.mxu0
        %v1854 = vadd.f32 0.0, %v1853
        %v1855 = vpop.f32.mrf.mxu0
        %1856 = vdwg.mxu0
        %v1857 = vadd.f32 %v1531, %v1715
        %v1858 = vadd.f32 %v1532, %v1718
        %v1859 = vadd.f32 %v1533, %v1723
        %v1860 = vadd.f32 %v1534, %v1726
        %v1861 = vadd.f32 %v1535, %v1731
        %v1862 = vadd.f32 %v1536, %v1734
        %v1863 = vadd.f32 %v1537, %v1739
        %v1864 = vadd.f32 %v1538, %v1742
        %v1865 = vadd.f32 %v1539, %v1747
        %v1866 = vadd.f32 %v1540, %v1750
        %v1867 = vadd.f32 %v1541, %v1755
        %v1868 = vadd.f32 %v1542, %v1758
        %v1869 = vadd.f32 %v1543, %v1763
        %v1870 = vadd.f32 %v1544, %v1766
        %v1871 = vadd.f32 %v1545, %v1771
        %v1872 = vadd.f32 %v1546, %v1774
        %v1873 = vadd.f32 %v1547, %v1779
        %v1874 = vadd.f32 %v1548, %v1782
        %v1875 = vadd.f32 %v1549, %v1787
        %v1876 = vadd.f32 %v1550, %v1790
        %v1877 = vadd.f32 %v1551, %v1795
        %v1878 = vadd.f32 %v1552, %v1798
        %v1879 = vadd.f32 %v1553, %v1803
        %v1880 = vadd.f32 %v1554, %v1806
        %v1881 = vadd.f32 %v1555, %v1811
        %v1882 = vadd.f32 %v1556, %v1814
        %v1883 = vadd.f32 %v1557, %v1819
        %v1884 = vadd.f32 %v1558, %v1822
        %v1885 = vadd.f32 %v1559, %v1827
        %v1886 = vadd.f32 %v1560, %v1830
        %v1887 = vadd.f32 %v1561, %v1835
        %v1888 = vadd.f32 %v1562, %v1838
        %v1889 = vadd.f32 %v1563, %v1843
        %v1890 = vadd.f32 %v1564, %v1846
        %v1891 = vadd.f32 %v1565, %v1851
        %v1892 = vadd.f32 %v1566, %v1854
        %v1893 = vld [vmem:[%s329 + $0x14] sm:$0xff]
        %v1894 = vld [vmem:[%s329 + $0x1c] sm:$0xff]
        %v1895 = vld [vmem:[%s329 + $0x24] sm:$0xff]
        %v1896 = vld [vmem:[%s329 + $0x2c] sm:$0xff]
        %v1897 = vld [vmem:[%s329 + $0x34] sm:$0xff]
        %v1898 = vld [vmem:[%s329 + $0x3c] sm:$0xff]
        %v1899 = vld [vmem:[%s329 + $0x44] sm:$0xff]
        %v1900 = vld [vmem:[%s329 + $0x4c] sm:$0xff]
        %v1901 = vld [vmem:[%s329 + $0x54] sm:$0xff]
        %v1902 = vld [vmem:[%s329 + $0x5c] sm:$0xff]
        %v1903 = vld [vmem:[%s329 + $0x64] sm:$0xff]
        %v1904 = vld [vmem:[%s329 + $0x6c] sm:$0xff]
        %v1905 = vld [vmem:[%s329 + $0x74] sm:$0xff]
        %v1906 = vld [vmem:[%s329 + $0x7c] sm:$0xff]
        %v1907 = vld [vmem:[%s329 + $0x84] sm:$0xff]
        %v1908 = vld [vmem:[%s329 + $0x8c] sm:$0xff]
        %v1909 = vld [vmem:[%s329 + $0x94] sm:$0xff]
        %v1910 = vld [vmem:[%s329 + $0x9c] sm:$0xff]
        %v1911 = vld [vmem:[%s329 + $0xa4] sm:$0xff]
        %v1912 = vld [vmem:[%s329 + $0xac] sm:$0xff]
        %v1913 = vld [vmem:[%s329 + $0xb4] sm:$0xff]
        %v1914 = vld [vmem:[%s329 + $0xbc] sm:$0xff]
        %v1915 = vld [vmem:[%s329 + $0xc4] sm:$0xff]
        %v1916 = vld [vmem:[%s329 + $0xcc] sm:$0xff]
        %v1917 = vld [vmem:[%s329 + $0xd4] sm:$0xff]
        %v1918 = vld [vmem:[%s329 + $0xdc] sm:$0xff]
        %v1919 = vld [vmem:[%s329 + $0xe4] sm:$0xff]
        %v1920 = vld [vmem:[%s329 + $0xec] sm:$0xff]
        %v1921 = vld [vmem:[%s329 + $0xf4] sm:$0xff]
        %v1922 = vld [vmem:[%s329 + $0xfc] sm:$0xff]
        %v1923 = vld [vmem:[%s329 + $0x104] sm:$0xff]
        %v1924 = vld [vmem:[%s329 + $0x10c] sm:$0xff]
        %v1925 = vld [vmem:[%s329 + $0x114] sm:$0xff]
        %v1926 = vld [vmem:[%s329 + $0x11c] sm:$0xff]
        %v1927 = vld [vmem:[%s329 + $0x124] sm:$0xff]
        %v1928 = vld [vmem:[%s329 + $0x12c] sm:$0xff]
        %v1929 = vpack.c.bf16 %v1894, %v1893
        %v1930 = vpack.c.bf16 %v1896, %v1895
        %v1931 = vpack.c.bf16 %v1898, %v1897
        %v1932 = vpack.c.bf16 %v1900, %v1899
        %v1933 = vpack.c.bf16 %v1902, %v1901
        %v1934 = vpack.c.bf16 %v1904, %v1903
        %v1935 = vpack.c.bf16 %v1906, %v1905
        %v1936 = vpack.c.bf16 %v1908, %v1907
        %v1937 = vpack.c.bf16 %v1910, %v1909
        %v1938 = vpack.c.bf16 %v1912, %v1911
        %v1939 = vpack.c.bf16 %v1914, %v1913
        %v1940 = vpack.c.bf16 %v1916, %v1915
        %v1941 = vpack.c.bf16 %v1918, %v1917
        %v1942 = vpack.c.bf16 %v1920, %v1919
        %v1943 = vpack.c.bf16 %v1922, %v1921
        %v1944 = vpack.c.bf16 %v1924, %v1923
        %v1945 = vpack.c.bf16 %v1926, %v1925
        %v1946 = vpack.c.bf16 %v1928, %v1927
        %s1947 = scalar_lea.vmem %s3, 10
        %v1948 = vld [vmem:[%s1947] sm:$0x3]
        %v1950 = vsel %vm442, %v1929, 0
        %v1953 = vsel %vm442, %v1930, 0
        %v1956 = vsel %vm442, %v1931, 0
        %v1959 = vsel %vm442, %v1932, 0
        %v1962 = vsel %vm442, %v1933, 0
        %v1965 = vsel %vm442, %v1934, 0
        %v1968 = vsel %vm442, %v1935, 0
        %v1971 = vsel %vm442, %v1936, 0
        %v1974 = vsel %vm442, %v1937, 0
        %v1977 = vsel %vm442, %v1938, 0
        %v1980 = vsel %vm442, %v1939, 0
        %v1983 = vsel %vm442, %v1940, 0
        %v1986 = vsel %vm442, %v1941, 0
        %v1989 = vsel %vm442, %v1942, 0
        %v1992 = vsel %vm442, %v1943, 0
        %v1995 = vsel %vm442, %v1944, 0
        %v1998 = vsel %vm442, %v1945, 0
        %v2001 = vsel %vm442, %v1946, 0
        %v2004 = vand.u32 %v1948, %v500
        %2006 = vmatprep.subr.bf16.mxu0 0
        %2007 = vmatpush1.bf16.msra.mxu0 0
        %2008 = vmatprep.subr.bf16.mxu0 0
        %2009 = vmatpush1.bf16.msra.mxu0 0
        %2010 = vmatprep.subr.bf16.mxu0 0
        %2011 = vmatpush1.bf16.msra.mxu0 0
        %2012 = vmatprep.subr.bf16.mxu0 0
        %2013 = vmatpush1.bf16.msra.mxu0 0
        %2014 = vmatprep.subr.bf16.mxu0 0
        %2015 = vmatpush1.bf16.msra.mxu0 0
        %2016 = vmatprep.subr.bf16.mxu0 0
        %2017 = vmatpush1.bf16.msra.mxu0 0
        %2018 = vmatprep.subr.bf16.mxu0 0
        %2019 = vmatpush1.bf16.msra.mxu0 0
        %2020 = vmatprep.subr.bf16.mxu0 0
        %2021 = vmatpush1.bf16.msra.mxu0 %v2004
        %2022 = vmatprep.subr.bf16.mxu0 0
        %2023 = vmatpush2.bf16.msra.mxu0 0
        %2024 = vmatprep.subr.bf16.mxu0 0
        %2025 = vmatpush2.bf16.msra.mxu0 0
        %2026 = vmatprep.subr.bf16.mxu0 0
        %2027 = vmatpush2.bf16.msra.mxu0 0
        %2028 = vmatprep.subr.bf16.mxu0 0
        %2029 = vmatpush2.bf16.msra.mxu0 0
        %2030 = vmatprep.subr.bf16.mxu0 0
        %2031 = vmatpush2.bf16.msra.mxu0 0
        %2032 = vmatprep.subr.bf16.mxu0 0
        %2033 = vmatpush2.bf16.msra.mxu0 0
        %2034 = vmatprep.subr.bf16.mxu0 0
        %2035 = vmatpush2.bf16.msra.mxu0 0
        %2036 = vmatprep.subr.bf16.mxu0 0
        %2037 = vmatpush2.bf16.msra.mxu0 0
        %2038 = vmatprep.mubr.bf16.mxu0 0
        %2039 = vmatmul.mubr.bf16.gmra.mxu0 %v1950
        %v2040 = vpop.f32.mrf.mxu0
        %v2041 = vadd.f32 0.0, %v2040
        %v2042 = vpop.f32.mrf.mxu0
        %v2043 = vpop.f32.mrf.mxu0
        %v2044 = vadd.f32 0.0, %v2043
        %v2045 = vpop.f32.mrf.mxu0
        %2046 = vmatprep.mubr.bf16.mxu0 0
        %2047 = vmatmul.mubr.bf16.gmra.mxu0 %v1953
        %v2048 = vpop.f32.mrf.mxu0
        %v2049 = vadd.f32 0.0, %v2048
        %v2050 = vpop.f32.mrf.mxu0
        %v2051 = vpop.f32.mrf.mxu0
        %v2052 = vadd.f32 0.0, %v2051
        %v2053 = vpop.f32.mrf.mxu0
        %2054 = vmatprep.mubr.bf16.mxu0 0
        %2055 = vmatmul.mubr.bf16.gmra.mxu0 %v1956
        %v2056 = vpop.f32.mrf.mxu0
        %v2057 = vadd.f32 0.0, %v2056
        %v2058 = vpop.f32.mrf.mxu0
        %v2059 = vpop.f32.mrf.mxu0
        %v2060 = vadd.f32 0.0, %v2059
        %v2061 = vpop.f32.mrf.mxu0
        %2062 = vmatprep.mubr.bf16.mxu0 0
        %2063 = vmatmul.mubr.bf16.gmra.mxu0 %v1959
        %v2064 = vpop.f32.mrf.mxu0
        %v2065 = vadd.f32 0.0, %v2064
        %v2066 = vpop.f32.mrf.mxu0
        %v2067 = vpop.f32.mrf.mxu0
        %v2068 = vadd.f32 0.0, %v2067
        %v2069 = vpop.f32.mrf.mxu0
        %2070 = vmatprep.mubr.bf16.mxu0 0
        %2071 = vmatmul.mubr.bf16.gmra.mxu0 %v1962
        %v2072 = vpop.f32.mrf.mxu0
        %v2073 = vadd.f32 0.0, %v2072
        %v2074 = vpop.f32.mrf.mxu0
        %v2075 = vpop.f32.mrf.mxu0
        %v2076 = vadd.f32 0.0, %v2075
        %v2077 = vpop.f32.mrf.mxu0
        %2078 = vmatprep.mubr.bf16.mxu0 0
        %2079 = vmatmul.mubr.bf16.gmra.mxu0 %v1965
        %v2080 = vpop.f32.mrf.mxu0
        %v2081 = vadd.f32 0.0, %v2080
        %v2082 = vpop.f32.mrf.mxu0
        %v2083 = vpop.f32.mrf.mxu0
        %v2084 = vadd.f32 0.0, %v2083
        %v2085 = vpop.f32.mrf.mxu0
        %2086 = vmatprep.mubr.bf16.mxu0 0
        %2087 = vmatmul.mubr.bf16.gmra.mxu0 %v1968
        %v2088 = vpop.f32.mrf.mxu0
        %v2089 = vadd.f32 0.0, %v2088
        %v2090 = vpop.f32.mrf.mxu0
        %v2091 = vpop.f32.mrf.mxu0
        %v2092 = vadd.f32 0.0, %v2091
        %v2093 = vpop.f32.mrf.mxu0
        %2094 = vmatprep.mubr.bf16.mxu0 0
        %2095 = vmatmul.mubr.bf16.gmra.mxu0 %v1971
        %v2096 = vpop.f32.mrf.mxu0
        %v2097 = vadd.f32 0.0, %v2096
        %v2098 = vpop.f32.mrf.mxu0
        %v2099 = vpop.f32.mrf.mxu0
        %v2100 = vadd.f32 0.0, %v2099
        %v2101 = vpop.f32.mrf.mxu0
        %2102 = vmatprep.mubr.bf16.mxu0 0
        %2103 = vmatmul.mubr.bf16.gmra.mxu0 %v1974
        %v2104 = vpop.f32.mrf.mxu0
        %v2105 = vadd.f32 0.0, %v2104
        %v2106 = vpop.f32.mrf.mxu0
        %v2107 = vpop.f32.mrf.mxu0
        %v2108 = vadd.f32 0.0, %v2107
        %v2109 = vpop.f32.mrf.mxu0
        %2110 = vmatprep.mubr.bf16.mxu0 0
        %2111 = vmatmul.mubr.bf16.gmra.mxu0 %v1977
        %v2112 = vpop.f32.mrf.mxu0
        %v2113 = vadd.f32 0.0, %v2112
        %v2114 = vpop.f32.mrf.mxu0
        %v2115 = vpop.f32.mrf.mxu0
        %v2116 = vadd.f32 0.0, %v2115
        %v2117 = vpop.f32.mrf.mxu0
        %2118 = vmatprep.mubr.bf16.mxu0 0
        %2119 = vmatmul.mubr.bf16.gmra.mxu0 %v1980
        %v2120 = vpop.f32.mrf.mxu0
        %v2121 = vadd.f32 0.0, %v2120
        %v2122 = vpop.f32.mrf.mxu0
        %v2123 = vpop.f32.mrf.mxu0
        %v2124 = vadd.f32 0.0, %v2123
        %v2125 = vpop.f32.mrf.mxu0
        %2126 = vmatprep.mubr.bf16.mxu0 0
        %2127 = vmatmul.mubr.bf16.gmra.mxu0 %v1983
        %v2128 = vpop.f32.mrf.mxu0
        %v2129 = vadd.f32 0.0, %v2128
        %v2130 = vpop.f32.mrf.mxu0
        %v2131 = vpop.f32.mrf.mxu0
        %v2132 = vadd.f32 0.0, %v2131
        %v2133 = vpop.f32.mrf.mxu0
        %2134 = vmatprep.mubr.bf16.mxu0 0
        %2135 = vmatmul.mubr.bf16.gmra.mxu0 %v1986
        %v2136 = vpop.f32.mrf.mxu0
        %v2137 = vadd.f32 0.0, %v2136
        %v2138 = vpop.f32.mrf.mxu0
        %v2139 = vpop.f32.mrf.mxu0
        %v2140 = vadd.f32 0.0, %v2139
        %v2141 = vpop.f32.mrf.mxu0
        %2142 = vmatprep.mubr.bf16.mxu0 0
        %2143 = vmatmul.mubr.bf16.gmra.mxu0 %v1989
        %v2144 = vpop.f32.mrf.mxu0
        %v2145 = vadd.f32 0.0, %v2144
        %v2146 = vpop.f32.mrf.mxu0
        %v2147 = vpop.f32.mrf.mxu0
        %v2148 = vadd.f32 0.0, %v2147
        %v2149 = vpop.f32.mrf.mxu0
        %2150 = vmatprep.mubr.bf16.mxu0 0
        %2151 = vmatmul.mubr.bf16.gmra.mxu0 %v1992
        %v2152 = vpop.f32.mrf.mxu0
        %v2153 = vadd.f32 0.0, %v2152
        %v2154 = vpop.f32.mrf.mxu0
        %v2155 = vpop.f32.mrf.mxu0
        %v2156 = vadd.f32 0.0, %v2155
        %v2157 = vpop.f32.mrf.mxu0
        %2158 = vmatprep.mubr.bf16.mxu0 0
        %2159 = vmatmul.mubr.bf16.gmra.mxu0 %v1995
        %v2160 = vpop.f32.mrf.mxu0
        %v2161 = vadd.f32 0.0, %v2160
        %v2162 = vpop.f32.mrf.mxu0
        %v2163 = vpop.f32.mrf.mxu0
        %v2164 = vadd.f32 0.0, %v2163
        %v2165 = vpop.f32.mrf.mxu0
        %2166 = vmatprep.mubr.bf16.mxu0 0
        %2167 = vmatmul.mubr.bf16.gmra.mxu0 %v1998
        %v2168 = vpop.f32.mrf.mxu0
        %v2169 = vadd.f32 0.0, %v2168
        %v2170 = vpop.f32.mrf.mxu0
        %v2171 = vpop.f32.mrf.mxu0
        %v2172 = vadd.f32 0.0, %v2171
        %v2173 = vpop.f32.mrf.mxu0
        %2174 = vmatprep.mubr.bf16.mxu0 0
        %2175 = vmatmul.mubr.bf16.gmra.mxu0 %v2001
        %v2176 = vpop.f32.mrf.mxu0
        %v2177 = vadd.f32 0.0, %v2176
        %v2178 = vpop.f32.mrf.mxu0
        %v2179 = vpop.f32.mrf.mxu0
        %v2180 = vadd.f32 0.0, %v2179
        %v2181 = vpop.f32.mrf.mxu0
        %2182 = vdwg.mxu0
        %v2183 = vadd.f32 %v1857, %v2041
        %v2184 = vadd.f32 %v1858, %v2044
        %v2185 = vadd.f32 %v1859, %v2049
        %v2186 = vadd.f32 %v1860, %v2052
        %v2187 = vadd.f32 %v1861, %v2057
        %v2188 = vadd.f32 %v1862, %v2060
        %v2189 = vadd.f32 %v1863, %v2065
        %v2190 = vadd.f32 %v1864, %v2068
        %v2191 = vadd.f32 %v1865, %v2073
        %v2192 = vadd.f32 %v1866, %v2076
        %v2193 = vadd.f32 %v1867, %v2081
        %v2194 = vadd.f32 %v1868, %v2084
        %v2195 = vadd.f32 %v1869, %v2089
        %v2196 = vadd.f32 %v1870, %v2092
        %v2197 = vadd.f32 %v1871, %v2097
        %v2198 = vadd.f32 %v1872, %v2100
        %v2199 = vadd.f32 %v1873, %v2105
        %v2200 = vadd.f32 %v1874, %v2108
        %v2201 = vadd.f32 %v1875, %v2113
        %v2202 = vadd.f32 %v1876, %v2116
        %v2203 = vadd.f32 %v1877, %v2121
        %v2204 = vadd.f32 %v1878, %v2124
        %v2205 = vadd.f32 %v1879, %v2129
        %v2206 = vadd.f32 %v1880, %v2132
        %v2207 = vadd.f32 %v1881, %v2137
        %v2208 = vadd.f32 %v1882, %v2140
        %v2209 = vadd.f32 %v1883, %v2145
        %v2210 = vadd.f32 %v1884, %v2148
        %v2211 = vadd.f32 %v1885, %v2153
        %v2212 = vadd.f32 %v1886, %v2156
        %v2213 = vadd.f32 %v1887, %v2161
        %v2214 = vadd.f32 %v1888, %v2164
        %v2215 = vadd.f32 %v1889, %v2169
        %v2216 = vadd.f32 %v1890, %v2172
        %v2217 = vadd.f32 %v1891, %v2177
        %v2218 = vadd.f32 %v1892, %v2180
        %v2219 = vld [vmem:[%s329 + $0x24] sm:$0xff]
        %v2220 = vld [vmem:[%s329 + $0x2c] sm:$0xff]
        %v2221 = vld [vmem:[%s329 + $0x34] sm:$0xff]
        %v2222 = vld [vmem:[%s329 + $0x3c] sm:$0xff]
        %v2223 = vld [vmem:[%s329 + $0x44] sm:$0xff]
        %v2224 = vld [vmem:[%s329 + $0x4c] sm:$0xff]
        %v2225 = vld [vmem:[%s329 + $0x54] sm:$0xff]
        %v2226 = vld [vmem:[%s329 + $0x5c] sm:$0xff]
        %v2227 = vld [vmem:[%s329 + $0x64] sm:$0xff]
        %v2228 = vld [vmem:[%s329 + $0x6c] sm:$0xff]
        %v2229 = vld [vmem:[%s329 + $0x74] sm:$0xff]
        %v2230 = vld [vmem:[%s329 + $0x7c] sm:$0xff]
        %v2231 = vld [vmem:[%s329 + $0x84] sm:$0xff]
        %v2232 = vld [vmem:[%s329 + $0x8c] sm:$0xff]
        %v2233 = vld [vmem:[%s329 + $0x94] sm:$0xff]
        %v2234 = vld [vmem:[%s329 + $0x9c] sm:$0xff]
        %v2235 = vld [vmem:[%s329 + $0xa4] sm:$0xff]
        %v2236 = vld [vmem:[%s329 + $0xac] sm:$0xff]
        %v2237 = vld [vmem:[%s329 + $0xb4] sm:$0xff]
        %v2238 = vld [vmem:[%s329 + $0xbc] sm:$0xff]
        %v2239 = vld [vmem:[%s329 + $0xc4] sm:$0xff]
        %v2240 = vld [vmem:[%s329 + $0xcc] sm:$0xff]
        %v2241 = vld [vmem:[%s329 + $0xd4] sm:$0xff]
        %v2242 = vld [vmem:[%s329 + $0xdc] sm:$0xff]
        %v2243 = vld [vmem:[%s329 + $0xe4] sm:$0xff]
        %v2244 = vld [vmem:[%s329 + $0xec] sm:$0xff]
        %v2245 = vld [vmem:[%s329 + $0xf4] sm:$0xff]
        %v2246 = vld [vmem:[%s329 + $0xfc] sm:$0xff]
        %v2247 = vld [vmem:[%s329 + $0x104] sm:$0xff]
        %v2248 = vld [vmem:[%s329 + $0x10c] sm:$0xff]
        %v2249 = vld [vmem:[%s329 + $0x114] sm:$0xff]
        %v2250 = vld [vmem:[%s329 + $0x11c] sm:$0xff]
        %v2251 = vld [vmem:[%s329 + $0x124] sm:$0xff]
        %v2252 = vld [vmem:[%s329 + $0x12c] sm:$0xff]
        %v2253 = vld [vmem:[%s329 + $0x134] sm:$0xff]
        %v2254 = vld [vmem:[%s329 + $0x13c] sm:$0xff]
        %v2255 = vpack.c.bf16 %v2220, %v2219
        %v2256 = vpack.c.bf16 %v2222, %v2221
        %v2257 = vpack.c.bf16 %v2224, %v2223
        %v2258 = vpack.c.bf16 %v2226, %v2225
        %v2259 = vpack.c.bf16 %v2228, %v2227
        %v2260 = vpack.c.bf16 %v2230, %v2229
        %v2261 = vpack.c.bf16 %v2232, %v2231
        %v2262 = vpack.c.bf16 %v2234, %v2233
        %v2263 = vpack.c.bf16 %v2236, %v2235
        %v2264 = vpack.c.bf16 %v2238, %v2237
        %v2265 = vpack.c.bf16 %v2240, %v2239
        %v2266 = vpack.c.bf16 %v2242, %v2241
        %v2267 = vpack.c.bf16 %v2244, %v2243
        %v2268 = vpack.c.bf16 %v2246, %v2245
        %v2269 = vpack.c.bf16 %v2248, %v2247
        %v2270 = vpack.c.bf16 %v2250, %v2249
        %v2271 = vpack.c.bf16 %v2252, %v2251
        %v2272 = vpack.c.bf16 %v2254, %v2253
        %s2273 = scalar_lea.vmem %s3, 12
        %v2274 = vld [vmem:[%s2273] sm:$0x3]
        %v2276 = vsel %vm442, %v2255, 0
        %v2279 = vsel %vm442, %v2256, 0
        %v2282 = vsel %vm442, %v2257, 0
        %v2285 = vsel %vm442, %v2258, 0
        %v2288 = vsel %vm442, %v2259, 0
        %v2291 = vsel %vm442, %v2260, 0
        %v2294 = vsel %vm442, %v2261, 0
        %v2297 = vsel %vm442, %v2262, 0
        %v2300 = vsel %vm442, %v2263, 0
        %v2303 = vsel %vm442, %v2264, 0
        %v2306 = vsel %vm442, %v2265, 0
        %v2309 = vsel %vm442, %v2266, 0
        %v2312 = vsel %vm442, %v2267, 0
        %v2315 = vsel %vm442, %v2268, 0
        %v2318 = vsel %vm442, %v2269, 0
        %v2321 = vsel %vm442, %v2270, 0
        %v2324 = vsel %vm442, %v2271, 0
        %v2327 = vsel %vm442, %v2272, 0
        %v2330 = vand.u32 %v2274, %v500
        %2332 = vmatprep.subr.bf16.mxu0 0
        %2333 = vmatpush1.bf16.msra.mxu0 0
        %2334 = vmatprep.subr.bf16.mxu0 0
        %2335 = vmatpush1.bf16.msra.mxu0 0
        %2336 = vmatprep.subr.bf16.mxu0 0
        %2337 = vmatpush1.bf16.msra.mxu0 0
        %2338 = vmatprep.subr.bf16.mxu0 0
        %2339 = vmatpush1.bf16.msra.mxu0 0
        %2340 = vmatprep.subr.bf16.mxu0 0
        %2341 = vmatpush1.bf16.msra.mxu0 0
        %2342 = vmatprep.subr.bf16.mxu0 0
        %2343 = vmatpush1.bf16.msra.mxu0 0
        %2344 = vmatprep.subr.bf16.mxu0 0
        %2345 = vmatpush1.bf16.msra.mxu0 0
        %2346 = vmatprep.subr.bf16.mxu0 0
        %2347 = vmatpush1.bf16.msra.mxu0 %v2330
        %2348 = vmatprep.subr.bf16.mxu0 0
        %2349 = vmatpush2.bf16.msra.mxu0 0
        %2350 = vmatprep.subr.bf16.mxu0 0
        %2351 = vmatpush2.bf16.msra.mxu0 0
        %2352 = vmatprep.subr.bf16.mxu0 0
        %2353 = vmatpush2.bf16.msra.mxu0 0
        %2354 = vmatprep.subr.bf16.mxu0 0
        %2355 = vmatpush2.bf16.msra.mxu0 0
        %2356 = vmatprep.subr.bf16.mxu0 0
        %2357 = vmatpush2.bf16.msra.mxu0 0
        %2358 = vmatprep.subr.bf16.mxu0 0
        %2359 = vmatpush2.bf16.msra.mxu0 0
        %2360 = vmatprep.subr.bf16.mxu0 0
        %2361 = vmatpush2.bf16.msra.mxu0 0
        %2362 = vmatprep.subr.bf16.mxu0 0
        %2363 = vmatpush2.bf16.msra.mxu0 0
        %2364 = vmatprep.mubr.bf16.mxu0 0
        %2365 = vmatmul.mubr.bf16.gmra.mxu0 %v2276
        %v2366 = vpop.f32.mrf.mxu0
        %v2367 = vadd.f32 0.0, %v2366
        %v2368 = vpop.f32.mrf.mxu0
        %v2369 = vpop.f32.mrf.mxu0
        %v2370 = vadd.f32 0.0, %v2369
        %v2371 = vpop.f32.mrf.mxu0
        %2372 = vmatprep.mubr.bf16.mxu0 0
        %2373 = vmatmul.mubr.bf16.gmra.mxu0 %v2279
        %v2374 = vpop.f32.mrf.mxu0
        %v2375 = vadd.f32 0.0, %v2374
        %v2376 = vpop.f32.mrf.mxu0
        %v2377 = vpop.f32.mrf.mxu0
        %v2378 = vadd.f32 0.0, %v2377
        %v2379 = vpop.f32.mrf.mxu0
        %2380 = vmatprep.mubr.bf16.mxu0 0
        %2381 = vmatmul.mubr.bf16.gmra.mxu0 %v2282
        %v2382 = vpop.f32.mrf.mxu0
        %v2383 = vadd.f32 0.0, %v2382
        %v2384 = vpop.f32.mrf.mxu0
        %v2385 = vpop.f32.mrf.mxu0
        %v2386 = vadd.f32 0.0, %v2385
        %v2387 = vpop.f32.mrf.mxu0
        %2388 = vmatprep.mubr.bf16.mxu0 0
        %2389 = vmatmul.mubr.bf16.gmra.mxu0 %v2285
        %v2390 = vpop.f32.mrf.mxu0
        %v2391 = vadd.f32 0.0, %v2390
        %v2392 = vpop.f32.mrf.mxu0
        %v2393 = vpop.f32.mrf.mxu0
        %v2394 = vadd.f32 0.0, %v2393
        %v2395 = vpop.f32.mrf.mxu0
        %2396 = vmatprep.mubr.bf16.mxu0 0
        %2397 = vmatmul.mubr.bf16.gmra.mxu0 %v2288
        %v2398 = vpop.f32.mrf.mxu0
        %v2399 = vadd.f32 0.0, %v2398
        %v2400 = vpop.f32.mrf.mxu0
        %v2401 = vpop.f32.mrf.mxu0
        %v2402 = vadd.f32 0.0, %v2401
        %v2403 = vpop.f32.mrf.mxu0
        %2404 = vmatprep.mubr.bf16.mxu0 0
        %2405 = vmatmul.mubr.bf16.gmra.mxu0 %v2291
        %v2406 = vpop.f32.mrf.mxu0
        %v2407 = vadd.f32 0.0, %v2406
        %v2408 = vpop.f32.mrf.mxu0
        %v2409 = vpop.f32.mrf.mxu0
        %v2410 = vadd.f32 0.0, %v2409
        %v2411 = vpop.f32.mrf.mxu0
        %2412 = vmatprep.mubr.bf16.mxu0 0
        %2413 = vmatmul.mubr.bf16.gmra.mxu0 %v2294
        %v2414 = vpop.f32.mrf.mxu0
        %v2415 = vadd.f32 0.0, %v2414
        %v2416 = vpop.f32.mrf.mxu0
        %v2417 = vpop.f32.mrf.mxu0
        %v2418 = vadd.f32 0.0, %v2417
        %v2419 = vpop.f32.mrf.mxu0
        %2420 = vmatprep.mubr.bf16.mxu0 0
        %2421 = vmatmul.mubr.bf16.gmra.mxu0 %v2297
        %v2422 = vpop.f32.mrf.mxu0
        %v2423 = vadd.f32 0.0, %v2422
        %v2424 = vpop.f32.mrf.mxu0
        %v2425 = vpop.f32.mrf.mxu0
        %v2426 = vadd.f32 0.0, %v2425
        %v2427 = vpop.f32.mrf.mxu0
        %2428 = vmatprep.mubr.bf16.mxu0 0
        %2429 = vmatmul.mubr.bf16.gmra.mxu0 %v2300
        %v2430 = vpop.f32.mrf.mxu0
        %v2431 = vadd.f32 0.0, %v2430
        %v2432 = vpop.f32.mrf.mxu0
        %v2433 = vpop.f32.mrf.mxu0
        %v2434 = vadd.f32 0.0, %v2433
        %v2435 = vpop.f32.mrf.mxu0
        %2436 = vmatprep.mubr.bf16.mxu0 0
        %2437 = vmatmul.mubr.bf16.gmra.mxu0 %v2303
        %v2438 = vpop.f32.mrf.mxu0
        %v2439 = vadd.f32 0.0, %v2438
        %v2440 = vpop.f32.mrf.mxu0
        %v2441 = vpop.f32.mrf.mxu0
        %v2442 = vadd.f32 0.0, %v2441
        %v2443 = vpop.f32.mrf.mxu0
        %2444 = vmatprep.mubr.bf16.mxu0 0
        %2445 = vmatmul.mubr.bf16.gmra.mxu0 %v2306
        %v2446 = vpop.f32.mrf.mxu0
        %v2447 = vadd.f32 0.0, %v2446
        %v2448 = vpop.f32.mrf.mxu0
        %v2449 = vpop.f32.mrf.mxu0
        %v2450 = vadd.f32 0.0, %v2449
        %v2451 = vpop.f32.mrf.mxu0
        %2452 = vmatprep.mubr.bf16.mxu0 0
        %2453 = vmatmul.mubr.bf16.gmra.mxu0 %v2309
        %v2454 = vpop.f32.mrf.mxu0
        %v2455 = vadd.f32 0.0, %v2454
        %v2456 = vpop.f32.mrf.mxu0
        %v2457 = vpop.f32.mrf.mxu0
        %v2458 = vadd.f32 0.0, %v2457
        %v2459 = vpop.f32.mrf.mxu0
        %2460 = vmatprep.mubr.bf16.mxu0 0
        %2461 = vmatmul.mubr.bf16.gmra.mxu0 %v2312
        %v2462 = vpop.f32.mrf.mxu0
        %v2463 = vadd.f32 0.0, %v2462
        %v2464 = vpop.f32.mrf.mxu0
        %v2465 = vpop.f32.mrf.mxu0
        %v2466 = vadd.f32 0.0, %v2465
        %v2467 = vpop.f32.mrf.mxu0
        %2468 = vmatprep.mubr.bf16.mxu0 0
        %2469 = vmatmul.mubr.bf16.gmra.mxu0 %v2315
        %v2470 = vpop.f32.mrf.mxu0
        %v2471 = vadd.f32 0.0, %v2470
        %v2472 = vpop.f32.mrf.mxu0
        %v2473 = vpop.f32.mrf.mxu0
        %v2474 = vadd.f32 0.0, %v2473
        %v2475 = vpop.f32.mrf.mxu0
        %2476 = vmatprep.mubr.bf16.mxu0 0
        %2477 = vmatmul.mubr.bf16.gmra.mxu0 %v2318
        %v2478 = vpop.f32.mrf.mxu0
        %v2479 = vadd.f32 0.0, %v2478
        %v2480 = vpop.f32.mrf.mxu0
        %v2481 = vpop.f32.mrf.mxu0
        %v2482 = vadd.f32 0.0, %v2481
        %v2483 = vpop.f32.mrf.mxu0
        %2484 = vmatprep.mubr.bf16.mxu0 0
        %2485 = vmatmul.mubr.bf16.gmra.mxu0 %v2321
        %v2486 = vpop.f32.mrf.mxu0
        %v2487 = vadd.f32 0.0, %v2486
        %v2488 = vpop.f32.mrf.mxu0
        %v2489 = vpop.f32.mrf.mxu0
        %v2490 = vadd.f32 0.0, %v2489
        %v2491 = vpop.f32.mrf.mxu0
        %2492 = vmatprep.mubr.bf16.mxu0 0
        %2493 = vmatmul.mubr.bf16.gmra.mxu0 %v2324
        %v2494 = vpop.f32.mrf.mxu0
        %v2495 = vadd.f32 0.0, %v2494
        %v2496 = vpop.f32.mrf.mxu0
        %v2497 = vpop.f32.mrf.mxu0
        %v2498 = vadd.f32 0.0, %v2497
        %v2499 = vpop.f32.mrf.mxu0
        %2500 = vmatprep.mubr.bf16.mxu0 0
        %2501 = vmatmul.mubr.bf16.gmra.mxu0 %v2327
        %v2502 = vpop.f32.mrf.mxu0
        %v2503 = vadd.f32 0.0, %v2502
        %v2504 = vpop.f32.mrf.mxu0
        %v2505 = vpop.f32.mrf.mxu0
        %v2506 = vadd.f32 0.0, %v2505
        %v2507 = vpop.f32.mrf.mxu0
        %2508 = vdwg.mxu0
        %v2509 = vadd.f32 %v2183, %v2367
        %v2510 = vadd.f32 %v2184, %v2370
        %v2511 = vadd.f32 %v2185, %v2375
        %v2512 = vadd.f32 %v2186, %v2378
        %v2513 = vadd.f32 %v2187, %v2383
        %v2514 = vadd.f32 %v2188, %v2386
        %v2515 = vadd.f32 %v2189, %v2391
        %v2516 = vadd.f32 %v2190, %v2394
        %v2517 = vadd.f32 %v2191, %v2399
        %v2518 = vadd.f32 %v2192, %v2402
        %v2519 = vadd.f32 %v2193, %v2407
        %v2520 = vadd.f32 %v2194, %v2410
        %v2521 = vadd.f32 %v2195, %v2415
        %v2522 = vadd.f32 %v2196, %v2418
        %v2523 = vadd.f32 %v2197, %v2423
        %v2524 = vadd.f32 %v2198, %v2426
        %v2525 = vadd.f32 %v2199, %v2431
        %v2526 = vadd.f32 %v2200, %v2434
        %v2527 = vadd.f32 %v2201, %v2439
        %v2528 = vadd.f32 %v2202, %v2442
        %v2529 = vadd.f32 %v2203, %v2447
        %v2530 = vadd.f32 %v2204, %v2450
        %v2531 = vadd.f32 %v2205, %v2455
        %v2532 = vadd.f32 %v2206, %v2458
        %v2533 = vadd.f32 %v2207, %v2463
        %v2534 = vadd.f32 %v2208, %v2466
        %v2535 = vadd.f32 %v2209, %v2471
        %v2536 = vadd.f32 %v2210, %v2474
        %v2537 = vadd.f32 %v2211, %v2479
        %v2538 = vadd.f32 %v2212, %v2482
        %v2539 = vadd.f32 %v2213, %v2487
        %v2540 = vadd.f32 %v2214, %v2490
        %v2541 = vadd.f32 %v2215, %v2495
        %v2542 = vadd.f32 %v2216, %v2498
        %v2543 = vadd.f32 %v2217, %v2503
        %v2544 = vadd.f32 %v2218, %v2506
        %v2545 = vld [vmem:[%s329 + $0x25] sm:$0xff]
        %v2546 = vld [vmem:[%s329 + $0x2d] sm:$0xff]
        %v2547 = vld [vmem:[%s329 + $0x35] sm:$0xff]
        %v2548 = vld [vmem:[%s329 + $0x3d] sm:$0xff]
        %v2549 = vld [vmem:[%s329 + $0x45] sm:$0xff]
        %v2550 = vld [vmem:[%s329 + $0x4d] sm:$0xff]
        %v2551 = vld [vmem:[%s329 + $0x55] sm:$0xff]
        %v2552 = vld [vmem:[%s329 + $0x5d] sm:$0xff]
        %v2553 = vld [vmem:[%s329 + $0x65] sm:$0xff]
        %v2554 = vld [vmem:[%s329 + $0x6d] sm:$0xff]
        %v2555 = vld [vmem:[%s329 + $0x75] sm:$0xff]
        %v2556 = vld [vmem:[%s329 + $0x7d] sm:$0xff]
        %v2557 = vld [vmem:[%s329 + $0x85] sm:$0xff]
        %v2558 = vld [vmem:[%s329 + $0x8d] sm:$0xff]
        %v2559 = vld [vmem:[%s329 + $0x95] sm:$0xff]
        %v2560 = vld [vmem:[%s329 + $0x9d] sm:$0xff]
        %v2561 = vld [vmem:[%s329 + $0xa5] sm:$0xff]
        %v2562 = vld [vmem:[%s329 + $0xad] sm:$0xff]
        %v2563 = vld [vmem:[%s329 + $0xb5] sm:$0xff]
        %v2564 = vld [vmem:[%s329 + $0xbd] sm:$0xff]
        %v2565 = vld [vmem:[%s329 + $0xc5] sm:$0xff]
        %v2566 = vld [vmem:[%s329 + $0xcd] sm:$0xff]
        %v2567 = vld [vmem:[%s329 + $0xd5] sm:$0xff]
        %v2568 = vld [vmem:[%s329 + $0xdd] sm:$0xff]
        %v2569 = vld [vmem:[%s329 + $0xe5] sm:$0xff]
        %v2570 = vld [vmem:[%s329 + $0xed] sm:$0xff]
        %v2571 = vld [vmem:[%s329 + $0xf5] sm:$0xff]
        %v2572 = vld [vmem:[%s329 + $0xfd] sm:$0xff]
        %v2573 = vld [vmem:[%s329 + $0x105] sm:$0xff]
        %v2574 = vld [vmem:[%s329 + $0x10d] sm:$0xff]
        %v2575 = vld [vmem:[%s329 + $0x115] sm:$0xff]
        %v2576 = vld [vmem:[%s329 + $0x11d] sm:$0xff]
        %v2577 = vld [vmem:[%s329 + $0x125] sm:$0xff]
        %v2578 = vld [vmem:[%s329 + $0x12d] sm:$0xff]
        %v2579 = vld [vmem:[%s329 + $0x135] sm:$0xff]
        %v2580 = vld [vmem:[%s329 + $0x13d] sm:$0xff]
        %v2581 = vpack.c.bf16 %v2546, %v2545
        %v2582 = vpack.c.bf16 %v2548, %v2547
        %v2583 = vpack.c.bf16 %v2550, %v2549
        %v2584 = vpack.c.bf16 %v2552, %v2551
        %v2585 = vpack.c.bf16 %v2554, %v2553
        %v2586 = vpack.c.bf16 %v2556, %v2555
        %v2587 = vpack.c.bf16 %v2558, %v2557
        %v2588 = vpack.c.bf16 %v2560, %v2559
        %v2589 = vpack.c.bf16 %v2562, %v2561
        %v2590 = vpack.c.bf16 %v2564, %v2563
        %v2591 = vpack.c.bf16 %v2566, %v2565
        %v2592 = vpack.c.bf16 %v2568, %v2567
        %v2593 = vpack.c.bf16 %v2570, %v2569
        %v2594 = vpack.c.bf16 %v2572, %v2571
        %v2595 = vpack.c.bf16 %v2574, %v2573
        %v2596 = vpack.c.bf16 %v2576, %v2575
        %v2597 = vpack.c.bf16 %v2578, %v2577
        %v2598 = vpack.c.bf16 %v2580, %v2579
        %s2599 = scalar_lea.vmem %s3, 14
        %v2600 = vld [vmem:[%s2599] sm:$0x3]
        %v2602 = vsel %vm442, %v2581, 0
        %v2605 = vsel %vm442, %v2582, 0
        %v2608 = vsel %vm442, %v2583, 0
        %v2611 = vsel %vm442, %v2584, 0
        %v2614 = vsel %vm442, %v2585, 0
        %v2617 = vsel %vm442, %v2586, 0
        %v2620 = vsel %vm442, %v2587, 0
        %v2623 = vsel %vm442, %v2588, 0
        %v2626 = vsel %vm442, %v2589, 0
        %v2629 = vsel %vm442, %v2590, 0
        %v2632 = vsel %vm442, %v2591, 0
        %v2635 = vsel %vm442, %v2592, 0
        %v2638 = vsel %vm442, %v2593, 0
        %v2641 = vsel %vm442, %v2594, 0
        %v2644 = vsel %vm442, %v2595, 0
        %v2647 = vsel %vm442, %v2596, 0
        %v2650 = vsel %vm442, %v2597, 0
        %v2653 = vsel %vm442, %v2598, 0
        %v2656 = vand.u32 %v2600, %v500
        %2658 = vmatprep.subr.bf16.mxu0 0
        %2659 = vmatpush1.bf16.msra.mxu0 0
        %2660 = vmatprep.subr.bf16.mxu0 0
        %2661 = vmatpush1.bf16.msra.mxu0 0
        %2662 = vmatprep.subr.bf16.mxu0 0
        %2663 = vmatpush1.bf16.msra.mxu0 0
        %2664 = vmatprep.subr.bf16.mxu0 0
        %2665 = vmatpush1.bf16.msra.mxu0 0
        %2666 = vmatprep.subr.bf16.mxu0 0
        %2667 = vmatpush1.bf16.msra.mxu0 0
        %2668 = vmatprep.subr.bf16.mxu0 0
        %2669 = vmatpush1.bf16.msra.mxu0 0
        %2670 = vmatprep.subr.bf16.mxu0 0
        %2671 = vmatpush1.bf16.msra.mxu0 0
        %2672 = vmatprep.subr.bf16.mxu0 0
        %2673 = vmatpush1.bf16.msra.mxu0 %v2656
        %2674 = vmatprep.subr.bf16.mxu0 0
        %2675 = vmatpush2.bf16.msra.mxu0 0
        %2676 = vmatprep.subr.bf16.mxu0 0
        %2677 = vmatpush2.bf16.msra.mxu0 0
        %2678 = vmatprep.subr.bf16.mxu0 0
        %2679 = vmatpush2.bf16.msra.mxu0 0
        %2680 = vmatprep.subr.bf16.mxu0 0
        %2681 = vmatpush2.bf16.msra.mxu0 0
        %2682 = vmatprep.subr.bf16.mxu0 0
        %2683 = vmatpush2.bf16.msra.mxu0 0
        %2684 = vmatprep.subr.bf16.mxu0 0
        %2685 = vmatpush2.bf16.msra.mxu0 0
        %2686 = vmatprep.subr.bf16.mxu0 0
        %2687 = vmatpush2.bf16.msra.mxu0 0
        %2688 = vmatprep.subr.bf16.mxu0 0
        %2689 = vmatpush2.bf16.msra.mxu0 0
        %2690 = vmatprep.mubr.bf16.mxu0 0
        %2691 = vmatmul.mubr.bf16.gmra.mxu0 %v2602
        %v2692 = vpop.f32.mrf.mxu0
        %v2693 = vadd.f32 0.0, %v2692
        %v2694 = vpop.f32.mrf.mxu0
        %v2695 = vpop.f32.mrf.mxu0
        %v2696 = vadd.f32 0.0, %v2695
        %v2697 = vpop.f32.mrf.mxu0
        %2698 = vmatprep.mubr.bf16.mxu0 0
        %2699 = vmatmul.mubr.bf16.gmra.mxu0 %v2605
        %v2700 = vpop.f32.mrf.mxu0
        %v2701 = vadd.f32 0.0, %v2700
        %v2702 = vpop.f32.mrf.mxu0
        %v2703 = vpop.f32.mrf.mxu0
        %v2704 = vadd.f32 0.0, %v2703
        %v2705 = vpop.f32.mrf.mxu0
        %2706 = vmatprep.mubr.bf16.mxu0 0
        %2707 = vmatmul.mubr.bf16.gmra.mxu0 %v2608
        %v2708 = vpop.f32.mrf.mxu0
        %v2709 = vadd.f32 0.0, %v2708
        %v2710 = vpop.f32.mrf.mxu0
        %v2711 = vpop.f32.mrf.mxu0
        %v2712 = vadd.f32 0.0, %v2711
        %v2713 = vpop.f32.mrf.mxu0
        %2714 = vmatprep.mubr.bf16.mxu0 0
        %2715 = vmatmul.mubr.bf16.gmra.mxu0 %v2611
        %v2716 = vpop.f32.mrf.mxu0
        %v2717 = vadd.f32 0.0, %v2716
        %v2718 = vpop.f32.mrf.mxu0
        %v2719 = vpop.f32.mrf.mxu0
        %v2720 = vadd.f32 0.0, %v2719
        %v2721 = vpop.f32.mrf.mxu0
        %2722 = vmatprep.mubr.bf16.mxu0 0
        %2723 = vmatmul.mubr.bf16.gmra.mxu0 %v2614
        %v2724 = vpop.f32.mrf.mxu0
        %v2725 = vadd.f32 0.0, %v2724
        %v2726 = vpop.f32.mrf.mxu0
        %v2727 = vpop.f32.mrf.mxu0
        %v2728 = vadd.f32 0.0, %v2727
        %v2729 = vpop.f32.mrf.mxu0
        %2730 = vmatprep.mubr.bf16.mxu0 0
        %2731 = vmatmul.mubr.bf16.gmra.mxu0 %v2617
        %v2732 = vpop.f32.mrf.mxu0
        %v2733 = vadd.f32 0.0, %v2732
        %v2734 = vpop.f32.mrf.mxu0
        %v2735 = vpop.f32.mrf.mxu0
        %v2736 = vadd.f32 0.0, %v2735
        %v2737 = vpop.f32.mrf.mxu0
        %2738 = vmatprep.mubr.bf16.mxu0 0
        %2739 = vmatmul.mubr.bf16.gmra.mxu0 %v2620
        %v2740 = vpop.f32.mrf.mxu0
        %v2741 = vadd.f32 0.0, %v2740
        %v2742 = vpop.f32.mrf.mxu0
        %v2743 = vpop.f32.mrf.mxu0
        %v2744 = vadd.f32 0.0, %v2743
        %v2745 = vpop.f32.mrf.mxu0
        %2746 = vmatprep.mubr.bf16.mxu0 0
        %2747 = vmatmul.mubr.bf16.gmra.mxu0 %v2623
        %v2748 = vpop.f32.mrf.mxu0
        %v2749 = vadd.f32 0.0, %v2748
        %v2750 = vpop.f32.mrf.mxu0
        %v2751 = vpop.f32.mrf.mxu0
        %v2752 = vadd.f32 0.0, %v2751
        %v2753 = vpop.f32.mrf.mxu0
        %2754 = vmatprep.mubr.bf16.mxu0 0
        %2755 = vmatmul.mubr.bf16.gmra.mxu0 %v2626
        %v2756 = vpop.f32.mrf.mxu0
        %v2757 = vadd.f32 0.0, %v2756
        %v2758 = vpop.f32.mrf.mxu0
        %v2759 = vpop.f32.mrf.mxu0
        %v2760 = vadd.f32 0.0, %v2759
        %v2761 = vpop.f32.mrf.mxu0
        %2762 = vmatprep.mubr.bf16.mxu0 0
        %2763 = vmatmul.mubr.bf16.gmra.mxu0 %v2629
        %v2764 = vpop.f32.mrf.mxu0
        %v2765 = vadd.f32 0.0, %v2764
        %v2766 = vpop.f32.mrf.mxu0
        %v2767 = vpop.f32.mrf.mxu0
        %v2768 = vadd.f32 0.0, %v2767
        %v2769 = vpop.f32.mrf.mxu0
        %2770 = vmatprep.mubr.bf16.mxu0 0
        %2771 = vmatmul.mubr.bf16.gmra.mxu0 %v2632
        %v2772 = vpop.f32.mrf.mxu0
        %v2773 = vadd.f32 0.0, %v2772
        %v2774 = vpop.f32.mrf.mxu0
        %v2775 = vpop.f32.mrf.mxu0
        %v2776 = vadd.f32 0.0, %v2775
        %v2777 = vpop.f32.mrf.mxu0
        %2778 = vmatprep.mubr.bf16.mxu0 0
        %2779 = vmatmul.mubr.bf16.gmra.mxu0 %v2635
        %v2780 = vpop.f32.mrf.mxu0
        %v2781 = vadd.f32 0.0, %v2780
        %v2782 = vpop.f32.mrf.mxu0
        %v2783 = vpop.f32.mrf.mxu0
        %v2784 = vadd.f32 0.0, %v2783
        %v2785 = vpop.f32.mrf.mxu0
        %2786 = vmatprep.mubr.bf16.mxu0 0
        %2787 = vmatmul.mubr.bf16.gmra.mxu0 %v2638
        %v2788 = vpop.f32.mrf.mxu0
        %v2789 = vadd.f32 0.0, %v2788
        %v2790 = vpop.f32.mrf.mxu0
        %v2791 = vpop.f32.mrf.mxu0
        %v2792 = vadd.f32 0.0, %v2791
        %v2793 = vpop.f32.mrf.mxu0
        %2794 = vmatprep.mubr.bf16.mxu0 0
        %2795 = vmatmul.mubr.bf16.gmra.mxu0 %v2641
        %v2796 = vpop.f32.mrf.mxu0
        %v2797 = vadd.f32 0.0, %v2796
        %v2798 = vpop.f32.mrf.mxu0
        %v2799 = vpop.f32.mrf.mxu0
        %v2800 = vadd.f32 0.0, %v2799
        %v2801 = vpop.f32.mrf.mxu0
        %2802 = vmatprep.mubr.bf16.mxu0 0
        %2803 = vmatmul.mubr.bf16.gmra.mxu0 %v2644
        %v2804 = vpop.f32.mrf.mxu0
        %v2805 = vadd.f32 0.0, %v2804
        %v2806 = vpop.f32.mrf.mxu0
        %v2807 = vpop.f32.mrf.mxu0
        %v2808 = vadd.f32 0.0, %v2807
        %v2809 = vpop.f32.mrf.mxu0
        %2810 = vmatprep.mubr.bf16.mxu0 0
        %2811 = vmatmul.mubr.bf16.gmra.mxu0 %v2647
        %v2812 = vpop.f32.mrf.mxu0
        %v2813 = vadd.f32 0.0, %v2812
        %v2814 = vpop.f32.mrf.mxu0
        %v2815 = vpop.f32.mrf.mxu0
        %v2816 = vadd.f32 0.0, %v2815
        %v2817 = vpop.f32.mrf.mxu0
        %2818 = vmatprep.mubr.bf16.mxu0 0
        %2819 = vmatmul.mubr.bf16.gmra.mxu0 %v2650
        %v2820 = vpop.f32.mrf.mxu0
        %v2821 = vadd.f32 0.0, %v2820
        %v2822 = vpop.f32.mrf.mxu0
        %v2823 = vpop.f32.mrf.mxu0
        %v2824 = vadd.f32 0.0, %v2823
        %v2825 = vpop.f32.mrf.mxu0
        %2826 = vmatprep.mubr.bf16.mxu0 0
        %2827 = vmatmul.mubr.bf16.gmra.mxu0 %v2653
        %v2828 = vpop.f32.mrf.mxu0
        %v2829 = vadd.f32 0.0, %v2828
        %v2830 = vpop.f32.mrf.mxu0
        %v2831 = vpop.f32.mrf.mxu0
        %v2832 = vadd.f32 0.0, %v2831
        %v2833 = vpop.f32.mrf.mxu0
        %2834 = vdwg.mxu0
        %v2835 = vadd.f32 %v2509, %v2693
        %v2836 = vadd.f32 %v2510, %v2696
        %v2837 = vadd.f32 %v2511, %v2701
        %v2838 = vadd.f32 %v2512, %v2704
        %v2839 = vadd.f32 %v2513, %v2709
        %v2840 = vadd.f32 %v2514, %v2712
        %v2841 = vadd.f32 %v2515, %v2717
        %v2842 = vadd.f32 %v2516, %v2720
        %v2843 = vadd.f32 %v2517, %v2725
        %v2844 = vadd.f32 %v2518, %v2728
        %v2845 = vadd.f32 %v2519, %v2733
        %v2846 = vadd.f32 %v2520, %v2736
        %v2847 = vadd.f32 %v2521, %v2741
        %v2848 = vadd.f32 %v2522, %v2744
        %v2849 = vadd.f32 %v2523, %v2749
        %v2850 = vadd.f32 %v2524, %v2752
        %v2851 = vadd.f32 %v2525, %v2757
        %v2852 = vadd.f32 %v2526, %v2760
        %v2853 = vadd.f32 %v2527, %v2765
        %v2854 = vadd.f32 %v2528, %v2768
        %v2855 = vadd.f32 %v2529, %v2773
        %v2856 = vadd.f32 %v2530, %v2776
        %v2857 = vadd.f32 %v2531, %v2781
        %v2858 = vadd.f32 %v2532, %v2784
        %v2859 = vadd.f32 %v2533, %v2789
        %v2860 = vadd.f32 %v2534, %v2792
        %v2861 = vadd.f32 %v2535, %v2797
        %v2862 = vadd.f32 %v2536, %v2800
        %v2863 = vadd.f32 %v2537, %v2805
        %v2864 = vadd.f32 %v2538, %v2808
        %v2865 = vadd.f32 %v2539, %v2813
        %v2866 = vadd.f32 %v2540, %v2816
        %v2867 = vadd.f32 %v2541, %v2821
        %v2868 = vadd.f32 %v2542, %v2824
        %v2869 = vadd.f32 %v2543, %v2829
        %v2870 = vadd.f32 %v2544, %v2832
        %v2871 = vld [vmem:[%s329 + $0x26] sm:$0xff]
        %v2872 = vld [vmem:[%s329 + $0x2e] sm:$0xff]
        %v2873 = vld [vmem:[%s329 + $0x36] sm:$0xff]
        %v2874 = vld [vmem:[%s329 + $0x3e] sm:$0xff]
        %v2875 = vld [vmem:[%s329 + $0x46] sm:$0xff]
        %v2876 = vld [vmem:[%s329 + $0x4e] sm:$0xff]
        %v2877 = vld [vmem:[%s329 + $0x56] sm:$0xff]
        %v2878 = vld [vmem:[%s329 + $0x5e] sm:$0xff]
        %v2879 = vld [vmem:[%s329 + $0x66] sm:$0xff]
        %v2880 = vld [vmem:[%s329 + $0x6e] sm:$0xff]
        %v2881 = vld [vmem:[%s329 + $0x76] sm:$0xff]
        %v2882 = vld [vmem:[%s329 + $0x7e] sm:$0xff]
        %v2883 = vld [vmem:[%s329 + $0x86] sm:$0xff]
        %v2884 = vld [vmem:[%s329 + $0x8e] sm:$0xff]
        %v2885 = vld [vmem:[%s329 + $0x96] sm:$0xff]
        %v2886 = vld [vmem:[%s329 + $0x9e] sm:$0xff]
        %v2887 = vld [vmem:[%s329 + $0xa6] sm:$0xff]
        %v2888 = vld [vmem:[%s329 + $0xae] sm:$0xff]
        %v2889 = vld [vmem:[%s329 + $0xb6] sm:$0xff]
        %v2890 = vld [vmem:[%s329 + $0xbe] sm:$0xff]
        %v2891 = vld [vmem:[%s329 + $0xc6] sm:$0xff]
        %v2892 = vld [vmem:[%s329 + $0xce] sm:$0xff]
        %v2893 = vld [vmem:[%s329 + $0xd6] sm:$0xff]
        %v2894 = vld [vmem:[%s329 + $0xde] sm:$0xff]
        %v2895 = vld [vmem:[%s329 + $0xe6] sm:$0xff]
        %v2896 = vld [vmem:[%s329 + $0xee] sm:$0xff]
        %v2897 = vld [vmem:[%s329 + $0xf6] sm:$0xff]
        %v2898 = vld [vmem:[%s329 + $0xfe] sm:$0xff]
        %v2899 = vld [vmem:[%s329 + $0x106] sm:$0xff]
        %v2900 = vld [vmem:[%s329 + $0x10e] sm:$0xff]
        %v2901 = vld [vmem:[%s329 + $0x116] sm:$0xff]
        %v2902 = vld [vmem:[%s329 + $0x11e] sm:$0xff]
        %v2903 = vld [vmem:[%s329 + $0x126] sm:$0xff]
        %v2904 = vld [vmem:[%s329 + $0x12e] sm:$0xff]
        %v2905 = vld [vmem:[%s329 + $0x136] sm:$0xff]
        %v2906 = vld [vmem:[%s329 + $0x13e] sm:$0xff]
        %v2907 = vpack.c.bf16 %v2872, %v2871
        %v2908 = vpack.c.bf16 %v2874, %v2873
        %v2909 = vpack.c.bf16 %v2876, %v2875
        %v2910 = vpack.c.bf16 %v2878, %v2877
        %v2911 = vpack.c.bf16 %v2880, %v2879
        %v2912 = vpack.c.bf16 %v2882, %v2881
        %v2913 = vpack.c.bf16 %v2884, %v2883
        %v2914 = vpack.c.bf16 %v2886, %v2885
        %v2915 = vpack.c.bf16 %v2888, %v2887
        %v2916 = vpack.c.bf16 %v2890, %v2889
        %v2917 = vpack.c.bf16 %v2892, %v2891
        %v2918 = vpack.c.bf16 %v2894, %v2893
        %v2919 = vpack.c.bf16 %v2896, %v2895
        %v2920 = vpack.c.bf16 %v2898, %v2897
        %v2921 = vpack.c.bf16 %v2900, %v2899
        %v2922 = vpack.c.bf16 %v2902, %v2901
        %v2923 = vpack.c.bf16 %v2904, %v2903
        %v2924 = vpack.c.bf16 %v2906, %v2905
        %s2925 = scalar_lea.vmem %s3, 16
        %v2926 = vld [vmem:[%s2925] sm:$0x3]
        %v2928 = vsel %vm442, %v2907, 0
        %v2931 = vsel %vm442, %v2908, 0
        %v2934 = vsel %vm442, %v2909, 0
        %v2937 = vsel %vm442, %v2910, 0
        %v2940 = vsel %vm442, %v2911, 0
        %v2943 = vsel %vm442, %v2912, 0
        %v2946 = vsel %vm442, %v2913, 0
        %v2949 = vsel %vm442, %v2914, 0
        %v2952 = vsel %vm442, %v2915, 0
        %v2955 = vsel %vm442, %v2916, 0
        %v2958 = vsel %vm442, %v2917, 0
        %v2961 = vsel %vm442, %v2918, 0
        %v2964 = vsel %vm442, %v2919, 0
        %v2967 = vsel %vm442, %v2920, 0
        %v2970 = vsel %vm442, %v2921, 0
        %v2973 = vsel %vm442, %v2922, 0
        %v2976 = vsel %vm442, %v2923, 0
        %v2979 = vsel %vm442, %v2924, 0
        %v2982 = vand.u32 %v2926, %v500
        %2984 = vmatprep.subr.bf16.mxu0 0
        %2985 = vmatpush1.bf16.msra.mxu0 0
        %2986 = vmatprep.subr.bf16.mxu0 0
        %2987 = vmatpush1.bf16.msra.mxu0 0
        %2988 = vmatprep.subr.bf16.mxu0 0
        %2989 = vmatpush1.bf16.msra.mxu0 0
        %2990 = vmatprep.subr.bf16.mxu0 0
        %2991 = vmatpush1.bf16.msra.mxu0 0
        %2992 = vmatprep.subr.bf16.mxu0 0
        %2993 = vmatpush1.bf16.msra.mxu0 0
        %2994 = vmatprep.subr.bf16.mxu0 0
        %2995 = vmatpush1.bf16.msra.mxu0 0
        %2996 = vmatprep.subr.bf16.mxu0 0
        %2997 = vmatpush1.bf16.msra.mxu0 0
        %2998 = vmatprep.subr.bf16.mxu0 0
        %2999 = vmatpush1.bf16.msra.mxu0 %v2982
        %3000 = vmatprep.subr.bf16.mxu0 0
        %3001 = vmatpush2.bf16.msra.mxu0 0
        %3002 = vmatprep.subr.bf16.mxu0 0
        %3003 = vmatpush2.bf16.msra.mxu0 0
        %3004 = vmatprep.subr.bf16.mxu0 0
        %3005 = vmatpush2.bf16.msra.mxu0 0
        %3006 = vmatprep.subr.bf16.mxu0 0
        %3007 = vmatpush2.bf16.msra.mxu0 0
        %3008 = vmatprep.subr.bf16.mxu0 0
        %3009 = vmatpush2.bf16.msra.mxu0 0
        %3010 = vmatprep.subr.bf16.mxu0 0
        %3011 = vmatpush2.bf16.msra.mxu0 0
        %3012 = vmatprep.subr.bf16.mxu0 0
        %3013 = vmatpush2.bf16.msra.mxu0 0
        %3014 = vmatprep.subr.bf16.mxu0 0
        %3015 = vmatpush2.bf16.msra.mxu0 0
        %3016 = vmatprep.mubr.bf16.mxu0 0
        %3017 = vmatmul.mubr.bf16.gmra.mxu0 %v2928
        %v3018 = vpop.f32.mrf.mxu0
        %v3019 = vadd.f32 0.0, %v3018
        %v3020 = vpop.f32.mrf.mxu0
        %v3021 = vpop.f32.mrf.mxu0
        %v3022 = vadd.f32 0.0, %v3021
        %v3023 = vpop.f32.mrf.mxu0
        %3024 = vmatprep.mubr.bf16.mxu0 0
        %3025 = vmatmul.mubr.bf16.gmra.mxu0 %v2931
        %v3026 = vpop.f32.mrf.mxu0
        %v3027 = vadd.f32 0.0, %v3026
        %v3028 = vpop.f32.mrf.mxu0
        %v3029 = vpop.f32.mrf.mxu0
        %v3030 = vadd.f32 0.0, %v3029
        %v3031 = vpop.f32.mrf.mxu0
        %3032 = vmatprep.mubr.bf16.mxu0 0
        %3033 = vmatmul.mubr.bf16.gmra.mxu0 %v2934
        %v3034 = vpop.f32.mrf.mxu0
        %v3035 = vadd.f32 0.0, %v3034
        %v3036 = vpop.f32.mrf.mxu0
        %v3037 = vpop.f32.mrf.mxu0
        %v3038 = vadd.f32 0.0, %v3037
        %v3039 = vpop.f32.mrf.mxu0
        %3040 = vmatprep.mubr.bf16.mxu0 0
        %3041 = vmatmul.mubr.bf16.gmra.mxu0 %v2937
        %v3042 = vpop.f32.mrf.mxu0
        %v3043 = vadd.f32 0.0, %v3042
        %v3044 = vpop.f32.mrf.mxu0
        %v3045 = vpop.f32.mrf.mxu0
        %v3046 = vadd.f32 0.0, %v3045
        %v3047 = vpop.f32.mrf.mxu0
        %3048 = vmatprep.mubr.bf16.mxu0 0
        %3049 = vmatmul.mubr.bf16.gmra.mxu0 %v2940
        %v3050 = vpop.f32.mrf.mxu0
        %v3051 = vadd.f32 0.0, %v3050
        %v3052 = vpop.f32.mrf.mxu0
        %v3053 = vpop.f32.mrf.mxu0
        %v3054 = vadd.f32 0.0, %v3053
        %v3055 = vpop.f32.mrf.mxu0
        %3056 = vmatprep.mubr.bf16.mxu0 0
        %3057 = vmatmul.mubr.bf16.gmra.mxu0 %v2943
        %v3058 = vpop.f32.mrf.mxu0
        %v3059 = vadd.f32 0.0, %v3058
        %v3060 = vpop.f32.mrf.mxu0
        %v3061 = vpop.f32.mrf.mxu0
        %v3062 = vadd.f32 0.0, %v3061
        %v3063 = vpop.f32.mrf.mxu0
        %3064 = vmatprep.mubr.bf16.mxu0 0
        %3065 = vmatmul.mubr.bf16.gmra.mxu0 %v2946
        %v3066 = vpop.f32.mrf.mxu0
        %v3067 = vadd.f32 0.0, %v3066
        %v3068 = vpop.f32.mrf.mxu0
        %v3069 = vpop.f32.mrf.mxu0
        %v3070 = vadd.f32 0.0, %v3069
        %v3071 = vpop.f32.mrf.mxu0
        %3072 = vmatprep.mubr.bf16.mxu0 0
        %3073 = vmatmul.mubr.bf16.gmra.mxu0 %v2949
        %v3074 = vpop.f32.mrf.mxu0
        %v3075 = vadd.f32 0.0, %v3074
        %v3076 = vpop.f32.mrf.mxu0
        %v3077 = vpop.f32.mrf.mxu0
        %v3078 = vadd.f32 0.0, %v3077
        %v3079 = vpop.f32.mrf.mxu0
        %3080 = vmatprep.mubr.bf16.mxu0 0
        %3081 = vmatmul.mubr.bf16.gmra.mxu0 %v2952
        %v3082 = vpop.f32.mrf.mxu0
        %v3083 = vadd.f32 0.0, %v3082
        %v3084 = vpop.f32.mrf.mxu0
        %v3085 = vpop.f32.mrf.mxu0
        %v3086 = vadd.f32 0.0, %v3085
        %v3087 = vpop.f32.mrf.mxu0
        %3088 = vmatprep.mubr.bf16.mxu0 0
        %3089 = vmatmul.mubr.bf16.gmra.mxu0 %v2955
        %v3090 = vpop.f32.mrf.mxu0
        %v3091 = vadd.f32 0.0, %v3090
        %v3092 = vpop.f32.mrf.mxu0
        %v3093 = vpop.f32.mrf.mxu0
        %v3094 = vadd.f32 0.0, %v3093
        %v3095 = vpop.f32.mrf.mxu0
        %3096 = vmatprep.mubr.bf16.mxu0 0
        %3097 = vmatmul.mubr.bf16.gmra.mxu0 %v2958
        %v3098 = vpop.f32.mrf.mxu0
        %v3099 = vadd.f32 0.0, %v3098
        %v3100 = vpop.f32.mrf.mxu0
        %v3101 = vpop.f32.mrf.mxu0
        %v3102 = vadd.f32 0.0, %v3101
        %v3103 = vpop.f32.mrf.mxu0
        %3104 = vmatprep.mubr.bf16.mxu0 0
        %3105 = vmatmul.mubr.bf16.gmra.mxu0 %v2961
        %v3106 = vpop.f32.mrf.mxu0
        %v3107 = vadd.f32 0.0, %v3106
        %v3108 = vpop.f32.mrf.mxu0
        %v3109 = vpop.f32.mrf.mxu0
        %v3110 = vadd.f32 0.0, %v3109
        %v3111 = vpop.f32.mrf.mxu0
        %3112 = vmatprep.mubr.bf16.mxu0 0
        %3113 = vmatmul.mubr.bf16.gmra.mxu0 %v2964
        %v3114 = vpop.f32.mrf.mxu0
        %v3115 = vadd.f32 0.0, %v3114
        %v3116 = vpop.f32.mrf.mxu0
        %v3117 = vpop.f32.mrf.mxu0
        %v3118 = vadd.f32 0.0, %v3117
        %v3119 = vpop.f32.mrf.mxu0
        %3120 = vmatprep.mubr.bf16.mxu0 0
        %3121 = vmatmul.mubr.bf16.gmra.mxu0 %v2967
        %v3122 = vpop.f32.mrf.mxu0
        %v3123 = vadd.f32 0.0, %v3122
        %v3124 = vpop.f32.mrf.mxu0
        %v3125 = vpop.f32.mrf.mxu0
        %v3126 = vadd.f32 0.0, %v3125
        %v3127 = vpop.f32.mrf.mxu0
        %3128 = vmatprep.mubr.bf16.mxu0 0
        %3129 = vmatmul.mubr.bf16.gmra.mxu0 %v2970
        %v3130 = vpop.f32.mrf.mxu0
        %v3131 = vadd.f32 0.0, %v3130
        %v3132 = vpop.f32.mrf.mxu0
        %v3133 = vpop.f32.mrf.mxu0
        %v3134 = vadd.f32 0.0, %v3133
        %v3135 = vpop.f32.mrf.mxu0
        %3136 = vmatprep.mubr.bf16.mxu0 0
        %3137 = vmatmul.mubr.bf16.gmra.mxu0 %v2973
        %v3138 = vpop.f32.mrf.mxu0
        %v3139 = vadd.f32 0.0, %v3138
        %v3140 = vpop.f32.mrf.mxu0
        %v3141 = vpop.f32.mrf.mxu0
        %v3142 = vadd.f32 0.0, %v3141
        %v3143 = vpop.f32.mrf.mxu0
        %3144 = vmatprep.mubr.bf16.mxu0 0
        %3145 = vmatmul.mubr.bf16.gmra.mxu0 %v2976
        %v3146 = vpop.f32.mrf.mxu0
        %v3147 = vadd.f32 0.0, %v3146
        %v3148 = vpop.f32.mrf.mxu0
        %v3149 = vpop.f32.mrf.mxu0
        %v3150 = vadd.f32 0.0, %v3149
        %v3151 = vpop.f32.mrf.mxu0
        %3152 = vmatprep.mubr.bf16.mxu0 0
        %3153 = vmatmul.mubr.bf16.gmra.mxu0 %v2979
        %v3154 = vpop.f32.mrf.mxu0
        %v3155 = vadd.f32 0.0, %v3154
        %v3156 = vpop.f32.mrf.mxu0
        %v3157 = vpop.f32.mrf.mxu0
        %v3158 = vadd.f32 0.0, %v3157
        %v3159 = vpop.f32.mrf.mxu0
        %3160 = vdwg.mxu0
        %v3161 = vadd.f32 %v2835, %v3019
        %v3162 = vadd.f32 %v2836, %v3022
        %v3163 = vadd.f32 %v2837, %v3027
        %v3164 = vadd.f32 %v2838, %v3030
        %v3165 = vadd.f32 %v2839, %v3035
        %v3166 = vadd.f32 %v2840, %v3038
        %v3167 = vadd.f32 %v2841, %v3043
        %v3168 = vadd.f32 %v2842, %v3046
        %v3169 = vadd.f32 %v2843, %v3051
        %v3170 = vadd.f32 %v2844, %v3054
        %v3171 = vadd.f32 %v2845, %v3059
        %v3172 = vadd.f32 %v2846, %v3062
        %v3173 = vadd.f32 %v2847, %v3067
        %v3174 = vadd.f32 %v2848, %v3070
        %v3175 = vadd.f32 %v2849, %v3075
        %v3176 = vadd.f32 %v2850, %v3078
        %v3177 = vadd.f32 %v2851, %v3083
        %v3178 = vadd.f32 %v2852, %v3086
        %v3179 = vadd.f32 %v2853, %v3091
        %v3180 = vadd.f32 %v2854, %v3094
        %v3181 = vadd.f32 %v2855, %v3099
        %v3182 = vadd.f32 %v2856, %v3102
        %v3183 = vadd.f32 %v2857, %v3107
        %v3184 = vadd.f32 %v2858, %v3110
        %v3185 = vadd.f32 %v2859, %v3115
        %v3186 = vadd.f32 %v2860, %v3118
        %v3187 = vadd.f32 %v2861, %v3123
        %v3188 = vadd.f32 %v2862, %v3126
        %v3189 = vadd.f32 %v2863, %v3131
        %v3190 = vadd.f32 %v2864, %v3134
        %v3191 = vadd.f32 %v2865, %v3139
        %v3192 = vadd.f32 %v2866, %v3142
        %v3193 = vadd.f32 %v2867, %v3147
        %v3194 = vadd.f32 %v2868, %v3150
        %v3195 = vadd.f32 %v2869, %v3155
        %v3196 = vadd.f32 %v2870, %v3158
        %v3197 = vld [vmem:[%s4] sm:$0x1]
        %v3199 = vlaneseq
        %v3200 = vshrl.u32 %v3199, 7
        %v3201 = vsub.s32 0, %v3200
        %v3202 = vrot.slane %v3197, %v3201
        %v3204 = vadd.f32 %v3161, %v3202
        %v3205 = vadd.f32 %v3162, %v3202
        %v3206 = vadd.f32 %v3163, %v3202
        %v3207 = vadd.f32 %v3164, %v3202
        %v3208 = vadd.f32 %v3165, %v3202
        %v3209 = vadd.f32 %v3166, %v3202
        %v3210 = vadd.f32 %v3167, %v3202
        %v3211 = vadd.f32 %v3168, %v3202
        %v3212 = vadd.f32 %v3169, %v3202
        %v3213 = vadd.f32 %v3170, %v3202
        %v3214 = vadd.f32 %v3171, %v3202
        %v3215 = vadd.f32 %v3172, %v3202
        %v3216 = vadd.f32 %v3173, %v3202
        %v3217 = vadd.f32 %v3174, %v3202
        %v3218 = vadd.f32 %v3175, %v3202
        %v3219 = vadd.f32 %v3176, %v3202
        %v3220 = vadd.f32 %v3177, %v3202
        %v3221 = vadd.f32 %v3178, %v3202
        %v3222 = vadd.f32 %v3179, %v3202
        %v3223 = vadd.f32 %v3180, %v3202
        %v3224 = vadd.f32 %v3181, %v3202
        %v3225 = vadd.f32 %v3182, %v3202
        %v3226 = vadd.f32 %v3183, %v3202
        %v3227 = vadd.f32 %v3184, %v3202
        %v3228 = vadd.f32 %v3185, %v3202
        %v3229 = vadd.f32 %v3186, %v3202
        %v3230 = vadd.f32 %v3187, %v3202
        %v3231 = vadd.f32 %v3188, %v3202
        %v3232 = vadd.f32 %v3189, %v3202
        %v3233 = vadd.f32 %v3190, %v3202
        %v3234 = vadd.f32 %v3191, %v3202
        %v3235 = vadd.f32 %v3192, %v3202
        %v3236 = vadd.f32 %v3193, %v3202
        %v3237 = vadd.f32 %v3194, %v3202
        %v3238 = vadd.f32 %v3195, %v3202
        %v3239 = vadd.f32 %v3196, %v3202
        %v3240 = vmax.f32 %v3204, 0.0
        %v3241 = vmax.f32 %v3205, 0.0
        %v3242 = vmax.f32 %v3206, 0.0
        %v3243 = vmax.f32 %v3207, 0.0
        %v3244 = vmax.f32 %v3208, 0.0
        %v3245 = vmax.f32 %v3209, 0.0
        %v3246 = vmax.f32 %v3210, 0.0
        %v3247 = vmax.f32 %v3211, 0.0
        %v3248 = vmax.f32 %v3212, 0.0
        %v3249 = vmax.f32 %v3213, 0.0
        %v3250 = vmax.f32 %v3214, 0.0
        %v3251 = vmax.f32 %v3215, 0.0
        %v3252 = vmax.f32 %v3216, 0.0
        %v3253 = vmax.f32 %v3217, 0.0
        %v3254 = vmax.f32 %v3218, 0.0
        %v3255 = vmax.f32 %v3219, 0.0
        %v3256 = vmax.f32 %v3220, 0.0
        %v3257 = vmax.f32 %v3221, 0.0
        %v3258 = vmax.f32 %v3222, 0.0
        %v3259 = vmax.f32 %v3223, 0.0
        %v3260 = vmax.f32 %v3224, 0.0
        %v3261 = vmax.f32 %v3225, 0.0
        %v3262 = vmax.f32 %v3226, 0.0
        %v3263 = vmax.f32 %v3227, 0.0
        %v3264 = vmax.f32 %v3228, 0.0
        %v3265 = vmax.f32 %v3229, 0.0
        %v3266 = vmax.f32 %v3230, 0.0
        %v3267 = vmax.f32 %v3231, 0.0
        %v3268 = vmax.f32 %v3232, 0.0
        %v3269 = vmax.f32 %v3233, 0.0
        %v3270 = vmax.f32 %v3234, 0.0
        %v3271 = vmax.f32 %v3235, 0.0
        %v3272 = vmax.f32 %v3236, 0.0
        %v3273 = vmax.f32 %v3237, 0.0
        %v3274 = vmax.f32 %v3238, 0.0
        %v3275 = vmax.f32 %v3239, 0.0
        %v3276 = vld [vmem:[%s1] sm:$0xff]
        %v3277 = vld [vmem:[%s1 + $0x8] sm:$0xff]
        %v3278 = vld [vmem:[%s1 + $0x10] sm:$0xff]
        %v3279 = vld [vmem:[%s1 + $0x18] sm:$0xff]
        %v3280 = vld [vmem:[%s1 + $0x20] sm:$0xff]
        %v3281 = vld [vmem:[%s1 + $0x28] sm:$0xff]
        %v3282 = vld [vmem:[%s1 + $0x30] sm:$0xff]
        %v3283 = vld [vmem:[%s1 + $0x38] sm:$0xff]
        %v3284 = vld [vmem:[%s1 + $0x40] sm:$0xff]
        %v3285 = vld [vmem:[%s1 + $0x48] sm:$0xff]
        %v3286 = vld [vmem:[%s1 + $0x50] sm:$0xff]
        %v3287 = vld [vmem:[%s1 + $0x58] sm:$0xff]
        %v3288 = vld [vmem:[%s1 + $0x60] sm:$0xff]
        %v3289 = vld [vmem:[%s1 + $0x68] sm:$0xff]
        %v3290 = vld [vmem:[%s1 + $0x70] sm:$0xff]
        %v3291 = vld [vmem:[%s1 + $0x78] sm:$0xff]
        %v3292 = vld [vmem:[%s1 + $0x80] sm:$0xff]
        %v3293 = vld [vmem:[%s1 + $0x88] sm:$0xff]
        %v3294 = vld [vmem:[%s1 + $0x90] sm:$0xff]
        %v3295 = vld [vmem:[%s1 + $0x98] sm:$0xff]
        %v3296 = vld [vmem:[%s1 + $0xa0] sm:$0xff]
        %v3297 = vld [vmem:[%s1 + $0xa8] sm:$0xff]
        %v3298 = vld [vmem:[%s1 + $0xb0] sm:$0xff]
        %v3299 = vld [vmem:[%s1 + $0xb8] sm:$0xff]
        %v3300 = vld [vmem:[%s1 + $0xc0] sm:$0xff]
        %v3301 = vld [vmem:[%s1 + $0xc8] sm:$0xff]
        %v3302 = vld [vmem:[%s1 + $0xd0] sm:$0xff]
        %v3303 = vld [vmem:[%s1 + $0xd8] sm:$0xff]
        %v3304 = vld [vmem:[%s1 + $0xe0] sm:$0xff]
        %v3305 = vld [vmem:[%s1 + $0xe8] sm:$0xff]
        %v3306 = vld [vmem:[%s1 + $0xf0] sm:$0xff]
        %v3307 = vld [vmem:[%s1 + $0xf8] sm:$0xff]
        %v3308 = vld [vmem:[%s1 + $0x100] sm:$0xff]
        %v3309 = vld [vmem:[%s1 + $0x108] sm:$0xff]
        %v3310 = vld [vmem:[%s1 + $0x110] sm:$0xff]
        %v3311 = vld [vmem:[%s1 + $0x118] sm:$0xff]
        %3313 = vset.pattern.permute.xlu0 0
        %3314 = vperm.xlu0 %3313, %v3276
        %v3315 = vpop.permute.xlu0 %3314
        %3318 = vset.pattern.permute.xlu0 0
        %3319 = vperm.xlu0 %3318, %v3277
        %v3320 = vpop.permute.xlu0 %3319
        %3323 = vset.pattern.permute.xlu0 0
        %3324 = vperm.xlu0 %3323, %v3278
        %v3325 = vpop.permute.xlu0 %3324
        %3328 = vset.pattern.permute.xlu0 0
        %3329 = vperm.xlu0 %3328, %v3279
        %v3330 = vpop.permute.xlu0 %3329
        %3333 = vset.pattern.permute.xlu0 0
        %3334 = vperm.xlu0 %3333, %v3280
        %v3335 = vpop.permute.xlu0 %3334
        %3338 = vset.pattern.permute.xlu0 0
        %3339 = vperm.xlu0 %3338, %v3281
        %v3340 = vpop.permute.xlu0 %3339
        %3343 = vset.pattern.permute.xlu0 0
        %3344 = vperm.xlu0 %3343, %v3282
        %v3345 = vpop.permute.xlu0 %3344
        %3348 = vset.pattern.permute.xlu0 0
        %3349 = vperm.xlu0 %3348, %v3283
        %v3350 = vpop.permute.xlu0 %3349
        %3353 = vset.pattern.permute.xlu0 0
        %3354 = vperm.xlu0 %3353, %v3284
        %v3355 = vpop.permute.xlu0 %3354
        %3358 = vset.pattern.permute.xlu0 0
        %3359 = vperm.xlu0 %3358, %v3285
        %v3360 = vpop.permute.xlu0 %3359
        %3363 = vset.pattern.permute.xlu0 0
        %3364 = vperm.xlu0 %3363, %v3286
        %v3365 = vpop.permute.xlu0 %3364
        %3368 = vset.pattern.permute.xlu0 0
        %3369 = vperm.xlu0 %3368, %v3287
        %v3370 = vpop.permute.xlu0 %3369
        %3373 = vset.pattern.permute.xlu0 0
        %3374 = vperm.xlu0 %3373, %v3288
        %v3375 = vpop.permute.xlu0 %3374
        %3378 = vset.pattern.permute.xlu0 0
        %3379 = vperm.xlu0 %3378, %v3289
        %v3380 = vpop.permute.xlu0 %3379
        %3383 = vset.pattern.permute.xlu0 0
        %3384 = vperm.xlu0 %3383, %v3290
        %v3385 = vpop.permute.xlu0 %3384
        %3388 = vset.pattern.permute.xlu0 0
        %3389 = vperm.xlu0 %3388, %v3291
        %v3390 = vpop.permute.xlu0 %3389
        %3393 = vset.pattern.permute.xlu0 0
        %3394 = vperm.xlu0 %3393, %v3292
        %v3395 = vpop.permute.xlu0 %3394
        %3398 = vset.pattern.permute.xlu0 0
        %3399 = vperm.xlu0 %3398, %v3293
        %v3400 = vpop.permute.xlu0 %3399
        %3403 = vset.pattern.permute.xlu0 0
        %3404 = vperm.xlu0 %3403, %v3294
        %v3405 = vpop.permute.xlu0 %3404
        %3408 = vset.pattern.permute.xlu0 0
        %3409 = vperm.xlu0 %3408, %v3295
        %v3410 = vpop.permute.xlu0 %3409
        %3413 = vset.pattern.permute.xlu0 0
        %3414 = vperm.xlu0 %3413, %v3296
        %v3415 = vpop.permute.xlu0 %3414
        %3418 = vset.pattern.permute.xlu0 0
        %3419 = vperm.xlu0 %3418, %v3297
        %v3420 = vpop.permute.xlu0 %3419
        %3423 = vset.pattern.permute.xlu0 0
        %3424 = vperm.xlu0 %3423, %v3298
        %v3425 = vpop.permute.xlu0 %3424
        %3428 = vset.pattern.permute.xlu0 0
        %3429 = vperm.xlu0 %3428, %v3299
        %v3430 = vpop.permute.xlu0 %3429
        %3433 = vset.pattern.permute.xlu0 0
        %3434 = vperm.xlu0 %3433, %v3300
        %v3435 = vpop.permute.xlu0 %3434
        %3438 = vset.pattern.permute.xlu0 0
        %3439 = vperm.xlu0 %3438, %v3301
        %v3440 = vpop.permute.xlu0 %3439
        %3443 = vset.pattern.permute.xlu0 0
        %3444 = vperm.xlu0 %3443, %v3302
        %v3445 = vpop.permute.xlu0 %3444
        %3448 = vset.pattern.permute.xlu0 0
        %3449 = vperm.xlu0 %3448, %v3303
        %v3450 = vpop.permute.xlu0 %3449
        %3453 = vset.pattern.permute.xlu0 0
        %3454 = vperm.xlu0 %3453, %v3304
        %v3455 = vpop.permute.xlu0 %3454
        %3458 = vset.pattern.permute.xlu0 0
        %3459 = vperm.xlu0 %3458, %v3305
        %v3460 = vpop.permute.xlu0 %3459
        %3463 = vset.pattern.permute.xlu0 0
        %3464 = vperm.xlu0 %3463, %v3306
        %v3465 = vpop.permute.xlu0 %3464
        %3468 = vset.pattern.permute.xlu0 0
        %3469 = vperm.xlu0 %3468, %v3307
        %v3470 = vpop.permute.xlu0 %3469
        %3473 = vset.pattern.permute.xlu0 0
        %3474 = vperm.xlu0 %3473, %v3308
        %v3475 = vpop.permute.xlu0 %3474
        %3478 = vset.pattern.permute.xlu0 0
        %3479 = vperm.xlu0 %3478, %v3309
        %v3480 = vpop.permute.xlu0 %3479
        %3483 = vset.pattern.permute.xlu0 0
        %3484 = vperm.xlu0 %3483, %v3310
        %v3485 = vpop.permute.xlu0 %3484
        %3488 = vset.pattern.permute.xlu0 0
        %3489 = vperm.xlu0 %3488, %v3311
        %v3490 = vpop.permute.xlu0 %3489
        %v3492 = vmul.f32 %v3240, %v3315
        %v3493 = vmul.f32 %v3241, %v3320
        %v3494 = vmul.f32 %v3242, %v3325
        %v3495 = vmul.f32 %v3243, %v3330
        %v3496 = vmul.f32 %v3244, %v3335
        %v3497 = vmul.f32 %v3245, %v3340
        %v3498 = vmul.f32 %v3246, %v3345
        %v3499 = vmul.f32 %v3247, %v3350
        %v3500 = vmul.f32 %v3248, %v3355
        %v3501 = vmul.f32 %v3249, %v3360
        %v3502 = vmul.f32 %v3250, %v3365
        %v3503 = vmul.f32 %v3251, %v3370
        %v3504 = vmul.f32 %v3252, %v3375
        %v3505 = vmul.f32 %v3253, %v3380
        %v3506 = vmul.f32 %v3254, %v3385
        %v3507 = vmul.f32 %v3255, %v3390
        %v3508 = vmul.f32 %v3256, %v3395
        %v3509 = vmul.f32 %v3257, %v3400
        %v3510 = vmul.f32 %v3258, %v3405
        %v3511 = vmul.f32 %v3259, %v3410
        %v3512 = vmul.f32 %v3260, %v3415
        %v3513 = vmul.f32 %v3261, %v3420
        %v3514 = vmul.f32 %v3262, %v3425
        %v3515 = vmul.f32 %v3263, %v3430
        %v3516 = vmul.f32 %v3264, %v3435
        %v3517 = vmul.f32 %v3265, %v3440
        %v3518 = vmul.f32 %v3266, %v3445
        %v3519 = vmul.f32 %v3267, %v3450
        %v3520 = vmul.f32 %v3268, %v3455
        %v3521 = vmul.f32 %v3269, %v3460
        %v3522 = vmul.f32 %v3270, %v3465
        %v3523 = vmul.f32 %v3271, %v3470
        %v3524 = vmul.f32 %v3272, %v3475
        %v3525 = vmul.f32 %v3273, %v3480
        %v3526 = vmul.f32 %v3274, %v3485
        %v3527 = vmul.f32 %v3275, %v3490
        %3528 = vst [vmem:[#allocation2] sm:$0xff] 0.0
        %3529 = vst [vmem:[#allocation2 + $0x8] sm:$0xff] 0.0
        %3530 = vst [vmem:[#allocation2 + $0x10] sm:$0xff] 0.0
        %3531 = vst [vmem:[#allocation2 + $0x18] sm:$0xff] 0.0
        %3532 = vst [vmem:[#allocation2 + $0x20] sm:$0xff] 0.0
        %3533 = vst [vmem:[#allocation2 + $0x28] sm:$0xff] 0.0
        %3534 = vst [vmem:[#allocation2 + $0x30] sm:$0xff] 0.0
        %3535 = vst [vmem:[#allocation2 + $0x38] sm:$0xff] 0.0
        %3536 = vst [vmem:[#allocation2 + $0x40] sm:$0xff] 0.0
        %3537 = vst [vmem:[#allocation2 + $0x48] sm:$0xff] 0.0
        %3538 = vst [vmem:[#allocation2 + $0x50] sm:$0xff] 0.0
        %3539 = vst [vmem:[#allocation2 + $0x58] sm:$0xff] 0.0
        %3540 = vst [vmem:[#allocation2 + $0x60] sm:$0xff] 0.0
        %3541 = vst [vmem:[#allocation2 + $0x68] sm:$0xff] 0.0
        %3542 = vst [vmem:[#allocation2 + $0x70] sm:$0xff] 0.0
        %3543 = vst [vmem:[#allocation2 + $0x78] sm:$0xff] 0.0
        %3544 = vst [vmem:[#allocation2 + $0x80] sm:$0xff] 0.0
        %3545 = vst [vmem:[#allocation2 + $0x88] sm:$0xff] 0.0
        %3546 = vst [vmem:[#allocation2 + $0x90] sm:$0xff] 0.0
        %3547 = vst [vmem:[#allocation2 + $0x98] sm:$0xff] 0.0
        %3548 = vst [vmem:[#allocation2 + $0xa0] sm:$0xff] 0.0
        %3549 = vst [vmem:[#allocation2 + $0xa8] sm:$0xff] 0.0
        %3550 = vst [vmem:[#allocation2 + $0xb0] sm:$0xff] 0.0
        %3551 = vst [vmem:[#allocation2 + $0xb8] sm:$0xff] 0.0
        %3552 = vst [vmem:[#allocation2 + $0xc0] sm:$0xff] 0.0
        %3553 = vst [vmem:[#allocation2 + $0xc8] sm:$0xff] 0.0
        %3554 = vst [vmem:[#allocation2 + $0xd0] sm:$0xff] 0.0
        %3555 = vst [vmem:[#allocation2 + $0xd8] sm:$0xff] 0.0
        %3556 = vst [vmem:[#allocation2 + $0xe0] sm:$0xff] 0.0
        %3557 = vst [vmem:[#allocation2 + $0xe8] sm:$0xff] 0.0
        %3558 = vst [vmem:[#allocation2 + $0xf0] sm:$0xff] 0.0
        %3559 = vst [vmem:[#allocation2 + $0xf8] sm:$0xff] 0.0
        %3560 = vst [vmem:[#allocation2 + $0x100] sm:$0xff] 0.0
        %3561 = vst [vmem:[#allocation2 + $0x108] sm:$0xff] 0.0
        %3562 = vst [vmem:[#allocation2 + $0x110] sm:$0xff] 0.0
        %3563 = vst [vmem:[#allocation2 + $0x118] sm:$0xff] 0.0
        %3564 = vst [vmem:[#allocation2 + $0x120] sm:$0xff] 0.0
        %3565 = vst [vmem:[#allocation2 + $0x128] sm:$0xff] 0.0
        %3566 = vst [vmem:[#allocation2 + $0x130] sm:$0xff] 0.0
        %3567 = vst [vmem:[#allocation2 + $0x138] sm:$0xff] 0.0
        %3568 = vst [vmem:[#allocation2 + $0x140] sm:$0xff] 0.0
        %3569 = vst [vmem:[#allocation2 + $0x148] sm:$0xff] 0.0
        %3570 = vst [vmem:[#allocation2 + $0x18] sm:$0xff] %v3492
        %3571 = vst [vmem:[#allocation2 + $0x20] sm:$0xff] %v3493
        %3572 = vst [vmem:[#allocation2 + $0x28] sm:$0xff] %v3494
        %3573 = vst [vmem:[#allocation2 + $0x30] sm:$0xff] %v3495
        %3574 = vst [vmem:[#allocation2 + $0x38] sm:$0xff] %v3496
        %3575 = vst [vmem:[#allocation2 + $0x40] sm:$0xff] %v3497
        %3576 = vst [vmem:[#allocation2 + $0x48] sm:$0xff] %v3498
        %3577 = vst [vmem:[#allocation2 + $0x50] sm:$0xff] %v3499
        %3578 = vst [vmem:[#allocation2 + $0x58] sm:$0xff] %v3500
        %3579 = vst [vmem:[#allocation2 + $0x60] sm:$0xff] %v3501
        %3580 = vst [vmem:[#allocation2 + $0x68] sm:$0xff] %v3502
        %3581 = vst [vmem:[#allocation2 + $0x70] sm:$0xff] %v3503
        %3582 = vst [vmem:[#allocation2 + $0x78] sm:$0xff] %v3504
        %3583 = vst [vmem:[#allocation2 + $0x80] sm:$0xff] %v3505
        %3584 = vst [vmem:[#allocation2 + $0x88] sm:$0xff] %v3506
        %3585 = vst [vmem:[#allocation2 + $0x90] sm:$0xff] %v3507
        %3586 = vst [vmem:[#allocation2 + $0x98] sm:$0xff] %v3508
        %3587 = vst [vmem:[#allocation2 + $0xa0] sm:$0xff] %v3509
        %3588 = vst [vmem:[#allocation2 + $0xa8] sm:$0xff] %v3510
        %3589 = vst [vmem:[#allocation2 + $0xb0] sm:$0xff] %v3511
        %3590 = vst [vmem:[#allocation2 + $0xb8] sm:$0xff] %v3512
        %3591 = vst [vmem:[#allocation2 + $0xc0] sm:$0xff] %v3513
        %3592 = vst [vmem:[#allocation2 + $0xc8] sm:$0xff] %v3514
        %3593 = vst [vmem:[#allocation2 + $0xd0] sm:$0xff] %v3515
        %3594 = vst [vmem:[#allocation2 + $0xd8] sm:$0xff] %v3516
        %3595 = vst [vmem:[#allocation2 + $0xe0] sm:$0xff] %v3517
        %3596 = vst [vmem:[#allocation2 + $0xe8] sm:$0xff] %v3518
        %3597 = vst [vmem:[#allocation2 + $0xf0] sm:$0xff] %v3519
        %3598 = vst [vmem:[#allocation2 + $0xf8] sm:$0xff] %v3520
        %3599 = vst [vmem:[#allocation2 + $0x100] sm:$0xff] %v3521
        %3600 = vst [vmem:[#allocation2 + $0x108] sm:$0xff] %v3522
        %3601 = vst [vmem:[#allocation2 + $0x110] sm:$0xff] %v3523
        %3602 = vst [vmem:[#allocation2 + $0x118] sm:$0xff] %v3524
        %3603 = vst [vmem:[#allocation2 + $0x120] sm:$0xff] %v3525
        %3604 = vst [vmem:[#allocation2 + $0x128] sm:$0xff] %v3526
        %3605 = vst [vmem:[#allocation2 + $0x130] sm:$0xff] %v3527
        %v3606 = vld [vmem:[#allocation2 + $0x5] sm:$0xff]
        %v3607 = vld [vmem:[#allocation2 + $0xd] sm:$0xff]
        %v3608 = vld [vmem:[#allocation2 + $0x15] sm:$0xff]
        %v3609 = vld [vmem:[#allocation2 + $0x1d] sm:$0xff]
        %v3610 = vld [vmem:[#allocation2 + $0x25] sm:$0xff]
        %v3611 = vld [vmem:[#allocation2 + $0x2d] sm:$0xff]
        %v3612 = vld [vmem:[#allocation2 + $0x35] sm:$0xff]
        %v3613 = vld [vmem:[#allocation2 + $0x3d] sm:$0xff]
        %v3614 = vld [vmem:[#allocation2 + $0x45] sm:$0xff]
        %v3615 = vld [vmem:[#allocation2 + $0x4d] sm:$0xff]
        %v3616 = vld [vmem:[#allocation2 + $0x55] sm:$0xff]
        %v3617 = vld [vmem:[#allocation2 + $0x5d] sm:$0xff]
        %v3618 = vld [vmem:[#allocation2 + $0x65] sm:$0xff]
        %v3619 = vld [vmem:[#allocation2 + $0x6d] sm:$0xff]
        %v3620 = vld [vmem:[#allocation2 + $0x75] sm:$0xff]
        %v3621 = vld [vmem:[#allocation2 + $0x7d] sm:$0xff]
        %v3622 = vld [vmem:[#allocation2 + $0x85] sm:$0xff]
        %v3623 = vld [vmem:[#allocation2 + $0x8d] sm:$0xff]
        %v3624 = vld [vmem:[#allocation2 + $0x95] sm:$0xff]
        %v3625 = vld [vmem:[#allocation2 + $0x9d] sm:$0xff]
        %v3626 = vld [vmem:[#allocation2 + $0xa5] sm:$0xff]
        %v3627 = vld [vmem:[#allocation2 + $0xad] sm:$0xff]
        %v3628 = vld [vmem:[#allocation2 + $0xb5] sm:$0xff]
        %v3629 = vld [vmem:[#allocation2 + $0xbd] sm:$0xff]
        %v3630 = vld [vmem:[#allocation2 + $0xc5] sm:$0xff]
        %v3631 = vld [vmem:[#allocation2 + $0xcd] sm:$0xff]
        %v3632 = vld [vmem:[#allocation2 + $0xd5] sm:$0xff]
        %v3633 = vld [vmem:[#allocation2 + $0xdd] sm:$0xff]
        %v3634 = vld [vmem:[#allocation2 + $0xe5] sm:$0xff]
        %v3635 = vld [vmem:[#allocation2 + $0xed] sm:$0xff]
        %v3636 = vld [vmem:[#allocation2 + $0xf5] sm:$0xff]
        %v3637 = vld [vmem:[#allocation2 + $0xfd] sm:$0xff]
        %v3638 = vld [vmem:[#allocation2 + $0x105] sm:$0xff]
        %v3639 = vld [vmem:[#allocation2 + $0x10d] sm:$0xff]
        %v3640 = vld [vmem:[#allocation2 + $0x115] sm:$0xff]
        %v3641 = vld [vmem:[#allocation2 + $0x11d] sm:$0xff]
        %v3642 = vpack.c.bf16 %v3607, %v3606
        %v3643 = vpack.c.bf16 %v3609, %v3608
        %v3644 = vpack.c.bf16 %v3611, %v3610
        %v3645 = vpack.c.bf16 %v3613, %v3612
        %v3646 = vpack.c.bf16 %v3615, %v3614
        %v3647 = vpack.c.bf16 %v3617, %v3616
        %v3648 = vpack.c.bf16 %v3619, %v3618
        %v3649 = vpack.c.bf16 %v3621, %v3620
        %v3650 = vpack.c.bf16 %v3623, %v3622
        %v3651 = vpack.c.bf16 %v3625, %v3624
        %v3652 = vpack.c.bf16 %v3627, %v3626
        %v3653 = vpack.c.bf16 %v3629, %v3628
        %v3654 = vpack.c.bf16 %v3631, %v3630
        %v3655 = vpack.c.bf16 %v3633, %v3632
        %v3656 = vpack.c.bf16 %v3635, %v3634
        %v3657 = vpack.c.bf16 %v3637, %v3636
        %v3658 = vpack.c.bf16 %v3639, %v3638
        %v3659 = vpack.c.bf16 %v3641, %v3640
        %v3660 = vld [vmem:[%s5] sm:$0xf]
        %v3661 = vld [vmem:[%s5 + $0x4] sm:$0xf]
        %v3662 = vld [vmem:[%s5 + $0x8] sm:$0xf]
        %v3663 = vld [vmem:[%s5 + $0xc] sm:$0xf]
        %v3664 = vld [vmem:[%s5 + $0x10] sm:$0xf]
        %v3665 = vld [vmem:[%s5 + $0x14] sm:$0xf]
        %v3666 = vld [vmem:[%s5 + $0x18] sm:$0xf]
        %v3667 = vld [vmem:[%s5 + $0x1c] sm:$0xf]
        %v3668 = vld [vmem:[%s5 + $0x20] sm:$0xf]
        %v3669 = vld [vmem:[%s5 + $0x24] sm:$0xf]
        %v3670 = vld [vmem:[%s5 + $0x28] sm:$0xf]
        %v3671 = vld [vmem:[%s5 + $0x2c] sm:$0xf]
        %v3672 = vld [vmem:[%s5 + $0x30] sm:$0xf]
        %v3673 = vld [vmem:[%s5 + $0x34] sm:$0xf]
        %v3674 = vld [vmem:[%s5 + $0x38] sm:$0xf]
        %v3675 = vld [vmem:[%s5 + $0x3c] sm:$0xf]
        %v3676 = vld [vmem:[#allocation2 + $0x6] sm:$0xff]
        %v3677 = vld [vmem:[#allocation2 + $0xe] sm:$0xff]
        %v3678 = vld [vmem:[#allocation2 + $0x16] sm:$0xff]
        %v3679 = vld [vmem:[#allocation2 + $0x1e] sm:$0xff]
        %v3680 = vld [vmem:[#allocation2 + $0x26] sm:$0xff]
        %v3681 = vld [vmem:[#allocation2 + $0x2e] sm:$0xff]
        %v3682 = vld [vmem:[#allocation2 + $0x36] sm:$0xff]
        %v3683 = vld [vmem:[#allocation2 + $0x3e] sm:$0xff]
        %v3684 = vld [vmem:[#allocation2 + $0x46] sm:$0xff]
        %v3685 = vld [vmem:[#allocation2 + $0x4e] sm:$0xff]
        %v3686 = vld [vmem:[#allocation2 + $0x56] sm:$0xff]
        %v3687 = vld [vmem:[#allocation2 + $0x5e] sm:$0xff]
        %v3688 = vld [vmem:[#allocation2 + $0x66] sm:$0xff]
        %v3689 = vld [vmem:[#allocation2 + $0x6e] sm:$0xff]
        %v3690 = vld [vmem:[#allocation2 + $0x76] sm:$0xff]
        %v3691 = vld [vmem:[#allocation2 + $0x7e] sm:$0xff]
        %v3692 = vld [vmem:[#allocation2 + $0x86] sm:$0xff]
        %v3693 = vld [vmem:[#allocation2 + $0x8e] sm:$0xff]
        %v3694 = vld [vmem:[#allocation2 + $0x96] sm:$0xff]
        %v3695 = vld [vmem:[#allocation2 + $0x9e] sm:$0xff]
        %v3696 = vld [vmem:[#allocation2 + $0xa6] sm:$0xff]
        %v3697 = vld [vmem:[#allocation2 + $0xae] sm:$0xff]
        %v3698 = vld [vmem:[#allocation2 + $0xb6] sm:$0xff]
        %v3699 = vld [vmem:[#allocation2 + $0xbe] sm:$0xff]
        %v3700 = vld [vmem:[#allocation2 + $0xc6] sm:$0xff]
        %v3701 = vld [vmem:[#allocation2 + $0xce] sm:$0xff]
        %v3702 = vld [vmem:[#allocation2 + $0xd6] sm:$0xff]
        %v3703 = vld [vmem:[#allocation2 + $0xde] sm:$0xff]
        %v3704 = vld [vmem:[#allocation2 + $0xe6] sm:$0xff]
        %v3705 = vld [vmem:[#allocation2 + $0xee] sm:$0xff]
        %v3706 = vld [vmem:[#allocation2 + $0xf6] sm:$0xff]
        %v3707 = vld [vmem:[#allocation2 + $0xfe] sm:$0xff]
        %v3708 = vld [vmem:[#allocation2 + $0x106] sm:$0xff]
        %v3709 = vld [vmem:[#allocation2 + $0x10e] sm:$0xff]
        %v3710 = vld [vmem:[#allocation2 + $0x116] sm:$0xff]
        %v3711 = vld [vmem:[#allocation2 + $0x11e] sm:$0xff]
        %v3712 = vpack.c.bf16 %v3677, %v3676
        %v3713 = vpack.c.bf16 %v3679, %v3678
        %v3714 = vpack.c.bf16 %v3681, %v3680
        %v3715 = vpack.c.bf16 %v3683, %v3682
        %v3716 = vpack.c.bf16 %v3685, %v3684
        %v3717 = vpack.c.bf16 %v3687, %v3686
        %v3718 = vpack.c.bf16 %v3689, %v3688
        %v3719 = vpack.c.bf16 %v3691, %v3690
        %v3720 = vpack.c.bf16 %v3693, %v3692
        %v3721 = vpack.c.bf16 %v3695, %v3694
        %v3722 = vpack.c.bf16 %v3697, %v3696
        %v3723 = vpack.c.bf16 %v3699, %v3698
        %v3724 = vpack.c.bf16 %v3701, %v3700
        %v3725 = vpack.c.bf16 %v3703, %v3702
        %v3726 = vpack.c.bf16 %v3705, %v3704
        %v3727 = vpack.c.bf16 %v3707, %v3706
        %v3728 = vpack.c.bf16 %v3709, %v3708
        %v3729 = vpack.c.bf16 %v3711, %v3710
        %s3730 = scalar_lea.vmem %s5, 64
        %v3731 = vld [vmem:[%s3730] sm:$0xf]
        %v3732 = vld [vmem:[%s3730 + $0x4] sm:$0xf]
        %v3733 = vld [vmem:[%s3730 + $0x8] sm:$0xf]
        %v3734 = vld [vmem:[%s3730 + $0xc] sm:$0xf]
        %v3735 = vld [vmem:[%s3730 + $0x10] sm:$0xf]
        %v3736 = vld [vmem:[%s3730 + $0x14] sm:$0xf]
        %v3737 = vld [vmem:[%s3730 + $0x18] sm:$0xf]
        %v3738 = vld [vmem:[%s3730 + $0x1c] sm:$0xf]
        %v3739 = vld [vmem:[%s3730 + $0x20] sm:$0xf]
        %v3740 = vld [vmem:[%s3730 + $0x24] sm:$0xf]
        %v3741 = vld [vmem:[%s3730 + $0x28] sm:$0xf]
        %v3742 = vld [vmem:[%s3730 + $0x2c] sm:$0xf]
        %v3743 = vld [vmem:[%s3730 + $0x30] sm:$0xf]
        %v3744 = vld [vmem:[%s3730 + $0x34] sm:$0xf]
        %v3745 = vld [vmem:[%s3730 + $0x38] sm:$0xf]
        %v3746 = vld [vmem:[%s3730 + $0x3c] sm:$0xf]
        %v3763 = vunpack.c.l.b16 %v3731
        %v3764 = vunpack.c.l.b16 %v3732
        %v3765 = vunpack.c.l.b16 %v3733
        %v3766 = vunpack.c.l.b16 %v3734
        %v3767 = vunpack.c.l.b16 %v3735
        %v3768 = vunpack.c.l.b16 %v3736
        %v3769 = vunpack.c.l.b16 %v3737
        %v3770 = vunpack.c.l.b16 %v3738
        %v3771 = vunpack.c.l.b16 %v3739
        %v3772 = vunpack.c.l.b16 %v3740
        %v3773 = vunpack.c.l.b16 %v3741
        %v3774 = vunpack.c.l.b16 %v3742
        %v3775 = vunpack.c.l.b16 %v3743
        %v3776 = vunpack.c.l.b16 %v3744
        %v3777 = vunpack.c.l.b16 %v3745
        %v3778 = vunpack.c.l.b16 %v3746
        %v3779 = vpack.c.b16 %v3764, %v3763
        %v3780 = vpack.c.b16 %v3766, %v3765
        %v3781 = vpack.c.b16 %v3768, %v3767
        %v3782 = vpack.c.b16 %v3770, %v3769
        %v3783 = vpack.c.b16 %v3772, %v3771
        %v3784 = vpack.c.b16 %v3774, %v3773
        %v3785 = vpack.c.b16 %v3776, %v3775
        %v3786 = vpack.c.b16 %v3778, %v3777
        %3795 = vmatprep.subr.bf16.mxu0 0
        %3796 = vmatpush1.bf16.msra.mxu0 %v3786
        %3797 = vmatprep.subr.bf16.mxu0 0
        %3798 = vmatpush1.bf16.msra.mxu0 %v3785
        %3799 = vmatprep.subr.bf16.mxu0 0
        %3800 = vmatpush1.bf16.msra.mxu0 %v3784
        %3801 = vmatprep.subr.bf16.mxu0 0
        %3802 = vmatpush1.bf16.msra.mxu0 %v3783
        %3803 = vmatprep.subr.bf16.mxu0 0
        %3804 = vmatpush1.bf16.msra.mxu0 %v3782
        %3805 = vmatprep.subr.bf16.mxu0 0
        %3806 = vmatpush1.bf16.msra.mxu0 %v3781
        %3807 = vmatprep.subr.bf16.mxu0 0
        %3808 = vmatpush1.bf16.msra.mxu0 %v3780
        %3809 = vmatprep.subr.bf16.mxu0 0
        %3810 = vmatpush1.bf16.msra.mxu0 %v3779
        %3811 = vmatprep.subr.bf16.mxu0 0
        %3812 = vmatpush2.bf16.msra.mxu0 0
        %3813 = vmatprep.subr.bf16.mxu0 0
        %3814 = vmatpush2.bf16.msra.mxu0 0
        %3815 = vmatprep.subr.bf16.mxu0 0
        %3816 = vmatpush2.bf16.msra.mxu0 0
        %3817 = vmatprep.subr.bf16.mxu0 0
        %3818 = vmatpush2.bf16.msra.mxu0 0
        %3819 = vmatprep.subr.bf16.mxu0 0
        %3820 = vmatpush2.bf16.msra.mxu0 0
        %3821 = vmatprep.subr.bf16.mxu0 0
        %3822 = vmatpush2.bf16.msra.mxu0 0
        %3823 = vmatprep.subr.bf16.mxu0 0
        %3824 = vmatpush2.bf16.msra.mxu0 0
        %3825 = vmatprep.subr.bf16.mxu0 0
        %3826 = vmatpush2.bf16.msra.mxu0 0
        %3827 = vmatprep.mubr.bf16.mxu0 0
        %3828 = vmatmul.mubr.bf16.gmra.mxu0 %v3712
        %v3829 = vpop.f32.mrf.mxu0
        %v3830 = vadd.f32 0.0, %v3829
        %v3831 = vpop.f32.mrf.mxu0
        %v3832 = vpop.f32.mrf.mxu0
        %v3833 = vadd.f32 0.0, %v3832
        %v3834 = vpop.f32.mrf.mxu0
        %3835 = vmatprep.mubr.bf16.mxu0 0
        %3836 = vmatmul.mubr.bf16.gmra.mxu0 %v3713
        %v3837 = vpop.f32.mrf.mxu0
        %v3838 = vadd.f32 0.0, %v3837
        %v3839 = vpop.f32.mrf.mxu0
        %v3840 = vpop.f32.mrf.mxu0
        %v3841 = vadd.f32 0.0, %v3840
        %v3842 = vpop.f32.mrf.mxu0
        %3843 = vmatprep.mubr.bf16.mxu0 0
        %3844 = vmatmul.mubr.bf16.gmra.mxu0 %v3714
        %v3845 = vpop.f32.mrf.mxu0
        %v3846 = vadd.f32 0.0, %v3845
        %v3847 = vpop.f32.mrf.mxu0
        %v3848 = vpop.f32.mrf.mxu0
        %v3849 = vadd.f32 0.0, %v3848
        %v3850 = vpop.f32.mrf.mxu0
        %3851 = vmatprep.mubr.bf16.mxu0 0
        %3852 = vmatmul.mubr.bf16.gmra.mxu0 %v3715
        %v3853 = vpop.f32.mrf.mxu0
        %v3854 = vadd.f32 0.0, %v3853
        %v3855 = vpop.f32.mrf.mxu0
        %v3856 = vpop.f32.mrf.mxu0
        %v3857 = vadd.f32 0.0, %v3856
        %v3858 = vpop.f32.mrf.mxu0
        %3859 = vmatprep.mubr.bf16.mxu0 0
        %3860 = vmatmul.mubr.bf16.gmra.mxu0 %v3716
        %v3861 = vpop.f32.mrf.mxu0
        %v3862 = vadd.f32 0.0, %v3861
        %v3863 = vpop.f32.mrf.mxu0
        %v3864 = vpop.f32.mrf.mxu0
        %v3865 = vadd.f32 0.0, %v3864
        %v3866 = vpop.f32.mrf.mxu0
        %3867 = vmatprep.mubr.bf16.mxu0 0
        %3868 = vmatmul.mubr.bf16.gmra.mxu0 %v3717
        %v3869 = vpop.f32.mrf.mxu0
        %v3870 = vadd.f32 0.0, %v3869
        %v3871 = vpop.f32.mrf.mxu0
        %v3872 = vpop.f32.mrf.mxu0
        %v3873 = vadd.f32 0.0, %v3872
        %v3874 = vpop.f32.mrf.mxu0
        %3875 = vmatprep.mubr.bf16.mxu0 0
        %3876 = vmatmul.mubr.bf16.gmra.mxu0 %v3718
        %v3877 = vpop.f32.mrf.mxu0
        %v3878 = vadd.f32 0.0, %v3877
        %v3879 = vpop.f32.mrf.mxu0
        %v3880 = vpop.f32.mrf.mxu0
        %v3881 = vadd.f32 0.0, %v3880
        %v3882 = vpop.f32.mrf.mxu0
        %3883 = vmatprep.mubr.bf16.mxu0 0
        %3884 = vmatmul.mubr.bf16.gmra.mxu0 %v3719
        %v3885 = vpop.f32.mrf.mxu0
        %v3886 = vadd.f32 0.0, %v3885
        %v3887 = vpop.f32.mrf.mxu0
        %v3888 = vpop.f32.mrf.mxu0
        %v3889 = vadd.f32 0.0, %v3888
        %v3890 = vpop.f32.mrf.mxu0
        %3891 = vmatprep.mubr.bf16.mxu0 0
        %3892 = vmatmul.mubr.bf16.gmra.mxu0 %v3720
        %v3893 = vpop.f32.mrf.mxu0
        %v3894 = vadd.f32 0.0, %v3893
        %v3895 = vpop.f32.mrf.mxu0
        %v3896 = vpop.f32.mrf.mxu0
        %v3897 = vadd.f32 0.0, %v3896
        %v3898 = vpop.f32.mrf.mxu0
        %3899 = vmatprep.mubr.bf16.mxu0 0
        %3900 = vmatmul.mubr.bf16.gmra.mxu0 %v3721
        %v3901 = vpop.f32.mrf.mxu0
        %v3902 = vadd.f32 0.0, %v3901
        %v3903 = vpop.f32.mrf.mxu0
        %v3904 = vpop.f32.mrf.mxu0
        %v3905 = vadd.f32 0.0, %v3904
        %v3906 = vpop.f32.mrf.mxu0
        %3907 = vmatprep.mubr.bf16.mxu0 0
        %3908 = vmatmul.mubr.bf16.gmra.mxu0 %v3722
        %v3909 = vpop.f32.mrf.mxu0
        %v3910 = vadd.f32 0.0, %v3909
        %v3911 = vpop.f32.mrf.mxu0
        %v3912 = vpop.f32.mrf.mxu0
        %v3913 = vadd.f32 0.0, %v3912
        %v3914 = vpop.f32.mrf.mxu0
        %3915 = vmatprep.mubr.bf16.mxu0 0
        %3916 = vmatmul.mubr.bf16.gmra.mxu0 %v3723
        %v3917 = vpop.f32.mrf.mxu0
        %v3918 = vadd.f32 0.0, %v3917
        %v3919 = vpop.f32.mrf.mxu0
        %v3920 = vpop.f32.mrf.mxu0
        %v3921 = vadd.f32 0.0, %v3920
        %v3922 = vpop.f32.mrf.mxu0
        %3923 = vmatprep.mubr.bf16.mxu0 0
        %3924 = vmatmul.mubr.bf16.gmra.mxu0 %v3724
        %v3925 = vpop.f32.mrf.mxu0
        %v3926 = vadd.f32 0.0, %v3925
        %v3927 = vpop.f32.mrf.mxu0
        %v3928 = vpop.f32.mrf.mxu0
        %v3929 = vadd.f32 0.0, %v3928
        %v3930 = vpop.f32.mrf.mxu0
        %3931 = vmatprep.mubr.bf16.mxu0 0
        %3932 = vmatmul.mubr.bf16.gmra.mxu0 %v3725
        %v3933 = vpop.f32.mrf.mxu0
        %v3934 = vadd.f32 0.0, %v3933
        %v3935 = vpop.f32.mrf.mxu0
        %v3936 = vpop.f32.mrf.mxu0
        %v3937 = vadd.f32 0.0, %v3936
        %v3938 = vpop.f32.mrf.mxu0
        %3939 = vmatprep.mubr.bf16.mxu0 0
        %3940 = vmatmul.mubr.bf16.gmra.mxu0 %v3726
        %v3941 = vpop.f32.mrf.mxu0
        %v3942 = vadd.f32 0.0, %v3941
        %v3943 = vpop.f32.mrf.mxu0
        %v3944 = vpop.f32.mrf.mxu0
        %v3945 = vadd.f32 0.0, %v3944
        %v3946 = vpop.f32.mrf.mxu0
        %3947 = vmatprep.mubr.bf16.mxu0 0
        %3948 = vmatmul.mubr.bf16.gmra.mxu0 %v3727
        %v3949 = vpop.f32.mrf.mxu0
        %v3950 = vadd.f32 0.0, %v3949
        %v3951 = vpop.f32.mrf.mxu0
        %v3952 = vpop.f32.mrf.mxu0
        %v3953 = vadd.f32 0.0, %v3952
        %v3954 = vpop.f32.mrf.mxu0
        %3955 = vmatprep.mubr.bf16.mxu0 0
        %3956 = vmatmul.mubr.bf16.gmra.mxu0 %v3728
        %v3957 = vpop.f32.mrf.mxu0
        %v3958 = vadd.f32 0.0, %v3957
        %v3959 = vpop.f32.mrf.mxu0
        %v3960 = vpop.f32.mrf.mxu0
        %v3961 = vadd.f32 0.0, %v3960
        %v3962 = vpop.f32.mrf.mxu0
        %3963 = vmatprep.mubr.bf16.mxu0 0
        %3964 = vmatmul.mubr.bf16.gmra.mxu0 %v3729
        %v3965 = vpop.f32.mrf.mxu0
        %v3966 = vadd.f32 0.0, %v3965
        %v3967 = vpop.f32.mrf.mxu0
        %v3968 = vpop.f32.mrf.mxu0
        %v3969 = vadd.f32 0.0, %v3968
        %v3970 = vpop.f32.mrf.mxu0
        %3971 = vdwg.mxu0
        %v3988 = vunpack.c.l.b16 %v3660
        %v3989 = vunpack.c.l.b16 %v3661
        %v3990 = vunpack.c.l.b16 %v3662
        %v3991 = vunpack.c.l.b16 %v3663
        %v3992 = vunpack.c.l.b16 %v3664
        %v3993 = vunpack.c.l.b16 %v3665
        %v3994 = vunpack.c.l.b16 %v3666
        %v3995 = vunpack.c.l.b16 %v3667
        %v3996 = vunpack.c.l.b16 %v3668
        %v3997 = vunpack.c.l.b16 %v3669
        %v3998 = vunpack.c.l.b16 %v3670
        %v3999 = vunpack.c.l.b16 %v3671
        %v4000 = vunpack.c.l.b16 %v3672
        %v4001 = vunpack.c.l.b16 %v3673
        %v4002 = vunpack.c.l.b16 %v3674
        %v4003 = vunpack.c.l.b16 %v3675
        %v4004 = vpack.c.b16 %v3989, %v3988
        %v4005 = vpack.c.b16 %v3991, %v3990
        %v4006 = vpack.c.b16 %v3993, %v3992
        %v4007 = vpack.c.b16 %v3995, %v3994
        %v4008 = vpack.c.b16 %v3997, %v3996
        %v4009 = vpack.c.b16 %v3999, %v3998
        %v4010 = vpack.c.b16 %v4001, %v4000
        %v4011 = vpack.c.b16 %v4003, %v4002
        %4020 = vmatprep.subr.bf16.mxu0 0
        %4021 = vmatpush1.bf16.msra.mxu0 %v4011
        %4022 = vmatprep.subr.bf16.mxu0 0
        %4023 = vmatpush1.bf16.msra.mxu0 %v4010
        %4024 = vmatprep.subr.bf16.mxu0 0
        %4025 = vmatpush1.bf16.msra.mxu0 %v4009
        %4026 = vmatprep.subr.bf16.mxu0 0
        %4027 = vmatpush1.bf16.msra.mxu0 %v4008
        %4028 = vmatprep.subr.bf16.mxu0 0
        %4029 = vmatpush1.bf16.msra.mxu0 %v4007
        %4030 = vmatprep.subr.bf16.mxu0 0
        %4031 = vmatpush1.bf16.msra.mxu0 %v4006
        %4032 = vmatprep.subr.bf16.mxu0 0
        %4033 = vmatpush1.bf16.msra.mxu0 %v4005
        %4034 = vmatprep.subr.bf16.mxu0 0
        %4035 = vmatpush1.bf16.msra.mxu0 %v4004
        %4036 = vmatprep.subr.bf16.mxu0 0
        %4037 = vmatpush2.bf16.msra.mxu0 0
        %4038 = vmatprep.subr.bf16.mxu0 0
        %4039 = vmatpush2.bf16.msra.mxu0 0
        %4040 = vmatprep.subr.bf16.mxu0 0
        %4041 = vmatpush2.bf16.msra.mxu0 0
        %4042 = vmatprep.subr.bf16.mxu0 0
        %4043 = vmatpush2.bf16.msra.mxu0 0
        %4044 = vmatprep.subr.bf16.mxu0 0
        %4045 = vmatpush2.bf16.msra.mxu0 0
        %4046 = vmatprep.subr.bf16.mxu0 0
        %4047 = vmatpush2.bf16.msra.mxu0 0
        %4048 = vmatprep.subr.bf16.mxu0 0
        %4049 = vmatpush2.bf16.msra.mxu0 0
        %4050 = vmatprep.subr.bf16.mxu0 0
        %4051 = vmatpush2.bf16.msra.mxu0 0
        %4052 = vmatprep.mubr.bf16.mxu0 0
        %4053 = vmatmul.mubr.bf16.gmra.mxu0 %v3642
        %v4054 = vpop.f32.mrf.mxu0
        %v4055 = vadd.f32 %v3830, %v4054
        %v4056 = vpop.f32.mrf.mxu0
        %v4057 = vpop.f32.mrf.mxu0
        %v4058 = vadd.f32 %v3833, %v4057
        %v4059 = vpop.f32.mrf.mxu0
        %4060 = vmatprep.mubr.bf16.mxu0 0
        %4061 = vmatmul.mubr.bf16.gmra.mxu0 %v3643
        %v4062 = vpop.f32.mrf.mxu0
        %v4063 = vadd.f32 %v3838, %v4062
        %v4064 = vpop.f32.mrf.mxu0
        %v4065 = vpop.f32.mrf.mxu0
        %v4066 = vadd.f32 %v3841, %v4065
        %v4067 = vpop.f32.mrf.mxu0
        %4068 = vmatprep.mubr.bf16.mxu0 0
        %4069 = vmatmul.mubr.bf16.gmra.mxu0 %v3644
        %v4070 = vpop.f32.mrf.mxu0
        %v4071 = vadd.f32 %v3846, %v4070
        %v4072 = vpop.f32.mrf.mxu0
        %v4073 = vpop.f32.mrf.mxu0
        %v4074 = vadd.f32 %v3849, %v4073
        %v4075 = vpop.f32.mrf.mxu0
        %4076 = vmatprep.mubr.bf16.mxu0 0
        %4077 = vmatmul.mubr.bf16.gmra.mxu0 %v3645
        %v4078 = vpop.f32.mrf.mxu0
        %v4079 = vadd.f32 %v3854, %v4078
        %v4080 = vpop.f32.mrf.mxu0
        %v4081 = vpop.f32.mrf.mxu0
        %v4082 = vadd.f32 %v3857, %v4081
        %v4083 = vpop.f32.mrf.mxu0
        %4084 = vmatprep.mubr.bf16.mxu0 0
        %4085 = vmatmul.mubr.bf16.gmra.mxu0 %v3646
        %v4086 = vpop.f32.mrf.mxu0
        %v4087 = vadd.f32 %v3862, %v4086
        %v4088 = vpop.f32.mrf.mxu0
        %v4089 = vpop.f32.mrf.mxu0
        %v4090 = vadd.f32 %v3865, %v4089
        %v4091 = vpop.f32.mrf.mxu0
        %4092 = vmatprep.mubr.bf16.mxu0 0
        %4093 = vmatmul.mubr.bf16.gmra.mxu0 %v3647
        %v4094 = vpop.f32.mrf.mxu0
        %v4095 = vadd.f32 %v3870, %v4094
        %v4096 = vpop.f32.mrf.mxu0
        %v4097 = vpop.f32.mrf.mxu0
        %v4098 = vadd.f32 %v3873, %v4097
        %v4099 = vpop.f32.mrf.mxu0
        %4100 = vmatprep.mubr.bf16.mxu0 0
        %4101 = vmatmul.mubr.bf16.gmra.mxu0 %v3648
        %v4102 = vpop.f32.mrf.mxu0
        %v4103 = vadd.f32 %v3878, %v4102
        %v4104 = vpop.f32.mrf.mxu0
        %v4105 = vpop.f32.mrf.mxu0
        %v4106 = vadd.f32 %v3881, %v4105
        %v4107 = vpop.f32.mrf.mxu0
        %4108 = vmatprep.mubr.bf16.mxu0 0
        %4109 = vmatmul.mubr.bf16.gmra.mxu0 %v3649
        %v4110 = vpop.f32.mrf.mxu0
        %v4111 = vadd.f32 %v3886, %v4110
        %v4112 = vpop.f32.mrf.mxu0
        %v4113 = vpop.f32.mrf.mxu0
        %v4114 = vadd.f32 %v3889, %v4113
        %v4115 = vpop.f32.mrf.mxu0
        %4116 = vmatprep.mubr.bf16.mxu0 0
        %4117 = vmatmul.mubr.bf16.gmra.mxu0 %v3650
        %v4118 = vpop.f32.mrf.mxu0
        %v4119 = vadd.f32 %v3894, %v4118
        %v4120 = vpop.f32.mrf.mxu0
        %v4121 = vpop.f32.mrf.mxu0
        %v4122 = vadd.f32 %v3897, %v4121
        %v4123 = vpop.f32.mrf.mxu0
        %4124 = vmatprep.mubr.bf16.mxu0 0
        %4125 = vmatmul.mubr.bf16.gmra.mxu0 %v3651
        %v4126 = vpop.f32.mrf.mxu0
        %v4127 = vadd.f32 %v3902, %v4126
        %v4128 = vpop.f32.mrf.mxu0
        %v4129 = vpop.f32.mrf.mxu0
        %v4130 = vadd.f32 %v3905, %v4129
        %v4131 = vpop.f32.mrf.mxu0
        %4132 = vmatprep.mubr.bf16.mxu0 0
        %4133 = vmatmul.mubr.bf16.gmra.mxu0 %v3652
        %v4134 = vpop.f32.mrf.mxu0
        %v4135 = vadd.f32 %v3910, %v4134
        %v4136 = vpop.f32.mrf.mxu0
        %v4137 = vpop.f32.mrf.mxu0
        %v4138 = vadd.f32 %v3913, %v4137
        %v4139 = vpop.f32.mrf.mxu0
        %4140 = vmatprep.mubr.bf16.mxu0 0
        %4141 = vmatmul.mubr.bf16.gmra.mxu0 %v3653
        %v4142 = vpop.f32.mrf.mxu0
        %v4143 = vadd.f32 %v3918, %v4142
        %v4144 = vpop.f32.mrf.mxu0
        %v4145 = vpop.f32.mrf.mxu0
        %v4146 = vadd.f32 %v3921, %v4145
        %v4147 = vpop.f32.mrf.mxu0
        %4148 = vmatprep.mubr.bf16.mxu0 0
        %4149 = vmatmul.mubr.bf16.gmra.mxu0 %v3654
        %v4150 = vpop.f32.mrf.mxu0
        %v4151 = vadd.f32 %v3926, %v4150
        %v4152 = vpop.f32.mrf.mxu0
        %v4153 = vpop.f32.mrf.mxu0
        %v4154 = vadd.f32 %v3929, %v4153
        %v4155 = vpop.f32.mrf.mxu0
        %4156 = vmatprep.mubr.bf16.mxu0 0
        %4157 = vmatmul.mubr.bf16.gmra.mxu0 %v3655
        %v4158 = vpop.f32.mrf.mxu0
        %v4159 = vadd.f32 %v3934, %v4158
        %v4160 = vpop.f32.mrf.mxu0
        %v4161 = vpop.f32.mrf.mxu0
        %v4162 = vadd.f32 %v3937, %v4161
        %v4163 = vpop.f32.mrf.mxu0
        %4164 = vmatprep.mubr.bf16.mxu0 0
        %4165 = vmatmul.mubr.bf16.gmra.mxu0 %v3656
        %v4166 = vpop.f32.mrf.mxu0
        %v4167 = vadd.f32 %v3942, %v4166
        %v4168 = vpop.f32.mrf.mxu0
        %v4169 = vpop.f32.mrf.mxu0
        %v4170 = vadd.f32 %v3945, %v4169
        %v4171 = vpop.f32.mrf.mxu0
        %4172 = vmatprep.mubr.bf16.mxu0 0
        %4173 = vmatmul.mubr.bf16.gmra.mxu0 %v3657
        %v4174 = vpop.f32.mrf.mxu0
        %v4175 = vadd.f32 %v3950, %v4174
        %v4176 = vpop.f32.mrf.mxu0
        %v4177 = vpop.f32.mrf.mxu0
        %v4178 = vadd.f32 %v3953, %v4177
        %v4179 = vpop.f32.mrf.mxu0
        %4180 = vmatprep.mubr.bf16.mxu0 0
        %4181 = vmatmul.mubr.bf16.gmra.mxu0 %v3658
        %v4182 = vpop.f32.mrf.mxu0
        %v4183 = vadd.f32 %v3958, %v4182
        %v4184 = vpop.f32.mrf.mxu0
        %v4185 = vpop.f32.mrf.mxu0
        %v4186 = vadd.f32 %v3961, %v4185
        %v4187 = vpop.f32.mrf.mxu0
        %4188 = vmatprep.mubr.bf16.mxu0 0
        %4189 = vmatmul.mubr.bf16.gmra.mxu0 %v3659
        %v4190 = vpop.f32.mrf.mxu0
        %v4191 = vadd.f32 %v3966, %v4190
        %v4192 = vpop.f32.mrf.mxu0
        %v4193 = vpop.f32.mrf.mxu0
        %v4194 = vadd.f32 %v3969, %v4193
        %v4195 = vpop.f32.mrf.mxu0
        %4196 = vdwg.mxu0
        %v4197 = vld [vmem:[#allocation2 + $0x7] sm:$0xff]
        %v4198 = vld [vmem:[#allocation2 + $0xf] sm:$0xff]
        %v4199 = vld [vmem:[#allocation2 + $0x17] sm:$0xff]
        %v4200 = vld [vmem:[#allocation2 + $0x1f] sm:$0xff]
        %v4201 = vld [vmem:[#allocation2 + $0x27] sm:$0xff]
        %v4202 = vld [vmem:[#allocation2 + $0x2f] sm:$0xff]
        %v4203 = vld [vmem:[#allocation2 + $0x37] sm:$0xff]
        %v4204 = vld [vmem:[#allocation2 + $0x3f] sm:$0xff]
        %v4205 = vld [vmem:[#allocation2 + $0x47] sm:$0xff]
        %v4206 = vld [vmem:[#allocation2 + $0x4f] sm:$0xff]
        %v4207 = vld [vmem:[#allocation2 + $0x57] sm:$0xff]
        %v4208 = vld [vmem:[#allocation2 + $0x5f] sm:$0xff]
        %v4209 = vld [vmem:[#allocation2 + $0x67] sm:$0xff]
        %v4210 = vld [vmem:[#allocation2 + $0x6f] sm:$0xff]
        %v4211 = vld [vmem:[#allocation2 + $0x77] sm:$0xff]
        %v4212 = vld [vmem:[#allocation2 + $0x7f] sm:$0xff]
        %v4213 = vld [vmem:[#allocation2 + $0x87] sm:$0xff]
        %v4214 = vld [vmem:[#allocation2 + $0x8f] sm:$0xff]
        %v4215 = vld [vmem:[#allocation2 + $0x97] sm:$0xff]
        %v4216 = vld [vmem:[#allocation2 + $0x9f] sm:$0xff]
        %v4217 = vld [vmem:[#allocation2 + $0xa7] sm:$0xff]
        %v4218 = vld [vmem:[#allocation2 + $0xaf] sm:$0xff]
        %v4219 = vld [vmem:[#allocation2 + $0xb7] sm:$0xff]
        %v4220 = vld [vmem:[#allocation2 + $0xbf] sm:$0xff]
        %v4221 = vld [vmem:[#allocation2 + $0xc7] sm:$0xff]
        %v4222 = vld [vmem:[#allocation2 + $0xcf] sm:$0xff]
        %v4223 = vld [vmem:[#allocation2 + $0xd7] sm:$0xff]
        %v4224 = vld [vmem:[#allocation2 + $0xdf] sm:$0xff]
        %v4225 = vld [vmem:[#allocation2 + $0xe7] sm:$0xff]
        %v4226 = vld [vmem:[#allocation2 + $0xef] sm:$0xff]
        %v4227 = vld [vmem:[#allocation2 + $0xf7] sm:$0xff]
        %v4228 = vld [vmem:[#allocation2 + $0xff] sm:$0xff]
        %v4229 = vld [vmem:[#allocation2 + $0x107] sm:$0xff]
        %v4230 = vld [vmem:[#allocation2 + $0x10f] sm:$0xff]
        %v4231 = vld [vmem:[#allocation2 + $0x117] sm:$0xff]
        %v4232 = vld [vmem:[#allocation2 + $0x11f] sm:$0xff]
        %v4233 = vpack.c.bf16 %v4198, %v4197
        %v4234 = vpack.c.bf16 %v4200, %v4199
        %v4235 = vpack.c.bf16 %v4202, %v4201
        %v4236 = vpack.c.bf16 %v4204, %v4203
        %v4237 = vpack.c.bf16 %v4206, %v4205
        %v4238 = vpack.c.bf16 %v4208, %v4207
        %v4239 = vpack.c.bf16 %v4210, %v4209
        %v4240 = vpack.c.bf16 %v4212, %v4211
        %v4241 = vpack.c.bf16 %v4214, %v4213
        %v4242 = vpack.c.bf16 %v4216, %v4215
        %v4243 = vpack.c.bf16 %v4218, %v4217
        %v4244 = vpack.c.bf16 %v4220, %v4219
        %v4245 = vpack.c.bf16 %v4222, %v4221
        %v4246 = vpack.c.bf16 %v4224, %v4223
        %v4247 = vpack.c.bf16 %v4226, %v4225
        %v4248 = vpack.c.bf16 %v4228, %v4227
        %v4249 = vpack.c.bf16 %v4230, %v4229
        %v4250 = vpack.c.bf16 %v4232, %v4231
        %s4251 = scalar_lea.vmem %s5, 128
        %v4252 = vld [vmem:[%s4251] sm:$0xf]
        %v4253 = vld [vmem:[%s4251 + $0x4] sm:$0xf]
        %v4254 = vld [vmem:[%s4251 + $0x8] sm:$0xf]
        %v4255 = vld [vmem:[%s4251 + $0xc] sm:$0xf]
        %v4256 = vld [vmem:[%s4251 + $0x10] sm:$0xf]
        %v4257 = vld [vmem:[%s4251 + $0x14] sm:$0xf]
        %v4258 = vld [vmem:[%s4251 + $0x18] sm:$0xf]
        %v4259 = vld [vmem:[%s4251 + $0x1c] sm:$0xf]
        %v4260 = vld [vmem:[%s4251 + $0x20] sm:$0xf]
        %v4261 = vld [vmem:[%s4251 + $0x24] sm:$0xf]
        %v4262 = vld [vmem:[%s4251 + $0x28] sm:$0xf]
        %v4263 = vld [vmem:[%s4251 + $0x2c] sm:$0xf]
        %v4264 = vld [vmem:[%s4251 + $0x30] sm:$0xf]
        %v4265 = vld [vmem:[%s4251 + $0x34] sm:$0xf]
        %v4266 = vld [vmem:[%s4251 + $0x38] sm:$0xf]
        %v4267 = vld [vmem:[%s4251 + $0x3c] sm:$0xf]
        %v4284 = vunpack.c.l.b16 %v4252
        %v4285 = vunpack.c.l.b16 %v4253
        %v4286 = vunpack.c.l.b16 %v4254
        %v4287 = vunpack.c.l.b16 %v4255
        %v4288 = vunpack.c.l.b16 %v4256
        %v4289 = vunpack.c.l.b16 %v4257
        %v4290 = vunpack.c.l.b16 %v4258
        %v4291 = vunpack.c.l.b16 %v4259
        %v4292 = vunpack.c.l.b16 %v4260
        %v4293 = vunpack.c.l.b16 %v4261
        %v4294 = vunpack.c.l.b16 %v4262
        %v4295 = vunpack.c.l.b16 %v4263
        %v4296 = vunpack.c.l.b16 %v4264
        %v4297 = vunpack.c.l.b16 %v4265
        %v4298 = vunpack.c.l.b16 %v4266
        %v4299 = vunpack.c.l.b16 %v4267
        %v4300 = vpack.c.b16 %v4285, %v4284
        %v4301 = vpack.c.b16 %v4287, %v4286
        %v4302 = vpack.c.b16 %v4289, %v4288
        %v4303 = vpack.c.b16 %v4291, %v4290
        %v4304 = vpack.c.b16 %v4293, %v4292
        %v4305 = vpack.c.b16 %v4295, %v4294
        %v4306 = vpack.c.b16 %v4297, %v4296
        %v4307 = vpack.c.b16 %v4299, %v4298
        %4316 = vmatprep.subr.bf16.mxu0 0
        %4317 = vmatpush1.bf16.msra.mxu0 %v4307
        %4318 = vmatprep.subr.bf16.mxu0 0
        %4319 = vmatpush1.bf16.msra.mxu0 %v4306
        %4320 = vmatprep.subr.bf16.mxu0 0
        %4321 = vmatpush1.bf16.msra.mxu0 %v4305
        %4322 = vmatprep.subr.bf16.mxu0 0
        %4323 = vmatpush1.bf16.msra.mxu0 %v4304
        %4324 = vmatprep.subr.bf16.mxu0 0
        %4325 = vmatpush1.bf16.msra.mxu0 %v4303
        %4326 = vmatprep.subr.bf16.mxu0 0
        %4327 = vmatpush1.bf16.msra.mxu0 %v4302
        %4328 = vmatprep.subr.bf16.mxu0 0
        %4329 = vmatpush1.bf16.msra.mxu0 %v4301
        %4330 = vmatprep.subr.bf16.mxu0 0
        %4331 = vmatpush1.bf16.msra.mxu0 %v4300
        %4332 = vmatprep.subr.bf16.mxu0 0
        %4333 = vmatpush2.bf16.msra.mxu0 0
        %4334 = vmatprep.subr.bf16.mxu0 0
        %4335 = vmatpush2.bf16.msra.mxu0 0
        %4336 = vmatprep.subr.bf16.mxu0 0
        %4337 = vmatpush2.bf16.msra.mxu0 0
        %4338 = vmatprep.subr.bf16.mxu0 0
        %4339 = vmatpush2.bf16.msra.mxu0 0
        %4340 = vmatprep.subr.bf16.mxu0 0
        %4341 = vmatpush2.bf16.msra.mxu0 0
        %4342 = vmatprep.subr.bf16.mxu0 0
        %4343 = vmatpush2.bf16.msra.mxu0 0
        %4344 = vmatprep.subr.bf16.mxu0 0
        %4345 = vmatpush2.bf16.msra.mxu0 0
        %4346 = vmatprep.subr.bf16.mxu0 0
        %4347 = vmatpush2.bf16.msra.mxu0 0
        %4348 = vmatprep.mubr.bf16.mxu0 0
        %4349 = vmatmul.mubr.bf16.gmra.mxu0 %v4233
        %v4350 = vpop.f32.mrf.mxu0
        %v4351 = vadd.f32 0.0, %v4350
        %v4352 = vpop.f32.mrf.mxu0
        %v4353 = vpop.f32.mrf.mxu0
        %v4354 = vadd.f32 0.0, %v4353
        %v4355 = vpop.f32.mrf.mxu0
        %4356 = vmatprep.mubr.bf16.mxu0 0
        %4357 = vmatmul.mubr.bf16.gmra.mxu0 %v4234
        %v4358 = vpop.f32.mrf.mxu0
        %v4359 = vadd.f32 0.0, %v4358
        %v4360 = vpop.f32.mrf.mxu0
        %v4361 = vpop.f32.mrf.mxu0
        %v4362 = vadd.f32 0.0, %v4361
        %v4363 = vpop.f32.mrf.mxu0
        %4364 = vmatprep.mubr.bf16.mxu0 0
        %4365 = vmatmul.mubr.bf16.gmra.mxu0 %v4235
        %v4366 = vpop.f32.mrf.mxu0
        %v4367 = vadd.f32 0.0, %v4366
        %v4368 = vpop.f32.mrf.mxu0
        %v4369 = vpop.f32.mrf.mxu0
        %v4370 = vadd.f32 0.0, %v4369
        %v4371 = vpop.f32.mrf.mxu0
        %4372 = vmatprep.mubr.bf16.mxu0 0
        %4373 = vmatmul.mubr.bf16.gmra.mxu0 %v4236
        %v4374 = vpop.f32.mrf.mxu0
        %v4375 = vadd.f32 0.0, %v4374
        %v4376 = vpop.f32.mrf.mxu0
        %v4377 = vpop.f32.mrf.mxu0
        %v4378 = vadd.f32 0.0, %v4377
        %v4379 = vpop.f32.mrf.mxu0
        %4380 = vmatprep.mubr.bf16.mxu0 0
        %4381 = vmatmul.mubr.bf16.gmra.mxu0 %v4237
        %v4382 = vpop.f32.mrf.mxu0
        %v4383 = vadd.f32 0.0, %v4382
        %v4384 = vpop.f32.mrf.mxu0
        %v4385 = vpop.f32.mrf.mxu0
        %v4386 = vadd.f32 0.0, %v4385
        %v4387 = vpop.f32.mrf.mxu0
        %4388 = vmatprep.mubr.bf16.mxu0 0
        %4389 = vmatmul.mubr.bf16.gmra.mxu0 %v4238
        %v4390 = vpop.f32.mrf.mxu0
        %v4391 = vadd.f32 0.0, %v4390
        %v4392 = vpop.f32.mrf.mxu0
        %v4393 = vpop.f32.mrf.mxu0
        %v4394 = vadd.f32 0.0, %v4393
        %v4395 = vpop.f32.mrf.mxu0
        %4396 = vmatprep.mubr.bf16.mxu0 0
        %4397 = vmatmul.mubr.bf16.gmra.mxu0 %v4239
        %v4398 = vpop.f32.mrf.mxu0
        %v4399 = vadd.f32 0.0, %v4398
        %v4400 = vpop.f32.mrf.mxu0
        %v4401 = vpop.f32.mrf.mxu0
        %v4402 = vadd.f32 0.0, %v4401
        %v4403 = vpop.f32.mrf.mxu0
        %4404 = vmatprep.mubr.bf16.mxu0 0
        %4405 = vmatmul.mubr.bf16.gmra.mxu0 %v4240
        %v4406 = vpop.f32.mrf.mxu0
        %v4407 = vadd.f32 0.0, %v4406
        %v4408 = vpop.f32.mrf.mxu0
        %v4409 = vpop.f32.mrf.mxu0
        %v4410 = vadd.f32 0.0, %v4409
        %v4411 = vpop.f32.mrf.mxu0
        %4412 = vmatprep.mubr.bf16.mxu0 0
        %4413 = vmatmul.mubr.bf16.gmra.mxu0 %v4241
        %v4414 = vpop.f32.mrf.mxu0
        %v4415 = vadd.f32 0.0, %v4414
        %v4416 = vpop.f32.mrf.mxu0
        %v4417 = vpop.f32.mrf.mxu0
        %v4418 = vadd.f32 0.0, %v4417
        %v4419 = vpop.f32.mrf.mxu0
        %4420 = vmatprep.mubr.bf16.mxu0 0
        %4421 = vmatmul.mubr.bf16.gmra.mxu0 %v4242
        %v4422 = vpop.f32.mrf.mxu0
        %v4423 = vadd.f32 0.0, %v4422
        %v4424 = vpop.f32.mrf.mxu0
        %v4425 = vpop.f32.mrf.mxu0
        %v4426 = vadd.f32 0.0, %v4425
        %v4427 = vpop.f32.mrf.mxu0
        %4428 = vmatprep.mubr.bf16.mxu0 0
        %4429 = vmatmul.mubr.bf16.gmra.mxu0 %v4243
        %v4430 = vpop.f32.mrf.mxu0
        %v4431 = vadd.f32 0.0, %v4430
        %v4432 = vpop.f32.mrf.mxu0
        %v4433 = vpop.f32.mrf.mxu0
        %v4434 = vadd.f32 0.0, %v4433
        %v4435 = vpop.f32.mrf.mxu0
        %4436 = vmatprep.mubr.bf16.mxu0 0
        %4437 = vmatmul.mubr.bf16.gmra.mxu0 %v4244
        %v4438 = vpop.f32.mrf.mxu0
        %v4439 = vadd.f32 0.0, %v4438
        %v4440 = vpop.f32.mrf.mxu0
        %v4441 = vpop.f32.mrf.mxu0
        %v4442 = vadd.f32 0.0, %v4441
        %v4443 = vpop.f32.mrf.mxu0
        %4444 = vmatprep.mubr.bf16.mxu0 0
        %4445 = vmatmul.mubr.bf16.gmra.mxu0 %v4245
        %v4446 = vpop.f32.mrf.mxu0
        %v4447 = vadd.f32 0.0, %v4446
        %v4448 = vpop.f32.mrf.mxu0
        %v4449 = vpop.f32.mrf.mxu0
        %v4450 = vadd.f32 0.0, %v4449
        %v4451 = vpop.f32.mrf.mxu0
        %4452 = vmatprep.mubr.bf16.mxu0 0
        %4453 = vmatmul.mubr.bf16.gmra.mxu0 %v4246
        %v4454 = vpop.f32.mrf.mxu0
        %v4455 = vadd.f32 0.0, %v4454
        %v4456 = vpop.f32.mrf.mxu0
        %v4457 = vpop.f32.mrf.mxu0
        %v4458 = vadd.f32 0.0, %v4457
        %v4459 = vpop.f32.mrf.mxu0
        %4460 = vmatprep.mubr.bf16.mxu0 0
        %4461 = vmatmul.mubr.bf16.gmra.mxu0 %v4247
        %v4462 = vpop.f32.mrf.mxu0
        %v4463 = vadd.f32 0.0, %v4462
        %v4464 = vpop.f32.mrf.mxu0
        %v4465 = vpop.f32.mrf.mxu0
        %v4466 = vadd.f32 0.0, %v4465
        %v4467 = vpop.f32.mrf.mxu0
        %4468 = vmatprep.mubr.bf16.mxu0 0
        %4469 = vmatmul.mubr.bf16.gmra.mxu0 %v4248
        %v4470 = vpop.f32.mrf.mxu0
        %v4471 = vadd.f32 0.0, %v4470
        %v4472 = vpop.f32.mrf.mxu0
        %v4473 = vpop.f32.mrf.mxu0
        %v4474 = vadd.f32 0.0, %v4473
        %v4475 = vpop.f32.mrf.mxu0
        %4476 = vmatprep.mubr.bf16.mxu0 0
        %4477 = vmatmul.mubr.bf16.gmra.mxu0 %v4249
        %v4478 = vpop.f32.mrf.mxu0
        %v4479 = vadd.f32 0.0, %v4478
        %v4480 = vpop.f32.mrf.mxu0
        %v4481 = vpop.f32.mrf.mxu0
        %v4482 = vadd.f32 0.0, %v4481
        %v4483 = vpop.f32.mrf.mxu0
        %4484 = vmatprep.mubr.bf16.mxu0 0
        %4485 = vmatmul.mubr.bf16.gmra.mxu0 %v4250
        %v4486 = vpop.f32.mrf.mxu0
        %v4487 = vadd.f32 0.0, %v4486
        %v4488 = vpop.f32.mrf.mxu0
        %v4489 = vpop.f32.mrf.mxu0
        %v4490 = vadd.f32 0.0, %v4489
        %v4491 = vpop.f32.mrf.mxu0
        %4492 = vdwg.mxu0
        %v4493 = vadd.f32 %v4055, %v4351
        %v4494 = vadd.f32 %v4058, %v4354
        %v4495 = vadd.f32 %v4063, %v4359
        %v4496 = vadd.f32 %v4066, %v4362
        %v4497 = vadd.f32 %v4071, %v4367
        %v4498 = vadd.f32 %v4074, %v4370
        %v4499 = vadd.f32 %v4079, %v4375
        %v4500 = vadd.f32 %v4082, %v4378
        %v4501 = vadd.f32 %v4087, %v4383
        %v4502 = vadd.f32 %v4090, %v4386
        %v4503 = vadd.f32 %v4095, %v4391
        %v4504 = vadd.f32 %v4098, %v4394
        %v4505 = vadd.f32 %v4103, %v4399
        %v4506 = vadd.f32 %v4106, %v4402
        %v4507 = vadd.f32 %v4111, %v4407
        %v4508 = vadd.f32 %v4114, %v4410
        %v4509 = vadd.f32 %v4119, %v4415
        %v4510 = vadd.f32 %v4122, %v4418
        %v4511 = vadd.f32 %v4127, %v4423
        %v4512 = vadd.f32 %v4130, %v4426
        %v4513 = vadd.f32 %v4135, %v4431
        %v4514 = vadd.f32 %v4138, %v4434
        %v4515 = vadd.f32 %v4143, %v4439
        %v4516 = vadd.f32 %v4146, %v4442
        %v4517 = vadd.f32 %v4151, %v4447
        %v4518 = vadd.f32 %v4154, %v4450
        %v4519 = vadd.f32 %v4159, %v4455
        %v4520 = vadd.f32 %v4162, %v4458
        %v4521 = vadd.f32 %v4167, %v4463
        %v4522 = vadd.f32 %v4170, %v4466
        %v4523 = vadd.f32 %v4175, %v4471
        %v4524 = vadd.f32 %v4178, %v4474
        %v4525 = vadd.f32 %v4183, %v4479
        %v4526 = vadd.f32 %v4186, %v4482
        %v4527 = vadd.f32 %v4191, %v4487
        %v4528 = vadd.f32 %v4194, %v4490
        %v4529 = vld [vmem:[#allocation2 + $0x17] sm:$0xff]
        %v4530 = vld [vmem:[#allocation2 + $0x1f] sm:$0xff]
        %v4531 = vld [vmem:[#allocation2 + $0x27] sm:$0xff]
        %v4532 = vld [vmem:[#allocation2 + $0x2f] sm:$0xff]
        %v4533 = vld [vmem:[#allocation2 + $0x37] sm:$0xff]
        %v4534 = vld [vmem:[#allocation2 + $0x3f] sm:$0xff]
        %v4535 = vld [vmem:[#allocation2 + $0x47] sm:$0xff]
        %v4536 = vld [vmem:[#allocation2 + $0x4f] sm:$0xff]
        %v4537 = vld [vmem:[#allocation2 + $0x57] sm:$0xff]
        %v4538 = vld [vmem:[#allocation2 + $0x5f] sm:$0xff]
        %v4539 = vld [vmem:[#allocation2 + $0x67] sm:$0xff]
        %v4540 = vld [vmem:[#allocation2 + $0x6f] sm:$0xff]
        %v4541 = vld [vmem:[#allocation2 + $0x77] sm:$0xff]
        %v4542 = vld [vmem:[#allocation2 + $0x7f] sm:$0xff]
        %v4543 = vld [vmem:[#allocation2 + $0x87] sm:$0xff]
        %v4544 = vld [vmem:[#allocation2 + $0x8f] sm:$0xff]
        %v4545 = vld [vmem:[#allocation2 + $0x97] sm:$0xff]
        %v4546 = vld [vmem:[#allocation2 + $0x9f] sm:$0xff]
        %v4547 = vld [vmem:[#allocation2 + $0xa7] sm:$0xff]
        %v4548 = vld [vmem:[#allocation2 + $0xaf] sm:$0xff]
        %v4549 = vld [vmem:[#allocation2 + $0xb7] sm:$0xff]
        %v4550 = vld [vmem:[#allocation2 + $0xbf] sm:$0xff]
        %v4551 = vld [vmem:[#allocation2 + $0xc7] sm:$0xff]
        %v4552 = vld [vmem:[#allocation2 + $0xcf] sm:$0xff]
        %v4553 = vld [vmem:[#allocation2 + $0xd7] sm:$0xff]
        %v4554 = vld [vmem:[#allocation2 + $0xdf] sm:$0xff]
        %v4555 = vld [vmem:[#allocation2 + $0xe7] sm:$0xff]
        %v4556 = vld [vmem:[#allocation2 + $0xef] sm:$0xff]
        %v4557 = vld [vmem:[#allocation2 + $0xf7] sm:$0xff]
        %v4558 = vld [vmem:[#allocation2 + $0xff] sm:$0xff]
        %v4559 = vld [vmem:[#allocation2 + $0x107] sm:$0xff]
        %v4560 = vld [vmem:[#allocation2 + $0x10f] sm:$0xff]
        %v4561 = vld [vmem:[#allocation2 + $0x117] sm:$0xff]
        %v4562 = vld [vmem:[#allocation2 + $0x11f] sm:$0xff]
        %v4563 = vld [vmem:[#allocation2 + $0x127] sm:$0xff]
        %v4564 = vld [vmem:[#allocation2 + $0x12f] sm:$0xff]
        %v4565 = vpack.c.bf16 %v4530, %v4529
        %v4566 = vpack.c.bf16 %v4532, %v4531
        %v4567 = vpack.c.bf16 %v4534, %v4533
        %v4568 = vpack.c.bf16 %v4536, %v4535
        %v4569 = vpack.c.bf16 %v4538, %v4537
        %v4570 = vpack.c.bf16 %v4540, %v4539
        %v4571 = vpack.c.bf16 %v4542, %v4541
        %v4572 = vpack.c.bf16 %v4544, %v4543
        %v4573 = vpack.c.bf16 %v4546, %v4545
        %v4574 = vpack.c.bf16 %v4548, %v4547
        %v4575 = vpack.c.bf16 %v4550, %v4549
        %v4576 = vpack.c.bf16 %v4552, %v4551
        %v4577 = vpack.c.bf16 %v4554, %v4553
        %v4578 = vpack.c.bf16 %v4556, %v4555
        %v4579 = vpack.c.bf16 %v4558, %v4557
        %v4580 = vpack.c.bf16 %v4560, %v4559
        %v4581 = vpack.c.bf16 %v4562, %v4561
        %v4582 = vpack.c.bf16 %v4564, %v4563
        %s4583 = scalar_lea.vmem %s5, 192
        %v4584 = vld [vmem:[%s4583] sm:$0xf]
        %v4585 = vld [vmem:[%s4583 + $0x4] sm:$0xf]
        %v4586 = vld [vmem:[%s4583 + $0x8] sm:$0xf]
        %v4587 = vld [vmem:[%s4583 + $0xc] sm:$0xf]
        %v4588 = vld [vmem:[%s4583 + $0x10] sm:$0xf]
        %v4589 = vld [vmem:[%s4583 + $0x14] sm:$0xf]
        %v4590 = vld [vmem:[%s4583 + $0x18] sm:$0xf]
        %v4591 = vld [vmem:[%s4583 + $0x1c] sm:$0xf]
        %v4592 = vld [vmem:[%s4583 + $0x20] sm:$0xf]
        %v4593 = vld [vmem:[%s4583 + $0x24] sm:$0xf]
        %v4594 = vld [vmem:[%s4583 + $0x28] sm:$0xf]
        %v4595 = vld [vmem:[%s4583 + $0x2c] sm:$0xf]
        %v4596 = vld [vmem:[%s4583 + $0x30] sm:$0xf]
        %v4597 = vld [vmem:[%s4583 + $0x34] sm:$0xf]
        %v4598 = vld [vmem:[%s4583 + $0x38] sm:$0xf]
        %v4599 = vld [vmem:[%s4583 + $0x3c] sm:$0xf]
        %v4616 = vunpack.c.l.b16 %v4584
        %v4617 = vunpack.c.l.b16 %v4585
        %v4618 = vunpack.c.l.b16 %v4586
        %v4619 = vunpack.c.l.b16 %v4587
        %v4620 = vunpack.c.l.b16 %v4588
        %v4621 = vunpack.c.l.b16 %v4589
        %v4622 = vunpack.c.l.b16 %v4590
        %v4623 = vunpack.c.l.b16 %v4591
        %v4624 = vunpack.c.l.b16 %v4592
        %v4625 = vunpack.c.l.b16 %v4593
        %v4626 = vunpack.c.l.b16 %v4594
        %v4627 = vunpack.c.l.b16 %v4595
        %v4628 = vunpack.c.l.b16 %v4596
        %v4629 = vunpack.c.l.b16 %v4597
        %v4630 = vunpack.c.l.b16 %v4598
        %v4631 = vunpack.c.l.b16 %v4599
        %v4632 = vpack.c.b16 %v4617, %v4616
        %v4633 = vpack.c.b16 %v4619, %v4618
        %v4634 = vpack.c.b16 %v4621, %v4620
        %v4635 = vpack.c.b16 %v4623, %v4622
        %v4636 = vpack.c.b16 %v4625, %v4624
        %v4637 = vpack.c.b16 %v4627, %v4626
        %v4638 = vpack.c.b16 %v4629, %v4628
        %v4639 = vpack.c.b16 %v4631, %v4630
        %4648 = vmatprep.subr.bf16.mxu0 0
        %4649 = vmatpush1.bf16.msra.mxu0 %v4639
        %4650 = vmatprep.subr.bf16.mxu0 0
        %4651 = vmatpush1.bf16.msra.mxu0 %v4638
        %4652 = vmatprep.subr.bf16.mxu0 0
        %4653 = vmatpush1.bf16.msra.mxu0 %v4637
        %4654 = vmatprep.subr.bf16.mxu0 0
        %4655 = vmatpush1.bf16.msra.mxu0 %v4636
        %4656 = vmatprep.subr.bf16.mxu0 0
        %4657 = vmatpush1.bf16.msra.mxu0 %v4635
        %4658 = vmatprep.subr.bf16.mxu0 0
        %4659 = vmatpush1.bf16.msra.mxu0 %v4634
        %4660 = vmatprep.subr.bf16.mxu0 0
        %4661 = vmatpush1.bf16.msra.mxu0 %v4633
        %4662 = vmatprep.subr.bf16.mxu0 0
        %4663 = vmatpush1.bf16.msra.mxu0 %v4632
        %4664 = vmatprep.subr.bf16.mxu0 0
        %4665 = vmatpush2.bf16.msra.mxu0 0
        %4666 = vmatprep.subr.bf16.mxu0 0
        %4667 = vmatpush2.bf16.msra.mxu0 0
        %4668 = vmatprep.subr.bf16.mxu0 0
        %4669 = vmatpush2.bf16.msra.mxu0 0
        %4670 = vmatprep.subr.bf16.mxu0 0
        %4671 = vmatpush2.bf16.msra.mxu0 0
        %4672 = vmatprep.subr.bf16.mxu0 0
        %4673 = vmatpush2.bf16.msra.mxu0 0
        %4674 = vmatprep.subr.bf16.mxu0 0
        %4675 = vmatpush2.bf16.msra.mxu0 0
        %4676 = vmatprep.subr.bf16.mxu0 0
        %4677 = vmatpush2.bf16.msra.mxu0 0
        %4678 = vmatprep.subr.bf16.mxu0 0
        %4679 = vmatpush2.bf16.msra.mxu0 0
        %4680 = vmatprep.mubr.bf16.mxu0 0
        %4681 = vmatmul.mubr.bf16.gmra.mxu0 %v4565
        %v4682 = vpop.f32.mrf.mxu0
        %v4683 = vadd.f32 0.0, %v4682
        %v4684 = vpop.f32.mrf.mxu0
        %v4685 = vpop.f32.mrf.mxu0
        %v4686 = vadd.f32 0.0, %v4685
        %v4687 = vpop.f32.mrf.mxu0
        %4688 = vmatprep.mubr.bf16.mxu0 0
        %4689 = vmatmul.mubr.bf16.gmra.mxu0 %v4566
        %v4690 = vpop.f32.mrf.mxu0
        %v4691 = vadd.f32 0.0, %v4690
        %v4692 = vpop.f32.mrf.mxu0
        %v4693 = vpop.f32.mrf.mxu0
        %v4694 = vadd.f32 0.0, %v4693
        %v4695 = vpop.f32.mrf.mxu0
        %4696 = vmatprep.mubr.bf16.mxu0 0
        %4697 = vmatmul.mubr.bf16.gmra.mxu0 %v4567
        %v4698 = vpop.f32.mrf.mxu0
        %v4699 = vadd.f32 0.0, %v4698
        %v4700 = vpop.f32.mrf.mxu0
        %v4701 = vpop.f32.mrf.mxu0
        %v4702 = vadd.f32 0.0, %v4701
        %v4703 = vpop.f32.mrf.mxu0
        %4704 = vmatprep.mubr.bf16.mxu0 0
        %4705 = vmatmul.mubr.bf16.gmra.mxu0 %v4568
        %v4706 = vpop.f32.mrf.mxu0
        %v4707 = vadd.f32 0.0, %v4706
        %v4708 = vpop.f32.mrf.mxu0
        %v4709 = vpop.f32.mrf.mxu0
        %v4710 = vadd.f32 0.0, %v4709
        %v4711 = vpop.f32.mrf.mxu0
        %4712 = vmatprep.mubr.bf16.mxu0 0
        %4713 = vmatmul.mubr.bf16.gmra.mxu0 %v4569
        %v4714 = vpop.f32.mrf.mxu0
        %v4715 = vadd.f32 0.0, %v4714
        %v4716 = vpop.f32.mrf.mxu0
        %v4717 = vpop.f32.mrf.mxu0
        %v4718 = vadd.f32 0.0, %v4717
        %v4719 = vpop.f32.mrf.mxu0
        %4720 = vmatprep.mubr.bf16.mxu0 0
        %4721 = vmatmul.mubr.bf16.gmra.mxu0 %v4570
        %v4722 = vpop.f32.mrf.mxu0
        %v4723 = vadd.f32 0.0, %v4722
        %v4724 = vpop.f32.mrf.mxu0
        %v4725 = vpop.f32.mrf.mxu0
        %v4726 = vadd.f32 0.0, %v4725
        %v4727 = vpop.f32.mrf.mxu0
        %4728 = vmatprep.mubr.bf16.mxu0 0
        %4729 = vmatmul.mubr.bf16.gmra.mxu0 %v4571
        %v4730 = vpop.f32.mrf.mxu0
        %v4731 = vadd.f32 0.0, %v4730
        %v4732 = vpop.f32.mrf.mxu0
        %v4733 = vpop.f32.mrf.mxu0
        %v4734 = vadd.f32 0.0, %v4733
        %v4735 = vpop.f32.mrf.mxu0
        %4736 = vmatprep.mubr.bf16.mxu0 0
        %4737 = vmatmul.mubr.bf16.gmra.mxu0 %v4572
        %v4738 = vpop.f32.mrf.mxu0
        %v4739 = vadd.f32 0.0, %v4738
        %v4740 = vpop.f32.mrf.mxu0
        %v4741 = vpop.f32.mrf.mxu0
        %v4742 = vadd.f32 0.0, %v4741
        %v4743 = vpop.f32.mrf.mxu0
        %4744 = vmatprep.mubr.bf16.mxu0 0
        %4745 = vmatmul.mubr.bf16.gmra.mxu0 %v4573
        %v4746 = vpop.f32.mrf.mxu0
        %v4747 = vadd.f32 0.0, %v4746
        %v4748 = vpop.f32.mrf.mxu0
        %v4749 = vpop.f32.mrf.mxu0
        %v4750 = vadd.f32 0.0, %v4749
        %v4751 = vpop.f32.mrf.mxu0
        %4752 = vmatprep.mubr.bf16.mxu0 0
        %4753 = vmatmul.mubr.bf16.gmra.mxu0 %v4574
        %v4754 = vpop.f32.mrf.mxu0
        %v4755 = vadd.f32 0.0, %v4754
        %v4756 = vpop.f32.mrf.mxu0
        %v4757 = vpop.f32.mrf.mxu0
        %v4758 = vadd.f32 0.0, %v4757
        %v4759 = vpop.f32.mrf.mxu0
        %4760 = vmatprep.mubr.bf16.mxu0 0
        %4761 = vmatmul.mubr.bf16.gmra.mxu0 %v4575
        %v4762 = vpop.f32.mrf.mxu0
        %v4763 = vadd.f32 0.0, %v4762
        %v4764 = vpop.f32.mrf.mxu0
        %v4765 = vpop.f32.mrf.mxu0
        %v4766 = vadd.f32 0.0, %v4765
        %v4767 = vpop.f32.mrf.mxu0
        %4768 = vmatprep.mubr.bf16.mxu0 0
        %4769 = vmatmul.mubr.bf16.gmra.mxu0 %v4576
        %v4770 = vpop.f32.mrf.mxu0
        %v4771 = vadd.f32 0.0, %v4770
        %v4772 = vpop.f32.mrf.mxu0
        %v4773 = vpop.f32.mrf.mxu0
        %v4774 = vadd.f32 0.0, %v4773
        %v4775 = vpop.f32.mrf.mxu0
        %4776 = vmatprep.mubr.bf16.mxu0 0
        %4777 = vmatmul.mubr.bf16.gmra.mxu0 %v4577
        %v4778 = vpop.f32.mrf.mxu0
        %v4779 = vadd.f32 0.0, %v4778
        %v4780 = vpop.f32.mrf.mxu0
        %v4781 = vpop.f32.mrf.mxu0
        %v4782 = vadd.f32 0.0, %v4781
        %v4783 = vpop.f32.mrf.mxu0
        %4784 = vmatprep.mubr.bf16.mxu0 0
        %4785 = vmatmul.mubr.bf16.gmra.mxu0 %v4578
        %v4786 = vpop.f32.mrf.mxu0
        %v4787 = vadd.f32 0.0, %v4786
        %v4788 = vpop.f32.mrf.mxu0
        %v4789 = vpop.f32.mrf.mxu0
        %v4790 = vadd.f32 0.0, %v4789
        %v4791 = vpop.f32.mrf.mxu0
        %4792 = vmatprep.mubr.bf16.mxu0 0
        %4793 = vmatmul.mubr.bf16.gmra.mxu0 %v4579
        %v4794 = vpop.f32.mrf.mxu0
        %v4795 = vadd.f32 0.0, %v4794
        %v4796 = vpop.f32.mrf.mxu0
        %v4797 = vpop.f32.mrf.mxu0
        %v4798 = vadd.f32 0.0, %v4797
        %v4799 = vpop.f32.mrf.mxu0
        %4800 = vmatprep.mubr.bf16.mxu0 0
        %4801 = vmatmul.mubr.bf16.gmra.mxu0 %v4580
        %v4802 = vpop.f32.mrf.mxu0
        %v4803 = vadd.f32 0.0, %v4802
        %v4804 = vpop.f32.mrf.mxu0
        %v4805 = vpop.f32.mrf.mxu0
        %v4806 = vadd.f32 0.0, %v4805
        %v4807 = vpop.f32.mrf.mxu0
        %4808 = vmatprep.mubr.bf16.mxu0 0
        %4809 = vmatmul.mubr.bf16.gmra.mxu0 %v4581
        %v4810 = vpop.f32.mrf.mxu0
        %v4811 = vadd.f32 0.0, %v4810
        %v4812 = vpop.f32.mrf.mxu0
        %v4813 = vpop.f32.mrf.mxu0
        %v4814 = vadd.f32 0.0, %v4813
        %v4815 = vpop.f32.mrf.mxu0
        %4816 = vmatprep.mubr.bf16.mxu0 0
        %4817 = vmatmul.mubr.bf16.gmra.mxu0 %v4582
        %v4818 = vpop.f32.mrf.mxu0
        %v4819 = vadd.f32 0.0, %v4818
        %v4820 = vpop.f32.mrf.mxu0
        %v4821 = vpop.f32.mrf.mxu0
        %v4822 = vadd.f32 0.0, %v4821
        %v4823 = vpop.f32.mrf.mxu0
        %4824 = vdwg.mxu0
        %v4825 = vadd.f32 %v4493, %v4683
        %v4826 = vadd.f32 %v4494, %v4686
        %v4827 = vadd.f32 %v4495, %v4691
        %v4828 = vadd.f32 %v4496, %v4694
        %v4829 = vadd.f32 %v4497, %v4699
        %v4830 = vadd.f32 %v4498, %v4702
        %v4831 = vadd.f32 %v4499, %v4707
        %v4832 = vadd.f32 %v4500, %v4710
        %v4833 = vadd.f32 %v4501, %v4715
        %v4834 = vadd.f32 %v4502, %v4718
        %v4835 = vadd.f32 %v4503, %v4723
        %v4836 = vadd.f32 %v4504, %v4726
        %v4837 = vadd.f32 %v4505, %v4731
        %v4838 = vadd.f32 %v4506, %v4734
        %v4839 = vadd.f32 %v4507, %v4739
        %v4840 = vadd.f32 %v4508, %v4742
        %v4841 = vadd.f32 %v4509, %v4747
        %v4842 = vadd.f32 %v4510, %v4750
        %v4843 = vadd.f32 %v4511, %v4755
        %v4844 = vadd.f32 %v4512, %v4758
        %v4845 = vadd.f32 %v4513, %v4763
        %v4846 = vadd.f32 %v4514, %v4766
        %v4847 = vadd.f32 %v4515, %v4771
        %v4848 = vadd.f32 %v4516, %v4774
        %v4849 = vadd.f32 %v4517, %v4779
        %v4850 = vadd.f32 %v4518, %v4782
        %v4851 = vadd.f32 %v4519, %v4787
        %v4852 = vadd.f32 %v4520, %v4790
        %v4853 = vadd.f32 %v4521, %v4795
        %v4854 = vadd.f32 %v4522, %v4798
        %v4855 = vadd.f32 %v4523, %v4803
        %v4856 = vadd.f32 %v4524, %v4806
        %v4857 = vadd.f32 %v4525, %v4811
        %v4858 = vadd.f32 %v4526, %v4814
        %v4859 = vadd.f32 %v4527, %v4819
        %v4860 = vadd.f32 %v4528, %v4822
        %v4861 = vld [vmem:[#allocation2 + $0x18] sm:$0xff]
        %v4862 = vld [vmem:[#allocation2 + $0x20] sm:$0xff]
        %v4863 = vld [vmem:[#allocation2 + $0x28] sm:$0xff]
        %v4864 = vld [vmem:[#allocation2 + $0x30] sm:$0xff]
        %v4865 = vld [vmem:[#allocation2 + $0x38] sm:$0xff]
        %v4866 = vld [vmem:[#allocation2 + $0x40] sm:$0xff]
        %v4867 = vld [vmem:[#allocation2 + $0x48] sm:$0xff]
        %v4868 = vld [vmem:[#allocation2 + $0x50] sm:$0xff]
        %v4869 = vld [vmem:[#allocation2 + $0x58] sm:$0xff]
        %v4870 = vld [vmem:[#allocation2 + $0x60] sm:$0xff]
        %v4871 = vld [vmem:[#allocation2 + $0x68] sm:$0xff]
        %v4872 = vld [vmem:[#allocation2 + $0x70] sm:$0xff]
        %v4873 = vld [vmem:[#allocation2 + $0x78] sm:$0xff]
        %v4874 = vld [vmem:[#allocation2 + $0x80] sm:$0xff]
        %v4875 = vld [vmem:[#allocation2 + $0x88] sm:$0xff]
        %v4876 = vld [vmem:[#allocation2 + $0x90] sm:$0xff]
        %v4877 = vld [vmem:[#allocation2 + $0x98] sm:$0xff]
        %v4878 = vld [vmem:[#allocation2 + $0xa0] sm:$0xff]
        %v4879 = vld [vmem:[#allocation2 + $0xa8] sm:$0xff]
        %v4880 = vld [vmem:[#allocation2 + $0xb0] sm:$0xff]
        %v4881 = vld [vmem:[#allocation2 + $0xb8] sm:$0xff]
        %v4882 = vld [vmem:[#allocation2 + $0xc0] sm:$0xff]
        %v4883 = vld [vmem:[#allocation2 + $0xc8] sm:$0xff]
        %v4884 = vld [vmem:[#allocation2 + $0xd0] sm:$0xff]
        %v4885 = vld [vmem:[#allocation2 + $0xd8] sm:$0xff]
        %v4886 = vld [vmem:[#allocation2 + $0xe0] sm:$0xff]
        %v4887 = vld [vmem:[#allocation2 + $0xe8] sm:$0xff]
        %v4888 = vld [vmem:[#allocation2 + $0xf0] sm:$0xff]
        %v4889 = vld [vmem:[#allocation2 + $0xf8] sm:$0xff]
        %v4890 = vld [vmem:[#allocation2 + $0x100] sm:$0xff]
        %v4891 = vld [vmem:[#allocation2 + $0x108] sm:$0xff]
        %v4892 = vld [vmem:[#allocation2 + $0x110] sm:$0xff]
        %v4893 = vld [vmem:[#allocation2 + $0x118] sm:$0xff]
        %v4894 = vld [vmem:[#allocation2 + $0x120] sm:$0xff]
        %v4895 = vld [vmem:[#allocation2 + $0x128] sm:$0xff]
        %v4896 = vld [vmem:[#allocation2 + $0x130] sm:$0xff]
        %v4897 = vpack.c.bf16 %v4862, %v4861
        %v4898 = vpack.c.bf16 %v4864, %v4863
        %v4899 = vpack.c.bf16 %v4866, %v4865
        %v4900 = vpack.c.bf16 %v4868, %v4867
        %v4901 = vpack.c.bf16 %v4870, %v4869
        %v4902 = vpack.c.bf16 %v4872, %v4871
        %v4903 = vpack.c.bf16 %v4874, %v4873
        %v4904 = vpack.c.bf16 %v4876, %v4875
        %v4905 = vpack.c.bf16 %v4878, %v4877
        %v4906 = vpack.c.bf16 %v4880, %v4879
        %v4907 = vpack.c.bf16 %v4882, %v4881
        %v4908 = vpack.c.bf16 %v4884, %v4883
        %v4909 = vpack.c.bf16 %v4886, %v4885
        %v4910 = vpack.c.bf16 %v4888, %v4887
        %v4911 = vpack.c.bf16 %v4890, %v4889
        %v4912 = vpack.c.bf16 %v4892, %v4891
        %v4913 = vpack.c.bf16 %v4894, %v4893
        %v4914 = vpack.c.bf16 %v4896, %v4895
        %s4915 = scalar_lea.vmem %s5, 256
        %v4916 = vld [vmem:[%s4915] sm:$0xf]
        %v4917 = vld [vmem:[%s4915 + $0x4] sm:$0xf]
        %v4918 = vld [vmem:[%s4915 + $0x8] sm:$0xf]
        %v4919 = vld [vmem:[%s4915 + $0xc] sm:$0xf]
        %v4920 = vld [vmem:[%s4915 + $0x10] sm:$0xf]
        %v4921 = vld [vmem:[%s4915 + $0x14] sm:$0xf]
        %v4922 = vld [vmem:[%s4915 + $0x18] sm:$0xf]
        %v4923 = vld [vmem:[%s4915 + $0x1c] sm:$0xf]
        %v4924 = vld [vmem:[%s4915 + $0x20] sm:$0xf]
        %v4925 = vld [vmem:[%s4915 + $0x24] sm:$0xf]
        %v4926 = vld [vmem:[%s4915 + $0x28] sm:$0xf]
        %v4927 = vld [vmem:[%s4915 + $0x2c] sm:$0xf]
        %v4928 = vld [vmem:[%s4915 + $0x30] sm:$0xf]
        %v4929 = vld [vmem:[%s4915 + $0x34] sm:$0xf]
        %v4930 = vld [vmem:[%s4915 + $0x38] sm:$0xf]
        %v4931 = vld [vmem:[%s4915 + $0x3c] sm:$0xf]
        %v4948 = vunpack.c.l.b16 %v4916
        %v4949 = vunpack.c.l.b16 %v4917
        %v4950 = vunpack.c.l.b16 %v4918
        %v4951 = vunpack.c.l.b16 %v4919
        %v4952 = vunpack.c.l.b16 %v4920
        %v4953 = vunpack.c.l.b16 %v4921
        %v4954 = vunpack.c.l.b16 %v4922
        %v4955 = vunpack.c.l.b16 %v4923
        %v4956 = vunpack.c.l.b16 %v4924
        %v4957 = vunpack.c.l.b16 %v4925
        %v4958 = vunpack.c.l.b16 %v4926
        %v4959 = vunpack.c.l.b16 %v4927
        %v4960 = vunpack.c.l.b16 %v4928
        %v4961 = vunpack.c.l.b16 %v4929
        %v4962 = vunpack.c.l.b16 %v4930
        %v4963 = vunpack.c.l.b16 %v4931
        %v4964 = vpack.c.b16 %v4949, %v4948
        %v4965 = vpack.c.b16 %v4951, %v4950
        %v4966 = vpack.c.b16 %v4953, %v4952
        %v4967 = vpack.c.b16 %v4955, %v4954
        %v4968 = vpack.c.b16 %v4957, %v4956
        %v4969 = vpack.c.b16 %v4959, %v4958
        %v4970 = vpack.c.b16 %v4961, %v4960
        %v4971 = vpack.c.b16 %v4963, %v4962
        %4980 = vmatprep.subr.bf16.mxu0 0
        %4981 = vmatpush1.bf16.msra.mxu0 %v4971
        %4982 = vmatprep.subr.bf16.mxu0 0
        %4983 = vmatpush1.bf16.msra.mxu0 %v4970
        %4984 = vmatprep.subr.bf16.mxu0 0
        %4985 = vmatpush1.bf16.msra.mxu0 %v4969
        %4986 = vmatprep.subr.bf16.mxu0 0
        %4987 = vmatpush1.bf16.msra.mxu0 %v4968
        %4988 = vmatprep.subr.bf16.mxu0 0
        %4989 = vmatpush1.bf16.msra.mxu0 %v4967
        %4990 = vmatprep.subr.bf16.mxu0 0
        %4991 = vmatpush1.bf16.msra.mxu0 %v4966
        %4992 = vmatprep.subr.bf16.mxu0 0
        %4993 = vmatpush1.bf16.msra.mxu0 %v4965
        %4994 = vmatprep.subr.bf16.mxu0 0
        %4995 = vmatpush1.bf16.msra.mxu0 %v4964
        %4996 = vmatprep.subr.bf16.mxu0 0
        %4997 = vmatpush2.bf16.msra.mxu0 0
        %4998 = vmatprep.subr.bf16.mxu0 0
        %4999 = vmatpush2.bf16.msra.mxu0 0
        %5000 = vmatprep.subr.bf16.mxu0 0
        %5001 = vmatpush2.bf16.msra.mxu0 0
        %5002 = vmatprep.subr.bf16.mxu0 0
        %5003 = vmatpush2.bf16.msra.mxu0 0
        %5004 = vmatprep.subr.bf16.mxu0 0
        %5005 = vmatpush2.bf16.msra.mxu0 0
        %5006 = vmatprep.subr.bf16.mxu0 0
        %5007 = vmatpush2.bf16.msra.mxu0 0
        %5008 = vmatprep.subr.bf16.mxu0 0
        %5009 = vmatpush2.bf16.msra.mxu0 0
        %5010 = vmatprep.subr.bf16.mxu0 0
        %5011 = vmatpush2.bf16.msra.mxu0 0
        %5012 = vmatprep.mubr.bf16.mxu0 0
        %5013 = vmatmul.mubr.bf16.gmra.mxu0 %v4897
        %v5014 = vpop.f32.mrf.mxu0
        %v5015 = vadd.f32 0.0, %v5014
        %v5016 = vpop.f32.mrf.mxu0
        %v5017 = vpop.f32.mrf.mxu0
        %v5018 = vadd.f32 0.0, %v5017
        %v5019 = vpop.f32.mrf.mxu0
        %5020 = vmatprep.mubr.bf16.mxu0 0
        %5021 = vmatmul.mubr.bf16.gmra.mxu0 %v4898
        %v5022 = vpop.f32.mrf.mxu0
        %v5023 = vadd.f32 0.0, %v5022
        %v5024 = vpop.f32.mrf.mxu0
        %v5025 = vpop.f32.mrf.mxu0
        %v5026 = vadd.f32 0.0, %v5025
        %v5027 = vpop.f32.mrf.mxu0
        %5028 = vmatprep.mubr.bf16.mxu0 0
        %5029 = vmatmul.mubr.bf16.gmra.mxu0 %v4899
        %v5030 = vpop.f32.mrf.mxu0
        %v5031 = vadd.f32 0.0, %v5030
        %v5032 = vpop.f32.mrf.mxu0
        %v5033 = vpop.f32.mrf.mxu0
        %v5034 = vadd.f32 0.0, %v5033
        %v5035 = vpop.f32.mrf.mxu0
        %5036 = vmatprep.mubr.bf16.mxu0 0
        %5037 = vmatmul.mubr.bf16.gmra.mxu0 %v4900
        %v5038 = vpop.f32.mrf.mxu0
        %v5039 = vadd.f32 0.0, %v5038
        %v5040 = vpop.f32.mrf.mxu0
        %v5041 = vpop.f32.mrf.mxu0
        %v5042 = vadd.f32 0.0, %v5041
        %v5043 = vpop.f32.mrf.mxu0
        %5044 = vmatprep.mubr.bf16.mxu0 0
        %5045 = vmatmul.mubr.bf16.gmra.mxu0 %v4901
        %v5046 = vpop.f32.mrf.mxu0
        %v5047 = vadd.f32 0.0, %v5046
        %v5048 = vpop.f32.mrf.mxu0
        %v5049 = vpop.f32.mrf.mxu0
        %v5050 = vadd.f32 0.0, %v5049
        %v5051 = vpop.f32.mrf.mxu0
        %5052 = vmatprep.mubr.bf16.mxu0 0
        %5053 = vmatmul.mubr.bf16.gmra.mxu0 %v4902
        %v5054 = vpop.f32.mrf.mxu0
        %v5055 = vadd.f32 0.0, %v5054
        %v5056 = vpop.f32.mrf.mxu0
        %v5057 = vpop.f32.mrf.mxu0
        %v5058 = vadd.f32 0.0, %v5057
        %v5059 = vpop.f32.mrf.mxu0
        %5060 = vmatprep.mubr.bf16.mxu0 0
        %5061 = vmatmul.mubr.bf16.gmra.mxu0 %v4903
        %v5062 = vpop.f32.mrf.mxu0
        %v5063 = vadd.f32 0.0, %v5062
        %v5064 = vpop.f32.mrf.mxu0
        %v5065 = vpop.f32.mrf.mxu0
        %v5066 = vadd.f32 0.0, %v5065
        %v5067 = vpop.f32.mrf.mxu0
        %5068 = vmatprep.mubr.bf16.mxu0 0
        %5069 = vmatmul.mubr.bf16.gmra.mxu0 %v4904
        %v5070 = vpop.f32.mrf.mxu0
        %v5071 = vadd.f32 0.0, %v5070
        %v5072 = vpop.f32.mrf.mxu0
        %v5073 = vpop.f32.mrf.mxu0
        %v5074 = vadd.f32 0.0, %v5073
        %v5075 = vpop.f32.mrf.mxu0
        %5076 = vmatprep.mubr.bf16.mxu0 0
        %5077 = vmatmul.mubr.bf16.gmra.mxu0 %v4905
        %v5078 = vpop.f32.mrf.mxu0
        %v5079 = vadd.f32 0.0, %v5078
        %v5080 = vpop.f32.mrf.mxu0
        %v5081 = vpop.f32.mrf.mxu0
        %v5082 = vadd.f32 0.0, %v5081
        %v5083 = vpop.f32.mrf.mxu0
        %5084 = vmatprep.mubr.bf16.mxu0 0
        %5085 = vmatmul.mubr.bf16.gmra.mxu0 %v4906
        %v5086 = vpop.f32.mrf.mxu0
        %v5087 = vadd.f32 0.0, %v5086
        %v5088 = vpop.f32.mrf.mxu0
        %v5089 = vpop.f32.mrf.mxu0
        %v5090 = vadd.f32 0.0, %v5089
        %v5091 = vpop.f32.mrf.mxu0
        %5092 = vmatprep.mubr.bf16.mxu0 0
        %5093 = vmatmul.mubr.bf16.gmra.mxu0 %v4907
        %v5094 = vpop.f32.mrf.mxu0
        %v5095 = vadd.f32 0.0, %v5094
        %v5096 = vpop.f32.mrf.mxu0
        %v5097 = vpop.f32.mrf.mxu0
        %v5098 = vadd.f32 0.0, %v5097
        %v5099 = vpop.f32.mrf.mxu0
        %5100 = vmatprep.mubr.bf16.mxu0 0
        %5101 = vmatmul.mubr.bf16.gmra.mxu0 %v4908
        %v5102 = vpop.f32.mrf.mxu0
        %v5103 = vadd.f32 0.0, %v5102
        %v5104 = vpop.f32.mrf.mxu0
        %v5105 = vpop.f32.mrf.mxu0
        %v5106 = vadd.f32 0.0, %v5105
        %v5107 = vpop.f32.mrf.mxu0
        %5108 = vmatprep.mubr.bf16.mxu0 0
        %5109 = vmatmul.mubr.bf16.gmra.mxu0 %v4909
        %v5110 = vpop.f32.mrf.mxu0
        %v5111 = vadd.f32 0.0, %v5110
        %v5112 = vpop.f32.mrf.mxu0
        %v5113 = vpop.f32.mrf.mxu0
        %v5114 = vadd.f32 0.0, %v5113
        %v5115 = vpop.f32.mrf.mxu0
        %5116 = vmatprep.mubr.bf16.mxu0 0
        %5117 = vmatmul.mubr.bf16.gmra.mxu0 %v4910
        %v5118 = vpop.f32.mrf.mxu0
        %v5119 = vadd.f32 0.0, %v5118
        %v5120 = vpop.f32.mrf.mxu0
        %v5121 = vpop.f32.mrf.mxu0
        %v5122 = vadd.f32 0.0, %v5121
        %v5123 = vpop.f32.mrf.mxu0
        %5124 = vmatprep.mubr.bf16.mxu0 0
        %5125 = vmatmul.mubr.bf16.gmra.mxu0 %v4911
        %v5126 = vpop.f32.mrf.mxu0
        %v5127 = vadd.f32 0.0, %v5126
        %v5128 = vpop.f32.mrf.mxu0
        %v5129 = vpop.f32.mrf.mxu0
        %v5130 = vadd.f32 0.0, %v5129
        %v5131 = vpop.f32.mrf.mxu0
        %5132 = vmatprep.mubr.bf16.mxu0 0
        %5133 = vmatmul.mubr.bf16.gmra.mxu0 %v4912
        %v5134 = vpop.f32.mrf.mxu0
        %v5135 = vadd.f32 0.0, %v5134
        %v5136 = vpop.f32.mrf.mxu0
        %v5137 = vpop.f32.mrf.mxu0
        %v5138 = vadd.f32 0.0, %v5137
        %v5139 = vpop.f32.mrf.mxu0
        %5140 = vmatprep.mubr.bf16.mxu0 0
        %5141 = vmatmul.mubr.bf16.gmra.mxu0 %v4913
        %v5142 = vpop.f32.mrf.mxu0
        %v5143 = vadd.f32 0.0, %v5142
        %v5144 = vpop.f32.mrf.mxu0
        %v5145 = vpop.f32.mrf.mxu0
        %v5146 = vadd.f32 0.0, %v5145
        %v5147 = vpop.f32.mrf.mxu0
        %5148 = vmatprep.mubr.bf16.mxu0 0
        %5149 = vmatmul.mubr.bf16.gmra.mxu0 %v4914
        %v5150 = vpop.f32.mrf.mxu0
        %v5151 = vadd.f32 0.0, %v5150
        %v5152 = vpop.f32.mrf.mxu0
        %v5153 = vpop.f32.mrf.mxu0
        %v5154 = vadd.f32 0.0, %v5153
        %v5155 = vpop.f32.mrf.mxu0
        %5156 = vdwg.mxu0
        %v5157 = vadd.f32 %v4825, %v5015
        %v5158 = vadd.f32 %v4826, %v5018
        %v5159 = vadd.f32 %v4827, %v5023
        %v5160 = vadd.f32 %v4828, %v5026
        %v5161 = vadd.f32 %v4829, %v5031
        %v5162 = vadd.f32 %v4830, %v5034
        %v5163 = vadd.f32 %v4831, %v5039
        %v5164 = vadd.f32 %v4832, %v5042
        %v5165 = vadd.f32 %v4833, %v5047
        %v5166 = vadd.f32 %v4834, %v5050
        %v5167 = vadd.f32 %v4835, %v5055
        %v5168 = vadd.f32 %v4836, %v5058
        %v5169 = vadd.f32 %v4837, %v5063
        %v5170 = vadd.f32 %v4838, %v5066
        %v5171 = vadd.f32 %v4839, %v5071
        %v5172 = vadd.f32 %v4840, %v5074
        %v5173 = vadd.f32 %v4841, %v5079
        %v5174 = vadd.f32 %v4842, %v5082
        %v5175 = vadd.f32 %v4843, %v5087
        %v5176 = vadd.f32 %v4844, %v5090
        %v5177 = vadd.f32 %v4845, %v5095
        %v5178 = vadd.f32 %v4846, %v5098
        %v5179 = vadd.f32 %v4847, %v5103
        %v5180 = vadd.f32 %v4848, %v5106
        %v5181 = vadd.f32 %v4849, %v5111
        %v5182 = vadd.f32 %v4850, %v5114
        %v5183 = vadd.f32 %v4851, %v5119
        %v5184 = vadd.f32 %v4852, %v5122
        %v5185 = vadd.f32 %v4853, %v5127
        %v5186 = vadd.f32 %v4854, %v5130
        %v5187 = vadd.f32 %v4855, %v5135
        %v5188 = vadd.f32 %v4856, %v5138
        %v5189 = vadd.f32 %v4857, %v5143
        %v5190 = vadd.f32 %v4858, %v5146
        %v5191 = vadd.f32 %v4859, %v5151
        %v5192 = vadd.f32 %v4860, %v5154
        %v5193 = vld [vmem:[#allocation2 + $0x19] sm:$0xff]
        %v5194 = vld [vmem:[#allocation2 + $0x21] sm:$0xff]
        %v5195 = vld [vmem:[#allocation2 + $0x29] sm:$0xff]
        %v5196 = vld [vmem:[#allocation2 + $0x31] sm:$0xff]
        %v5197 = vld [vmem:[#allocation2 + $0x39] sm:$0xff]
        %v5198 = vld [vmem:[#allocation2 + $0x41] sm:$0xff]
        %v5199 = vld [vmem:[#allocation2 + $0x49] sm:$0xff]
        %v5200 = vld [vmem:[#allocation2 + $0x51] sm:$0xff]
        %v5201 = vld [vmem:[#allocation2 + $0x59] sm:$0xff]
        %v5202 = vld [vmem:[#allocation2 + $0x61] sm:$0xff]
        %v5203 = vld [vmem:[#allocation2 + $0x69] sm:$0xff]
        %v5204 = vld [vmem:[#allocation2 + $0x71] sm:$0xff]
        %v5205 = vld [vmem:[#allocation2 + $0x79] sm:$0xff]
        %v5206 = vld [vmem:[#allocation2 + $0x81] sm:$0xff]
        %v5207 = vld [vmem:[#allocation2 + $0x89] sm:$0xff]
        %v5208 = vld [vmem:[#allocation2 + $0x91] sm:$0xff]
        %v5209 = vld [vmem:[#allocation2 + $0x99] sm:$0xff]
        %v5210 = vld [vmem:[#allocation2 + $0xa1] sm:$0xff]
        %v5211 = vld [vmem:[#allocation2 + $0xa9] sm:$0xff]
        %v5212 = vld [vmem:[#allocation2 + $0xb1] sm:$0xff]
        %v5213 = vld [vmem:[#allocation2 + $0xb9] sm:$0xff]
        %v5214 = vld [vmem:[#allocation2 + $0xc1] sm:$0xff]
        %v5215 = vld [vmem:[#allocation2 + $0xc9] sm:$0xff]
        %v5216 = vld [vmem:[#allocation2 + $0xd1] sm:$0xff]
        %v5217 = vld [vmem:[#allocation2 + $0xd9] sm:$0xff]
        %v5218 = vld [vmem:[#allocation2 + $0xe1] sm:$0xff]
        %v5219 = vld [vmem:[#allocation2 + $0xe9] sm:$0xff]
        %v5220 = vld [vmem:[#allocation2 + $0xf1] sm:$0xff]
        %v5221 = vld [vmem:[#allocation2 + $0xf9] sm:$0xff]
        %v5222 = vld [vmem:[#allocation2 + $0x101] sm:$0xff]
        %v5223 = vld [vmem:[#allocation2 + $0x109] sm:$0xff]
        %v5224 = vld [vmem:[#allocation2 + $0x111] sm:$0xff]
        %v5225 = vld [vmem:[#allocation2 + $0x119] sm:$0xff]
        %v5226 = vld [vmem:[#allocation2 + $0x121] sm:$0xff]
        %v5227 = vld [vmem:[#allocation2 + $0x129] sm:$0xff]
        %v5228 = vld [vmem:[#allocation2 + $0x131] sm:$0xff]
        %v5229 = vpack.c.bf16 %v5194, %v5193
        %v5230 = vpack.c.bf16 %v5196, %v5195
        %v5231 = vpack.c.bf16 %v5198, %v5197
        %v5232 = vpack.c.bf16 %v5200, %v5199
        %v5233 = vpack.c.bf16 %v5202, %v5201
        %v5234 = vpack.c.bf16 %v5204, %v5203
        %v5235 = vpack.c.bf16 %v5206, %v5205
        %v5236 = vpack.c.bf16 %v5208, %v5207
        %v5237 = vpack.c.bf16 %v5210, %v5209
        %v5238 = vpack.c.bf16 %v5212, %v5211
        %v5239 = vpack.c.bf16 %v5214, %v5213
        %v5240 = vpack.c.bf16 %v5216, %v5215
        %v5241 = vpack.c.bf16 %v5218, %v5217
        %v5242 = vpack.c.bf16 %v5220, %v5219
        %v5243 = vpack.c.bf16 %v5222, %v5221
        %v5244 = vpack.c.bf16 %v5224, %v5223
        %v5245 = vpack.c.bf16 %v5226, %v5225
        %v5246 = vpack.c.bf16 %v5228, %v5227
        %s5247 = scalar_lea.vmem %s5, 320
        %v5248 = vld [vmem:[%s5247] sm:$0xf]
        %v5249 = vld [vmem:[%s5247 + $0x4] sm:$0xf]
        %v5250 = vld [vmem:[%s5247 + $0x8] sm:$0xf]
        %v5251 = vld [vmem:[%s5247 + $0xc] sm:$0xf]
        %v5252 = vld [vmem:[%s5247 + $0x10] sm:$0xf]
        %v5253 = vld [vmem:[%s5247 + $0x14] sm:$0xf]
        %v5254 = vld [vmem:[%s5247 + $0x18] sm:$0xf]
        %v5255 = vld [vmem:[%s5247 + $0x1c] sm:$0xf]
        %v5256 = vld [vmem:[%s5247 + $0x20] sm:$0xf]
        %v5257 = vld [vmem:[%s5247 + $0x24] sm:$0xf]
        %v5258 = vld [vmem:[%s5247 + $0x28] sm:$0xf]
        %v5259 = vld [vmem:[%s5247 + $0x2c] sm:$0xf]
        %v5260 = vld [vmem:[%s5247 + $0x30] sm:$0xf]
        %v5261 = vld [vmem:[%s5247 + $0x34] sm:$0xf]
        %v5262 = vld [vmem:[%s5247 + $0x38] sm:$0xf]
        %v5263 = vld [vmem:[%s5247 + $0x3c] sm:$0xf]
        %v5280 = vunpack.c.l.b16 %v5248
        %v5281 = vunpack.c.l.b16 %v5249
        %v5282 = vunpack.c.l.b16 %v5250
        %v5283 = vunpack.c.l.b16 %v5251
        %v5284 = vunpack.c.l.b16 %v5252
        %v5285 = vunpack.c.l.b16 %v5253
        %v5286 = vunpack.c.l.b16 %v5254
        %v5287 = vunpack.c.l.b16 %v5255
        %v5288 = vunpack.c.l.b16 %v5256
        %v5289 = vunpack.c.l.b16 %v5257
        %v5290 = vunpack.c.l.b16 %v5258
        %v5291 = vunpack.c.l.b16 %v5259
        %v5292 = vunpack.c.l.b16 %v5260
        %v5293 = vunpack.c.l.b16 %v5261
        %v5294 = vunpack.c.l.b16 %v5262
        %v5295 = vunpack.c.l.b16 %v5263
        %v5296 = vpack.c.b16 %v5281, %v5280
        %v5297 = vpack.c.b16 %v5283, %v5282
        %v5298 = vpack.c.b16 %v5285, %v5284
        %v5299 = vpack.c.b16 %v5287, %v5286
        %v5300 = vpack.c.b16 %v5289, %v5288
        %v5301 = vpack.c.b16 %v5291, %v5290
        %v5302 = vpack.c.b16 %v5293, %v5292
        %v5303 = vpack.c.b16 %v5295, %v5294
        %5312 = vmatprep.subr.bf16.mxu0 0
        %5313 = vmatpush1.bf16.msra.mxu0 %v5303
        %5314 = vmatprep.subr.bf16.mxu0 0
        %5315 = vmatpush1.bf16.msra.mxu0 %v5302
        %5316 = vmatprep.subr.bf16.mxu0 0
        %5317 = vmatpush1.bf16.msra.mxu0 %v5301
        %5318 = vmatprep.subr.bf16.mxu0 0
        %5319 = vmatpush1.bf16.msra.mxu0 %v5300
        %5320 = vmatprep.subr.bf16.mxu0 0
        %5321 = vmatpush1.bf16.msra.mxu0 %v5299
        %5322 = vmatprep.subr.bf16.mxu0 0
        %5323 = vmatpush1.bf16.msra.mxu0 %v5298
        %5324 = vmatprep.subr.bf16.mxu0 0
        %5325 = vmatpush1.bf16.msra.mxu0 %v5297
        %5326 = vmatprep.subr.bf16.mxu0 0
        %5327 = vmatpush1.bf16.msra.mxu0 %v5296
        %5328 = vmatprep.subr.bf16.mxu0 0
        %5329 = vmatpush2.bf16.msra.mxu0 0
        %5330 = vmatprep.subr.bf16.mxu0 0
        %5331 = vmatpush2.bf16.msra.mxu0 0
        %5332 = vmatprep.subr.bf16.mxu0 0
        %5333 = vmatpush2.bf16.msra.mxu0 0
        %5334 = vmatprep.subr.bf16.mxu0 0
        %5335 = vmatpush2.bf16.msra.mxu0 0
        %5336 = vmatprep.subr.bf16.mxu0 0
        %5337 = vmatpush2.bf16.msra.mxu0 0
        %5338 = vmatprep.subr.bf16.mxu0 0
        %5339 = vmatpush2.bf16.msra.mxu0 0
        %5340 = vmatprep.subr.bf16.mxu0 0
        %5341 = vmatpush2.bf16.msra.mxu0 0
        %5342 = vmatprep.subr.bf16.mxu0 0
        %5343 = vmatpush2.bf16.msra.mxu0 0
        %5344 = vmatprep.mubr.bf16.mxu0 0
        %5345 = vmatmul.mubr.bf16.gmra.mxu0 %v5229
        %v5346 = vpop.f32.mrf.mxu0
        %v5347 = vadd.f32 0.0, %v5346
        %v5348 = vpop.f32.mrf.mxu0
        %v5349 = vpop.f32.mrf.mxu0
        %v5350 = vadd.f32 0.0, %v5349
        %v5351 = vpop.f32.mrf.mxu0
        %5352 = vmatprep.mubr.bf16.mxu0 0
        %5353 = vmatmul.mubr.bf16.gmra.mxu0 %v5230
        %v5354 = vpop.f32.mrf.mxu0
        %v5355 = vadd.f32 0.0, %v5354
        %v5356 = vpop.f32.mrf.mxu0
        %v5357 = vpop.f32.mrf.mxu0
        %v5358 = vadd.f32 0.0, %v5357
        %v5359 = vpop.f32.mrf.mxu0
        %5360 = vmatprep.mubr.bf16.mxu0 0
        %5361 = vmatmul.mubr.bf16.gmra.mxu0 %v5231
        %v5362 = vpop.f32.mrf.mxu0
        %v5363 = vadd.f32 0.0, %v5362
        %v5364 = vpop.f32.mrf.mxu0
        %v5365 = vpop.f32.mrf.mxu0
        %v5366 = vadd.f32 0.0, %v5365
        %v5367 = vpop.f32.mrf.mxu0
        %5368 = vmatprep.mubr.bf16.mxu0 0
        %5369 = vmatmul.mubr.bf16.gmra.mxu0 %v5232
        %v5370 = vpop.f32.mrf.mxu0
        %v5371 = vadd.f32 0.0, %v5370
        %v5372 = vpop.f32.mrf.mxu0
        %v5373 = vpop.f32.mrf.mxu0
        %v5374 = vadd.f32 0.0, %v5373
        %v5375 = vpop.f32.mrf.mxu0
        %5376 = vmatprep.mubr.bf16.mxu0 0
        %5377 = vmatmul.mubr.bf16.gmra.mxu0 %v5233
        %v5378 = vpop.f32.mrf.mxu0
        %v5379 = vadd.f32 0.0, %v5378
        %v5380 = vpop.f32.mrf.mxu0
        %v5381 = vpop.f32.mrf.mxu0
        %v5382 = vadd.f32 0.0, %v5381
        %v5383 = vpop.f32.mrf.mxu0
        %5384 = vmatprep.mubr.bf16.mxu0 0
        %5385 = vmatmul.mubr.bf16.gmra.mxu0 %v5234
        %v5386 = vpop.f32.mrf.mxu0
        %v5387 = vadd.f32 0.0, %v5386
        %v5388 = vpop.f32.mrf.mxu0
        %v5389 = vpop.f32.mrf.mxu0
        %v5390 = vadd.f32 0.0, %v5389
        %v5391 = vpop.f32.mrf.mxu0
        %5392 = vmatprep.mubr.bf16.mxu0 0
        %5393 = vmatmul.mubr.bf16.gmra.mxu0 %v5235
        %v5394 = vpop.f32.mrf.mxu0
        %v5395 = vadd.f32 0.0, %v5394
        %v5396 = vpop.f32.mrf.mxu0
        %v5397 = vpop.f32.mrf.mxu0
        %v5398 = vadd.f32 0.0, %v5397
        %v5399 = vpop.f32.mrf.mxu0
        %5400 = vmatprep.mubr.bf16.mxu0 0
        %5401 = vmatmul.mubr.bf16.gmra.mxu0 %v5236
        %v5402 = vpop.f32.mrf.mxu0
        %v5403 = vadd.f32 0.0, %v5402
        %v5404 = vpop.f32.mrf.mxu0
        %v5405 = vpop.f32.mrf.mxu0
        %v5406 = vadd.f32 0.0, %v5405
        %v5407 = vpop.f32.mrf.mxu0
        %5408 = vmatprep.mubr.bf16.mxu0 0
        %5409 = vmatmul.mubr.bf16.gmra.mxu0 %v5237
        %v5410 = vpop.f32.mrf.mxu0
        %v5411 = vadd.f32 0.0, %v5410
        %v5412 = vpop.f32.mrf.mxu0
        %v5413 = vpop.f32.mrf.mxu0
        %v5414 = vadd.f32 0.0, %v5413
        %v5415 = vpop.f32.mrf.mxu0
        %5416 = vmatprep.mubr.bf16.mxu0 0
        %5417 = vmatmul.mubr.bf16.gmra.mxu0 %v5238
        %v5418 = vpop.f32.mrf.mxu0
        %v5419 = vadd.f32 0.0, %v5418
        %v5420 = vpop.f32.mrf.mxu0
        %v5421 = vpop.f32.mrf.mxu0
        %v5422 = vadd.f32 0.0, %v5421
        %v5423 = vpop.f32.mrf.mxu0
        %5424 = vmatprep.mubr.bf16.mxu0 0
        %5425 = vmatmul.mubr.bf16.gmra.mxu0 %v5239
        %v5426 = vpop.f32.mrf.mxu0
        %v5427 = vadd.f32 0.0, %v5426
        %v5428 = vpop.f32.mrf.mxu0
        %v5429 = vpop.f32.mrf.mxu0
        %v5430 = vadd.f32 0.0, %v5429
        %v5431 = vpop.f32.mrf.mxu0
        %5432 = vmatprep.mubr.bf16.mxu0 0
        %5433 = vmatmul.mubr.bf16.gmra.mxu0 %v5240
        %v5434 = vpop.f32.mrf.mxu0
        %v5435 = vadd.f32 0.0, %v5434
        %v5436 = vpop.f32.mrf.mxu0
        %v5437 = vpop.f32.mrf.mxu0
        %v5438 = vadd.f32 0.0, %v5437
        %v5439 = vpop.f32.mrf.mxu0
        %5440 = vmatprep.mubr.bf16.mxu0 0
        %5441 = vmatmul.mubr.bf16.gmra.mxu0 %v5241
        %v5442 = vpop.f32.mrf.mxu0
        %v5443 = vadd.f32 0.0, %v5442
        %v5444 = vpop.f32.mrf.mxu0
        %v5445 = vpop.f32.mrf.mxu0
        %v5446 = vadd.f32 0.0, %v5445
        %v5447 = vpop.f32.mrf.mxu0
        %5448 = vmatprep.mubr.bf16.mxu0 0
        %5449 = vmatmul.mubr.bf16.gmra.mxu0 %v5242
        %v5450 = vpop.f32.mrf.mxu0
        %v5451 = vadd.f32 0.0, %v5450
        %v5452 = vpop.f32.mrf.mxu0
        %v5453 = vpop.f32.mrf.mxu0
        %v5454 = vadd.f32 0.0, %v5453
        %v5455 = vpop.f32.mrf.mxu0
        %5456 = vmatprep.mubr.bf16.mxu0 0
        %5457 = vmatmul.mubr.bf16.gmra.mxu0 %v5243
        %v5458 = vpop.f32.mrf.mxu0
        %v5459 = vadd.f32 0.0, %v5458
        %v5460 = vpop.f32.mrf.mxu0
        %v5461 = vpop.f32.mrf.mxu0
        %v5462 = vadd.f32 0.0, %v5461
        %v5463 = vpop.f32.mrf.mxu0
        %5464 = vmatprep.mubr.bf16.mxu0 0
        %5465 = vmatmul.mubr.bf16.gmra.mxu0 %v5244
        %v5466 = vpop.f32.mrf.mxu0
        %v5467 = vadd.f32 0.0, %v5466
        %v5468 = vpop.f32.mrf.mxu0
        %v5469 = vpop.f32.mrf.mxu0
        %v5470 = vadd.f32 0.0, %v5469
        %v5471 = vpop.f32.mrf.mxu0
        %5472 = vmatprep.mubr.bf16.mxu0 0
        %5473 = vmatmul.mubr.bf16.gmra.mxu0 %v5245
        %v5474 = vpop.f32.mrf.mxu0
        %v5475 = vadd.f32 0.0, %v5474
        %v5476 = vpop.f32.mrf.mxu0
        %v5477 = vpop.f32.mrf.mxu0
        %v5478 = vadd.f32 0.0, %v5477
        %v5479 = vpop.f32.mrf.mxu0
        %5480 = vmatprep.mubr.bf16.mxu0 0
        %5481 = vmatmul.mubr.bf16.gmra.mxu0 %v5246
        %v5482 = vpop.f32.mrf.mxu0
        %v5483 = vadd.f32 0.0, %v5482
        %v5484 = vpop.f32.mrf.mxu0
        %v5485 = vpop.f32.mrf.mxu0
        %v5486 = vadd.f32 0.0, %v5485
        %v5487 = vpop.f32.mrf.mxu0
        %5488 = vdwg.mxu0
        %v5489 = vadd.f32 %v5157, %v5347
        %v5490 = vadd.f32 %v5158, %v5350
        %v5491 = vadd.f32 %v5159, %v5355
        %v5492 = vadd.f32 %v5160, %v5358
        %v5493 = vadd.f32 %v5161, %v5363
        %v5494 = vadd.f32 %v5162, %v5366
        %v5495 = vadd.f32 %v5163, %v5371
        %v5496 = vadd.f32 %v5164, %v5374
        %v5497 = vadd.f32 %v5165, %v5379
        %v5498 = vadd.f32 %v5166, %v5382
        %v5499 = vadd.f32 %v5167, %v5387
        %v5500 = vadd.f32 %v5168, %v5390
        %v5501 = vadd.f32 %v5169, %v5395
        %v5502 = vadd.f32 %v5170, %v5398
        %v5503 = vadd.f32 %v5171, %v5403
        %v5504 = vadd.f32 %v5172, %v5406
        %v5505 = vadd.f32 %v5173, %v5411
        %v5506 = vadd.f32 %v5174, %v5414
        %v5507 = vadd.f32 %v5175, %v5419
        %v5508 = vadd.f32 %v5176, %v5422
        %v5509 = vadd.f32 %v5177, %v5427
        %v5510 = vadd.f32 %v5178, %v5430
        %v5511 = vadd.f32 %v5179, %v5435
        %v5512 = vadd.f32 %v5180, %v5438
        %v5513 = vadd.f32 %v5181, %v5443
        %v5514 = vadd.f32 %v5182, %v5446
        %v5515 = vadd.f32 %v5183, %v5451
        %v5516 = vadd.f32 %v5184, %v5454
        %v5517 = vadd.f32 %v5185, %v5459
        %v5518 = vadd.f32 %v5186, %v5462
        %v5519 = vadd.f32 %v5187, %v5467
        %v5520 = vadd.f32 %v5188, %v5470
        %v5521 = vadd.f32 %v5189, %v5475
        %v5522 = vadd.f32 %v5190, %v5478
        %v5523 = vadd.f32 %v5191, %v5483
        %v5524 = vadd.f32 %v5192, %v5486
        %v5525 = vld [vmem:[#allocation2 + $0x29] sm:$0xff]
        %v5526 = vld [vmem:[#allocation2 + $0x31] sm:$0xff]
        %v5527 = vld [vmem:[#allocation2 + $0x39] sm:$0xff]
        %v5528 = vld [vmem:[#allocation2 + $0x41] sm:$0xff]
        %v5529 = vld [vmem:[#allocation2 + $0x49] sm:$0xff]
        %v5530 = vld [vmem:[#allocation2 + $0x51] sm:$0xff]
        %v5531 = vld [vmem:[#allocation2 + $0x59] sm:$0xff]
        %v5532 = vld [vmem:[#allocation2 + $0x61] sm:$0xff]
        %v5533 = vld [vmem:[#allocation2 + $0x69] sm:$0xff]
        %v5534 = vld [vmem:[#allocation2 + $0x71] sm:$0xff]
        %v5535 = vld [vmem:[#allocation2 + $0x79] sm:$0xff]
        %v5536 = vld [vmem:[#allocation2 + $0x81] sm:$0xff]
        %v5537 = vld [vmem:[#allocation2 + $0x89] sm:$0xff]
        %v5538 = vld [vmem:[#allocation2 + $0x91] sm:$0xff]
        %v5539 = vld [vmem:[#allocation2 + $0x99] sm:$0xff]
        %v5540 = vld [vmem:[#allocation2 + $0xa1] sm:$0xff]
        %v5541 = vld [vmem:[#allocation2 + $0xa9] sm:$0xff]
        %v5542 = vld [vmem:[#allocation2 + $0xb1] sm:$0xff]
        %v5543 = vld [vmem:[#allocation2 + $0xb9] sm:$0xff]
        %v5544 = vld [vmem:[#allocation2 + $0xc1] sm:$0xff]
        %v5545 = vld [vmem:[#allocation2 + $0xc9] sm:$0xff]
        %v5546 = vld [vmem:[#allocation2 + $0xd1] sm:$0xff]
        %v5547 = vld [vmem:[#allocation2 + $0xd9] sm:$0xff]
        %v5548 = vld [vmem:[#allocation2 + $0xe1] sm:$0xff]
        %v5549 = vld [vmem:[#allocation2 + $0xe9] sm:$0xff]
        %v5550 = vld [vmem:[#allocation2 + $0xf1] sm:$0xff]
        %v5551 = vld [vmem:[#allocation2 + $0xf9] sm:$0xff]
        %v5552 = vld [vmem:[#allocation2 + $0x101] sm:$0xff]
        %v5553 = vld [vmem:[#allocation2 + $0x109] sm:$0xff]
        %v5554 = vld [vmem:[#allocation2 + $0x111] sm:$0xff]
        %v5555 = vld [vmem:[#allocation2 + $0x119] sm:$0xff]
        %v5556 = vld [vmem:[#allocation2 + $0x121] sm:$0xff]
        %v5557 = vld [vmem:[#allocation2 + $0x129] sm:$0xff]
        %v5558 = vld [vmem:[#allocation2 + $0x131] sm:$0xff]
        %v5559 = vld [vmem:[#allocation2 + $0x139] sm:$0xff]
        %v5560 = vld [vmem:[#allocation2 + $0x141] sm:$0xff]
        %v5561 = vpack.c.bf16 %v5526, %v5525
        %v5562 = vpack.c.bf16 %v5528, %v5527
        %v5563 = vpack.c.bf16 %v5530, %v5529
        %v5564 = vpack.c.bf16 %v5532, %v5531
        %v5565 = vpack.c.bf16 %v5534, %v5533
        %v5566 = vpack.c.bf16 %v5536, %v5535
        %v5567 = vpack.c.bf16 %v5538, %v5537
        %v5568 = vpack.c.bf16 %v5540, %v5539
        %v5569 = vpack.c.bf16 %v5542, %v5541
        %v5570 = vpack.c.bf16 %v5544, %v5543
        %v5571 = vpack.c.bf16 %v5546, %v5545
        %v5572 = vpack.c.bf16 %v5548, %v5547
        %v5573 = vpack.c.bf16 %v5550, %v5549
        %v5574 = vpack.c.bf16 %v5552, %v5551
        %v5575 = vpack.c.bf16 %v5554, %v5553
        %v5576 = vpack.c.bf16 %v5556, %v5555
        %v5577 = vpack.c.bf16 %v5558, %v5557
        %v5578 = vpack.c.bf16 %v5560, %v5559
        %s5579 = scalar_lea.vmem %s5, 384
        %v5580 = vld [vmem:[%s5579] sm:$0xf]
        %v5581 = vld [vmem:[%s5579 + $0x4] sm:$0xf]
        %v5582 = vld [vmem:[%s5579 + $0x8] sm:$0xf]
        %v5583 = vld [vmem:[%s5579 + $0xc] sm:$0xf]
        %v5584 = vld [vmem:[%s5579 + $0x10] sm:$0xf]
        %v5585 = vld [vmem:[%s5579 + $0x14] sm:$0xf]
        %v5586 = vld [vmem:[%s5579 + $0x18] sm:$0xf]
        %v5587 = vld [vmem:[%s5579 + $0x1c] sm:$0xf]
        %v5588 = vld [vmem:[%s5579 + $0x20] sm:$0xf]
        %v5589 = vld [vmem:[%s5579 + $0x24] sm:$0xf]
        %v5590 = vld [vmem:[%s5579 + $0x28] sm:$0xf]
        %v5591 = vld [vmem:[%s5579 + $0x2c] sm:$0xf]
        %v5592 = vld [vmem:[%s5579 + $0x30] sm:$0xf]
        %v5593 = vld [vmem:[%s5579 + $0x34] sm:$0xf]
        %v5594 = vld [vmem:[%s5579 + $0x38] sm:$0xf]
        %v5595 = vld [vmem:[%s5579 + $0x3c] sm:$0xf]
        %v5612 = vunpack.c.l.b16 %v5580
        %v5613 = vunpack.c.l.b16 %v5581
        %v5614 = vunpack.c.l.b16 %v5582
        %v5615 = vunpack.c.l.b16 %v5583
        %v5616 = vunpack.c.l.b16 %v5584
        %v5617 = vunpack.c.l.b16 %v5585
        %v5618 = vunpack.c.l.b16 %v5586
        %v5619 = vunpack.c.l.b16 %v5587
        %v5620 = vunpack.c.l.b16 %v5588
        %v5621 = vunpack.c.l.b16 %v5589
        %v5622 = vunpack.c.l.b16 %v5590
        %v5623 = vunpack.c.l.b16 %v5591
        %v5624 = vunpack.c.l.b16 %v5592
        %v5625 = vunpack.c.l.b16 %v5593
        %v5626 = vunpack.c.l.b16 %v5594
        %v5627 = vunpack.c.l.b16 %v5595
        %v5628 = vpack.c.b16 %v5613, %v5612
        %v5629 = vpack.c.b16 %v5615, %v5614
        %v5630 = vpack.c.b16 %v5617, %v5616
        %v5631 = vpack.c.b16 %v5619, %v5618
        %v5632 = vpack.c.b16 %v5621, %v5620
        %v5633 = vpack.c.b16 %v5623, %v5622
        %v5634 = vpack.c.b16 %v5625, %v5624
        %v5635 = vpack.c.b16 %v5627, %v5626
        %5644 = vmatprep.subr.bf16.mxu0 0
        %5645 = vmatpush1.bf16.msra.mxu0 %v5635
        %5646 = vmatprep.subr.bf16.mxu0 0
        %5647 = vmatpush1.bf16.msra.mxu0 %v5634
        %5648 = vmatprep.subr.bf16.mxu0 0
        %5649 = vmatpush1.bf16.msra.mxu0 %v5633
        %5650 = vmatprep.subr.bf16.mxu0 0
        %5651 = vmatpush1.bf16.msra.mxu0 %v5632
        %5652 = vmatprep.subr.bf16.mxu0 0
        %5653 = vmatpush1.bf16.msra.mxu0 %v5631
        %5654 = vmatprep.subr.bf16.mxu0 0
        %5655 = vmatpush1.bf16.msra.mxu0 %v5630
        %5656 = vmatprep.subr.bf16.mxu0 0
        %5657 = vmatpush1.bf16.msra.mxu0 %v5629
        %5658 = vmatprep.subr.bf16.mxu0 0
        %5659 = vmatpush1.bf16.msra.mxu0 %v5628
        %5660 = vmatprep.subr.bf16.mxu0 0
        %5661 = vmatpush2.bf16.msra.mxu0 0
        %5662 = vmatprep.subr.bf16.mxu0 0
        %5663 = vmatpush2.bf16.msra.mxu0 0
        %5664 = vmatprep.subr.bf16.mxu0 0
        %5665 = vmatpush2.bf16.msra.mxu0 0
        %5666 = vmatprep.subr.bf16.mxu0 0
        %5667 = vmatpush2.bf16.msra.mxu0 0
        %5668 = vmatprep.subr.bf16.mxu0 0
        %5669 = vmatpush2.bf16.msra.mxu0 0
        %5670 = vmatprep.subr.bf16.mxu0 0
        %5671 = vmatpush2.bf16.msra.mxu0 0
        %5672 = vmatprep.subr.bf16.mxu0 0
        %5673 = vmatpush2.bf16.msra.mxu0 0
        %5674 = vmatprep.subr.bf16.mxu0 0
        %5675 = vmatpush2.bf16.msra.mxu0 0
        %5676 = vmatprep.mubr.bf16.mxu0 0
        %5677 = vmatmul.mubr.bf16.gmra.mxu0 %v5561
        %v5678 = vpop.f32.mrf.mxu0
        %v5679 = vadd.f32 0.0, %v5678
        %v5680 = vpop.f32.mrf.mxu0
        %v5681 = vpop.f32.mrf.mxu0
        %v5682 = vadd.f32 0.0, %v5681
        %v5683 = vpop.f32.mrf.mxu0
        %5684 = vmatprep.mubr.bf16.mxu0 0
        %5685 = vmatmul.mubr.bf16.gmra.mxu0 %v5562
        %v5686 = vpop.f32.mrf.mxu0
        %v5687 = vadd.f32 0.0, %v5686
        %v5688 = vpop.f32.mrf.mxu0
        %v5689 = vpop.f32.mrf.mxu0
        %v5690 = vadd.f32 0.0, %v5689
        %v5691 = vpop.f32.mrf.mxu0
        %5692 = vmatprep.mubr.bf16.mxu0 0
        %5693 = vmatmul.mubr.bf16.gmra.mxu0 %v5563
        %v5694 = vpop.f32.mrf.mxu0
        %v5695 = vadd.f32 0.0, %v5694
        %v5696 = vpop.f32.mrf.mxu0
        %v5697 = vpop.f32.mrf.mxu0
        %v5698 = vadd.f32 0.0, %v5697
        %v5699 = vpop.f32.mrf.mxu0
        %5700 = vmatprep.mubr.bf16.mxu0 0
        %5701 = vmatmul.mubr.bf16.gmra.mxu0 %v5564
        %v5702 = vpop.f32.mrf.mxu0
        %v5703 = vadd.f32 0.0, %v5702
        %v5704 = vpop.f32.mrf.mxu0
        %v5705 = vpop.f32.mrf.mxu0
        %v5706 = vadd.f32 0.0, %v5705
        %v5707 = vpop.f32.mrf.mxu0
        %5708 = vmatprep.mubr.bf16.mxu0 0
        %5709 = vmatmul.mubr.bf16.gmra.mxu0 %v5565
        %v5710 = vpop.f32.mrf.mxu0
        %v5711 = vadd.f32 0.0, %v5710
        %v5712 = vpop.f32.mrf.mxu0
        %v5713 = vpop.f32.mrf.mxu0
        %v5714 = vadd.f32 0.0, %v5713
        %v5715 = vpop.f32.mrf.mxu0
        %5716 = vmatprep.mubr.bf16.mxu0 0
        %5717 = vmatmul.mubr.bf16.gmra.mxu0 %v5566
        %v5718 = vpop.f32.mrf.mxu0
        %v5719 = vadd.f32 0.0, %v5718
        %v5720 = vpop.f32.mrf.mxu0
        %v5721 = vpop.f32.mrf.mxu0
        %v5722 = vadd.f32 0.0, %v5721
        %v5723 = vpop.f32.mrf.mxu0
        %5724 = vmatprep.mubr.bf16.mxu0 0
        %5725 = vmatmul.mubr.bf16.gmra.mxu0 %v5567
        %v5726 = vpop.f32.mrf.mxu0
        %v5727 = vadd.f32 0.0, %v5726
        %v5728 = vpop.f32.mrf.mxu0
        %v5729 = vpop.f32.mrf.mxu0
        %v5730 = vadd.f32 0.0, %v5729
        %v5731 = vpop.f32.mrf.mxu0
        %5732 = vmatprep.mubr.bf16.mxu0 0
        %5733 = vmatmul.mubr.bf16.gmra.mxu0 %v5568
        %v5734 = vpop.f32.mrf.mxu0
        %v5735 = vadd.f32 0.0, %v5734
        %v5736 = vpop.f32.mrf.mxu0
        %v5737 = vpop.f32.mrf.mxu0
        %v5738 = vadd.f32 0.0, %v5737
        %v5739 = vpop.f32.mrf.mxu0
        %5740 = vmatprep.mubr.bf16.mxu0 0
        %5741 = vmatmul.mubr.bf16.gmra.mxu0 %v5569
        %v5742 = vpop.f32.mrf.mxu0
        %v5743 = vadd.f32 0.0, %v5742
        %v5744 = vpop.f32.mrf.mxu0
        %v5745 = vpop.f32.mrf.mxu0
        %v5746 = vadd.f32 0.0, %v5745
        %v5747 = vpop.f32.mrf.mxu0
        %5748 = vmatprep.mubr.bf16.mxu0 0
        %5749 = vmatmul.mubr.bf16.gmra.mxu0 %v5570
        %v5750 = vpop.f32.mrf.mxu0
        %v5751 = vadd.f32 0.0, %v5750
        %v5752 = vpop.f32.mrf.mxu0
        %v5753 = vpop.f32.mrf.mxu0
        %v5754 = vadd.f32 0.0, %v5753
        %v5755 = vpop.f32.mrf.mxu0
        %5756 = vmatprep.mubr.bf16.mxu0 0
        %5757 = vmatmul.mubr.bf16.gmra.mxu0 %v5571
        %v5758 = vpop.f32.mrf.mxu0
        %v5759 = vadd.f32 0.0, %v5758
        %v5760 = vpop.f32.mrf.mxu0
        %v5761 = vpop.f32.mrf.mxu0
        %v5762 = vadd.f32 0.0, %v5761
        %v5763 = vpop.f32.mrf.mxu0
        %5764 = vmatprep.mubr.bf16.mxu0 0
        %5765 = vmatmul.mubr.bf16.gmra.mxu0 %v5572
        %v5766 = vpop.f32.mrf.mxu0
        %v5767 = vadd.f32 0.0, %v5766
        %v5768 = vpop.f32.mrf.mxu0
        %v5769 = vpop.f32.mrf.mxu0
        %v5770 = vadd.f32 0.0, %v5769
        %v5771 = vpop.f32.mrf.mxu0
        %5772 = vmatprep.mubr.bf16.mxu0 0
        %5773 = vmatmul.mubr.bf16.gmra.mxu0 %v5573
        %v5774 = vpop.f32.mrf.mxu0
        %v5775 = vadd.f32 0.0, %v5774
        %v5776 = vpop.f32.mrf.mxu0
        %v5777 = vpop.f32.mrf.mxu0
        %v5778 = vadd.f32 0.0, %v5777
        %v5779 = vpop.f32.mrf.mxu0
        %5780 = vmatprep.mubr.bf16.mxu0 0
        %5781 = vmatmul.mubr.bf16.gmra.mxu0 %v5574
        %v5782 = vpop.f32.mrf.mxu0
        %v5783 = vadd.f32 0.0, %v5782
        %v5784 = vpop.f32.mrf.mxu0
        %v5785 = vpop.f32.mrf.mxu0
        %v5786 = vadd.f32 0.0, %v5785
        %v5787 = vpop.f32.mrf.mxu0
        %5788 = vmatprep.mubr.bf16.mxu0 0
        %5789 = vmatmul.mubr.bf16.gmra.mxu0 %v5575
        %v5790 = vpop.f32.mrf.mxu0
        %v5791 = vadd.f32 0.0, %v5790
        %v5792 = vpop.f32.mrf.mxu0
        %v5793 = vpop.f32.mrf.mxu0
        %v5794 = vadd.f32 0.0, %v5793
        %v5795 = vpop.f32.mrf.mxu0
        %5796 = vmatprep.mubr.bf16.mxu0 0
        %5797 = vmatmul.mubr.bf16.gmra.mxu0 %v5576
        %v5798 = vpop.f32.mrf.mxu0
        %v5799 = vadd.f32 0.0, %v5798
        %v5800 = vpop.f32.mrf.mxu0
        %v5801 = vpop.f32.mrf.mxu0
        %v5802 = vadd.f32 0.0, %v5801
        %v5803 = vpop.f32.mrf.mxu0
        %5804 = vmatprep.mubr.bf16.mxu0 0
        %5805 = vmatmul.mubr.bf16.gmra.mxu0 %v5577
        %v5806 = vpop.f32.mrf.mxu0
        %v5807 = vadd.f32 0.0, %v5806
        %v5808 = vpop.f32.mrf.mxu0
        %v5809 = vpop.f32.mrf.mxu0
        %v5810 = vadd.f32 0.0, %v5809
        %v5811 = vpop.f32.mrf.mxu0
        %5812 = vmatprep.mubr.bf16.mxu0 0
        %5813 = vmatmul.mubr.bf16.gmra.mxu0 %v5578
        %v5814 = vpop.f32.mrf.mxu0
        %v5815 = vadd.f32 0.0, %v5814
        %v5816 = vpop.f32.mrf.mxu0
        %v5817 = vpop.f32.mrf.mxu0
        %v5818 = vadd.f32 0.0, %v5817
        %v5819 = vpop.f32.mrf.mxu0
        %5820 = vdwg.mxu0
        %v5821 = vadd.f32 %v5489, %v5679
        %v5822 = vadd.f32 %v5490, %v5682
        %v5823 = vadd.f32 %v5491, %v5687
        %v5824 = vadd.f32 %v5492, %v5690
        %v5825 = vadd.f32 %v5493, %v5695
        %v5826 = vadd.f32 %v5494, %v5698
        %v5827 = vadd.f32 %v5495, %v5703
        %v5828 = vadd.f32 %v5496, %v5706
        %v5829 = vadd.f32 %v5497, %v5711
        %v5830 = vadd.f32 %v5498, %v5714
        %v5831 = vadd.f32 %v5499, %v5719
        %v5832 = vadd.f32 %v5500, %v5722
        %v5833 = vadd.f32 %v5501, %v5727
        %v5834 = vadd.f32 %v5502, %v5730
        %v5835 = vadd.f32 %v5503, %v5735
        %v5836 = vadd.f32 %v5504, %v5738
        %v5837 = vadd.f32 %v5505, %v5743
        %v5838 = vadd.f32 %v5506, %v5746
        %v5839 = vadd.f32 %v5507, %v5751
        %v5840 = vadd.f32 %v5508, %v5754
        %v5841 = vadd.f32 %v5509, %v5759
        %v5842 = vadd.f32 %v5510, %v5762
        %v5843 = vadd.f32 %v5511, %v5767
        %v5844 = vadd.f32 %v5512, %v5770
        %v5845 = vadd.f32 %v5513, %v5775
        %v5846 = vadd.f32 %v5514, %v5778
        %v5847 = vadd.f32 %v5515, %v5783
        %v5848 = vadd.f32 %v5516, %v5786
        %v5849 = vadd.f32 %v5517, %v5791
        %v5850 = vadd.f32 %v5518, %v5794
        %v5851 = vadd.f32 %v5519, %v5799
        %v5852 = vadd.f32 %v5520, %v5802
        %v5853 = vadd.f32 %v5521, %v5807
        %v5854 = vadd.f32 %v5522, %v5810
        %v5855 = vadd.f32 %v5523, %v5815
        %v5856 = vadd.f32 %v5524, %v5818
        %v5857 = vld [vmem:[#allocation2 + $0x2a] sm:$0xff]
        %v5858 = vld [vmem:[#allocation2 + $0x32] sm:$0xff]
        %v5859 = vld [vmem:[#allocation2 + $0x3a] sm:$0xff]
        %v5860 = vld [vmem:[#allocation2 + $0x42] sm:$0xff]
        %v5861 = vld [vmem:[#allocation2 + $0x4a] sm:$0xff]
        %v5862 = vld [vmem:[#allocation2 + $0x52] sm:$0xff]
        %v5863 = vld [vmem:[#allocation2 + $0x5a] sm:$0xff]
        %v5864 = vld [vmem:[#allocation2 + $0x62] sm:$0xff]
        %v5865 = vld [vmem:[#allocation2 + $0x6a] sm:$0xff]
        %v5866 = vld [vmem:[#allocation2 + $0x72] sm:$0xff]
        %v5867 = vld [vmem:[#allocation2 + $0x7a] sm:$0xff]
        %v5868 = vld [vmem:[#allocation2 + $0x82] sm:$0xff]
        %v5869 = vld [vmem:[#allocation2 + $0x8a] sm:$0xff]
        %v5870 = vld [vmem:[#allocation2 + $0x92] sm:$0xff]
        %v5871 = vld [vmem:[#allocation2 + $0x9a] sm:$0xff]
        %v5872 = vld [vmem:[#allocation2 + $0xa2] sm:$0xff]
        %v5873 = vld [vmem:[#allocation2 + $0xaa] sm:$0xff]
        %v5874 = vld [vmem:[#allocation2 + $0xb2] sm:$0xff]
        %v5875 = vld [vmem:[#allocation2 + $0xba] sm:$0xff]
        %v5876 = vld [vmem:[#allocation2 + $0xc2] sm:$0xff]
        %v5877 = vld [vmem:[#allocation2 + $0xca] sm:$0xff]
        %v5878 = vld [vmem:[#allocation2 + $0xd2] sm:$0xff]
        %v5879 = vld [vmem:[#allocation2 + $0xda] sm:$0xff]
        %v5880 = vld [vmem:[#allocation2 + $0xe2] sm:$0xff]
        %v5881 = vld [vmem:[#allocation2 + $0xea] sm:$0xff]
        %v5882 = vld [vmem:[#allocation2 + $0xf2] sm:$0xff]
        %v5883 = vld [vmem:[#allocation2 + $0xfa] sm:$0xff]
        %v5884 = vld [vmem:[#allocation2 + $0x102] sm:$0xff]
        %v5885 = vld [vmem:[#allocation2 + $0x10a] sm:$0xff]
        %v5886 = vld [vmem:[#allocation2 + $0x112] sm:$0xff]
        %v5887 = vld [vmem:[#allocation2 + $0x11a] sm:$0xff]
        %v5888 = vld [vmem:[#allocation2 + $0x122] sm:$0xff]
        %v5889 = vld [vmem:[#allocation2 + $0x12a] sm:$0xff]
        %v5890 = vld [vmem:[#allocation2 + $0x132] sm:$0xff]
        %v5891 = vld [vmem:[#allocation2 + $0x13a] sm:$0xff]
        %v5892 = vld [vmem:[#allocation2 + $0x142] sm:$0xff]
        %v5893 = vpack.c.bf16 %v5858, %v5857
        %v5894 = vpack.c.bf16 %v5860, %v5859
        %v5895 = vpack.c.bf16 %v5862, %v5861
        %v5896 = vpack.c.bf16 %v5864, %v5863
        %v5897 = vpack.c.bf16 %v5866, %v5865
        %v5898 = vpack.c.bf16 %v5868, %v5867
        %v5899 = vpack.c.bf16 %v5870, %v5869
        %v5900 = vpack.c.bf16 %v5872, %v5871
        %v5901 = vpack.c.bf16 %v5874, %v5873
        %v5902 = vpack.c.bf16 %v5876, %v5875
        %v5903 = vpack.c.bf16 %v5878, %v5877
        %v5904 = vpack.c.bf16 %v5880, %v5879
        %v5905 = vpack.c.bf16 %v5882, %v5881
        %v5906 = vpack.c.bf16 %v5884, %v5883
        %v5907 = vpack.c.bf16 %v5886, %v5885
        %v5908 = vpack.c.bf16 %v5888, %v5887
        %v5909 = vpack.c.bf16 %v5890, %v5889
        %v5910 = vpack.c.bf16 %v5892, %v5891
        %s5911 = scalar_lea.vmem %s5, 448
        %v5912 = vld [vmem:[%s5911] sm:$0xf]
        %v5913 = vld [vmem:[%s5911 + $0x4] sm:$0xf]
        %v5914 = vld [vmem:[%s5911 + $0x8] sm:$0xf]
        %v5915 = vld [vmem:[%s5911 + $0xc] sm:$0xf]
        %v5916 = vld [vmem:[%s5911 + $0x10] sm:$0xf]
        %v5917 = vld [vmem:[%s5911 + $0x14] sm:$0xf]
        %v5918 = vld [vmem:[%s5911 + $0x18] sm:$0xf]
        %v5919 = vld [vmem:[%s5911 + $0x1c] sm:$0xf]
        %v5920 = vld [vmem:[%s5911 + $0x20] sm:$0xf]
        %v5921 = vld [vmem:[%s5911 + $0x24] sm:$0xf]
        %v5922 = vld [vmem:[%s5911 + $0x28] sm:$0xf]
        %v5923 = vld [vmem:[%s5911 + $0x2c] sm:$0xf]
        %v5924 = vld [vmem:[%s5911 + $0x30] sm:$0xf]
        %v5925 = vld [vmem:[%s5911 + $0x34] sm:$0xf]
        %v5926 = vld [vmem:[%s5911 + $0x38] sm:$0xf]
        %v5927 = vld [vmem:[%s5911 + $0x3c] sm:$0xf]
        %v5944 = vunpack.c.l.b16 %v5912
        %v5945 = vunpack.c.l.b16 %v5913
        %v5946 = vunpack.c.l.b16 %v5914
        %v5947 = vunpack.c.l.b16 %v5915
        %v5948 = vunpack.c.l.b16 %v5916
        %v5949 = vunpack.c.l.b16 %v5917
        %v5950 = vunpack.c.l.b16 %v5918
        %v5951 = vunpack.c.l.b16 %v5919
        %v5952 = vunpack.c.l.b16 %v5920
        %v5953 = vunpack.c.l.b16 %v5921
        %v5954 = vunpack.c.l.b16 %v5922
        %v5955 = vunpack.c.l.b16 %v5923
        %v5956 = vunpack.c.l.b16 %v5924
        %v5957 = vunpack.c.l.b16 %v5925
        %v5958 = vunpack.c.l.b16 %v5926
        %v5959 = vunpack.c.l.b16 %v5927
        %v5960 = vpack.c.b16 %v5945, %v5944
        %v5961 = vpack.c.b16 %v5947, %v5946
        %v5962 = vpack.c.b16 %v5949, %v5948
        %v5963 = vpack.c.b16 %v5951, %v5950
        %v5964 = vpack.c.b16 %v5953, %v5952
        %v5965 = vpack.c.b16 %v5955, %v5954
        %v5966 = vpack.c.b16 %v5957, %v5956
        %v5967 = vpack.c.b16 %v5959, %v5958
        %5976 = vmatprep.subr.bf16.mxu0 0
        %5977 = vmatpush1.bf16.msra.mxu0 %v5967
        %5978 = vmatprep.subr.bf16.mxu0 0
        %5979 = vmatpush1.bf16.msra.mxu0 %v5966
        %5980 = vmatprep.subr.bf16.mxu0 0
        %5981 = vmatpush1.bf16.msra.mxu0 %v5965
        %5982 = vmatprep.subr.bf16.mxu0 0
        %5983 = vmatpush1.bf16.msra.mxu0 %v5964
        %5984 = vmatprep.subr.bf16.mxu0 0
        %5985 = vmatpush1.bf16.msra.mxu0 %v5963
        %5986 = vmatprep.subr.bf16.mxu0 0
        %5987 = vmatpush1.bf16.msra.mxu0 %v5962
        %5988 = vmatprep.subr.bf16.mxu0 0
        %5989 = vmatpush1.bf16.msra.mxu0 %v5961
        %5990 = vmatprep.subr.bf16.mxu0 0
        %5991 = vmatpush1.bf16.msra.mxu0 %v5960
        %5992 = vmatprep.subr.bf16.mxu0 0
        %5993 = vmatpush2.bf16.msra.mxu0 0
        %5994 = vmatprep.subr.bf16.mxu0 0
        %5995 = vmatpush2.bf16.msra.mxu0 0
        %5996 = vmatprep.subr.bf16.mxu0 0
        %5997 = vmatpush2.bf16.msra.mxu0 0
        %5998 = vmatprep.subr.bf16.mxu0 0
        %5999 = vmatpush2.bf16.msra.mxu0 0
        %6000 = vmatprep.subr.bf16.mxu0 0
        %6001 = vmatpush2.bf16.msra.mxu0 0
        %6002 = vmatprep.subr.bf16.mxu0 0
        %6003 = vmatpush2.bf16.msra.mxu0 0
        %6004 = vmatprep.subr.bf16.mxu0 0
        %6005 = vmatpush2.bf16.msra.mxu0 0
        %6006 = vmatprep.subr.bf16.mxu0 0
        %6007 = vmatpush2.bf16.msra.mxu0 0
        %6008 = vmatprep.mubr.bf16.mxu0 0
        %6009 = vmatmul.mubr.bf16.gmra.mxu0 %v5893
        %v6010 = vpop.f32.mrf.mxu0
        %v6011 = vadd.f32 0.0, %v6010
        %v6012 = vpop.f32.mrf.mxu0
        %v6013 = vpop.f32.mrf.mxu0
        %v6014 = vadd.f32 0.0, %v6013
        %v6015 = vpop.f32.mrf.mxu0
        %6016 = vmatprep.mubr.bf16.mxu0 0
        %6017 = vmatmul.mubr.bf16.gmra.mxu0 %v5894
        %v6018 = vpop.f32.mrf.mxu0
        %v6019 = vadd.f32 0.0, %v6018
        %v6020 = vpop.f32.mrf.mxu0
        %v6021 = vpop.f32.mrf.mxu0
        %v6022 = vadd.f32 0.0, %v6021
        %v6023 = vpop.f32.mrf.mxu0
        %6024 = vmatprep.mubr.bf16.mxu0 0
        %6025 = vmatmul.mubr.bf16.gmra.mxu0 %v5895
        %v6026 = vpop.f32.mrf.mxu0
        %v6027 = vadd.f32 0.0, %v6026
        %v6028 = vpop.f32.mrf.mxu0
        %v6029 = vpop.f32.mrf.mxu0
        %v6030 = vadd.f32 0.0, %v6029
        %v6031 = vpop.f32.mrf.mxu0
        %6032 = vmatprep.mubr.bf16.mxu0 0
        %6033 = vmatmul.mubr.bf16.gmra.mxu0 %v5896
        %v6034 = vpop.f32.mrf.mxu0
        %v6035 = vadd.f32 0.0, %v6034
        %v6036 = vpop.f32.mrf.mxu0
        %v6037 = vpop.f32.mrf.mxu0
        %v6038 = vadd.f32 0.0, %v6037
        %v6039 = vpop.f32.mrf.mxu0
        %6040 = vmatprep.mubr.bf16.mxu0 0
        %6041 = vmatmul.mubr.bf16.gmra.mxu0 %v5897
        %v6042 = vpop.f32.mrf.mxu0
        %v6043 = vadd.f32 0.0, %v6042
        %v6044 = vpop.f32.mrf.mxu0
        %v6045 = vpop.f32.mrf.mxu0
        %v6046 = vadd.f32 0.0, %v6045
        %v6047 = vpop.f32.mrf.mxu0
        %6048 = vmatprep.mubr.bf16.mxu0 0
        %6049 = vmatmul.mubr.bf16.gmra.mxu0 %v5898
        %v6050 = vpop.f32.mrf.mxu0
        %v6051 = vadd.f32 0.0, %v6050
        %v6052 = vpop.f32.mrf.mxu0
        %v6053 = vpop.f32.mrf.mxu0
        %v6054 = vadd.f32 0.0, %v6053
        %v6055 = vpop.f32.mrf.mxu0
        %6056 = vmatprep.mubr.bf16.mxu0 0
        %6057 = vmatmul.mubr.bf16.gmra.mxu0 %v5899
        %v6058 = vpop.f32.mrf.mxu0
        %v6059 = vadd.f32 0.0, %v6058
        %v6060 = vpop.f32.mrf.mxu0
        %v6061 = vpop.f32.mrf.mxu0
        %v6062 = vadd.f32 0.0, %v6061
        %v6063 = vpop.f32.mrf.mxu0
        %6064 = vmatprep.mubr.bf16.mxu0 0
        %6065 = vmatmul.mubr.bf16.gmra.mxu0 %v5900
        %v6066 = vpop.f32.mrf.mxu0
        %v6067 = vadd.f32 0.0, %v6066
        %v6068 = vpop.f32.mrf.mxu0
        %v6069 = vpop.f32.mrf.mxu0
        %v6070 = vadd.f32 0.0, %v6069
        %v6071 = vpop.f32.mrf.mxu0
        %6072 = vmatprep.mubr.bf16.mxu0 0
        %6073 = vmatmul.mubr.bf16.gmra.mxu0 %v5901
        %v6074 = vpop.f32.mrf.mxu0
        %v6075 = vadd.f32 0.0, %v6074
        %v6076 = vpop.f32.mrf.mxu0
        %v6077 = vpop.f32.mrf.mxu0
        %v6078 = vadd.f32 0.0, %v6077
        %v6079 = vpop.f32.mrf.mxu0
        %6080 = vmatprep.mubr.bf16.mxu0 0
        %6081 = vmatmul.mubr.bf16.gmra.mxu0 %v5902
        %v6082 = vpop.f32.mrf.mxu0
        %v6083 = vadd.f32 0.0, %v6082
        %v6084 = vpop.f32.mrf.mxu0
        %v6085 = vpop.f32.mrf.mxu0
        %v6086 = vadd.f32 0.0, %v6085
        %v6087 = vpop.f32.mrf.mxu0
        %6088 = vmatprep.mubr.bf16.mxu0 0
        %6089 = vmatmul.mubr.bf16.gmra.mxu0 %v5903
        %v6090 = vpop.f32.mrf.mxu0
        %v6091 = vadd.f32 0.0, %v6090
        %v6092 = vpop.f32.mrf.mxu0
        %v6093 = vpop.f32.mrf.mxu0
        %v6094 = vadd.f32 0.0, %v6093
        %v6095 = vpop.f32.mrf.mxu0
        %6096 = vmatprep.mubr.bf16.mxu0 0
        %6097 = vmatmul.mubr.bf16.gmra.mxu0 %v5904
        %v6098 = vpop.f32.mrf.mxu0
        %v6099 = vadd.f32 0.0, %v6098
        %v6100 = vpop.f32.mrf.mxu0
        %v6101 = vpop.f32.mrf.mxu0
        %v6102 = vadd.f32 0.0, %v6101
        %v6103 = vpop.f32.mrf.mxu0
        %6104 = vmatprep.mubr.bf16.mxu0 0
        %6105 = vmatmul.mubr.bf16.gmra.mxu0 %v5905
        %v6106 = vpop.f32.mrf.mxu0
        %v6107 = vadd.f32 0.0, %v6106
        %v6108 = vpop.f32.mrf.mxu0
        %v6109 = vpop.f32.mrf.mxu0
        %v6110 = vadd.f32 0.0, %v6109
        %v6111 = vpop.f32.mrf.mxu0
        %6112 = vmatprep.mubr.bf16.mxu0 0
        %6113 = vmatmul.mubr.bf16.gmra.mxu0 %v5906
        %v6114 = vpop.f32.mrf.mxu0
        %v6115 = vadd.f32 0.0, %v6114
        %v6116 = vpop.f32.mrf.mxu0
        %v6117 = vpop.f32.mrf.mxu0
        %v6118 = vadd.f32 0.0, %v6117
        %v6119 = vpop.f32.mrf.mxu0
        %6120 = vmatprep.mubr.bf16.mxu0 0
        %6121 = vmatmul.mubr.bf16.gmra.mxu0 %v5907
        %v6122 = vpop.f32.mrf.mxu0
        %v6123 = vadd.f32 0.0, %v6122
        %v6124 = vpop.f32.mrf.mxu0
        %v6125 = vpop.f32.mrf.mxu0
        %v6126 = vadd.f32 0.0, %v6125
        %v6127 = vpop.f32.mrf.mxu0
        %6128 = vmatprep.mubr.bf16.mxu0 0
        %6129 = vmatmul.mubr.bf16.gmra.mxu0 %v5908
        %v6130 = vpop.f32.mrf.mxu0
        %v6131 = vadd.f32 0.0, %v6130
        %v6132 = vpop.f32.mrf.mxu0
        %v6133 = vpop.f32.mrf.mxu0
        %v6134 = vadd.f32 0.0, %v6133
        %v6135 = vpop.f32.mrf.mxu0
        %6136 = vmatprep.mubr.bf16.mxu0 0
        %6137 = vmatmul.mubr.bf16.gmra.mxu0 %v5909
        %v6138 = vpop.f32.mrf.mxu0
        %v6139 = vadd.f32 0.0, %v6138
        %v6140 = vpop.f32.mrf.mxu0
        %v6141 = vpop.f32.mrf.mxu0
        %v6142 = vadd.f32 0.0, %v6141
        %v6143 = vpop.f32.mrf.mxu0
        %6144 = vmatprep.mubr.bf16.mxu0 0
        %6145 = vmatmul.mubr.bf16.gmra.mxu0 %v5910
        %v6146 = vpop.f32.mrf.mxu0
        %v6147 = vadd.f32 0.0, %v6146
        %v6148 = vpop.f32.mrf.mxu0
        %v6149 = vpop.f32.mrf.mxu0
        %v6150 = vadd.f32 0.0, %v6149
        %v6151 = vpop.f32.mrf.mxu0
        %6152 = vdwg.mxu0
        %v6153 = vadd.f32 %v5821, %v6011
        %v6154 = vadd.f32 %v5822, %v6014
        %v6155 = vadd.f32 %v5823, %v6019
        %v6156 = vadd.f32 %v5824, %v6022
        %v6157 = vadd.f32 %v5825, %v6027
        %v6158 = vadd.f32 %v5826, %v6030
        %v6159 = vadd.f32 %v5827, %v6035
        %v6160 = vadd.f32 %v5828, %v6038
        %v6161 = vadd.f32 %v5829, %v6043
        %v6162 = vadd.f32 %v5830, %v6046
        %v6163 = vadd.f32 %v5831, %v6051
        %v6164 = vadd.f32 %v5832, %v6054
        %v6165 = vadd.f32 %v5833, %v6059
        %v6166 = vadd.f32 %v5834, %v6062
        %v6167 = vadd.f32 %v5835, %v6067
        %v6168 = vadd.f32 %v5836, %v6070
        %v6169 = vadd.f32 %v5837, %v6075
        %v6170 = vadd.f32 %v5838, %v6078
        %v6171 = vadd.f32 %v5839, %v6083
        %v6172 = vadd.f32 %v5840, %v6086
        %v6173 = vadd.f32 %v5841, %v6091
        %v6174 = vadd.f32 %v5842, %v6094
        %v6175 = vadd.f32 %v5843, %v6099
        %v6176 = vadd.f32 %v5844, %v6102
        %v6177 = vadd.f32 %v5845, %v6107
        %v6178 = vadd.f32 %v5846, %v6110
        %v6179 = vadd.f32 %v5847, %v6115
        %v6180 = vadd.f32 %v5848, %v6118
        %v6181 = vadd.f32 %v5849, %v6123
        %v6182 = vadd.f32 %v5850, %v6126
        %v6183 = vadd.f32 %v5851, %v6131
        %v6184 = vadd.f32 %v5852, %v6134
        %v6185 = vadd.f32 %v5853, %v6139
        %v6186 = vadd.f32 %v5854, %v6142
        %v6187 = vadd.f32 %v5855, %v6147
        %v6188 = vadd.f32 %v5856, %v6150
        %v6189 = vld [vmem:[#allocation2 + $0x2b] sm:$0xff]
        %v6190 = vld [vmem:[#allocation2 + $0x33] sm:$0xff]
        %v6191 = vld [vmem:[#allocation2 + $0x3b] sm:$0xff]
        %v6192 = vld [vmem:[#allocation2 + $0x43] sm:$0xff]
        %v6193 = vld [vmem:[#allocation2 + $0x4b] sm:$0xff]
        %v6194 = vld [vmem:[#allocation2 + $0x53] sm:$0xff]
        %v6195 = vld [vmem:[#allocation2 + $0x5b] sm:$0xff]
        %v6196 = vld [vmem:[#allocation2 + $0x63] sm:$0xff]
        %v6197 = vld [vmem:[#allocation2 + $0x6b] sm:$0xff]
        %v6198 = vld [vmem:[#allocation2 + $0x73] sm:$0xff]
        %v6199 = vld [vmem:[#allocation2 + $0x7b] sm:$0xff]
        %v6200 = vld [vmem:[#allocation2 + $0x83] sm:$0xff]
        %v6201 = vld [vmem:[#allocation2 + $0x8b] sm:$0xff]
        %v6202 = vld [vmem:[#allocation2 + $0x93] sm:$0xff]
        %v6203 = vld [vmem:[#allocation2 + $0x9b] sm:$0xff]
        %v6204 = vld [vmem:[#allocation2 + $0xa3] sm:$0xff]
        %v6205 = vld [vmem:[#allocation2 + $0xab] sm:$0xff]
        %v6206 = vld [vmem:[#allocation2 + $0xb3] sm:$0xff]
        %v6207 = vld [vmem:[#allocation2 + $0xbb] sm:$0xff]
        %v6208 = vld [vmem:[#allocation2 + $0xc3] sm:$0xff]
        %v6209 = vld [vmem:[#allocation2 + $0xcb] sm:$0xff]
        %v6210 = vld [vmem:[#allocation2 + $0xd3] sm:$0xff]
        %v6211 = vld [vmem:[#allocation2 + $0xdb] sm:$0xff]
        %v6212 = vld [vmem:[#allocation2 + $0xe3] sm:$0xff]
        %v6213 = vld [vmem:[#allocation2 + $0xeb] sm:$0xff]
        %v6214 = vld [vmem:[#allocation2 + $0xf3] sm:$0xff]
        %v6215 = vld [vmem:[#allocation2 + $0xfb] sm:$0xff]
        %v6216 = vld [vmem:[#allocation2 + $0x103] sm:$0xff]
        %v6217 = vld [vmem:[#allocation2 + $0x10b] sm:$0xff]
        %v6218 = vld [vmem:[#allocation2 + $0x113] sm:$0xff]
        %v6219 = vld [vmem:[#allocation2 + $0x11b] sm:$0xff]
        %v6220 = vld [vmem:[#allocation2 + $0x123] sm:$0xff]
        %v6221 = vld [vmem:[#allocation2 + $0x12b] sm:$0xff]
        %v6222 = vld [vmem:[#allocation2 + $0x133] sm:$0xff]
        %v6223 = vld [vmem:[#allocation2 + $0x13b] sm:$0xff]
        %v6224 = vld [vmem:[#allocation2 + $0x143] sm:$0xff]
        %v6225 = vpack.c.bf16 %v6190, %v6189
        %v6226 = vpack.c.bf16 %v6192, %v6191
        %v6227 = vpack.c.bf16 %v6194, %v6193
        %v6228 = vpack.c.bf16 %v6196, %v6195
        %v6229 = vpack.c.bf16 %v6198, %v6197
        %v6230 = vpack.c.bf16 %v6200, %v6199
        %v6231 = vpack.c.bf16 %v6202, %v6201
        %v6232 = vpack.c.bf16 %v6204, %v6203
        %v6233 = vpack.c.bf16 %v6206, %v6205
        %v6234 = vpack.c.bf16 %v6208, %v6207
        %v6235 = vpack.c.bf16 %v6210, %v6209
        %v6236 = vpack.c.bf16 %v6212, %v6211
        %v6237 = vpack.c.bf16 %v6214, %v6213
        %v6238 = vpack.c.bf16 %v6216, %v6215
        %v6239 = vpack.c.bf16 %v6218, %v6217
        %v6240 = vpack.c.bf16 %v6220, %v6219
        %v6241 = vpack.c.bf16 %v6222, %v6221
        %v6242 = vpack.c.bf16 %v6224, %v6223
        %s6243 = scalar_lea.vmem %s5, 512
        %v6244 = vld [vmem:[%s6243] sm:$0xf]
        %v6245 = vld [vmem:[%s6243 + $0x4] sm:$0xf]
        %v6246 = vld [vmem:[%s6243 + $0x8] sm:$0xf]
        %v6247 = vld [vmem:[%s6243 + $0xc] sm:$0xf]
        %v6248 = vld [vmem:[%s6243 + $0x10] sm:$0xf]
        %v6249 = vld [vmem:[%s6243 + $0x14] sm:$0xf]
        %v6250 = vld [vmem:[%s6243 + $0x18] sm:$0xf]
        %v6251 = vld [vmem:[%s6243 + $0x1c] sm:$0xf]
        %v6252 = vld [vmem:[%s6243 + $0x20] sm:$0xf]
        %v6253 = vld [vmem:[%s6243 + $0x24] sm:$0xf]
        %v6254 = vld [vmem:[%s6243 + $0x28] sm:$0xf]
        %v6255 = vld [vmem:[%s6243 + $0x2c] sm:$0xf]
        %v6256 = vld [vmem:[%s6243 + $0x30] sm:$0xf]
        %v6257 = vld [vmem:[%s6243 + $0x34] sm:$0xf]
        %v6258 = vld [vmem:[%s6243 + $0x38] sm:$0xf]
        %v6259 = vld [vmem:[%s6243 + $0x3c] sm:$0xf]
        %v6276 = vunpack.c.l.b16 %v6244
        %v6277 = vunpack.c.l.b16 %v6245
        %v6278 = vunpack.c.l.b16 %v6246
        %v6279 = vunpack.c.l.b16 %v6247
        %v6280 = vunpack.c.l.b16 %v6248
        %v6281 = vunpack.c.l.b16 %v6249
        %v6282 = vunpack.c.l.b16 %v6250
        %v6283 = vunpack.c.l.b16 %v6251
        %v6284 = vunpack.c.l.b16 %v6252
        %v6285 = vunpack.c.l.b16 %v6253
        %v6286 = vunpack.c.l.b16 %v6254
        %v6287 = vunpack.c.l.b16 %v6255
        %v6288 = vunpack.c.l.b16 %v6256
        %v6289 = vunpack.c.l.b16 %v6257
        %v6290 = vunpack.c.l.b16 %v6258
        %v6291 = vunpack.c.l.b16 %v6259
        %v6292 = vpack.c.b16 %v6277, %v6276
        %v6293 = vpack.c.b16 %v6279, %v6278
        %v6294 = vpack.c.b16 %v6281, %v6280
        %v6295 = vpack.c.b16 %v6283, %v6282
        %v6296 = vpack.c.b16 %v6285, %v6284
        %v6297 = vpack.c.b16 %v6287, %v6286
        %v6298 = vpack.c.b16 %v6289, %v6288
        %v6299 = vpack.c.b16 %v6291, %v6290
        %6308 = vmatprep.subr.bf16.mxu0 0
        %6309 = vmatpush1.bf16.msra.mxu0 %v6299
        %6310 = vmatprep.subr.bf16.mxu0 0
        %6311 = vmatpush1.bf16.msra.mxu0 %v6298
        %6312 = vmatprep.subr.bf16.mxu0 0
        %6313 = vmatpush1.bf16.msra.mxu0 %v6297
        %6314 = vmatprep.subr.bf16.mxu0 0
        %6315 = vmatpush1.bf16.msra.mxu0 %v6296
        %6316 = vmatprep.subr.bf16.mxu0 0
        %6317 = vmatpush1.bf16.msra.mxu0 %v6295
        %6318 = vmatprep.subr.bf16.mxu0 0
        %6319 = vmatpush1.bf16.msra.mxu0 %v6294
        %6320 = vmatprep.subr.bf16.mxu0 0
        %6321 = vmatpush1.bf16.msra.mxu0 %v6293
        %6322 = vmatprep.subr.bf16.mxu0 0
        %6323 = vmatpush1.bf16.msra.mxu0 %v6292
        %6324 = vmatprep.subr.bf16.mxu0 0
        %6325 = vmatpush2.bf16.msra.mxu0 0
        %6326 = vmatprep.subr.bf16.mxu0 0
        %6327 = vmatpush2.bf16.msra.mxu0 0
        %6328 = vmatprep.subr.bf16.mxu0 0
        %6329 = vmatpush2.bf16.msra.mxu0 0
        %6330 = vmatprep.subr.bf16.mxu0 0
        %6331 = vmatpush2.bf16.msra.mxu0 0
        %6332 = vmatprep.subr.bf16.mxu0 0
        %6333 = vmatpush2.bf16.msra.mxu0 0
        %6334 = vmatprep.subr.bf16.mxu0 0
        %6335 = vmatpush2.bf16.msra.mxu0 0
        %6336 = vmatprep.subr.bf16.mxu0 0
        %6337 = vmatpush2.bf16.msra.mxu0 0
        %6338 = vmatprep.subr.bf16.mxu0 0
        %6339 = vmatpush2.bf16.msra.mxu0 0
        %6340 = vmatprep.mubr.bf16.mxu0 0
        %6341 = vmatmul.mubr.bf16.gmra.mxu0 %v6225
        %v6342 = vpop.f32.mrf.mxu0
        %v6343 = vadd.f32 0.0, %v6342
        %v6344 = vpop.f32.mrf.mxu0
        %v6345 = vpop.f32.mrf.mxu0
        %v6346 = vadd.f32 0.0, %v6345
        %v6347 = vpop.f32.mrf.mxu0
        %6348 = vmatprep.mubr.bf16.mxu0 0
        %6349 = vmatmul.mubr.bf16.gmra.mxu0 %v6226
        %v6350 = vpop.f32.mrf.mxu0
        %v6351 = vadd.f32 0.0, %v6350
        %v6352 = vpop.f32.mrf.mxu0
        %v6353 = vpop.f32.mrf.mxu0
        %v6354 = vadd.f32 0.0, %v6353
        %v6355 = vpop.f32.mrf.mxu0
        %6356 = vmatprep.mubr.bf16.mxu0 0
        %6357 = vmatmul.mubr.bf16.gmra.mxu0 %v6227
        %v6358 = vpop.f32.mrf.mxu0
        %v6359 = vadd.f32 0.0, %v6358
        %v6360 = vpop.f32.mrf.mxu0
        %v6361 = vpop.f32.mrf.mxu0
        %v6362 = vadd.f32 0.0, %v6361
        %v6363 = vpop.f32.mrf.mxu0
        %6364 = vmatprep.mubr.bf16.mxu0 0
        %6365 = vmatmul.mubr.bf16.gmra.mxu0 %v6228
        %v6366 = vpop.f32.mrf.mxu0
        %v6367 = vadd.f32 0.0, %v6366
        %v6368 = vpop.f32.mrf.mxu0
        %v6369 = vpop.f32.mrf.mxu0
        %v6370 = vadd.f32 0.0, %v6369
        %v6371 = vpop.f32.mrf.mxu0
        %6372 = vmatprep.mubr.bf16.mxu0 0
        %6373 = vmatmul.mubr.bf16.gmra.mxu0 %v6229
        %v6374 = vpop.f32.mrf.mxu0
        %v6375 = vadd.f32 0.0, %v6374
        %v6376 = vpop.f32.mrf.mxu0
        %v6377 = vpop.f32.mrf.mxu0
        %v6378 = vadd.f32 0.0, %v6377
        %v6379 = vpop.f32.mrf.mxu0
        %6380 = vmatprep.mubr.bf16.mxu0 0
        %6381 = vmatmul.mubr.bf16.gmra.mxu0 %v6230
        %v6382 = vpop.f32.mrf.mxu0
        %v6383 = vadd.f32 0.0, %v6382
        %v6384 = vpop.f32.mrf.mxu0
        %v6385 = vpop.f32.mrf.mxu0
        %v6386 = vadd.f32 0.0, %v6385
        %v6387 = vpop.f32.mrf.mxu0
        %6388 = vmatprep.mubr.bf16.mxu0 0
        %6389 = vmatmul.mubr.bf16.gmra.mxu0 %v6231
        %v6390 = vpop.f32.mrf.mxu0
        %v6391 = vadd.f32 0.0, %v6390
        %v6392 = vpop.f32.mrf.mxu0
        %v6393 = vpop.f32.mrf.mxu0
        %v6394 = vadd.f32 0.0, %v6393
        %v6395 = vpop.f32.mrf.mxu0
        %6396 = vmatprep.mubr.bf16.mxu0 0
        %6397 = vmatmul.mubr.bf16.gmra.mxu0 %v6232
        %v6398 = vpop.f32.mrf.mxu0
        %v6399 = vadd.f32 0.0, %v6398
        %v6400 = vpop.f32.mrf.mxu0
        %v6401 = vpop.f32.mrf.mxu0
        %v6402 = vadd.f32 0.0, %v6401
        %v6403 = vpop.f32.mrf.mxu0
        %6404 = vmatprep.mubr.bf16.mxu0 0
        %6405 = vmatmul.mubr.bf16.gmra.mxu0 %v6233
        %v6406 = vpop.f32.mrf.mxu0
        %v6407 = vadd.f32 0.0, %v6406
        %v6408 = vpop.f32.mrf.mxu0
        %v6409 = vpop.f32.mrf.mxu0
        %v6410 = vadd.f32 0.0, %v6409
        %v6411 = vpop.f32.mrf.mxu0
        %6412 = vmatprep.mubr.bf16.mxu0 0
        %6413 = vmatmul.mubr.bf16.gmra.mxu0 %v6234
        %v6414 = vpop.f32.mrf.mxu0
        %v6415 = vadd.f32 0.0, %v6414
        %v6416 = vpop.f32.mrf.mxu0
        %v6417 = vpop.f32.mrf.mxu0
        %v6418 = vadd.f32 0.0, %v6417
        %v6419 = vpop.f32.mrf.mxu0
        %6420 = vmatprep.mubr.bf16.mxu0 0
        %6421 = vmatmul.mubr.bf16.gmra.mxu0 %v6235
        %v6422 = vpop.f32.mrf.mxu0
        %v6423 = vadd.f32 0.0, %v6422
        %v6424 = vpop.f32.mrf.mxu0
        %v6425 = vpop.f32.mrf.mxu0
        %v6426 = vadd.f32 0.0, %v6425
        %v6427 = vpop.f32.mrf.mxu0
        %6428 = vmatprep.mubr.bf16.mxu0 0
        %6429 = vmatmul.mubr.bf16.gmra.mxu0 %v6236
        %v6430 = vpop.f32.mrf.mxu0
        %v6431 = vadd.f32 0.0, %v6430
        %v6432 = vpop.f32.mrf.mxu0
        %v6433 = vpop.f32.mrf.mxu0
        %v6434 = vadd.f32 0.0, %v6433
        %v6435 = vpop.f32.mrf.mxu0
        %6436 = vmatprep.mubr.bf16.mxu0 0
        %6437 = vmatmul.mubr.bf16.gmra.mxu0 %v6237
        %v6438 = vpop.f32.mrf.mxu0
        %v6439 = vadd.f32 0.0, %v6438
        %v6440 = vpop.f32.mrf.mxu0
        %v6441 = vpop.f32.mrf.mxu0
        %v6442 = vadd.f32 0.0, %v6441
        %v6443 = vpop.f32.mrf.mxu0
        %6444 = vmatprep.mubr.bf16.mxu0 0
        %6445 = vmatmul.mubr.bf16.gmra.mxu0 %v6238
        %v6446 = vpop.f32.mrf.mxu0
        %v6447 = vadd.f32 0.0, %v6446
        %v6448 = vpop.f32.mrf.mxu0
        %v6449 = vpop.f32.mrf.mxu0
        %v6450 = vadd.f32 0.0, %v6449
        %v6451 = vpop.f32.mrf.mxu0
        %6452 = vmatprep.mubr.bf16.mxu0 0
        %6453 = vmatmul.mubr.bf16.gmra.mxu0 %v6239
        %v6454 = vpop.f32.mrf.mxu0
        %v6455 = vadd.f32 0.0, %v6454
        %v6456 = vpop.f32.mrf.mxu0
        %v6457 = vpop.f32.mrf.mxu0
        %v6458 = vadd.f32 0.0, %v6457
        %v6459 = vpop.f32.mrf.mxu0
        %6460 = vmatprep.mubr.bf16.mxu0 0
        %6461 = vmatmul.mubr.bf16.gmra.mxu0 %v6240
        %v6462 = vpop.f32.mrf.mxu0
        %v6463 = vadd.f32 0.0, %v6462
        %v6464 = vpop.f32.mrf.mxu0
        %v6465 = vpop.f32.mrf.mxu0
        %v6466 = vadd.f32 0.0, %v6465
        %v6467 = vpop.f32.mrf.mxu0
        %6468 = vmatprep.mubr.bf16.mxu0 0
        %6469 = vmatmul.mubr.bf16.gmra.mxu0 %v6241
        %v6470 = vpop.f32.mrf.mxu0
        %v6471 = vadd.f32 0.0, %v6470
        %v6472 = vpop.f32.mrf.mxu0
        %v6473 = vpop.f32.mrf.mxu0
        %v6474 = vadd.f32 0.0, %v6473
        %v6475 = vpop.f32.mrf.mxu0
        %6476 = vmatprep.mubr.bf16.mxu0 0
        %6477 = vmatmul.mubr.bf16.gmra.mxu0 %v6242
        %v6478 = vpop.f32.mrf.mxu0
        %v6479 = vadd.f32 0.0, %v6478
        %v6480 = vpop.f32.mrf.mxu0
        %v6481 = vpop.f32.mrf.mxu0
        %v6482 = vadd.f32 0.0, %v6481
        %v6483 = vpop.f32.mrf.mxu0
        %6484 = vdwg.mxu0
        %v6485 = vadd.f32 %v6153, %v6343
        %v6486 = vadd.f32 %v6154, %v6346
        %v6487 = vadd.f32 %v6155, %v6351
        %v6488 = vadd.f32 %v6156, %v6354
        %v6489 = vadd.f32 %v6157, %v6359
        %v6490 = vadd.f32 %v6158, %v6362
        %v6491 = vadd.f32 %v6159, %v6367
        %v6492 = vadd.f32 %v6160, %v6370
        %v6493 = vadd.f32 %v6161, %v6375
        %v6494 = vadd.f32 %v6162, %v6378
        %v6495 = vadd.f32 %v6163, %v6383
        %v6496 = vadd.f32 %v6164, %v6386
        %v6497 = vadd.f32 %v6165, %v6391
        %v6498 = vadd.f32 %v6166, %v6394
        %v6499 = vadd.f32 %v6167, %v6399
        %v6500 = vadd.f32 %v6168, %v6402
        %v6501 = vadd.f32 %v6169, %v6407
        %v6502 = vadd.f32 %v6170, %v6410
        %v6503 = vadd.f32 %v6171, %v6415
        %v6504 = vadd.f32 %v6172, %v6418
        %v6505 = vadd.f32 %v6173, %v6423
        %v6506 = vadd.f32 %v6174, %v6426
        %v6507 = vadd.f32 %v6175, %v6431
        %v6508 = vadd.f32 %v6176, %v6434
        %v6509 = vadd.f32 %v6177, %v6439
        %v6510 = vadd.f32 %v6178, %v6442
        %v6511 = vadd.f32 %v6179, %v6447
        %v6512 = vadd.f32 %v6180, %v6450
        %v6513 = vadd.f32 %v6181, %v6455
        %v6514 = vadd.f32 %v6182, %v6458
        %v6515 = vadd.f32 %v6183, %v6463
        %v6516 = vadd.f32 %v6184, %v6466
        %v6517 = vadd.f32 %v6185, %v6471
        %v6518 = vadd.f32 %v6186, %v6474
        %v6519 = vadd.f32 %v6187, %v6479
        %v6520 = vadd.f32 %v6188, %v6482
        %v6521 = vld [vmem:[%s6] sm:$0x1]
        %v6523 = vlaneseq
        %v6524 = vshrl.u32 %v6523, 7
        %v6525 = vsub.s32 0, %v6524
        %v6526 = vrot.slane %v6521, %v6525
        %v6528 = vadd.f32 %v6485, %v6526
        %v6529 = vadd.f32 %v6486, %v6526
        %v6530 = vadd.f32 %v6487, %v6526
        %v6531 = vadd.f32 %v6488, %v6526
        %v6532 = vadd.f32 %v6489, %v6526
        %v6533 = vadd.f32 %v6490, %v6526
        %v6534 = vadd.f32 %v6491, %v6526
        %v6535 = vadd.f32 %v6492, %v6526
        %v6536 = vadd.f32 %v6493, %v6526
        %v6537 = vadd.f32 %v6494, %v6526
        %v6538 = vadd.f32 %v6495, %v6526
        %v6539 = vadd.f32 %v6496, %v6526
        %v6540 = vadd.f32 %v6497, %v6526
        %v6541 = vadd.f32 %v6498, %v6526
        %v6542 = vadd.f32 %v6499, %v6526
        %v6543 = vadd.f32 %v6500, %v6526
        %v6544 = vadd.f32 %v6501, %v6526
        %v6545 = vadd.f32 %v6502, %v6526
        %v6546 = vadd.f32 %v6503, %v6526
        %v6547 = vadd.f32 %v6504, %v6526
        %v6548 = vadd.f32 %v6505, %v6526
        %v6549 = vadd.f32 %v6506, %v6526
        %v6550 = vadd.f32 %v6507, %v6526
        %v6551 = vadd.f32 %v6508, %v6526
        %v6552 = vadd.f32 %v6509, %v6526
        %v6553 = vadd.f32 %v6510, %v6526
        %v6554 = vadd.f32 %v6511, %v6526
        %v6555 = vadd.f32 %v6512, %v6526
        %v6556 = vadd.f32 %v6513, %v6526
        %v6557 = vadd.f32 %v6514, %v6526
        %v6558 = vadd.f32 %v6515, %v6526
        %v6559 = vadd.f32 %v6516, %v6526
        %v6560 = vadd.f32 %v6517, %v6526
        %v6561 = vadd.f32 %v6518, %v6526
        %v6562 = vadd.f32 %v6519, %v6526
        %v6563 = vadd.f32 %v6520, %v6526
        %v6564 = vmax.f32 %v6528, 0.0
        %v6565 = vmax.f32 %v6529, 0.0
        %v6566 = vmax.f32 %v6530, 0.0
        %v6567 = vmax.f32 %v6531, 0.0
        %v6568 = vmax.f32 %v6532, 0.0
        %v6569 = vmax.f32 %v6533, 0.0
        %v6570 = vmax.f32 %v6534, 0.0
        %v6571 = vmax.f32 %v6535, 0.0
        %v6572 = vmax.f32 %v6536, 0.0
        %v6573 = vmax.f32 %v6537, 0.0
        %v6574 = vmax.f32 %v6538, 0.0
        %v6575 = vmax.f32 %v6539, 0.0
        %v6576 = vmax.f32 %v6540, 0.0
        %v6577 = vmax.f32 %v6541, 0.0
        %v6578 = vmax.f32 %v6542, 0.0
        %v6579 = vmax.f32 %v6543, 0.0
        %v6580 = vmax.f32 %v6544, 0.0
        %v6581 = vmax.f32 %v6545, 0.0
        %v6582 = vmax.f32 %v6546, 0.0
        %v6583 = vmax.f32 %v6547, 0.0
        %v6584 = vmax.f32 %v6548, 0.0
        %v6585 = vmax.f32 %v6549, 0.0
        %v6586 = vmax.f32 %v6550, 0.0
        %v6587 = vmax.f32 %v6551, 0.0
        %v6588 = vmax.f32 %v6552, 0.0
        %v6589 = vmax.f32 %v6553, 0.0
        %v6590 = vmax.f32 %v6554, 0.0
        %v6591 = vmax.f32 %v6555, 0.0
        %v6592 = vmax.f32 %v6556, 0.0
        %v6593 = vmax.f32 %v6557, 0.0
        %v6594 = vmax.f32 %v6558, 0.0
        %v6595 = vmax.f32 %v6559, 0.0
        %v6596 = vmax.f32 %v6560, 0.0
        %v6597 = vmax.f32 %v6561, 0.0
        %v6598 = vmax.f32 %v6562, 0.0
        %v6599 = vmax.f32 %v6563, 0.0
        %v6600 = vld [vmem:[%s2] sm:$0x7]
        %v6602 = vlaneseq
        %v6603 = vshrl.u32 %v6602, 7
        %v6604 = vsub.s32 0, %v6603
        %v6605 = vrot.slane %v6600, %v6604
        %v6606 = vlaneseq
        %v6607 = vshrl.u32 %v6606, 7
        %v6608 = vsub.s32 1, %v6607
        %v6609 = vrot.slane %v6600, %v6608
        %v6610 = vlaneseq
        %v6611 = vshrl.u32 %v6610, 7
        %v6612 = vsub.s32 2, %v6611
        %v6613 = vrot.slane %v6600, %v6612
        %vm6616 = vcmask 261120
        %v6617 = vsel %vm6616, %v6613, 0
        %6619 = vmatprep.subr.mxu0 0.0
        %6620 = vmatpush1.msra.mxu0 %v6579
        %6621 = vmatprep.subr.mxu0 0.0
        %6622 = vmatpush1.msra.mxu0 %v6578
        %6623 = vmatprep.subr.mxu0 0.0
        %6624 = vmatpush1.msra.mxu0 %v6577
        %6625 = vmatprep.subr.mxu0 0.0
        %6626 = vmatpush1.msra.mxu0 %v6576
        %6627 = vmatprep.subr.mxu0 0.0
        %6628 = vmatpush1.msra.mxu0 %v6575
        %6629 = vmatprep.subr.mxu0 0.0
        %6630 = vmatpush1.msra.mxu0 %v6574
        %6631 = vmatprep.subr.mxu0 0.0
        %6632 = vmatpush1.msra.mxu0 %v6573
        %6633 = vmatprep.subr.mxu0 0.0
        %6634 = vmatpush1.msra.mxu0 %v6572
        %6635 = vmatprep.subr.mxu0 0.0
        %6636 = vmatpush1.msra.mxu0 %v6571
        %6637 = vmatprep.subr.mxu0 0.0
        %6638 = vmatpush1.msra.mxu0 %v6570
        %6639 = vmatprep.subr.mxu0 0.0
        %6640 = vmatpush1.msra.mxu0 %v6569
        %6641 = vmatprep.subr.mxu0 0.0
        %6642 = vmatpush1.msra.mxu0 %v6568
        %6643 = vmatprep.subr.mxu0 0.0
        %6644 = vmatpush1.msra.mxu0 %v6567
        %6645 = vmatprep.subr.mxu0 0.0
        %6646 = vmatpush1.msra.mxu0 %v6566
        %6647 = vmatprep.subr.mxu0 0.0
        %6648 = vmatpush1.msra.mxu0 %v6565
        %6649 = vmatprep.subr.mxu0 0.0
        %6650 = vmatpush1.msra.mxu0 %v6564
        %6651 = vmatprep.subr.mxu0 0.0
        %6652 = vmatpush2.msra.mxu0 %v6595
        %6653 = vmatprep.subr.mxu0 0.0
        %6654 = vmatpush2.msra.mxu0 %v6594
        %6655 = vmatprep.subr.mxu0 0.0
        %6656 = vmatpush2.msra.mxu0 %v6593
        %6657 = vmatprep.subr.mxu0 0.0
        %6658 = vmatpush2.msra.mxu0 %v6592
        %6659 = vmatprep.subr.mxu0 0.0
        %6660 = vmatpush2.msra.mxu0 %v6591
        %6661 = vmatprep.subr.mxu0 0.0
        %6662 = vmatpush2.msra.mxu0 %v6590
        %6663 = vmatprep.subr.mxu0 0.0
        %6664 = vmatpush2.msra.mxu0 %v6589
        %6665 = vmatprep.subr.mxu0 0.0
        %6666 = vmatpush2.msra.mxu0 %v6588
        %6667 = vmatprep.subr.mxu0 0.0
        %6668 = vmatpush2.msra.mxu0 %v6587
        %6669 = vmatprep.subr.mxu0 0.0
        %6670 = vmatpush2.msra.mxu0 %v6586
        %6671 = vmatprep.subr.mxu0 0.0
        %6672 = vmatpush2.msra.mxu0 %v6585
        %6673 = vmatprep.subr.mxu0 0.0
        %6674 = vmatpush2.msra.mxu0 %v6584
        %6675 = vmatprep.subr.mxu0 0.0
        %6676 = vmatpush2.msra.mxu0 %v6583
        %6677 = vmatprep.subr.mxu0 0.0
        %6678 = vmatpush2.msra.mxu0 %v6582
        %6679 = vmatprep.subr.mxu0 0.0
        %6680 = vmatpush2.msra.mxu0 %v6581
        %6681 = vmatprep.subr.mxu0 0.0
        %6682 = vmatpush2.msra.mxu0 %v6580
        %6683 = vmatprep.mubr.f32.mxu0 %v6609
        %6684 = vmatmul.mubr.f32.gmra.mxu0 %v6605
        %v6685 = vpop.f32.mrf.mxu0
        %v6686 = vadd.f32 0.0, %v6685
        %v6687 = vpop.f32.mrf.mxu0
        %6688 = vdwg.mxu0
        %6689 = vmatprep.subr.mxu0 0.0
        %6690 = vmatpush1.msra.mxu0 0.0
        %6691 = vmatprep.subr.mxu0 0.0
        %6692 = vmatpush1.msra.mxu0 0.0
        %6693 = vmatprep.subr.mxu0 0.0
        %6694 = vmatpush1.msra.mxu0 0.0
        %6695 = vmatprep.subr.mxu0 0.0
        %6696 = vmatpush1.msra.mxu0 0.0
        %6697 = vmatprep.subr.mxu0 0.0
        %6698 = vmatpush1.msra.mxu0 0.0
        %6699 = vmatprep.subr.mxu0 0.0
        %6700 = vmatpush1.msra.mxu0 0.0
        %6701 = vmatprep.subr.mxu0 0.0
        %6702 = vmatpush1.msra.mxu0 0.0
        %6703 = vmatprep.subr.mxu0 0.0
        %6704 = vmatpush1.msra.mxu0 0.0
        %6705 = vmatprep.subr.mxu0 0.0
        %6706 = vmatpush1.msra.mxu0 0.0
        %6707 = vmatprep.subr.mxu0 0.0
        %6708 = vmatpush1.msra.mxu0 0.0
        %6709 = vmatprep.subr.mxu0 0.0
        %6710 = vmatpush1.msra.mxu0 0.0
        %6711 = vmatprep.subr.mxu0 0.0
        %6712 = vmatpush1.msra.mxu0 0.0
        %6713 = vmatprep.subr.mxu0 0.0
        %6714 = vmatpush1.msra.mxu0 %v6599
        %6715 = vmatprep.subr.mxu0 0.0
        %6716 = vmatpush1.msra.mxu0 %v6598
        %6717 = vmatprep.subr.mxu0 0.0
        %6718 = vmatpush1.msra.mxu0 %v6597
        %6719 = vmatprep.subr.mxu0 0.0
        %6720 = vmatpush1.msra.mxu0 %v6596
        %6721 = vmatprep.subr.mxu0 0.0
        %6722 = vmatpush2.msra.mxu0 0.0
        %6723 = vmatprep.subr.mxu0 0.0
        %6724 = vmatpush2.msra.mxu0 0.0
        %6725 = vmatprep.subr.mxu0 0.0
        %6726 = vmatpush2.msra.mxu0 0.0
        %6727 = vmatprep.subr.mxu0 0.0
        %6728 = vmatpush2.msra.mxu0 0.0
        %6729 = vmatprep.subr.mxu0 0.0
        %6730 = vmatpush2.msra.mxu0 0.0
        %6731 = vmatprep.subr.mxu0 0.0
        %6732 = vmatpush2.msra.mxu0 0.0
        %6733 = vmatprep.subr.mxu0 0.0
        %6734 = vmatpush2.msra.mxu0 0.0
        %6735 = vmatprep.subr.mxu0 0.0
        %6736 = vmatpush2.msra.mxu0 0.0
        %6737 = vmatprep.subr.mxu0 0.0
        %6738 = vmatpush2.msra.mxu0 0.0
        %6739 = vmatprep.subr.mxu0 0.0
        %6740 = vmatpush2.msra.mxu0 0.0
        %6741 = vmatprep.subr.mxu0 0.0
        %6742 = vmatpush2.msra.mxu0 0.0
        %6743 = vmatprep.subr.mxu0 0.0
        %6744 = vmatpush2.msra.mxu0 0.0
        %6745 = vmatprep.subr.mxu0 0.0
        %6746 = vmatpush2.msra.mxu0 0.0
        %6747 = vmatprep.subr.mxu0 0.0
        %6748 = vmatpush2.msra.mxu0 0.0
        %6749 = vmatprep.subr.mxu0 0.0
        %6750 = vmatpush2.msra.mxu0 0.0
        %6751 = vmatprep.subr.mxu0 0.0
        %6752 = vmatpush2.msra.mxu0 0.0
        %6753 = vmatprep.mubr.f32.mxu0 0.0
        %6754 = vmatmul.mubr.f32.gmra.mxu0 %v6617
        %v6755 = vpop.f32.mrf.mxu0
        %v6756 = vadd.f32 %v6686, %v6755
        %v6757 = vpop.f32.mrf.mxu0
        %6758 = vdwg.mxu0
        %v6759 = vld [vmem:[%s7] sm:$0xff]
        %v6760 = vld [vmem:[%s7 + $0x8] sm:$0xff]
        %v6761 = vld [vmem:[%s7 + $0x10] sm:$0xff]
        %v6762 = vld [vmem:[%s7 + $0x18] sm:$0xff]
        %v6763 = vld [vmem:[%s7 + $0x20] sm:$0xff]
        %v6764 = vld [vmem:[%s7 + $0x28] sm:$0xff]
        %v6765 = vld [vmem:[%s7 + $0x30] sm:$0xff]
        %v6766 = vld [vmem:[%s7 + $0x38] sm:$0xff]
        %v6767 = vld [vmem:[%s7 + $0x40] sm:$0xff]
        %v6768 = vld [vmem:[%s7 + $0x48] sm:$0xff]
        %v6769 = vld [vmem:[%s7 + $0x50] sm:$0xff]
        %v6770 = vld [vmem:[%s7 + $0x58] sm:$0xff]
        %v6771 = vld [vmem:[%s7 + $0x60] sm:$0xff]
        %v6772 = vld [vmem:[%s7 + $0x68] sm:$0xff]
        %v6773 = vld [vmem:[%s7 + $0x70] sm:$0xff]
        %v6774 = vld [vmem:[%s7 + $0x78] sm:$0xff]
        %v6775 = vld [vmem:[%s8] sm:$0x1]
        %6776 = vmatprep.subr.mxu0 0.0
        %6777 = vmatpush1.msra.mxu0 %v6774
        %6778 = vmatprep.subr.mxu0 0.0
        %6779 = vmatpush1.msra.mxu0 %v6773
        %6780 = vmatprep.subr.mxu0 0.0
        %6781 = vmatpush1.msra.mxu0 %v6772
        %6782 = vmatprep.subr.mxu0 0.0
        %6783 = vmatpush1.msra.mxu0 %v6771
        %6784 = vmatprep.subr.mxu0 0.0
        %6785 = vmatpush1.msra.mxu0 %v6770
        %6786 = vmatprep.subr.mxu0 0.0
        %6787 = vmatpush1.msra.mxu0 %v6769
        %6788 = vmatprep.subr.mxu0 0.0
        %6789 = vmatpush1.msra.mxu0 %v6768
        %6790 = vmatprep.subr.mxu0 0.0
        %6791 = vmatpush1.msra.mxu0 %v6767
        %6792 = vmatprep.subr.mxu0 0.0
        %6793 = vmatpush1.msra.mxu0 %v6766
        %6794 = vmatprep.subr.mxu0 0.0
        %6795 = vmatpush1.msra.mxu0 %v6765
        %6796 = vmatprep.subr.mxu0 0.0
        %6797 = vmatpush1.msra.mxu0 %v6764
        %6798 = vmatprep.subr.mxu0 0.0
        %6799 = vmatpush1.msra.mxu0 %v6763
        %6800 = vmatprep.subr.mxu0 0.0
        %6801 = vmatpush1.msra.mxu0 %v6762
        %6802 = vmatprep.subr.mxu0 0.0
        %6803 = vmatpush1.msra.mxu0 %v6761
        %6804 = vmatprep.subr.mxu0 0.0
        %6805 = vmatpush1.msra.mxu0 %v6760
        %6806 = vmatprep.subr.mxu0 0.0
        %6807 = vmatpush1.msra.mxu0 %v6759
        %6808 = vmatprep.subr.mxu0 0.0
        %6809 = vmatpush2.msra.mxu0 0.0
        %6810 = vmatprep.subr.mxu0 0.0
        %6811 = vmatpush2.msra.mxu0 0.0
        %6812 = vmatprep.subr.mxu0 0.0
        %6813 = vmatpush2.msra.mxu0 0.0
        %6814 = vmatprep.subr.mxu0 0.0
        %6815 = vmatpush2.msra.mxu0 0.0
        %6816 = vmatprep.subr.mxu0 0.0
        %6817 = vmatpush2.msra.mxu0 0.0
        %6818 = vmatprep.subr.mxu0 0.0
        %6819 = vmatpush2.msra.mxu0 0.0
        %6820 = vmatprep.subr.mxu0 0.0
        %6821 = vmatpush2.msra.mxu0 0.0
        %6822 = vmatprep.subr.mxu0 0.0
        %6823 = vmatpush2.msra.mxu0 0.0
        %6824 = vmatprep.subr.mxu0 0.0
        %6825 = vmatpush2.msra.mxu0 0.0
        %6826 = vmatprep.subr.mxu0 0.0
        %6827 = vmatpush2.msra.mxu0 0.0
        %6828 = vmatprep.subr.mxu0 0.0
        %6829 = vmatpush2.msra.mxu0 0.0
        %6830 = vmatprep.subr.mxu0 0.0
        %6831 = vmatpush2.msra.mxu0 0.0
        %6832 = vmatprep.subr.mxu0 0.0
        %6833 = vmatpush2.msra.mxu0 0.0
        %6834 = vmatprep.subr.mxu0 0.0
        %6835 = vmatpush2.msra.mxu0 0.0
        %6836 = vmatprep.subr.mxu0 0.0
        %6837 = vmatpush2.msra.mxu0 0.0
        %6838 = vmatprep.subr.mxu0 0.0
        %6839 = vmatpush2.msra.mxu0 0.0
        %6840 = vmatprep.mubr.f32.mxu0 0.0
        %6841 = vmatmul.mubr.f32.gmra.mxu0 %v6756
        %v6842 = vpop.f32.mrf.mxu0
        %v6843 = vadd.f32 %v6775, %v6842
        %v6844 = vpop.f32.mrf.mxu0
        %6845 = vdwg.mxu0
        %6846 = vst [vmem:[%s324] sm:$0x1] %v6843
        %s6847 = sand.u32 %s225, 1
        %s6848 = scalar_lea.sflag [#allocation4], %s6847
        %s6849 = sand.u32 %s225, 1
        %s6850 = scalar_lea.vmem [#allocation3], %s6849
        // Predicated region
        $region57: #{image_encoder_forward.1} parent=55 // pred_check
          %p6851 = pneg %p235
        $region58: #{image_encoder_forward.1} parent=55 // pred_check_branch
          %6853 = sbr.rel (%p6851) target = $region60
        $region59: #{image_encoder_forward.1} parent=55 // pred_region
          %s6855 = ssub.s32 16, 16
          %6856 = vsyncadd %s6848, %s6855
          %s6857 = smul.addr %s23, 16
          %s6858 = scalar_lea.hbm %s9, %s6857
          %s6860 = sshll.u32 %s6850, 4
          %s6861 = int_to_ptr.vmem [resolvable:$true] %s6860
          %6863 = dma.vmem_to_hbm [thread:$0]  %s6861, 16, %s6858, %s6848
        $region60: #{image_encoder_forward.1} parent=55 // pred_fallthru
          _
      $region56: #{image_encoder_forward.1} parent=5 // pred_fallthru
        _
      %p6864 = scmp.le.s32.totalorder 2, %s18
      // Predicated region
      $region61: #{image_encoder_forward.1} parent=5 // pred_check
        %p6865 = pneg %p6864
      $region62: #{image_encoder_forward.1} parent=5 // pred_check_branch
        %6867 = sbr.rel (%p6865) target = $region64
      $region63: #{image_encoder_forward.1} parent=5 // pred_region
        %s6868 = ssub.s32 %s18, 2
        // Predicated region
        $region65: #{image_encoder_forward.1} parent=63 // pred_check
          %p6869 = pneg %p241
        $region66: #{image_encoder_forward.1} parent=63 // pred_check_branch
          %6871 = sbr.rel (%p6869) target = $region68
        $region67: #{image_encoder_forward.1} parent=63 // pred_region
          %s6872 = sand.u32 %s226, 1
          %s6873 = scalar_lea.sflag [#allocation4], %s6872
          %s6874 = sand.u32 %s226, 1
          %s6875 = scalar_lea.vmem [#allocation3], %s6874
          %6876 = dma.done %s6873, 16
        $region68: #{image_encoder_forward.1} parent=63 // pred_fallthru
          _
      $region64: #{image_encoder_forward.1} parent=5 // pred_fallthru
        _
    $region6: #{image_encoder_forward.1} parent=1 // loop_footer
      %s22 = sadd.s32 1, %s18
    $region7: #{image_encoder_forward.1} parent=1 // loop_footer_branch
      %17 = sbr.rel target = $region3
    $region8: #{image_encoder_forward.1} parent=1 // loop_exit
      _
    %6877 = vsyncpa [#allocation4], 1
    %s6878 = scalar_lea.sflag [#allocation4], 1
    %6879 = vsyncpa %s6878, 1

</llo_original>
